<compile_context>
chip_gen: v7x
topology: tpu7x:2x2x1
jax: 0.10.0
libtpu: 0.0.40
codegen_flags: <defaults>
</compile_context>

<pallas_src>
import math

import jax
import jax.numpy as jnp
from jax import lax
from jax.experimental import pallas as pl
from jax.experimental.pallas import tpu as pltpu

LN_EPS = 1e-5


def _make_kernel(H, HD, P, w):
    """H = n_heads, HD = head dim, P = n_points (single level), w = grid width."""
    D = H * HD
    HP = H * P
    scale = 1.0 / math.sqrt(HD)
    f32 = jnp.float32
    bf16 = jnp.bfloat16

    def kernel(tgt_ref, qpos_ref, src_ref,
               sa_w_qk_ref, sa_b_qk_ref, sa_w_v_ref, sa_b_v_ref,
               sa_wo_ref, sa_bo_ref,
               dv_w_ref, dv_b_ref, dsp_w_ref, dsp_b_ref, do_w_ref, do_b_ref,
               w1_ref, b1_ref, w2_ref, b2_ref, ln_g_ref, ln_b_ref,
               out_ref,
               x_sc, vdef_sc, qkv_sc, samp_sc, head_sc):
        layer = pl.program_id(1)
        n_layers = pl.num_programs(1)
        Lq = x_sc.shape[0]
        Lk = vdef_sc.shape[0]

        # ---- layer 0: load activation + hoist value_proj(src) (layer-invariant,
        #      weights are shared across the deep-copied layers).
        @pl.when(layer == 0)
        def _init():
            x_sc[...] = tgt_ref[0].astype(f32)
            vdef_sc[...] = (jnp.dot(src_ref[0].astype(bf16), dv_w_ref[...],
                                    preferred_element_type=f32)
                            + dv_b_ref[...])

        x = x_sc[...]                       # (Lq, D) f32, running activation
        qpos = qpos_ref[0].astype(f32)      # (Lq, D)

        def layernorm(v, i):                # per-plane ref indexing (free view)
            mu = jnp.mean(v, axis=-1, keepdims=True)
            var = jnp.mean((v - mu) * (v - mu), axis=-1, keepdims=True)
            return (v - mu) * lax.rsqrt(var + LN_EPS) * ln_g_ref[i] + ln_b_ref[i]

        def softmax_last(s):                # f32 softmax, EUP reciprocal
            s = s - jnp.max(s, axis=-1, keepdims=True)
            e = jnp.exp(s)
            return e * pl.reciprocal(jnp.sum(e, axis=-1, keepdims=True),
                                     approx=True)

        # ---------------- self attention (nn.MultiheadAttention) -------------
        # Lane-dense projections: one (Lq,D)@(D,2D) for Q|K and one (Lq,D)@(D,D)
        # for V, staged through VMEM so per-head (Lq,HD) tiles come from plain
        # ref slicing (no vector lane<->sublane reshapes).
        xq = (x + qpos).astype(bf16)
        qkv_sc[:, :2 * D] = (jnp.dot(xq, sa_w_qk_ref[...],
                                     preferred_element_type=f32)
                             + sa_b_qk_ref[...])
        qkv_sc[:, 2 * D:] = (jnp.dot(x.astype(bf16), sa_w_v_ref[...],
                                     preferred_element_type=f32)
                             + sa_b_v_ref[...])
        # TODO(synk): pack the H score/PV matmuls into one block-diagonal
        #             (H*Lq, H*Lq) matmul when H*Lq ~= 128 (review item 4).
        for hh in range(H):
            q_h = qkv_sc[:, hh * HD:(hh + 1) * HD] * scale          # (Lq,HD) f32
            k_h = qkv_sc[:, D + hh * HD:D + (hh + 1) * HD]
            v_h = qkv_sc[:, 2 * D + hh * HD:2 * D + (hh + 1) * HD]
            s = jnp.einsum('qc,kc->qk', q_h.astype(bf16), k_h.astype(bf16),
                           preferred_element_type=f32)              # (Lq,Lq)
            p = softmax_last(s)
            head_sc[:, hh * HD:(hh + 1) * HD] = jnp.dot(
                p.astype(bf16), v_h.astype(bf16), preferred_element_type=f32)
        # fused head-concat + output projection: one (Lq,128)@(128,D) matmul
        sa = jnp.dot(head_sc[...].astype(bf16), sa_wo_ref[...],
                     preferred_element_type=f32) + sa_bo_ref[...]
        x = layernorm(x + sa, 0)                                     # norm2

        # -------------- deformable cross attention (MSDeformAttn) ------------
        # Merged sampling projection: offsets-x | offsets-y | attn logits in a
        # single (Lq,D)@(D,3*H*P) matmul, staged in VMEM for per-head slicing.
        xc = (x + qpos).astype(bf16)
        samp_sc[...] = (jnp.dot(xc, dsp_w_ref[...],
                                preferred_element_type=f32) + dsp_b_ref[...])

        # Reference-point grids generated in-kernel (no input DMA): pixel
        # coordinate of query q is (q % w, q // w); value cell k likewise.
        qi = lax.broadcasted_iota(jnp.int32, (Lq, 1), 0).astype(f32)
        ki = lax.broadcasted_iota(jnp.int32, (1, Lk), 1).astype(f32)
        q_row = jnp.floor(qi / w)
        q_col = qi - q_row * w
        k_row = jnp.floor(ki / w)
        k_col = ki - k_row * w

        for hh in range(H):
            offx = samp_sc[:, hh * P:(hh + 1) * P]                   # (Lq,P)
            offy = samp_sc[:, HP + hh * P:HP + (hh + 1) * P]
            attn = softmax_last(
                samp_sc[:, 2 * HP + hh * P:2 * HP + (hh + 1) * P])   # (Lq,P)
            px = q_col + offx                                        # (Lq,P)
            py = q_row + offy
            # bilinear kernel over the flattened h*w value grid (zeros padding)
            wx = jnp.maximum(0.0, 1.0 - jnp.abs(px[:, :, None] - k_col))
            wy = jnp.maximum(0.0, 1.0 - jnp.abs(py[:, :, None] - k_row))
            A = jnp.sum(attn[:, :, None] * wx * wy, axis=1)          # (Lq,Lk)
            head_sc[:, hh * HD:(hh + 1) * HD] = jnp.dot(
                A.astype(bf16), vdef_sc[:, hh * HD:(hh + 1) * HD].astype(bf16),
                preferred_element_type=f32)
        ca = jnp.dot(head_sc[...].astype(bf16), do_w_ref[...],
                     preferred_element_type=f32) + do_b_ref[...]
        x = layernorm(x + ca, 1)                                     # norm1

        # ------------------------------ FFN (relu) ---------------------------
        hid = jnp.maximum(
            jnp.dot(x.astype(bf16), w1_ref[...],
                    preferred_element_type=f32) + b1_ref[...], 0.0)
        ff = jnp.dot(hid.astype(bf16), w2_ref[...],
                     preferred_element_type=f32) + b2_ref[...]
        x = layernorm(x + ff, 2)                                     # norm3

        x_sc[...] = x                      # carry to next layer (VMEM resident)

        @pl.when(layer == n_layers - 1)
        def _store():
            out_ref[0] = x.astype(out_ref.dtype)

    return kernel


def decoder_forward(tgt, query_pos, src, src_spatial_shapes,
                    src_level_start_index, h, w, params, num_layers=1,
                    *, vmem_limit_bytes=32 * 1024 * 1024):
    """Apply `num_layers` DecoderLayers (shared, deep-copied weights) fused
    into one pallas_call.  All tensors are batch-first (B, Lq, D)."""
    del src_spatial_shapes, src_level_start_index  # single level, static h/w
    B, Lq, D = tgt.shape
    _, Lk, _ = src.shape
    H, P = params['n_heads'], params['n_points']
    HD = D // H
    assert D == H * HD and Lq == h * w and Lk == h * w

    def dspec(shape):
        n = len(shape)
        return pl.BlockSpec((1,) + tuple(shape[1:]),
                            lambda b, l, _n=n: (b,) + (0,) * (_n - 1))

    def wspec(shape):
        # Grid-invariant weight blocks (constant index_map -> DMA'd once).
        # TODO(synk): pipeline_mode=pl.Buffered(1) would drop their second
        #             double-buffer copy (matters on v7x's 64 MiB VMEM).
        n = len(shape)
        return pl.BlockSpec(tuple(shape), lambda b, l, _n=n: (0,) * _n)

    weight_order = ['sa_w_qk', 'sa_b_qk', 'sa_w_v', 'sa_b_v', 'sa_wo', 'sa_bo',
                    'dv_w', 'dv_b', 'dsp_w', 'dsp_b', 'do_w', 'do_b',
                    'ffn_w1', 'ffn_b1', 'ffn_w2', 'ffn_b2', 'ln_g', 'ln_b']
    weights = [params[k] for k in weight_order]

    in_specs = ([dspec(tgt.shape), dspec(query_pos.shape), dspec(src.shape)]
                + [wspec(wt.shape) for wt in weights])
    out_spec = pl.BlockSpec((1, Lq, D), lambda b, l: (b, 0, 0))

    return pl.pallas_call(
        _make_kernel(H, HD, P, w),
        out_shape=jax.ShapeDtypeStruct((B, Lq, D), tgt.dtype),
        grid_spec=pltpu.PrefetchScalarGridSpec(
            num_scalar_prefetch=0,
            grid=(B, num_layers),           # B parallel (megacore), layers sequential
            in_specs=in_specs,
            out_specs=out_spec,
            scratch_shapes=[
                pltpu.VMEM((Lq, D), jnp.float32),          # running activation
                pltpu.VMEM((Lk, D), jnp.float32),          # hoisted value_proj(src)
                pltpu.VMEM((Lq, 3 * D), jnp.float32),      # q | k | v staging
                pltpu.VMEM((Lq, 3 * H * P), jnp.float32),  # sampling proj staging
                pltpu.VMEM((Lq, D), jnp.float32),          # per-head attn outputs
            ]),
        compiler_params=pltpu.CompilerParams(
            dimension_semantics=("parallel", "arbitrary"),
            vmem_limit_bytes=vmem_limit_bytes),
    )(tgt, query_pos, src, *weights)


def decoder_layer_forward(tgt, query_pos, src, src_spatial_shapes,
                          src_level_start_index, h, w, params):
    """Single DecoderLayer.forward (eval mode)."""
    return decoder_forward(tgt, query_pos, src, src_spatial_shapes,
                           src_level_start_index, h, w, params, num_layers=1)


def init_layer_params(key, d_model, d_ffn, n_heads, n_points):
    """Lane-dense (x @ W) weight layout.

    Mapping to PyTorch DecoderLayer parameters:
      sa_w_qk  = self_attn.in_proj_weight[:2D, :].T   (q -> cols 0:D, k -> D:2D)
      sa_w_v   = self_attn.in_proj_weight[2D:, :].T
      sa_wo    = self_attn.out_proj.weight.T
      dv_w     = cross_attn.value_proj.weight.T
      dsp_w[:, c*H*P + hh*P + p] =
          c==0: cross_attn.sampling_offsets.weight[2*(hh*P+p) + 0, :]   (x)
          c==1: cross_attn.sampling_offsets.weight[2*(hh*P+p) + 1, :]   (y)
          c==2: cross_attn.attention_weights.weight[hh*P + p, :]
      do_w     = cross_attn.output_proj.weight.T
      ffn_w1 / ffn_w2 = linear1.weight.T / linear2.weight.T
    """
    D = d_model
    HP = n_heads * n_points
    ks = jax.random.split(key, 9)
    bf16, f32 = jnp.bfloat16, jnp.float32
    s_in = 1.0 / math.sqrt(D)
    s_ff = 1.0 / math.sqrt(d_ffn)

    def nrm(k, shape, scale):
        return (jax.random.normal(k, shape, f32) * scale).astype(bf16)

    return {
        'n_heads': n_heads, 'n_points': n_points,
        # self attention
        'sa_w_qk': nrm(ks[0], (D, 2 * D), s_in),
        'sa_b_qk': jnp.zeros((1, 2 * D), f32),
        'sa_w_v':  nrm(ks[1], (D, D), s_in),
        'sa_b_v':  jnp.zeros((1, D), f32),
        'sa_wo':   nrm(ks[2], (D, D), s_in),
        'sa_bo':   jnp.zeros((1, D), f32),
        # MSDeformAttn (single level): value, sampling (x|y|attn), out proj
        'dv_w':  nrm(ks[3], (D, D), s_in),
        'dv_b':  jnp.zeros((1, D), f32),
        'dsp_w': nrm(ks[4], (D, 3 * HP), s_in),
        'dsp_b': jax.random.normal(ks[5], (1, 3 * HP), f32) * 0.5,
        'do_w':  nrm(ks[6], (D, D), s_in),
        'do_b':  jnp.zeros((1, D), f32),
        # FFN
        'ffn_w1': nrm(ks[7], (D, d_ffn), s_in),
        'ffn_b1': jnp.zeros((1, d_ffn), f32),
        'ffn_w2': nrm(ks[8], (d_ffn, D), s_ff),
        'ffn_b2': jnp.zeros((1, D), f32),
        # LayerNorms (f32): [norm2 (post-SA), norm1 (post-CA), norm3 (post-FFN)]
        'ln_g': jnp.ones((3, D), f32),
        'ln_b': jnp.zeros((3, D), f32),
    }


if __name__ == "__main__":
    B, h, w = 2, 4, 4
    d_model, d_ffn, n_heads, n_points = 128, 256, 8, 4   # lane-dense D
    Lq = Lk = h * w

    key = jax.random.PRNGKey(0)
    k1, k2, k3, kp = jax.random.split(key, 4)
    tgt = jax.random.normal(k1, (B, Lq, d_model), jnp.float32)
    query_pos = jax.random.normal(k2, (B, Lq, d_model), jnp.float32)
    src = jax.random.normal(k3, (B, Lk, d_model), jnp.float32)
    src_spatial_shapes = jnp.array([[h, w]], dtype=jnp.int32)
    src_level_start_index = jnp.array([0], dtype=jnp.int32)
    params = init_layer_params(kp, d_model, d_ffn, n_heads, n_points)

    # Single DecoderLayer (the module spec).
    out1 = decoder_layer_forward(tgt, query_pos, src, src_spatial_shapes,
                                 src_level_start_index, h, w, params)
    out1 = jax.block_until_ready(out1)
    assert out1.shape == (B, Lq, d_model) and bool(jnp.isfinite(out1).all())

    # Fused 2-layer stack (deep-copied / shared weights), one pallas_call.
    out2 = jax.block_until_ready(
        decoder_forward(tgt, query_pos, src, src_spatial_shapes,
                        src_level_start_index, h, w, params, num_layers=2))
    assert out2.shape == (B, Lq, d_model) and bool(jnp.isfinite(out2).all())

    print("KERNEL_OK")
</pallas_src>

<mosaic_0001>
module attributes {stable_mosaic.version = 11 : i64} {
  func.func @kernel(%arg0: i32, %arg1: i32, %arg2: memref<1x16x128xf32, #tpu.memory_space<vmem>>, %arg3: memref<1x16x128xf32, #tpu.memory_space<vmem>>, %arg4: memref<1x16x128xf32, #tpu.memory_space<vmem>>, %arg5: memref<128x256xbf16, #tpu.memory_space<vmem>>, %arg6: memref<1x256xf32, #tpu.memory_space<vmem>>, %arg7: memref<128x128xbf16, #tpu.memory_space<vmem>>, %arg8: memref<1x128xf32, #tpu.memory_space<vmem>>, %arg9: memref<128x128xbf16, #tpu.memory_space<vmem>>, %arg10: memref<1x128xf32, #tpu.memory_space<vmem>>, %arg11: memref<128x128xbf16, #tpu.memory_space<vmem>>, %arg12: memref<1x128xf32, #tpu.memory_space<vmem>>, %arg13: memref<128x96xbf16, #tpu.memory_space<vmem>>, %arg14: memref<1x96xf32, #tpu.memory_space<vmem>>, %arg15: memref<128x128xbf16, #tpu.memory_space<vmem>>, %arg16: memref<1x128xf32, #tpu.memory_space<vmem>>, %arg17: memref<128x256xbf16, #tpu.memory_space<vmem>>, %arg18: memref<1x256xf32, #tpu.memory_space<vmem>>, %arg19: memref<256x128xbf16, #tpu.memory_space<vmem>>, %arg20: memref<1x128xf32, #tpu.memory_space<vmem>>, %arg21: memref<3x128xf32, #tpu.memory_space<vmem>>, %arg22: memref<3x128xf32, #tpu.memory_space<vmem>>, %arg23: memref<1x16x128xf32, #tpu.memory_space<vmem>>, %arg24: memref<16x128xf32, #tpu.memory_space<vmem>>, %arg25: memref<16x128xf32, #tpu.memory_space<vmem>>, %arg26: memref<16x384xf32, #tpu.memory_space<vmem>>, %arg27: memref<16x96xf32, #tpu.memory_space<vmem>>, %arg28: memref<16x128xf32, #tpu.memory_space<vmem>>) attributes {dimension_semantics = [#tpu.dimension_semantics<parallel>, #tpu.dimension_semantics<arbitrary>], iteration_bounds = array<i64: 2, 1>, scalar_prefetch = 0 : i64, scratch_operands = 5 : i64, tpu.core_type = #tpu.core_type<tc>, window_params = [{transform_indices = @transform_0, window_bounds = array<i64: 1, 16, 128>}, {transform_indices = @transform_1, window_bounds = array<i64: 1, 16, 128>}, {transform_indices = @transform_2, window_bounds = array<i64: 1, 16, 128>}, {pipeline_mode = #tpu.pipeline_mode<synchronous>, transform_indices = @transform_3, window_bounds = array<i64: 128, 256>}, {pipeline_mode = #tpu.pipeline_mode<synchronous>, transform_indices = @transform_4, window_bounds = array<i64: 1, 256>}, {pipeline_mode = #tpu.pipeline_mode<synchronous>, transform_indices = @transform_5, window_bounds = array<i64: 128, 128>}, {pipeline_mode = #tpu.pipeline_mode<synchronous>, transform_indices = @transform_6, window_bounds = array<i64: 1, 128>}, {pipeline_mode = #tpu.pipeline_mode<synchronous>, transform_indices = @transform_7, window_bounds = array<i64: 128, 128>}, {pipeline_mode = #tpu.pipeline_mode<synchronous>, transform_indices = @transform_8, window_bounds = array<i64: 1, 128>}, {pipeline_mode = #tpu.pipeline_mode<synchronous>, transform_indices = @transform_9, window_bounds = array<i64: 128, 128>}, {pipeline_mode = #tpu.pipeline_mode<synchronous>, transform_indices = @transform_10, window_bounds = array<i64: 1, 128>}, {pipeline_mode = #tpu.pipeline_mode<synchronous>, transform_indices = @transform_11, window_bounds = array<i64: 128, 96>}, {pipeline_mode = #tpu.pipeline_mode<synchronous>, transform_indices = @transform_12, window_bounds = array<i64: 1, 96>}, {pipeline_mode = #tpu.pipeline_mode<synchronous>, transform_indices = @transform_13, window_bounds = array<i64: 128, 128>}, {pipeline_mode = #tpu.pipeline_mode<synchronous>, transform_indices = @transform_14, window_bounds = array<i64: 1, 128>}, {pipeline_mode = #tpu.pipeline_mode<synchronous>, transform_indices = @transform_15, window_bounds = array<i64: 128, 256>}, {pipeline_mode = #tpu.pipeline_mode<synchronous>, transform_indices = @transform_16, window_bounds = array<i64: 1, 256>}, {pipeline_mode = #tpu.pipeline_mode<synchronous>, transform_indices = @transform_17, window_bounds = array<i64: 256, 128>}, {pipeline_mode = #tpu.pipeline_mode<synchronous>, transform_indices = @transform_18, window_bounds = array<i64: 1, 128>}, {pipeline_mode = #tpu.pipeline_mode<synchronous>, transform_indices = @transform_19, window_bounds = array<i64: 3, 128>}, {pipeline_mode = #tpu.pipeline_mode<synchronous>, transform_indices = @transform_20, window_bounds = array<i64: 3, 128>}, {transform_indices = @transform_21, window_bounds = array<i64: 1, 16, 128>}]} {
    %c0_i32 = arith.constant 0 : i32
    %0 = arith.cmpi eq, %arg1, %c0_i32 : i32
    %1 = arith.extui %0 : i1 to i32
    %c0_i32_0 = arith.constant 0 : i32
    %2 = arith.cmpi ne, %1, %c0_i32_0 : i32
    scf.if %2 {
      %c0_290 = arith.constant 0 : index
      %c0_291 = arith.constant 0 : index
      %c0_292 = arith.constant 0 : index
      %722 = vector.load %arg2[%c0_290, %c0_291, %c0_292] : memref<1x16x128xf32, #tpu.memory_space<vmem>>, vector<1x16x128xf32>
      %723 = vector.shape_cast %722 : vector<1x16x128xf32> to vector<16x128xf32>
      %c0_293 = arith.constant 0 : index
      %c0_294 = arith.constant 0 : index
      %724 = vector.load %arg24[%c0_293, %c0_294] : memref<16x128xf32, #tpu.memory_space<vmem>>, vector<16x128xf32>
      tpu.vector_store %arg24[%c0_293, %c0_294], %723 {strides = array<i32>} : memref<16x128xf32, #tpu.memory_space<vmem>>, vector<16x128xf32>,
      %c0_295 = arith.constant 0 : index
      %c0_296 = arith.constant 0 : index
      %c0_297 = arith.constant 0 : index
      %725 = vector.load %arg4[%c0_295, %c0_296, %c0_297] : memref<1x16x128xf32, #tpu.memory_space<vmem>>, vector<1x16x128xf32>
      %726 = vector.shape_cast %725 : vector<1x16x128xf32> to vector<16x128xf32>
      %727 = arith.truncf %726 : vector<16x128xf32> to vector<16x128xbf16>
      %c0_298 = arith.constant 0 : index
      %c0_299 = arith.constant 0 : index
      %728 = vector.load %arg11[%c0_298, %c0_299] : memref<128x128xbf16, #tpu.memory_space<vmem>>, vector<128x128xbf16>
      %cst_300 = arith.constant dense<0.000000e+00> : vector<16x128xf32>
      %729 = tpu.matmul %727, %728, %cst_300 {dimension_numbers = #tpu.dot_dimension_numbers<[1], [0], [0], [1], [0, 0, 1, 1], [], []>} : vector<16x128xbf16>, vector<128x128xbf16>, vector<16x128xf32> -> vector<16x128xf32>
      %c0_301 = arith.constant 0 : index
      %c0_302 = arith.constant 0 : index
      %730 = vector.load %arg12[%c0_301, %c0_302] : memref<1x128xf32, #tpu.memory_space<vmem>>, vector<1x128xf32>
      %731 = vector.broadcast %730 : vector<1x128xf32> to vector<16x128xf32>
      %732 = arith.addf %729, %731 : vector<16x128xf32>
      %c0_303 = arith.constant 0 : index
      %c0_304 = arith.constant 0 : index
      %733 = vector.load %arg25[%c0_303, %c0_304] : memref<16x128xf32, #tpu.memory_space<vmem>>, vector<16x128xf32>
      tpu.vector_store %arg25[%c0_303, %c0_304], %732 {strides = array<i32>} : memref<16x128xf32, #tpu.memory_space<vmem>>, vector<16x128xf32>,
    } else {
    }
    %c0 = arith.constant 0 : index
    %c0_1 = arith.constant 0 : index
    %3 = vector.load %arg24[%c0, %c0_1] : memref<16x128xf32, #tpu.memory_space<vmem>>, vector<16x128xf32>
    %c0_2 = arith.constant 0 : index
    %c0_3 = arith.constant 0 : index
    %c0_4 = arith.constant 0 : index
    %4 = vector.load %arg3[%c0_2, %c0_3, %c0_4] : memref<1x16x128xf32, #tpu.memory_space<vmem>>, vector<1x16x128xf32>
    %5 = vector.shape_cast %4 : vector<1x16x128xf32> to vector<16x128xf32>
    %6 = arith.addf %3, %5 : vector<16x128xf32>
    %7 = arith.truncf %6 : vector<16x128xf32> to vector<16x128xbf16>
    %c0_5 = arith.constant 0 : index
    %c0_6 = arith.constant 0 : index
    %8 = vector.load %arg5[%c0_5, %c0_6] : memref<128x256xbf16, #tpu.memory_space<vmem>>, vector<128x256xbf16>
    %cst = arith.constant dense<0.000000e+00> : vector<16x256xf32>
    %9 = tpu.matmul %7, %8, %cst {dimension_numbers = #tpu.dot_dimension_numbers<[1], [0], [0], [1], [0, 0, 1, 1], [], []>} : vector<16x128xbf16>, vector<128x256xbf16>, vector<16x256xf32> -> vector<16x256xf32>
    %c0_7 = arith.constant 0 : index
    %c0_8 = arith.constant 0 : index
    %10 = vector.load %arg6[%c0_7, %c0_8] : memref<1x256xf32, #tpu.memory_space<vmem>>, vector<1x256xf32>
    %11 = vector.broadcast %10 : vector<1x256xf32> to vector<16x256xf32>
    %12 = arith.addf %9, %11 : vector<16x256xf32>
    %c0_9 = arith.constant 0 : index
    %c0_10 = arith.constant 0 : index
    %13 = vector.load %arg26[%c0_9, %c0_10] : memref<16x384xf32, #tpu.memory_space<vmem>>, vector<16x256xf32>
    tpu.vector_store %arg26[%c0_9, %c0_10], %12 {strides = array<i32>} : memref<16x384xf32, #tpu.memory_space<vmem>>, vector<16x256xf32>,
    %14 = arith.truncf %3 : vector<16x128xf32> to vector<16x128xbf16>
    %c0_11 = arith.constant 0 : index
    %c0_12 = arith.constant 0 : index
    %15 = vector.load %arg7[%c0_11, %c0_12] : memref<128x128xbf16, #tpu.memory_space<vmem>>, vector<128x128xbf16>
    %cst_13 = arith.constant dense<0.000000e+00> : vector<16x128xf32>
    %16 = tpu.matmul %14, %15, %cst_13 {dimension_numbers = #tpu.dot_dimension_numbers<[1], [0], [0], [1], [0, 0, 1, 1], [], []>} : vector<16x128xbf16>, vector<128x128xbf16>, vector<16x128xf32> -> vector<16x128xf32>
    %c0_14 = arith.constant 0 : index
    %c0_15 = arith.constant 0 : index
    %17 = vector.load %arg8[%c0_14, %c0_15] : memref<1x128xf32, #tpu.memory_space<vmem>>, vector<1x128xf32>
    %18 = vector.broadcast %17 : vector<1x128xf32> to vector<16x128xf32>
    %19 = arith.addf %16, %18 : vector<16x128xf32>
    %c0_16 = arith.constant 0 : index
    %c256 = arith.constant 256 : index
    %20 = vector.load %arg26[%c0_16, %c256] : memref<16x384xf32, #tpu.memory_space<vmem>>, vector<16x128xf32>
    tpu.vector_store %arg26[%c0_16, %c256], %19 {strides = array<i32>} : memref<16x384xf32, #tpu.memory_space<vmem>>, vector<16x128xf32>,
    %c0_17 = arith.constant 0 : index
    %c0_18 = arith.constant 0 : index
    %21 = vector.load %arg26[%c0_17, %c0_18] : memref<16x384xf32, #tpu.memory_space<vmem>>, vector<16x16xf32>
    %cst_19 = arith.constant 2.500000e-01 : f32
    %22 = vector.broadcast %cst_19 : f32 to vector<16x16xf32>
    %23 = arith.mulf %21, %22 : vector<16x16xf32>
    %c0_20 = arith.constant 0 : index
    %c128 = arith.constant 128 : index
    %24 = vector.load %arg26[%c0_20, %c128] : memref<16x384xf32, #tpu.memory_space<vmem>>, vector<16x16xf32>
    %c0_21 = arith.constant 0 : index
    %c256_22 = arith.constant 256 : index
    %25 = vector.load %arg26[%c0_21, %c256_22] : memref<16x384xf32, #tpu.memory_space<vmem>>, vector<16x16xf32>
    %26 = arith.truncf %23 : vector<16x16xf32> to vector<16x16xbf16>
    %27 = arith.truncf %24 : vector<16x16xf32> to vector<16x16xbf16>
    "tpu.trace_start"() <{level = 10 : i32, message = "qc,kc->qk"}> : () -> ()
    %cst_23 = arith.constant dense<0.000000e+00> : vector<16x16xf32>
    %28 = tpu.matmul %26, %27, %cst_23 {dimension_numbers = #tpu.dot_dimension_numbers<[1], [1], [0], [0], [0, 0, 1, 0], [], []>} : vector<16x16xbf16>, vector<16x16xbf16>, vector<16x16xf32> -> vector<16x16xf32>
    "tpu.trace_stop"() : () -> ()
    %cst_24 = arith.constant dense<0xFF800000> : vector<16xf32>
    %29 = vector.multi_reduction <maximumf>, %28, %cst_24 [1] : vector<16x16xf32> to vector<16xf32>
    %30 = vector.shape_cast %29 : vector<16xf32> to vector<16x1xf32>
    %31 = vector.broadcast %30 : vector<16x1xf32> to vector<16x16xf32>
    %32 = arith.subf %28, %31 : vector<16x16xf32>
    %33 = math.exp %32 : vector<16x16xf32>
    %cst_25 = arith.constant dense<0.000000e+00> : vector<16xf32>
    %34 = vector.multi_reduction <add>, %33, %cst_25 [1] : vector<16x16xf32> to vector<16xf32>
    %35 = vector.shape_cast %34 : vector<16xf32> to vector<16x1xf32>
    %36 = tpu.reciprocal %35 {approx = true} : vector<16x1xf32> -> vector<16x1xf32>
    %37 = vector.broadcast %36 : vector<16x1xf32> to vector<16x16xf32>
    %38 = arith.mulf %33, %37 : vector<16x16xf32>
    %39 = arith.truncf %38 : vector<16x16xf32> to vector<16x16xbf16>
    %40 = arith.truncf %25 : vector<16x16xf32> to vector<16x16xbf16>
    %cst_26 = arith.constant dense<0.000000e+00> : vector<16x16xf32>
    %41 = tpu.matmul %39, %40, %cst_26 {dimension_numbers = #tpu.dot_dimension_numbers<[1], [0], [0], [1], [0, 0, 1, 1], [], []>} : vector<16x16xbf16>, vector<16x16xbf16>, vector<16x16xf32> -> vector<16x16xf32>
    %c0_27 = arith.constant 0 : index
    %c0_28 = arith.constant 0 : index
    %42 = vector.load %arg28[%c0_27, %c0_28] : memref<16x128xf32, #tpu.memory_space<vmem>>, vector<16x16xf32>
    tpu.vector_store %arg28[%c0_27, %c0_28], %41 {strides = array<i32>} : memref<16x128xf32, #tpu.memory_space<vmem>>, vector<16x16xf32>,
    %c0_29 = arith.constant 0 : index
    %c16 = arith.constant 16 : index
    %43 = vector.load %arg26[%c0_29, %c16] : memref<16x384xf32, #tpu.memory_space<vmem>>, vector<16x16xf32>
    %cst_30 = arith.constant 2.500000e-01 : f32
    %44 = vector.broadcast %cst_30 : f32 to vector<16x16xf32>
    %45 = arith.mulf %43, %44 : vector<16x16xf32>
    %c0_31 = arith.constant 0 : index
    %c144 = arith.constant 144 : index
    %46 = vector.load %arg26[%c0_31, %c144] : memref<16x384xf32, #tpu.memory_space<vmem>>, vector<16x16xf32>
    %c0_32 = arith.constant 0 : index
    %c272 = arith.constant 272 : index
    %47 = vector.load %arg26[%c0_32, %c272] : memref<16x384xf32, #tpu.memory_space<vmem>>, vector<16x16xf32>
    %48 = arith.truncf %45 : vector<16x16xf32> to vector<16x16xbf16>
    %49 = arith.truncf %46 : vector<16x16xf32> to vector<16x16xbf16>
    "tpu.trace_start"() <{level = 10 : i32, message = "qc,kc->qk"}> : () -> ()
    %cst_33 = arith.constant dense<0.000000e+00> : vector<16x16xf32>
    %50 = tpu.matmul %48, %49, %cst_33 {dimension_numbers = #tpu.dot_dimension_numbers<[1], [1], [0], [0], [0, 0, 1, 0], [], []>} : vector<16x16xbf16>, vector<16x16xbf16>, vector<16x16xf32> -> vector<16x16xf32>
    "tpu.trace_stop"() : () -> ()
    %cst_34 = arith.constant dense<0xFF800000> : vector<16xf32>
    %51 = vector.multi_reduction <maximumf>, %50, %cst_34 [1] : vector<16x16xf32> to vector<16xf32>
    %52 = vector.shape_cast %51 : vector<16xf32> to vector<16x1xf32>
    %53 = vector.broadcast %52 : vector<16x1xf32> to vector<16x16xf32>
    %54 = arith.subf %50, %53 : vector<16x16xf32>
    %55 = math.exp %54 : vector<16x16xf32>
    %cst_35 = arith.constant dense<0.000000e+00> : vector<16xf32>
    %56 = vector.multi_reduction <add>, %55, %cst_35 [1] : vector<16x16xf32> to vector<16xf32>
    %57 = vector.shape_cast %56 : vector<16xf32> to vector<16x1xf32>
    %58 = tpu.reciprocal %57 {approx = true} : vector<16x1xf32> -> vector<16x1xf32>
    %59 = vector.broadcast %58 : vector<16x1xf32> to vector<16x16xf32>
    %60 = arith.mulf %55, %59 : vector<16x16xf32>
    %61 = arith.truncf %60 : vector<16x16xf32> to vector<16x16xbf16>
    %62 = arith.truncf %47 : vector<16x16xf32> to vector<16x16xbf16>
    %cst_36 = arith.constant dense<0.000000e+00> : vector<16x16xf32>
    %63 = tpu.matmul %61, %62, %cst_36 {dimension_numbers = #tpu.dot_dimension_numbers<[1], [0], [0], [1], [0, 0, 1, 1], [], []>} : vector<16x16xbf16>, vector<16x16xbf16>, vector<16x16xf32> -> vector<16x16xf32>
    %c0_37 = arith.constant 0 : index
    %c16_38 = arith.constant 16 : index
    %64 = vector.load %arg28[%c0_37, %c16_38] : memref<16x128xf32, #tpu.memory_space<vmem>>, vector<16x16xf32>
    tpu.vector_store %arg28[%c0_37, %c16_38], %63 {strides = array<i32>} : memref<16x128xf32, #tpu.memory_space<vmem>>, vector<16x16xf32>,
    %c0_39 = arith.constant 0 : index
    %c32 = arith.constant 32 : index
    %65 = vector.load %arg26[%c0_39, %c32] : memref<16x384xf32, #tpu.memory_space<vmem>>, vector<16x16xf32>
    %cst_40 = arith.constant 2.500000e-01 : f32
    %66 = vector.broadcast %cst_40 : f32 to vector<16x16xf32>
    %67 = arith.mulf %65, %66 : vector<16x16xf32>
    %c0_41 = arith.constant 0 : index
    %c160 = arith.constant 160 : index
    %68 = vector.load %arg26[%c0_41, %c160] : memref<16x384xf32, #tpu.memory_space<vmem>>, vector<16x16xf32>
    %c0_42 = arith.constant 0 : index
    %c288 = arith.constant 288 : index
    %69 = vector.load %arg26[%c0_42, %c288] : memref<16x384xf32, #tpu.memory_space<vmem>>, vector<16x16xf32>
    %70 = arith.truncf %67 : vector<16x16xf32> to vector<16x16xbf16>
    %71 = arith.truncf %68 : vector<16x16xf32> to vector<16x16xbf16>
    "tpu.trace_start"() <{level = 10 : i32, message = "qc,kc->qk"}> : () -> ()
    %cst_43 = arith.constant dense<0.000000e+00> : vector<16x16xf32>
    %72 = tpu.matmul %70, %71, %cst_43 {dimension_numbers = #tpu.dot_dimension_numbers<[1], [1], [0], [0], [0, 0, 1, 0], [], []>} : vector<16x16xbf16>, vector<16x16xbf16>, vector<16x16xf32> -> vector<16x16xf32>
    "tpu.trace_stop"() : () -> ()
    %cst_44 = arith.constant dense<0xFF800000> : vector<16xf32>
    %73 = vector.multi_reduction <maximumf>, %72, %cst_44 [1] : vector<16x16xf32> to vector<16xf32>
    %74 = vector.shape_cast %73 : vector<16xf32> to vector<16x1xf32>
    %75 = vector.broadcast %74 : vector<16x1xf32> to vector<16x16xf32>
    %76 = arith.subf %72, %75 : vector<16x16xf32>
    %77 = math.exp %76 : vector<16x16xf32>
    %cst_45 = arith.constant dense<0.000000e+00> : vector<16xf32>
    %78 = vector.multi_reduction <add>, %77, %cst_45 [1] : vector<16x16xf32> to vector<16xf32>
    %79 = vector.shape_cast %78 : vector<16xf32> to vector<16x1xf32>
    %80 = tpu.reciprocal %79 {approx = true} : vector<16x1xf32> -> vector<16x1xf32>
    %81 = vector.broadcast %80 : vector<16x1xf32> to vector<16x16xf32>
    %82 = arith.mulf %77, %81 : vector<16x16xf32>
    %83 = arith.truncf %82 : vector<16x16xf32> to vector<16x16xbf16>
    %84 = arith.truncf %69 : vector<16x16xf32> to vector<16x16xbf16>
    %cst_46 = arith.constant dense<0.000000e+00> : vector<16x16xf32>
    %85 = tpu.matmul %83, %84, %cst_46 {dimension_numbers = #tpu.dot_dimension_numbers<[1], [0], [0], [1], [0, 0, 1, 1], [], []>} : vector<16x16xbf16>, vector<16x16xbf16>, vector<16x16xf32> -> vector<16x16xf32>
    %c0_47 = arith.constant 0 : index
    %c32_48 = arith.constant 32 : index
    %86 = vector.load %arg28[%c0_47, %c32_48] : memref<16x128xf32, #tpu.memory_space<vmem>>, vector<16x16xf32>
    tpu.vector_store %arg28[%c0_47, %c32_48], %85 {strides = array<i32>} : memref<16x128xf32, #tpu.memory_space<vmem>>, vector<16x16xf32>,
    %c0_49 = arith.constant 0 : index
    %c48 = arith.constant 48 : index
    %87 = vector.load %arg26[%c0_49, %c48] : memref<16x384xf32, #tpu.memory_space<vmem>>, vector<16x16xf32>
    %cst_50 = arith.constant 2.500000e-01 : f32
    %88 = vector.broadcast %cst_50 : f32 to vector<16x16xf32>
    %89 = arith.mulf %87, %88 : vector<16x16xf32>
    %c0_51 = arith.constant 0 : index
    %c176 = arith.constant 176 : index
    %90 = vector.load %arg26[%c0_51, %c176] : memref<16x384xf32, #tpu.memory_space<vmem>>, vector<16x16xf32>
    %c0_52 = arith.constant 0 : index
    %c304 = arith.constant 304 : index
    %91 = vector.load %arg26[%c0_52, %c304] : memref<16x384xf32, #tpu.memory_space<vmem>>, vector<16x16xf32>
    %92 = arith.truncf %89 : vector<16x16xf32> to vector<16x16xbf16>
    %93 = arith.truncf %90 : vector<16x16xf32> to vector<16x16xbf16>
    "tpu.trace_start"() <{level = 10 : i32, message = "qc,kc->qk"}> : () -> ()
    %cst_53 = arith.constant dense<0.000000e+00> : vector<16x16xf32>
    %94 = tpu.matmul %92, %93, %cst_53 {dimension_numbers = #tpu.dot_dimension_numbers<[1], [1], [0], [0], [0, 0, 1, 0], [], []>} : vector<16x16xbf16>, vector<16x16xbf16>, vector<16x16xf32> -> vector<16x16xf32>
    "tpu.trace_stop"() : () -> ()
    %cst_54 = arith.constant dense<0xFF800000> : vector<16xf32>
    %95 = vector.multi_reduction <maximumf>, %94, %cst_54 [1] : vector<16x16xf32> to vector<16xf32>
    %96 = vector.shape_cast %95 : vector<16xf32> to vector<16x1xf32>
    %97 = vector.broadcast %96 : vector<16x1xf32> to vector<16x16xf32>
    %98 = arith.subf %94, %97 : vector<16x16xf32>
    %99 = math.exp %98 : vector<16x16xf32>
    %cst_55 = arith.constant dense<0.000000e+00> : vector<16xf32>
    %100 = vector.multi_reduction <add>, %99, %cst_55 [1] : vector<16x16xf32> to vector<16xf32>
    %101 = vector.shape_cast %100 : vector<16xf32> to vector<16x1xf32>
    %102 = tpu.reciprocal %101 {approx = true} : vector<16x1xf32> -> vector<16x1xf32>
    %103 = vector.broadcast %102 : vector<16x1xf32> to vector<16x16xf32>
    %104 = arith.mulf %99, %103 : vector<16x16xf32>
    %105 = arith.truncf %104 : vector<16x16xf32> to vector<16x16xbf16>
    %106 = arith.truncf %91 : vector<16x16xf32> to vector<16x16xbf16>
    %cst_56 = arith.constant dense<0.000000e+00> : vector<16x16xf32>
    %107 = tpu.matmul %105, %106, %cst_56 {dimension_numbers = #tpu.dot_dimension_numbers<[1], [0], [0], [1], [0, 0, 1, 1], [], []>} : vector<16x16xbf16>, vector<16x16xbf16>, vector<16x16xf32> -> vector<16x16xf32>
    %c0_57 = arith.constant 0 : index
    %c48_58 = arith.constant 48 : index
    %108 = vector.load %arg28[%c0_57, %c48_58] : memref<16x128xf32, #tpu.memory_space<vmem>>, vector<16x16xf32>
    tpu.vector_store %arg28[%c0_57, %c48_58], %107 {strides = array<i32>} : memref<16x128xf32, #tpu.memory_space<vmem>>, vector<16x16xf32>,
    %c0_59 = arith.constant 0 : index
    %c64 = arith.constant 64 : index
    %109 = vector.load %arg26[%c0_59, %c64] : memref<16x384xf32, #tpu.memory_space<vmem>>, vector<16x16xf32>
    %cst_60 = arith.constant 2.500000e-01 : f32
    %110 = vector.broadcast %cst_60 : f32 to vector<16x16xf32>
    %111 = arith.mulf %109, %110 : vector<16x16xf32>
    %c0_61 = arith.constant 0 : index
    %c192 = arith.constant 192 : index
    %112 = vector.load %arg26[%c0_61, %c192] : memref<16x384xf32, #tpu.memory_space<vmem>>, vector<16x16xf32>
    %c0_62 = arith.constant 0 : index
    %c320 = arith.constant 320 : index
    %113 = vector.load %arg26[%c0_62, %c320] : memref<16x384xf32, #tpu.memory_space<vmem>>, vector<16x16xf32>
    %114 = arith.truncf %111 : vector<16x16xf32> to vector<16x16xbf16>
    %115 = arith.truncf %112 : vector<16x16xf32> to vector<16x16xbf16>
    "tpu.trace_start"() <{level = 10 : i32, message = "qc,kc->qk"}> : () -> ()
    %cst_63 = arith.constant dense<0.000000e+00> : vector<16x16xf32>
    %116 = tpu.matmul %114, %115, %cst_63 {dimension_numbers = #tpu.dot_dimension_numbers<[1], [1], [0], [0], [0, 0, 1, 0], [], []>} : vector<16x16xbf16>, vector<16x16xbf16>, vector<16x16xf32> -> vector<16x16xf32>
    "tpu.trace_stop"() : () -> ()
    %cst_64 = arith.constant dense<0xFF800000> : vector<16xf32>
    %117 = vector.multi_reduction <maximumf>, %116, %cst_64 [1] : vector<16x16xf32> to vector<16xf32>
    %118 = vector.shape_cast %117 : vector<16xf32> to vector<16x1xf32>
    %119 = vector.broadcast %118 : vector<16x1xf32> to vector<16x16xf32>
    %120 = arith.subf %116, %119 : vector<16x16xf32>
    %121 = math.exp %120 : vector<16x16xf32>
    %cst_65 = arith.constant dense<0.000000e+00> : vector<16xf32>
    %122 = vector.multi_reduction <add>, %121, %cst_65 [1] : vector<16x16xf32> to vector<16xf32>
    %123 = vector.shape_cast %122 : vector<16xf32> to vector<16x1xf32>
    %124 = tpu.reciprocal %123 {approx = true} : vector<16x1xf32> -> vector<16x1xf32>
    %125 = vector.broadcast %124 : vector<16x1xf32> to vector<16x16xf32>
    %126 = arith.mulf %121, %125 : vector<16x16xf32>
    %127 = arith.truncf %126 : vector<16x16xf32> to vector<16x16xbf16>
    %128 = arith.truncf %113 : vector<16x16xf32> to vector<16x16xbf16>
    %cst_66 = arith.constant dense<0.000000e+00> : vector<16x16xf32>
    %129 = tpu.matmul %127, %128, %cst_66 {dimension_numbers = #tpu.dot_dimension_numbers<[1], [0], [0], [1], [0, 0, 1, 1], [], []>} : vector<16x16xbf16>, vector<16x16xbf16>, vector<16x16xf32> -> vector<16x16xf32>
    %c0_67 = arith.constant 0 : index
    %c64_68 = arith.constant 64 : index
    %130 = vector.load %arg28[%c0_67, %c64_68] : memref<16x128xf32, #tpu.memory_space<vmem>>, vector<16x16xf32>
    tpu.vector_store %arg28[%c0_67, %c64_68], %129 {strides = array<i32>} : memref<16x128xf32, #tpu.memory_space<vmem>>, vector<16x16xf32>,
    %c0_69 = arith.constant 0 : index
    %c80 = arith.constant 80 : index
    %131 = vector.load %arg26[%c0_69, %c80] : memref<16x384xf32, #tpu.memory_space<vmem>>, vector<16x16xf32>
    %cst_70 = arith.constant 2.500000e-01 : f32
    %132 = vector.broadcast %cst_70 : f32 to vector<16x16xf32>
    %133 = arith.mulf %131, %132 : vector<16x16xf32>
    %c0_71 = arith.constant 0 : index
    %c208 = arith.constant 208 : index
    %134 = vector.load %arg26[%c0_71, %c208] : memref<16x384xf32, #tpu.memory_space<vmem>>, vector<16x16xf32>
    %c0_72 = arith.constant 0 : index
    %c336 = arith.constant 336 : index
    %135 = vector.load %arg26[%c0_72, %c336] : memref<16x384xf32, #tpu.memory_space<vmem>>, vector<16x16xf32>
    %136 = arith.truncf %133 : vector<16x16xf32> to vector<16x16xbf16>
    %137 = arith.truncf %134 : vector<16x16xf32> to vector<16x16xbf16>
    "tpu.trace_start"() <{level = 10 : i32, message = "qc,kc->qk"}> : () -> ()
    %cst_73 = arith.constant dense<0.000000e+00> : vector<16x16xf32>
    %138 = tpu.matmul %136, %137, %cst_73 {dimension_numbers = #tpu.dot_dimension_numbers<[1], [1], [0], [0], [0, 0, 1, 0], [], []>} : vector<16x16xbf16>, vector<16x16xbf16>, vector<16x16xf32> -> vector<16x16xf32>
    "tpu.trace_stop"() : () -> ()
    %cst_74 = arith.constant dense<0xFF800000> : vector<16xf32>
    %139 = vector.multi_reduction <maximumf>, %138, %cst_74 [1] : vector<16x16xf32> to vector<16xf32>
    %140 = vector.shape_cast %139 : vector<16xf32> to vector<16x1xf32>
    %141 = vector.broadcast %140 : vector<16x1xf32> to vector<16x16xf32>
    %142 = arith.subf %138, %141 : vector<16x16xf32>
    %143 = math.exp %142 : vector<16x16xf32>
    %cst_75 = arith.constant dense<0.000000e+00> : vector<16xf32>
    %144 = vector.multi_reduction <add>, %143, %cst_75 [1] : vector<16x16xf32> to vector<16xf32>
    %145 = vector.shape_cast %144 : vector<16xf32> to vector<16x1xf32>
    %146 = tpu.reciprocal %145 {approx = true} : vector<16x1xf32> -> vector<16x1xf32>
    %147 = vector.broadcast %146 : vector<16x1xf32> to vector<16x16xf32>
    %148 = arith.mulf %143, %147 : vector<16x16xf32>
    %149 = arith.truncf %148 : vector<16x16xf32> to vector<16x16xbf16>
    %150 = arith.truncf %135 : vector<16x16xf32> to vector<16x16xbf16>
    %cst_76 = arith.constant dense<0.000000e+00> : vector<16x16xf32>
    %151 = tpu.matmul %149, %150, %cst_76 {dimension_numbers = #tpu.dot_dimension_numbers<[1], [0], [0], [1], [0, 0, 1, 1], [], []>} : vector<16x16xbf16>, vector<16x16xbf16>, vector<16x16xf32> -> vector<16x16xf32>
    %c0_77 = arith.constant 0 : index
    %c80_78 = arith.constant 80 : index
    %152 = vector.load %arg28[%c0_77, %c80_78] : memref<16x128xf32, #tpu.memory_space<vmem>>, vector<16x16xf32>
    tpu.vector_store %arg28[%c0_77, %c80_78], %151 {strides = array<i32>} : memref<16x128xf32, #tpu.memory_space<vmem>>, vector<16x16xf32>,
    %c0_79 = arith.constant 0 : index
    %c96 = arith.constant 96 : index
    %153 = vector.load %arg26[%c0_79, %c96] : memref<16x384xf32, #tpu.memory_space<vmem>>, vector<16x16xf32>
    %cst_80 = arith.constant 2.500000e-01 : f32
    %154 = vector.broadcast %cst_80 : f32 to vector<16x16xf32>
    %155 = arith.mulf %153, %154 : vector<16x16xf32>
    %c0_81 = arith.constant 0 : index
    %c224 = arith.constant 224 : index
    %156 = vector.load %arg26[%c0_81, %c224] : memref<16x384xf32, #tpu.memory_space<vmem>>, vector<16x16xf32>
    %c0_82 = arith.constant 0 : index
    %c352 = arith.constant 352 : index
    %157 = vector.load %arg26[%c0_82, %c352] : memref<16x384xf32, #tpu.memory_space<vmem>>, vector<16x16xf32>
    %158 = arith.truncf %155 : vector<16x16xf32> to vector<16x16xbf16>
    %159 = arith.truncf %156 : vector<16x16xf32> to vector<16x16xbf16>
    "tpu.trace_start"() <{level = 10 : i32, message = "qc,kc->qk"}> : () -> ()
    %cst_83 = arith.constant dense<0.000000e+00> : vector<16x16xf32>
    %160 = tpu.matmul %158, %159, %cst_83 {dimension_numbers = #tpu.dot_dimension_numbers<[1], [1], [0], [0], [0, 0, 1, 0], [], []>} : vector<16x16xbf16>, vector<16x16xbf16>, vector<16x16xf32> -> vector<16x16xf32>
    "tpu.trace_stop"() : () -> ()
    %cst_84 = arith.constant dense<0xFF800000> : vector<16xf32>
    %161 = vector.multi_reduction <maximumf>, %160, %cst_84 [1] : vector<16x16xf32> to vector<16xf32>
    %162 = vector.shape_cast %161 : vector<16xf32> to vector<16x1xf32>
    %163 = vector.broadcast %162 : vector<16x1xf32> to vector<16x16xf32>
    %164 = arith.subf %160, %163 : vector<16x16xf32>
    %165 = math.exp %164 : vector<16x16xf32>
    %cst_85 = arith.constant dense<0.000000e+00> : vector<16xf32>
    %166 = vector.multi_reduction <add>, %165, %cst_85 [1] : vector<16x16xf32> to vector<16xf32>
    %167 = vector.shape_cast %166 : vector<16xf32> to vector<16x1xf32>
    %168 = tpu.reciprocal %167 {approx = true} : vector<16x1xf32> -> vector<16x1xf32>
    %169 = vector.broadcast %168 : vector<16x1xf32> to vector<16x16xf32>
    %170 = arith.mulf %165, %169 : vector<16x16xf32>
    %171 = arith.truncf %170 : vector<16x16xf32> to vector<16x16xbf16>
    %172 = arith.truncf %157 : vector<16x16xf32> to vector<16x16xbf16>
    %cst_86 = arith.constant dense<0.000000e+00> : vector<16x16xf32>
    %173 = tpu.matmul %171, %172, %cst_86 {dimension_numbers = #tpu.dot_dimension_numbers<[1], [0], [0], [1], [0, 0, 1, 1], [], []>} : vector<16x16xbf16>, vector<16x16xbf16>, vector<16x16xf32> -> vector<16x16xf32>
    %c0_87 = arith.constant 0 : index
    %c96_88 = arith.constant 96 : index
    %174 = vector.load %arg28[%c0_87, %c96_88] : memref<16x128xf32, #tpu.memory_space<vmem>>, vector<16x16xf32>
    tpu.vector_store %arg28[%c0_87, %c96_88], %173 {strides = array<i32>} : memref<16x128xf32, #tpu.memory_space<vmem>>, vector<16x16xf32>,
    %c0_89 = arith.constant 0 : index
    %c112 = arith.constant 112 : index
    %175 = vector.load %arg26[%c0_89, %c112] : memref<16x384xf32, #tpu.memory_space<vmem>>, vector<16x16xf32>
    %cst_90 = arith.constant 2.500000e-01 : f32
    %176 = vector.broadcast %cst_90 : f32 to vector<16x16xf32>
    %177 = arith.mulf %175, %176 : vector<16x16xf32>
    %c0_91 = arith.constant 0 : index
    %c240 = arith.constant 240 : index
    %178 = vector.load %arg26[%c0_91, %c240] : memref<16x384xf32, #tpu.memory_space<vmem>>, vector<16x16xf32>
    %c0_92 = arith.constant 0 : index
    %c368 = arith.constant 368 : index
    %179 = vector.load %arg26[%c0_92, %c368] : memref<16x384xf32, #tpu.memory_space<vmem>>, vector<16x16xf32>
    %180 = arith.truncf %177 : vector<16x16xf32> to vector<16x16xbf16>
    %181 = arith.truncf %178 : vector<16x16xf32> to vector<16x16xbf16>
    "tpu.trace_start"() <{level = 10 : i32, message = "qc,kc->qk"}> : () -> ()
    %cst_93 = arith.constant dense<0.000000e+00> : vector<16x16xf32>
    %182 = tpu.matmul %180, %181, %cst_93 {dimension_numbers = #tpu.dot_dimension_numbers<[1], [1], [0], [0], [0, 0, 1, 0], [], []>} : vector<16x16xbf16>, vector<16x16xbf16>, vector<16x16xf32> -> vector<16x16xf32>
    "tpu.trace_stop"() : () -> ()
    %cst_94 = arith.constant dense<0xFF800000> : vector<16xf32>
    %183 = vector.multi_reduction <maximumf>, %182, %cst_94 [1] : vector<16x16xf32> to vector<16xf32>
    %184 = vector.shape_cast %183 : vector<16xf32> to vector<16x1xf32>
    %185 = vector.broadcast %184 : vector<16x1xf32> to vector<16x16xf32>
    %186 = arith.subf %182, %185 : vector<16x16xf32>
    %187 = math.exp %186 : vector<16x16xf32>
    %cst_95 = arith.constant dense<0.000000e+00> : vector<16xf32>
    %188 = vector.multi_reduction <add>, %187, %cst_95 [1] : vector<16x16xf32> to vector<16xf32>
    %189 = vector.shape_cast %188 : vector<16xf32> to vector<16x1xf32>
    %190 = tpu.reciprocal %189 {approx = true} : vector<16x1xf32> -> vector<16x1xf32>
    %191 = vector.broadcast %190 : vector<16x1xf32> to vector<16x16xf32>
    %192 = arith.mulf %187, %191 : vector<16x16xf32>
    %193 = arith.truncf %192 : vector<16x16xf32> to vector<16x16xbf16>
    %194 = arith.truncf %179 : vector<16x16xf32> to vector<16x16xbf16>
    %cst_96 = arith.constant dense<0.000000e+00> : vector<16x16xf32>
    %195 = tpu.matmul %193, %194, %cst_96 {dimension_numbers = #tpu.dot_dimension_numbers<[1], [0], [0], [1], [0, 0, 1, 1], [], []>} : vector<16x16xbf16>, vector<16x16xbf16>, vector<16x16xf32> -> vector<16x16xf32>
    %c0_97 = arith.constant 0 : index
    %c112_98 = arith.constant 112 : index
    %196 = vector.load %arg28[%c0_97, %c112_98] : memref<16x128xf32, #tpu.memory_space<vmem>>, vector<16x16xf32>
    tpu.vector_store %arg28[%c0_97, %c112_98], %195 {strides = array<i32>} : memref<16x128xf32, #tpu.memory_space<vmem>>, vector<16x16xf32>,
    %c0_99 = arith.constant 0 : index
    %c0_100 = arith.constant 0 : index
    %197 = vector.load %arg28[%c0_99, %c0_100] : memref<16x128xf32, #tpu.memory_space<vmem>>, vector<16x128xf32>
    %198 = arith.truncf %197 : vector<16x128xf32> to vector<16x128xbf16>
    %c0_101 = arith.constant 0 : index
    %c0_102 = arith.constant 0 : index
    %199 = vector.load %arg9[%c0_101, %c0_102] : memref<128x128xbf16, #tpu.memory_space<vmem>>, vector<128x128xbf16>
    %cst_103 = arith.constant dense<0.000000e+00> : vector<16x128xf32>
    %200 = tpu.matmul %198, %199, %cst_103 {dimension_numbers = #tpu.dot_dimension_numbers<[1], [0], [0], [1], [0, 0, 1, 1], [], []>} : vector<16x128xbf16>, vector<128x128xbf16>, vector<16x128xf32> -> vector<16x128xf32>
    %c0_104 = arith.constant 0 : index
    %c0_105 = arith.constant 0 : index
    %201 = vector.load %arg10[%c0_104, %c0_105] : memref<1x128xf32, #tpu.memory_space<vmem>>, vector<1x128xf32>
    %202 = vector.broadcast %201 : vector<1x128xf32> to vector<16x128xf32>
    %203 = arith.addf %200, %202 : vector<16x128xf32>
    %204 = arith.addf %3, %203 : vector<16x128xf32>
    %cst_106 = arith.constant dense<0.000000e+00> : vector<16xf32>
    %205 = vector.multi_reduction <add>, %204, %cst_106 [1] : vector<16x128xf32> to vector<16xf32>
    %206 = vector.shape_cast %205 : vector<16xf32> to vector<16x1xf32>
    %cst_107 = arith.constant 1.280000e+02 : f32
    %207 = vector.broadcast %cst_107 : f32 to vector<16x1xf32>
    %208 = arith.divf %206, %207 : vector<16x1xf32>
    %209 = vector.broadcast %208 : vector<16x1xf32> to vector<16x128xf32>
    %210 = arith.subf %204, %209 : vector<16x128xf32>
    %211 = vector.broadcast %208 : vector<16x1xf32> to vector<16x128xf32>
    %212 = arith.subf %204, %211 : vector<16x128xf32>
    %213 = arith.mulf %210, %212 : vector<16x128xf32>
    %cst_108 = arith.constant dense<0.000000e+00> : vector<16xf32>
    %214 = vector.multi_reduction <add>, %213, %cst_108 [1] : vector<16x128xf32> to vector<16xf32>
    %215 = vector.shape_cast %214 : vector<16xf32> to vector<16x1xf32>
    %cst_109 = arith.constant 1.280000e+02 : f32
    %216 = vector.broadcast %cst_109 : f32 to vector<16x1xf32>
    %217 = arith.divf %215, %216 : vector<16x1xf32>
    %218 = vector.broadcast %208 : vector<16x1xf32> to vector<16x128xf32>
    %219 = arith.subf %204, %218 : vector<16x128xf32>
    %cst_110 = arith.constant 9.99999974E-6 : f32
    %220 = vector.broadcast %cst_110 : f32 to vector<16x1xf32>
    %221 = arith.addf %217, %220 : vector<16x1xf32>
    %222 = math.rsqrt %221 : vector<16x1xf32>
    %223 = vector.broadcast %222 : vector<16x1xf32> to vector<16x128xf32>
    %224 = arith.mulf %219, %223 : vector<16x128xf32>
    %c0_111 = arith.constant 0 : index
    %c0_112 = arith.constant 0 : index
    %225 = vector.load %arg21[%c0_111, %c0_112] : memref<3x128xf32, #tpu.memory_space<vmem>>, vector<1x128xf32>
    %226 = vector.shape_cast %225 : vector<1x128xf32> to vector<128xf32>
    %227 = vector.shape_cast %226 : vector<128xf32> to vector<1x128xf32>
    %228 = vector.broadcast %227 : vector<1x128xf32> to vector<16x128xf32>
    %229 = arith.mulf %224, %228 : vector<16x128xf32>
    %c0_113 = arith.constant 0 : index
    %c0_114 = arith.constant 0 : index
    %230 = vector.load %arg22[%c0_113, %c0_114] : memref<3x128xf32, #tpu.memory_space<vmem>>, vector<1x128xf32>
    %231 = vector.shape_cast %230 : vector<1x128xf32> to vector<128xf32>
    %232 = vector.shape_cast %231 : vector<128xf32> to vector<1x128xf32>
    %233 = vector.broadcast %232 : vector<1x128xf32> to vector<16x128xf32>
    %234 = arith.addf %229, %233 : vector<16x128xf32>
    %235 = arith.addf %234, %5 : vector<16x128xf32>
    %236 = arith.truncf %235 : vector<16x128xf32> to vector<16x128xbf16>
    %c0_115 = arith.constant 0 : index
    %c0_116 = arith.constant 0 : index
    %237 = vector.load %arg13[%c0_115, %c0_116] : memref<128x96xbf16, #tpu.memory_space<vmem>>, vector<128x96xbf16>
    %cst_117 = arith.constant dense<0.000000e+00> : vector<16x96xf32>
    %238 = tpu.matmul %236, %237, %cst_117 {dimension_numbers = #tpu.dot_dimension_numbers<[1], [0], [0], [1], [0, 0, 1, 1], [], []>} : vector<16x128xbf16>, vector<128x96xbf16>, vector<16x96xf32> -> vector<16x96xf32>
    %c0_118 = arith.constant 0 : index
    %c0_119 = arith.constant 0 : index
    %239 = vector.load %arg14[%c0_118, %c0_119] : memref<1x96xf32, #tpu.memory_space<vmem>>, vector<1x96xf32>
    %240 = vector.broadcast %239 : vector<1x96xf32> to vector<16x96xf32>
    %241 = arith.addf %238, %240 : vector<16x96xf32>
    %c0_120 = arith.constant 0 : index
    %c0_121 = arith.constant 0 : index
    %242 = vector.load %arg27[%c0_120, %c0_121] : memref<16x96xf32, #tpu.memory_space<vmem>>, vector<16x96xf32>
    tpu.vector_store %arg27[%c0_120, %c0_121], %241 {strides = array<i32>} : memref<16x96xf32, #tpu.memory_space<vmem>>, vector<16x96xf32>,
    %243 = tpu.iota {dimensions = array<i32: 0>} : vector<16x1xi32>
    %244 = arith.sitofp %243 : vector<16x1xi32> to vector<16x1xf32>
    %245 = tpu.iota {dimensions = array<i32: 1>} : vector<1x16xi32>
    %246 = arith.sitofp %245 : vector<1x16xi32> to vector<1x16xf32>
    %cst_122 = arith.constant 4.000000e+00 : f32
    %247 = vector.broadcast %cst_122 : f32 to vector<16x1xf32>
    %248 = arith.divf %244, %247 : vector<16x1xf32>
    %249 = math.floor %248 : vector<16x1xf32>
    %cst_123 = arith.constant 4.000000e+00 : f32
    %250 = vector.broadcast %cst_123 : f32 to vector<16x1xf32>
    %251 = arith.mulf %249, %250 : vector<16x1xf32>
    %252 = arith.subf %244, %251 : vector<16x1xf32>
    %cst_124 = arith.constant 4.000000e+00 : f32
    %253 = vector.broadcast %cst_124 : f32 to vector<1x16xf32>
    %254 = arith.divf %246, %253 : vector<1x16xf32>
    %255 = math.floor %254 : vector<1x16xf32>
    %cst_125 = arith.constant 4.000000e+00 : f32
    %256 = vector.broadcast %cst_125 : f32 to vector<1x16xf32>
    %257 = arith.mulf %255, %256 : vector<1x16xf32>
    %258 = arith.subf %246, %257 : vector<1x16xf32>
    %c0_126 = arith.constant 0 : index
    %c0_127 = arith.constant 0 : index
    %259 = vector.load %arg27[%c0_126, %c0_127] : memref<16x96xf32, #tpu.memory_space<vmem>>, vector<16x4xf32>
    %c0_128 = arith.constant 0 : index
    %c32_129 = arith.constant 32 : index
    %260 = vector.load %arg27[%c0_128, %c32_129] : memref<16x96xf32, #tpu.memory_space<vmem>>, vector<16x4xf32>
    %c0_130 = arith.constant 0 : index
    %c64_131 = arith.constant 64 : index
    %261 = vector.load %arg27[%c0_130, %c64_131] : memref<16x96xf32, #tpu.memory_space<vmem>>, vector<16x4xf32>
    %cst_132 = arith.constant dense<0xFF800000> : vector<16xf32>
    %262 = vector.multi_reduction <maximumf>, %261, %cst_132 [1] : vector<16x4xf32> to vector<16xf32>
    %263 = vector.shape_cast %262 : vector<16xf32> to vector<16x1xf32>
    %264 = vector.broadcast %263 : vector<16x1xf32> to vector<16x4xf32>
    %265 = arith.subf %261, %264 : vector<16x4xf32>
    %266 = math.exp %265 : vector<16x4xf32>
    %cst_133 = arith.constant dense<0.000000e+00> : vector<16xf32>
    %267 = vector.multi_reduction <add>, %266, %cst_133 [1] : vector<16x4xf32> to vector<16xf32>
    %268 = vector.shape_cast %267 : vector<16xf32> to vector<16x1xf32>
    %269 = tpu.reciprocal %268 {approx = true} : vector<16x1xf32> -> vector<16x1xf32>
    %270 = vector.broadcast %269 : vector<16x1xf32> to vector<16x4xf32>
    %271 = arith.mulf %266, %270 : vector<16x4xf32>
    %272 = vector.broadcast %252 : vector<16x1xf32> to vector<16x4xf32>
    %273 = arith.addf %272, %259 : vector<16x4xf32>
    %274 = vector.broadcast %249 : vector<16x1xf32> to vector<16x4xf32>
    %275 = arith.addf %274, %260 : vector<16x4xf32>
    %276 = vector.shape_cast %273 : vector<16x4xf32> to vector<16x4x1xf32>
    %277 = vector.shape_cast %258 : vector<1x16xf32> to vector<1x1x16xf32>
    %278 = vector.broadcast %276 : vector<16x4x1xf32> to vector<16x4x16xf32>
    %279 = vector.broadcast %277 : vector<1x1x16xf32> to vector<16x4x16xf32>
    %280 = arith.subf %278, %279 : vector<16x4x16xf32>
    %281 = math.absf %280 : vector<16x4x16xf32>
    %cst_134 = arith.constant 1.000000e+00 : f32
    %282 = vector.broadcast %cst_134 : f32 to vector<16x4x16xf32>
    %283 = arith.subf %282, %281 : vector<16x4x16xf32>
    %cst_135 = arith.constant 0.000000e+00 : f32
    %284 = vector.broadcast %cst_135 : f32 to vector<16x4x16xf32>
    %285 = arith.maximumf %284, %283 : vector<16x4x16xf32>
    %286 = vector.shape_cast %275 : vector<16x4xf32> to vector<16x4x1xf32>
    %287 = vector.shape_cast %255 : vector<1x16xf32> to vector<1x1x16xf32>
    %288 = vector.broadcast %286 : vector<16x4x1xf32> to vector<16x4x16xf32>
    %289 = vector.broadcast %287 : vector<1x1x16xf32> to vector<16x4x16xf32>
    %290 = arith.subf %288, %289 : vector<16x4x16xf32>
    %291 = math.absf %290 : vector<16x4x16xf32>
    %cst_136 = arith.constant 1.000000e+00 : f32
    %292 = vector.broadcast %cst_136 : f32 to vector<16x4x16xf32>
    %293 = arith.subf %292, %291 : vector<16x4x16xf32>
    %cst_137 = arith.constant 0.000000e+00 : f32
    %294 = vector.broadcast %cst_137 : f32 to vector<16x4x16xf32>
    %295 = arith.maximumf %294, %293 : vector<16x4x16xf32>
    %296 = vector.shape_cast %271 : vector<16x4xf32> to vector<16x4x1xf32>
    %297 = vector.broadcast %296 : vector<16x4x1xf32> to vector<16x4x16xf32>
    %298 = arith.mulf %297, %285 : vector<16x4x16xf32>
    %299 = arith.mulf %298, %295 : vector<16x4x16xf32>
    %cst_138 = arith.constant dense<0.000000e+00> : vector<16x16xf32>
    %300 = vector.multi_reduction <add>, %299, %cst_138 [1] : vector<16x4x16xf32> to vector<16x16xf32>
    %301 = arith.truncf %300 : vector<16x16xf32> to vector<16x16xbf16>
    %c0_139 = arith.constant 0 : index
    %c0_140 = arith.constant 0 : index
    %302 = vector.load %arg25[%c0_139, %c0_140] : memref<16x128xf32, #tpu.memory_space<vmem>>, vector<16x16xf32>
    %303 = arith.truncf %302 : vector<16x16xf32> to vector<16x16xbf16>
    %cst_141 = arith.constant dense<0.000000e+00> : vector<16x16xf32>
    %304 = tpu.matmul %301, %303, %cst_141 {dimension_numbers = #tpu.dot_dimension_numbers<[1], [0], [0], [1], [0, 0, 1, 1], [], []>} : vector<16x16xbf16>, vector<16x16xbf16>, vector<16x16xf32> -> vector<16x16xf32>
    %c0_142 = arith.constant 0 : index
    %c0_143 = arith.constant 0 : index
    %305 = vector.load %arg28[%c0_142, %c0_143] : memref<16x128xf32, #tpu.memory_space<vmem>>, vector<16x16xf32>
    tpu.vector_store %arg28[%c0_142, %c0_143], %304 {strides = array<i32>} : memref<16x128xf32, #tpu.memory_space<vmem>>, vector<16x16xf32>,
    %c0_144 = arith.constant 0 : index
    %c4 = arith.constant 4 : index
    %306 = vector.load %arg27[%c0_144, %c4] : memref<16x96xf32, #tpu.memory_space<vmem>>, vector<16x4xf32>
    %c0_145 = arith.constant 0 : index
    %c36 = arith.constant 36 : index
    %307 = vector.load %arg27[%c0_145, %c36] : memref<16x96xf32, #tpu.memory_space<vmem>>, vector<16x4xf32>
    %c0_146 = arith.constant 0 : index
    %c68 = arith.constant 68 : index
    %308 = vector.load %arg27[%c0_146, %c68] : memref<16x96xf32, #tpu.memory_space<vmem>>, vector<16x4xf32>
    %cst_147 = arith.constant dense<0xFF800000> : vector<16xf32>
    %309 = vector.multi_reduction <maximumf>, %308, %cst_147 [1] : vector<16x4xf32> to vector<16xf32>
    %310 = vector.shape_cast %309 : vector<16xf32> to vector<16x1xf32>
    %311 = vector.broadcast %310 : vector<16x1xf32> to vector<16x4xf32>
    %312 = arith.subf %308, %311 : vector<16x4xf32>
    %313 = math.exp %312 : vector<16x4xf32>
    %cst_148 = arith.constant dense<0.000000e+00> : vector<16xf32>
    %314 = vector.multi_reduction <add>, %313, %cst_148 [1] : vector<16x4xf32> to vector<16xf32>
    %315 = vector.shape_cast %314 : vector<16xf32> to vector<16x1xf32>
    %316 = tpu.reciprocal %315 {approx = true} : vector<16x1xf32> -> vector<16x1xf32>
    %317 = vector.broadcast %316 : vector<16x1xf32> to vector<16x4xf32>
    %318 = arith.mulf %313, %317 : vector<16x4xf32>
    %319 = vector.broadcast %252 : vector<16x1xf32> to vector<16x4xf32>
    %320 = arith.addf %319, %306 : vector<16x4xf32>
    %321 = vector.broadcast %249 : vector<16x1xf32> to vector<16x4xf32>
    %322 = arith.addf %321, %307 : vector<16x4xf32>
    %323 = vector.shape_cast %320 : vector<16x4xf32> to vector<16x4x1xf32>
    %324 = vector.shape_cast %258 : vector<1x16xf32> to vector<1x1x16xf32>
    %325 = vector.broadcast %323 : vector<16x4x1xf32> to vector<16x4x16xf32>
    %326 = vector.broadcast %324 : vector<1x1x16xf32> to vector<16x4x16xf32>
    %327 = arith.subf %325, %326 : vector<16x4x16xf32>
    %328 = math.absf %327 : vector<16x4x16xf32>
    %cst_149 = arith.constant 1.000000e+00 : f32
    %329 = vector.broadcast %cst_149 : f32 to vector<16x4x16xf32>
    %330 = arith.subf %329, %328 : vector<16x4x16xf32>
    %cst_150 = arith.constant 0.000000e+00 : f32
    %331 = vector.broadcast %cst_150 : f32 to vector<16x4x16xf32>
    %332 = arith.maximumf %331, %330 : vector<16x4x16xf32>
    %333 = vector.shape_cast %322 : vector<16x4xf32> to vector<16x4x1xf32>
    %334 = vector.shape_cast %255 : vector<1x16xf32> to vector<1x1x16xf32>
    %335 = vector.broadcast %333 : vector<16x4x1xf32> to vector<16x4x16xf32>
    %336 = vector.broadcast %334 : vector<1x1x16xf32> to vector<16x4x16xf32>
    %337 = arith.subf %335, %336 : vector<16x4x16xf32>
    %338 = math.absf %337 : vector<16x4x16xf32>
    %cst_151 = arith.constant 1.000000e+00 : f32
    %339 = vector.broadcast %cst_151 : f32 to vector<16x4x16xf32>
    %340 = arith.subf %339, %338 : vector<16x4x16xf32>
    %cst_152 = arith.constant 0.000000e+00 : f32
    %341 = vector.broadcast %cst_152 : f32 to vector<16x4x16xf32>
    %342 = arith.maximumf %341, %340 : vector<16x4x16xf32>
    %343 = vector.shape_cast %318 : vector<16x4xf32> to vector<16x4x1xf32>
    %344 = vector.broadcast %343 : vector<16x4x1xf32> to vector<16x4x16xf32>
    %345 = arith.mulf %344, %332 : vector<16x4x16xf32>
    %346 = arith.mulf %345, %342 : vector<16x4x16xf32>
    %cst_153 = arith.constant dense<0.000000e+00> : vector<16x16xf32>
    %347 = vector.multi_reduction <add>, %346, %cst_153 [1] : vector<16x4x16xf32> to vector<16x16xf32>
    %348 = arith.truncf %347 : vector<16x16xf32> to vector<16x16xbf16>
    %c0_154 = arith.constant 0 : index
    %c16_155 = arith.constant 16 : index
    %349 = vector.load %arg25[%c0_154, %c16_155] : memref<16x128xf32, #tpu.memory_space<vmem>>, vector<16x16xf32>
    %350 = arith.truncf %349 : vector<16x16xf32> to vector<16x16xbf16>
    %cst_156 = arith.constant dense<0.000000e+00> : vector<16x16xf32>
    %351 = tpu.matmul %348, %350, %cst_156 {dimension_numbers = #tpu.dot_dimension_numbers<[1], [0], [0], [1], [0, 0, 1, 1], [], []>} : vector<16x16xbf16>, vector<16x16xbf16>, vector<16x16xf32> -> vector<16x16xf32>
    %c0_157 = arith.constant 0 : index
    %c16_158 = arith.constant 16 : index
    %352 = vector.load %arg28[%c0_157, %c16_158] : memref<16x128xf32, #tpu.memory_space<vmem>>, vector<16x16xf32>
    tpu.vector_store %arg28[%c0_157, %c16_158], %351 {strides = array<i32>} : memref<16x128xf32, #tpu.memory_space<vmem>>, vector<16x16xf32>,
    %c0_159 = arith.constant 0 : index
    %c8 = arith.constant 8 : index
    %353 = vector.load %arg27[%c0_159, %c8] : memref<16x96xf32, #tpu.memory_space<vmem>>, vector<16x4xf32>
    %c0_160 = arith.constant 0 : index
    %c40 = arith.constant 40 : index
    %354 = vector.load %arg27[%c0_160, %c40] : memref<16x96xf32, #tpu.memory_space<vmem>>, vector<16x4xf32>
    %c0_161 = arith.constant 0 : index
    %c72 = arith.constant 72 : index
    %355 = vector.load %arg27[%c0_161, %c72] : memref<16x96xf32, #tpu.memory_space<vmem>>, vector<16x4xf32>
    %cst_162 = arith.constant dense<0xFF800000> : vector<16xf32>
    %356 = vector.multi_reduction <maximumf>, %355, %cst_162 [1] : vector<16x4xf32> to vector<16xf32>
    %357 = vector.shape_cast %356 : vector<16xf32> to vector<16x1xf32>
    %358 = vector.broadcast %357 : vector<16x1xf32> to vector<16x4xf32>
    %359 = arith.subf %355, %358 : vector<16x4xf32>
    %360 = math.exp %359 : vector<16x4xf32>
    %cst_163 = arith.constant dense<0.000000e+00> : vector<16xf32>
    %361 = vector.multi_reduction <add>, %360, %cst_163 [1] : vector<16x4xf32> to vector<16xf32>
    %362 = vector.shape_cast %361 : vector<16xf32> to vector<16x1xf32>
    %363 = tpu.reciprocal %362 {approx = true} : vector<16x1xf32> -> vector<16x1xf32>
    %364 = vector.broadcast %363 : vector<16x1xf32> to vector<16x4xf32>
    %365 = arith.mulf %360, %364 : vector<16x4xf32>
    %366 = vector.broadcast %252 : vector<16x1xf32> to vector<16x4xf32>
    %367 = arith.addf %366, %353 : vector<16x4xf32>
    %368 = vector.broadcast %249 : vector<16x1xf32> to vector<16x4xf32>
    %369 = arith.addf %368, %354 : vector<16x4xf32>
    %370 = vector.shape_cast %367 : vector<16x4xf32> to vector<16x4x1xf32>
    %371 = vector.shape_cast %258 : vector<1x16xf32> to vector<1x1x16xf32>
    %372 = vector.broadcast %370 : vector<16x4x1xf32> to vector<16x4x16xf32>
    %373 = vector.broadcast %371 : vector<1x1x16xf32> to vector<16x4x16xf32>
    %374 = arith.subf %372, %373 : vector<16x4x16xf32>
    %375 = math.absf %374 : vector<16x4x16xf32>
    %cst_164 = arith.constant 1.000000e+00 : f32
    %376 = vector.broadcast %cst_164 : f32 to vector<16x4x16xf32>
    %377 = arith.subf %376, %375 : vector<16x4x16xf32>
    %cst_165 = arith.constant 0.000000e+00 : f32
    %378 = vector.broadcast %cst_165 : f32 to vector<16x4x16xf32>
    %379 = arith.maximumf %378, %377 : vector<16x4x16xf32>
    %380 = vector.shape_cast %369 : vector<16x4xf32> to vector<16x4x1xf32>
    %381 = vector.shape_cast %255 : vector<1x16xf32> to vector<1x1x16xf32>
    %382 = vector.broadcast %380 : vector<16x4x1xf32> to vector<16x4x16xf32>
    %383 = vector.broadcast %381 : vector<1x1x16xf32> to vector<16x4x16xf32>
    %384 = arith.subf %382, %383 : vector<16x4x16xf32>
    %385 = math.absf %384 : vector<16x4x16xf32>
    %cst_166 = arith.constant 1.000000e+00 : f32
    %386 = vector.broadcast %cst_166 : f32 to vector<16x4x16xf32>
    %387 = arith.subf %386, %385 : vector<16x4x16xf32>
    %cst_167 = arith.constant 0.000000e+00 : f32
    %388 = vector.broadcast %cst_167 : f32 to vector<16x4x16xf32>
    %389 = arith.maximumf %388, %387 : vector<16x4x16xf32>
    %390 = vector.shape_cast %365 : vector<16x4xf32> to vector<16x4x1xf32>
    %391 = vector.broadcast %390 : vector<16x4x1xf32> to vector<16x4x16xf32>
    %392 = arith.mulf %391, %379 : vector<16x4x16xf32>
    %393 = arith.mulf %392, %389 : vector<16x4x16xf32>
    %cst_168 = arith.constant dense<0.000000e+00> : vector<16x16xf32>
    %394 = vector.multi_reduction <add>, %393, %cst_168 [1] : vector<16x4x16xf32> to vector<16x16xf32>
    %395 = arith.truncf %394 : vector<16x16xf32> to vector<16x16xbf16>
    %c0_169 = arith.constant 0 : index
    %c32_170 = arith.constant 32 : index
    %396 = vector.load %arg25[%c0_169, %c32_170] : memref<16x128xf32, #tpu.memory_space<vmem>>, vector<16x16xf32>
    %397 = arith.truncf %396 : vector<16x16xf32> to vector<16x16xbf16>
    %cst_171 = arith.constant dense<0.000000e+00> : vector<16x16xf32>
    %398 = tpu.matmul %395, %397, %cst_171 {dimension_numbers = #tpu.dot_dimension_numbers<[1], [0], [0], [1], [0, 0, 1, 1], [], []>} : vector<16x16xbf16>, vector<16x16xbf16>, vector<16x16xf32> -> vector<16x16xf32>
    %c0_172 = arith.constant 0 : index
    %c32_173 = arith.constant 32 : index
    %399 = vector.load %arg28[%c0_172, %c32_173] : memref<16x128xf32, #tpu.memory_space<vmem>>, vector<16x16xf32>
    tpu.vector_store %arg28[%c0_172, %c32_173], %398 {strides = array<i32>} : memref<16x128xf32, #tpu.memory_space<vmem>>, vector<16x16xf32>,
    %c0_174 = arith.constant 0 : index
    %c12 = arith.constant 12 : index
    %400 = vector.load %arg27[%c0_174, %c12] : memref<16x96xf32, #tpu.memory_space<vmem>>, vector<16x4xf32>
    %c0_175 = arith.constant 0 : index
    %c44 = arith.constant 44 : index
    %401 = vector.load %arg27[%c0_175, %c44] : memref<16x96xf32, #tpu.memory_space<vmem>>, vector<16x4xf32>
    %c0_176 = arith.constant 0 : index
    %c76 = arith.constant 76 : index
    %402 = vector.load %arg27[%c0_176, %c76] : memref<16x96xf32, #tpu.memory_space<vmem>>, vector<16x4xf32>
    %cst_177 = arith.constant dense<0xFF800000> : vector<16xf32>
    %403 = vector.multi_reduction <maximumf>, %402, %cst_177 [1] : vector<16x4xf32> to vector<16xf32>
    %404 = vector.shape_cast %403 : vector<16xf32> to vector<16x1xf32>
    %405 = vector.broadcast %404 : vector<16x1xf32> to vector<16x4xf32>
    %406 = arith.subf %402, %405 : vector<16x4xf32>
    %407 = math.exp %406 : vector<16x4xf32>
    %cst_178 = arith.constant dense<0.000000e+00> : vector<16xf32>
    %408 = vector.multi_reduction <add>, %407, %cst_178 [1] : vector<16x4xf32> to vector<16xf32>
    %409 = vector.shape_cast %408 : vector<16xf32> to vector<16x1xf32>
    %410 = tpu.reciprocal %409 {approx = true} : vector<16x1xf32> -> vector<16x1xf32>
    %411 = vector.broadcast %410 : vector<16x1xf32> to vector<16x4xf32>
    %412 = arith.mulf %407, %411 : vector<16x4xf32>
    %413 = vector.broadcast %252 : vector<16x1xf32> to vector<16x4xf32>
    %414 = arith.addf %413, %400 : vector<16x4xf32>
    %415 = vector.broadcast %249 : vector<16x1xf32> to vector<16x4xf32>
    %416 = arith.addf %415, %401 : vector<16x4xf32>
    %417 = vector.shape_cast %414 : vector<16x4xf32> to vector<16x4x1xf32>
    %418 = vector.shape_cast %258 : vector<1x16xf32> to vector<1x1x16xf32>
    %419 = vector.broadcast %417 : vector<16x4x1xf32> to vector<16x4x16xf32>
    %420 = vector.broadcast %418 : vector<1x1x16xf32> to vector<16x4x16xf32>
    %421 = arith.subf %419, %420 : vector<16x4x16xf32>
    %422 = math.absf %421 : vector<16x4x16xf32>
    %cst_179 = arith.constant 1.000000e+00 : f32
    %423 = vector.broadcast %cst_179 : f32 to vector<16x4x16xf32>
    %424 = arith.subf %423, %422 : vector<16x4x16xf32>
    %cst_180 = arith.constant 0.000000e+00 : f32
    %425 = vector.broadcast %cst_180 : f32 to vector<16x4x16xf32>
    %426 = arith.maximumf %425, %424 : vector<16x4x16xf32>
    %427 = vector.shape_cast %416 : vector<16x4xf32> to vector<16x4x1xf32>
    %428 = vector.shape_cast %255 : vector<1x16xf32> to vector<1x1x16xf32>
    %429 = vector.broadcast %427 : vector<16x4x1xf32> to vector<16x4x16xf32>
    %430 = vector.broadcast %428 : vector<1x1x16xf32> to vector<16x4x16xf32>
    %431 = arith.subf %429, %430 : vector<16x4x16xf32>
    %432 = math.absf %431 : vector<16x4x16xf32>
    %cst_181 = arith.constant 1.000000e+00 : f32
    %433 = vector.broadcast %cst_181 : f32 to vector<16x4x16xf32>
    %434 = arith.subf %433, %432 : vector<16x4x16xf32>
    %cst_182 = arith.constant 0.000000e+00 : f32
    %435 = vector.broadcast %cst_182 : f32 to vector<16x4x16xf32>
    %436 = arith.maximumf %435, %434 : vector<16x4x16xf32>
    %437 = vector.shape_cast %412 : vector<16x4xf32> to vector<16x4x1xf32>
    %438 = vector.broadcast %437 : vector<16x4x1xf32> to vector<16x4x16xf32>
    %439 = arith.mulf %438, %426 : vector<16x4x16xf32>
    %440 = arith.mulf %439, %436 : vector<16x4x16xf32>
    %cst_183 = arith.constant dense<0.000000e+00> : vector<16x16xf32>
    %441 = vector.multi_reduction <add>, %440, %cst_183 [1] : vector<16x4x16xf32> to vector<16x16xf32>
    %442 = arith.truncf %441 : vector<16x16xf32> to vector<16x16xbf16>
    %c0_184 = arith.constant 0 : index
    %c48_185 = arith.constant 48 : index
    %443 = vector.load %arg25[%c0_184, %c48_185] : memref<16x128xf32, #tpu.memory_space<vmem>>, vector<16x16xf32>
    %444 = arith.truncf %443 : vector<16x16xf32> to vector<16x16xbf16>
    %cst_186 = arith.constant dense<0.000000e+00> : vector<16x16xf32>
    %445 = tpu.matmul %442, %444, %cst_186 {dimension_numbers = #tpu.dot_dimension_numbers<[1], [0], [0], [1], [0, 0, 1, 1], [], []>} : vector<16x16xbf16>, vector<16x16xbf16>, vector<16x16xf32> -> vector<16x16xf32>
    %c0_187 = arith.constant 0 : index
    %c48_188 = arith.constant 48 : index
    %446 = vector.load %arg28[%c0_187, %c48_188] : memref<16x128xf32, #tpu.memory_space<vmem>>, vector<16x16xf32>
    tpu.vector_store %arg28[%c0_187, %c48_188], %445 {strides = array<i32>} : memref<16x128xf32, #tpu.memory_space<vmem>>, vector<16x16xf32>,
    %c0_189 = arith.constant 0 : index
    %c16_190 = arith.constant 16 : index
    %447 = vector.load %arg27[%c0_189, %c16_190] : memref<16x96xf32, #tpu.memory_space<vmem>>, vector<16x4xf32>
    %c0_191 = arith.constant 0 : index
    %c48_192 = arith.constant 48 : index
    %448 = vector.load %arg27[%c0_191, %c48_192] : memref<16x96xf32, #tpu.memory_space<vmem>>, vector<16x4xf32>
    %c0_193 = arith.constant 0 : index
    %c80_194 = arith.constant 80 : index
    %449 = vector.load %arg27[%c0_193, %c80_194] : memref<16x96xf32, #tpu.memory_space<vmem>>, vector<16x4xf32>
    %cst_195 = arith.constant dense<0xFF800000> : vector<16xf32>
    %450 = vector.multi_reduction <maximumf>, %449, %cst_195 [1] : vector<16x4xf32> to vector<16xf32>
    %451 = vector.shape_cast %450 : vector<16xf32> to vector<16x1xf32>
    %452 = vector.broadcast %451 : vector<16x1xf32> to vector<16x4xf32>
    %453 = arith.subf %449, %452 : vector<16x4xf32>
    %454 = math.exp %453 : vector<16x4xf32>
    %cst_196 = arith.constant dense<0.000000e+00> : vector<16xf32>
    %455 = vector.multi_reduction <add>, %454, %cst_196 [1] : vector<16x4xf32> to vector<16xf32>
    %456 = vector.shape_cast %455 : vector<16xf32> to vector<16x1xf32>
    %457 = tpu.reciprocal %456 {approx = true} : vector<16x1xf32> -> vector<16x1xf32>
    %458 = vector.broadcast %457 : vector<16x1xf32> to vector<16x4xf32>
    %459 = arith.mulf %454, %458 : vector<16x4xf32>
    %460 = vector.broadcast %252 : vector<16x1xf32> to vector<16x4xf32>
    %461 = arith.addf %460, %447 : vector<16x4xf32>
    %462 = vector.broadcast %249 : vector<16x1xf32> to vector<16x4xf32>
    %463 = arith.addf %462, %448 : vector<16x4xf32>
    %464 = vector.shape_cast %461 : vector<16x4xf32> to vector<16x4x1xf32>
    %465 = vector.shape_cast %258 : vector<1x16xf32> to vector<1x1x16xf32>
    %466 = vector.broadcast %464 : vector<16x4x1xf32> to vector<16x4x16xf32>
    %467 = vector.broadcast %465 : vector<1x1x16xf32> to vector<16x4x16xf32>
    %468 = arith.subf %466, %467 : vector<16x4x16xf32>
    %469 = math.absf %468 : vector<16x4x16xf32>
    %cst_197 = arith.constant 1.000000e+00 : f32
    %470 = vector.broadcast %cst_197 : f32 to vector<16x4x16xf32>
    %471 = arith.subf %470, %469 : vector<16x4x16xf32>
    %cst_198 = arith.constant 0.000000e+00 : f32
    %472 = vector.broadcast %cst_198 : f32 to vector<16x4x16xf32>
    %473 = arith.maximumf %472, %471 : vector<16x4x16xf32>
    %474 = vector.shape_cast %463 : vector<16x4xf32> to vector<16x4x1xf32>
    %475 = vector.shape_cast %255 : vector<1x16xf32> to vector<1x1x16xf32>
    %476 = vector.broadcast %474 : vector<16x4x1xf32> to vector<16x4x16xf32>
    %477 = vector.broadcast %475 : vector<1x1x16xf32> to vector<16x4x16xf32>
    %478 = arith.subf %476, %477 : vector<16x4x16xf32>
    %479 = math.absf %478 : vector<16x4x16xf32>
    %cst_199 = arith.constant 1.000000e+00 : f32
    %480 = vector.broadcast %cst_199 : f32 to vector<16x4x16xf32>
    %481 = arith.subf %480, %479 : vector<16x4x16xf32>
    %cst_200 = arith.constant 0.000000e+00 : f32
    %482 = vector.broadcast %cst_200 : f32 to vector<16x4x16xf32>
    %483 = arith.maximumf %482, %481 : vector<16x4x16xf32>
    %484 = vector.shape_cast %459 : vector<16x4xf32> to vector<16x4x1xf32>
    %485 = vector.broadcast %484 : vector<16x4x1xf32> to vector<16x4x16xf32>
    %486 = arith.mulf %485, %473 : vector<16x4x16xf32>
    %487 = arith.mulf %486, %483 : vector<16x4x16xf32>
    %cst_201 = arith.constant dense<0.000000e+00> : vector<16x16xf32>
    %488 = vector.multi_reduction <add>, %487, %cst_201 [1] : vector<16x4x16xf32> to vector<16x16xf32>
    %489 = arith.truncf %488 : vector<16x16xf32> to vector<16x16xbf16>
    %c0_202 = arith.constant 0 : index
    %c64_203 = arith.constant 64 : index
    %490 = vector.load %arg25[%c0_202, %c64_203] : memref<16x128xf32, #tpu.memory_space<vmem>>, vector<16x16xf32>
    %491 = arith.truncf %490 : vector<16x16xf32> to vector<16x16xbf16>
    %cst_204 = arith.constant dense<0.000000e+00> : vector<16x16xf32>
    %492 = tpu.matmul %489, %491, %cst_204 {dimension_numbers = #tpu.dot_dimension_numbers<[1], [0], [0], [1], [0, 0, 1, 1], [], []>} : vector<16x16xbf16>, vector<16x16xbf16>, vector<16x16xf32> -> vector<16x16xf32>
    %c0_205 = arith.constant 0 : index
    %c64_206 = arith.constant 64 : index
    %493 = vector.load %arg28[%c0_205, %c64_206] : memref<16x128xf32, #tpu.memory_space<vmem>>, vector<16x16xf32>
    tpu.vector_store %arg28[%c0_205, %c64_206], %492 {strides = array<i32>} : memref<16x128xf32, #tpu.memory_space<vmem>>, vector<16x16xf32>,
    %c0_207 = arith.constant 0 : index
    %c20 = arith.constant 20 : index
    %494 = vector.load %arg27[%c0_207, %c20] : memref<16x96xf32, #tpu.memory_space<vmem>>, vector<16x4xf32>
    %c0_208 = arith.constant 0 : index
    %c52 = arith.constant 52 : index
    %495 = vector.load %arg27[%c0_208, %c52] : memref<16x96xf32, #tpu.memory_space<vmem>>, vector<16x4xf32>
    %c0_209 = arith.constant 0 : index
    %c84 = arith.constant 84 : index
    %496 = vector.load %arg27[%c0_209, %c84] : memref<16x96xf32, #tpu.memory_space<vmem>>, vector<16x4xf32>
    %cst_210 = arith.constant dense<0xFF800000> : vector<16xf32>
    %497 = vector.multi_reduction <maximumf>, %496, %cst_210 [1] : vector<16x4xf32> to vector<16xf32>
    %498 = vector.shape_cast %497 : vector<16xf32> to vector<16x1xf32>
    %499 = vector.broadcast %498 : vector<16x1xf32> to vector<16x4xf32>
    %500 = arith.subf %496, %499 : vector<16x4xf32>
    %501 = math.exp %500 : vector<16x4xf32>
    %cst_211 = arith.constant dense<0.000000e+00> : vector<16xf32>
    %502 = vector.multi_reduction <add>, %501, %cst_211 [1] : vector<16x4xf32> to vector<16xf32>
    %503 = vector.shape_cast %502 : vector<16xf32> to vector<16x1xf32>
    %504 = tpu.reciprocal %503 {approx = true} : vector<16x1xf32> -> vector<16x1xf32>
    %505 = vector.broadcast %504 : vector<16x1xf32> to vector<16x4xf32>
    %506 = arith.mulf %501, %505 : vector<16x4xf32>
    %507 = vector.broadcast %252 : vector<16x1xf32> to vector<16x4xf32>
    %508 = arith.addf %507, %494 : vector<16x4xf32>
    %509 = vector.broadcast %249 : vector<16x1xf32> to vector<16x4xf32>
    %510 = arith.addf %509, %495 : vector<16x4xf32>
    %511 = vector.shape_cast %508 : vector<16x4xf32> to vector<16x4x1xf32>
    %512 = vector.shape_cast %258 : vector<1x16xf32> to vector<1x1x16xf32>
    %513 = vector.broadcast %511 : vector<16x4x1xf32> to vector<16x4x16xf32>
    %514 = vector.broadcast %512 : vector<1x1x16xf32> to vector<16x4x16xf32>
    %515 = arith.subf %513, %514 : vector<16x4x16xf32>
    %516 = math.absf %515 : vector<16x4x16xf32>
    %cst_212 = arith.constant 1.000000e+00 : f32
    %517 = vector.broadcast %cst_212 : f32 to vector<16x4x16xf32>
    %518 = arith.subf %517, %516 : vector<16x4x16xf32>
    %cst_213 = arith.constant 0.000000e+00 : f32
    %519 = vector.broadcast %cst_213 : f32 to vector<16x4x16xf32>
    %520 = arith.maximumf %519, %518 : vector<16x4x16xf32>
    %521 = vector.shape_cast %510 : vector<16x4xf32> to vector<16x4x1xf32>
    %522 = vector.shape_cast %255 : vector<1x16xf32> to vector<1x1x16xf32>
    %523 = vector.broadcast %521 : vector<16x4x1xf32> to vector<16x4x16xf32>
    %524 = vector.broadcast %522 : vector<1x1x16xf32> to vector<16x4x16xf32>
    %525 = arith.subf %523, %524 : vector<16x4x16xf32>
    %526 = math.absf %525 : vector<16x4x16xf32>
    %cst_214 = arith.constant 1.000000e+00 : f32
    %527 = vector.broadcast %cst_214 : f32 to vector<16x4x16xf32>
    %528 = arith.subf %527, %526 : vector<16x4x16xf32>
    %cst_215 = arith.constant 0.000000e+00 : f32
    %529 = vector.broadcast %cst_215 : f32 to vector<16x4x16xf32>
    %530 = arith.maximumf %529, %528 : vector<16x4x16xf32>
    %531 = vector.shape_cast %506 : vector<16x4xf32> to vector<16x4x1xf32>
    %532 = vector.broadcast %531 : vector<16x4x1xf32> to vector<16x4x16xf32>
    %533 = arith.mulf %532, %520 : vector<16x4x16xf32>
    %534 = arith.mulf %533, %530 : vector<16x4x16xf32>
    %cst_216 = arith.constant dense<0.000000e+00> : vector<16x16xf32>
    %535 = vector.multi_reduction <add>, %534, %cst_216 [1] : vector<16x4x16xf32> to vector<16x16xf32>
    %536 = arith.truncf %535 : vector<16x16xf32> to vector<16x16xbf16>
    %c0_217 = arith.constant 0 : index
    %c80_218 = arith.constant 80 : index
    %537 = vector.load %arg25[%c0_217, %c80_218] : memref<16x128xf32, #tpu.memory_space<vmem>>, vector<16x16xf32>
    %538 = arith.truncf %537 : vector<16x16xf32> to vector<16x16xbf16>
    %cst_219 = arith.constant dense<0.000000e+00> : vector<16x16xf32>
    %539 = tpu.matmul %536, %538, %cst_219 {dimension_numbers = #tpu.dot_dimension_numbers<[1], [0], [0], [1], [0, 0, 1, 1], [], []>} : vector<16x16xbf16>, vector<16x16xbf16>, vector<16x16xf32> -> vector<16x16xf32>
    %c0_220 = arith.constant 0 : index
    %c80_221 = arith.constant 80 : index
    %540 = vector.load %arg28[%c0_220, %c80_221] : memref<16x128xf32, #tpu.memory_space<vmem>>, vector<16x16xf32>
    tpu.vector_store %arg28[%c0_220, %c80_221], %539 {strides = array<i32>} : memref<16x128xf32, #tpu.memory_space<vmem>>, vector<16x16xf32>,
    %c0_222 = arith.constant 0 : index
    %c24 = arith.constant 24 : index
    %541 = vector.load %arg27[%c0_222, %c24] : memref<16x96xf32, #tpu.memory_space<vmem>>, vector<16x4xf32>
    %c0_223 = arith.constant 0 : index
    %c56 = arith.constant 56 : index
    %542 = vector.load %arg27[%c0_223, %c56] : memref<16x96xf32, #tpu.memory_space<vmem>>, vector<16x4xf32>
    %c0_224 = arith.constant 0 : index
    %c88 = arith.constant 88 : index
    %543 = vector.load %arg27[%c0_224, %c88] : memref<16x96xf32, #tpu.memory_space<vmem>>, vector<16x4xf32>
    %cst_225 = arith.constant dense<0xFF800000> : vector<16xf32>
    %544 = vector.multi_reduction <maximumf>, %543, %cst_225 [1] : vector<16x4xf32> to vector<16xf32>
    %545 = vector.shape_cast %544 : vector<16xf32> to vector<16x1xf32>
    %546 = vector.broadcast %545 : vector<16x1xf32> to vector<16x4xf32>
    %547 = arith.subf %543, %546 : vector<16x4xf32>
    %548 = math.exp %547 : vector<16x4xf32>
    %cst_226 = arith.constant dense<0.000000e+00> : vector<16xf32>
    %549 = vector.multi_reduction <add>, %548, %cst_226 [1] : vector<16x4xf32> to vector<16xf32>
    %550 = vector.shape_cast %549 : vector<16xf32> to vector<16x1xf32>
    %551 = tpu.reciprocal %550 {approx = true} : vector<16x1xf32> -> vector<16x1xf32>
    %552 = vector.broadcast %551 : vector<16x1xf32> to vector<16x4xf32>
    %553 = arith.mulf %548, %552 : vector<16x4xf32>
    %554 = vector.broadcast %252 : vector<16x1xf32> to vector<16x4xf32>
    %555 = arith.addf %554, %541 : vector<16x4xf32>
    %556 = vector.broadcast %249 : vector<16x1xf32> to vector<16x4xf32>
    %557 = arith.addf %556, %542 : vector<16x4xf32>
    %558 = vector.shape_cast %555 : vector<16x4xf32> to vector<16x4x1xf32>
    %559 = vector.shape_cast %258 : vector<1x16xf32> to vector<1x1x16xf32>
    %560 = vector.broadcast %558 : vector<16x4x1xf32> to vector<16x4x16xf32>
    %561 = vector.broadcast %559 : vector<1x1x16xf32> to vector<16x4x16xf32>
    %562 = arith.subf %560, %561 : vector<16x4x16xf32>
    %563 = math.absf %562 : vector<16x4x16xf32>
    %cst_227 = arith.constant 1.000000e+00 : f32
    %564 = vector.broadcast %cst_227 : f32 to vector<16x4x16xf32>
    %565 = arith.subf %564, %563 : vector<16x4x16xf32>
    %cst_228 = arith.constant 0.000000e+00 : f32
    %566 = vector.broadcast %cst_228 : f32 to vector<16x4x16xf32>
    %567 = arith.maximumf %566, %565 : vector<16x4x16xf32>
    %568 = vector.shape_cast %557 : vector<16x4xf32> to vector<16x4x1xf32>
    %569 = vector.shape_cast %255 : vector<1x16xf32> to vector<1x1x16xf32>
    %570 = vector.broadcast %568 : vector<16x4x1xf32> to vector<16x4x16xf32>
    %571 = vector.broadcast %569 : vector<1x1x16xf32> to vector<16x4x16xf32>
    %572 = arith.subf %570, %571 : vector<16x4x16xf32>
    %573 = math.absf %572 : vector<16x4x16xf32>
    %cst_229 = arith.constant 1.000000e+00 : f32
    %574 = vector.broadcast %cst_229 : f32 to vector<16x4x16xf32>
    %575 = arith.subf %574, %573 : vector<16x4x16xf32>
    %cst_230 = arith.constant 0.000000e+00 : f32
    %576 = vector.broadcast %cst_230 : f32 to vector<16x4x16xf32>
    %577 = arith.maximumf %576, %575 : vector<16x4x16xf32>
    %578 = vector.shape_cast %553 : vector<16x4xf32> to vector<16x4x1xf32>
    %579 = vector.broadcast %578 : vector<16x4x1xf32> to vector<16x4x16xf32>
    %580 = arith.mulf %579, %567 : vector<16x4x16xf32>
    %581 = arith.mulf %580, %577 : vector<16x4x16xf32>
    %cst_231 = arith.constant dense<0.000000e+00> : vector<16x16xf32>
    %582 = vector.multi_reduction <add>, %581, %cst_231 [1] : vector<16x4x16xf32> to vector<16x16xf32>
    %583 = arith.truncf %582 : vector<16x16xf32> to vector<16x16xbf16>
    %c0_232 = arith.constant 0 : index
    %c96_233 = arith.constant 96 : index
    %584 = vector.load %arg25[%c0_232, %c96_233] : memref<16x128xf32, #tpu.memory_space<vmem>>, vector<16x16xf32>
    %585 = arith.truncf %584 : vector<16x16xf32> to vector<16x16xbf16>
    %cst_234 = arith.constant dense<0.000000e+00> : vector<16x16xf32>
    %586 = tpu.matmul %583, %585, %cst_234 {dimension_numbers = #tpu.dot_dimension_numbers<[1], [0], [0], [1], [0, 0, 1, 1], [], []>} : vector<16x16xbf16>, vector<16x16xbf16>, vector<16x16xf32> -> vector<16x16xf32>
    %c0_235 = arith.constant 0 : index
    %c96_236 = arith.constant 96 : index
    %587 = vector.load %arg28[%c0_235, %c96_236] : memref<16x128xf32, #tpu.memory_space<vmem>>, vector<16x16xf32>
    tpu.vector_store %arg28[%c0_235, %c96_236], %586 {strides = array<i32>} : memref<16x128xf32, #tpu.memory_space<vmem>>, vector<16x16xf32>,
    %c0_237 = arith.constant 0 : index
    %c28 = arith.constant 28 : index
    %588 = vector.load %arg27[%c0_237, %c28] : memref<16x96xf32, #tpu.memory_space<vmem>>, vector<16x4xf32>
    %c0_238 = arith.constant 0 : index
    %c60 = arith.constant 60 : index
    %589 = vector.load %arg27[%c0_238, %c60] : memref<16x96xf32, #tpu.memory_space<vmem>>, vector<16x4xf32>
    %c0_239 = arith.constant 0 : index
    %c92 = arith.constant 92 : index
    %590 = vector.load %arg27[%c0_239, %c92] : memref<16x96xf32, #tpu.memory_space<vmem>>, vector<16x4xf32>
    %cst_240 = arith.constant dense<0xFF800000> : vector<16xf32>
    %591 = vector.multi_reduction <maximumf>, %590, %cst_240 [1] : vector<16x4xf32> to vector<16xf32>
    %592 = vector.shape_cast %591 : vector<16xf32> to vector<16x1xf32>
    %593 = vector.broadcast %592 : vector<16x1xf32> to vector<16x4xf32>
    %594 = arith.subf %590, %593 : vector<16x4xf32>
    %595 = math.exp %594 : vector<16x4xf32>
    %cst_241 = arith.constant dense<0.000000e+00> : vector<16xf32>
    %596 = vector.multi_reduction <add>, %595, %cst_241 [1] : vector<16x4xf32> to vector<16xf32>
    %597 = vector.shape_cast %596 : vector<16xf32> to vector<16x1xf32>
    %598 = tpu.reciprocal %597 {approx = true} : vector<16x1xf32> -> vector<16x1xf32>
    %599 = vector.broadcast %598 : vector<16x1xf32> to vector<16x4xf32>
    %600 = arith.mulf %595, %599 : vector<16x4xf32>
    %601 = vector.broadcast %252 : vector<16x1xf32> to vector<16x4xf32>
    %602 = arith.addf %601, %588 : vector<16x4xf32>
    %603 = vector.broadcast %249 : vector<16x1xf32> to vector<16x4xf32>
    %604 = arith.addf %603, %589 : vector<16x4xf32>
    %605 = vector.shape_cast %602 : vector<16x4xf32> to vector<16x4x1xf32>
    %606 = vector.shape_cast %258 : vector<1x16xf32> to vector<1x1x16xf32>
    %607 = vector.broadcast %605 : vector<16x4x1xf32> to vector<16x4x16xf32>
    %608 = vector.broadcast %606 : vector<1x1x16xf32> to vector<16x4x16xf32>
    %609 = arith.subf %607, %608 : vector<16x4x16xf32>
    %610 = math.absf %609 : vector<16x4x16xf32>
    %cst_242 = arith.constant 1.000000e+00 : f32
    %611 = vector.broadcast %cst_242 : f32 to vector<16x4x16xf32>
    %612 = arith.subf %611, %610 : vector<16x4x16xf32>
    %cst_243 = arith.constant 0.000000e+00 : f32
    %613 = vector.broadcast %cst_243 : f32 to vector<16x4x16xf32>
    %614 = arith.maximumf %613, %612 : vector<16x4x16xf32>
    %615 = vector.shape_cast %604 : vector<16x4xf32> to vector<16x4x1xf32>
    %616 = vector.shape_cast %255 : vector<1x16xf32> to vector<1x1x16xf32>
    %617 = vector.broadcast %615 : vector<16x4x1xf32> to vector<16x4x16xf32>
    %618 = vector.broadcast %616 : vector<1x1x16xf32> to vector<16x4x16xf32>
    %619 = arith.subf %617, %618 : vector<16x4x16xf32>
    %620 = math.absf %619 : vector<16x4x16xf32>
    %cst_244 = arith.constant 1.000000e+00 : f32
    %621 = vector.broadcast %cst_244 : f32 to vector<16x4x16xf32>
    %622 = arith.subf %621, %620 : vector<16x4x16xf32>
    %cst_245 = arith.constant 0.000000e+00 : f32
    %623 = vector.broadcast %cst_245 : f32 to vector<16x4x16xf32>
    %624 = arith.maximumf %623, %622 : vector<16x4x16xf32>
    %625 = vector.shape_cast %600 : vector<16x4xf32> to vector<16x4x1xf32>
    %626 = vector.broadcast %625 : vector<16x4x1xf32> to vector<16x4x16xf32>
    %627 = arith.mulf %626, %614 : vector<16x4x16xf32>
    %628 = arith.mulf %627, %624 : vector<16x4x16xf32>
    %cst_246 = arith.constant dense<0.000000e+00> : vector<16x16xf32>
    %629 = vector.multi_reduction <add>, %628, %cst_246 [1] : vector<16x4x16xf32> to vector<16x16xf32>
    %630 = arith.truncf %629 : vector<16x16xf32> to vector<16x16xbf16>
    %c0_247 = arith.constant 0 : index
    %c112_248 = arith.constant 112 : index
    %631 = vector.load %arg25[%c0_247, %c112_248] : memref<16x128xf32, #tpu.memory_space<vmem>>, vector<16x16xf32>
    %632 = arith.truncf %631 : vector<16x16xf32> to vector<16x16xbf16>
    %cst_249 = arith.constant dense<0.000000e+00> : vector<16x16xf32>
    %633 = tpu.matmul %630, %632, %cst_249 {dimension_numbers = #tpu.dot_dimension_numbers<[1], [0], [0], [1], [0, 0, 1, 1], [], []>} : vector<16x16xbf16>, vector<16x16xbf16>, vector<16x16xf32> -> vector<16x16xf32>
    %c0_250 = arith.constant 0 : index
    %c112_251 = arith.constant 112 : index
    %634 = vector.load %arg28[%c0_250, %c112_251] : memref<16x128xf32, #tpu.memory_space<vmem>>, vector<16x16xf32>
    tpu.vector_store %arg28[%c0_250, %c112_251], %633 {strides = array<i32>} : memref<16x128xf32, #tpu.memory_space<vmem>>, vector<16x16xf32>,
    %c0_252 = arith.constant 0 : index
    %c0_253 = arith.constant 0 : index
    %635 = vector.load %arg28[%c0_252, %c0_253] : memref<16x128xf32, #tpu.memory_space<vmem>>, vector<16x128xf32>
    %636 = arith.truncf %635 : vector<16x128xf32> to vector<16x128xbf16>
    %c0_254 = arith.constant 0 : index
    %c0_255 = arith.constant 0 : index
    %637 = vector.load %arg15[%c0_254, %c0_255] : memref<128x128xbf16, #tpu.memory_space<vmem>>, vector<128x128xbf16>
    %cst_256 = arith.constant dense<0.000000e+00> : vector<16x128xf32>
    %638 = tpu.matmul %636, %637, %cst_256 {dimension_numbers = #tpu.dot_dimension_numbers<[1], [0], [0], [1], [0, 0, 1, 1], [], []>} : vector<16x128xbf16>, vector<128x128xbf16>, vector<16x128xf32> -> vector<16x128xf32>
    %c0_257 = arith.constant 0 : index
    %c0_258 = arith.constant 0 : index
    %639 = vector.load %arg16[%c0_257, %c0_258] : memref<1x128xf32, #tpu.memory_space<vmem>>, vector<1x128xf32>
    %640 = vector.broadcast %639 : vector<1x128xf32> to vector<16x128xf32>
    %641 = arith.addf %638, %640 : vector<16x128xf32>
    %642 = arith.addf %234, %641 : vector<16x128xf32>
    %cst_259 = arith.constant dense<0.000000e+00> : vector<16xf32>
    %643 = vector.multi_reduction <add>, %642, %cst_259 [1] : vector<16x128xf32> to vector<16xf32>
    %644 = vector.shape_cast %643 : vector<16xf32> to vector<16x1xf32>
    %cst_260 = arith.constant 1.280000e+02 : f32
    %645 = vector.broadcast %cst_260 : f32 to vector<16x1xf32>
    %646 = arith.divf %644, %645 : vector<16x1xf32>
    %647 = vector.broadcast %646 : vector<16x1xf32> to vector<16x128xf32>
    %648 = arith.subf %642, %647 : vector<16x128xf32>
    %649 = vector.broadcast %646 : vector<16x1xf32> to vector<16x128xf32>
    %650 = arith.subf %642, %649 : vector<16x128xf32>
    %651 = arith.mulf %648, %650 : vector<16x128xf32>
    %cst_261 = arith.constant dense<0.000000e+00> : vector<16xf32>
    %652 = vector.multi_reduction <add>, %651, %cst_261 [1] : vector<16x128xf32> to vector<16xf32>
    %653 = vector.shape_cast %652 : vector<16xf32> to vector<16x1xf32>
    %cst_262 = arith.constant 1.280000e+02 : f32
    %654 = vector.broadcast %cst_262 : f32 to vector<16x1xf32>
    %655 = arith.divf %653, %654 : vector<16x1xf32>
    %656 = vector.broadcast %646 : vector<16x1xf32> to vector<16x128xf32>
    %657 = arith.subf %642, %656 : vector<16x128xf32>
    %cst_263 = arith.constant 9.99999974E-6 : f32
    %658 = vector.broadcast %cst_263 : f32 to vector<16x1xf32>
    %659 = arith.addf %655, %658 : vector<16x1xf32>
    %660 = math.rsqrt %659 : vector<16x1xf32>
    %661 = vector.broadcast %660 : vector<16x1xf32> to vector<16x128xf32>
    %662 = arith.mulf %657, %661 : vector<16x128xf32>
    %c1 = arith.constant 1 : index
    %c0_264 = arith.constant 0 : index
    %663 = vector.load %arg21[%c1, %c0_264] : memref<3x128xf32, #tpu.memory_space<vmem>>, vector<1x128xf32>
    %664 = vector.shape_cast %663 : vector<1x128xf32> to vector<128xf32>
    %665 = vector.shape_cast %664 : vector<128xf32> to vector<1x128xf32>
    %666 = vector.broadcast %665 : vector<1x128xf32> to vector<16x128xf32>
    %667 = arith.mulf %662, %666 : vector<16x128xf32>
    %c1_265 = arith.constant 1 : index
    %c0_266 = arith.constant 0 : index
    %668 = vector.load %arg22[%c1_265, %c0_266] : memref<3x128xf32, #tpu.memory_space<vmem>>, vector<1x128xf32>
    %669 = vector.shape_cast %668 : vector<1x128xf32> to vector<128xf32>
    %670 = vector.shape_cast %669 : vector<128xf32> to vector<1x128xf32>
    %671 = vector.broadcast %670 : vector<1x128xf32> to vector<16x128xf32>
    %672 = arith.addf %667, %671 : vector<16x128xf32>
    %673 = arith.truncf %672 : vector<16x128xf32> to vector<16x128xbf16>
    %c0_267 = arith.constant 0 : index
    %c0_268 = arith.constant 0 : index
    %674 = vector.load %arg17[%c0_267, %c0_268] : memref<128x256xbf16, #tpu.memory_space<vmem>>, vector<128x256xbf16>
    %cst_269 = arith.constant dense<0.000000e+00> : vector<16x256xf32>
    %675 = tpu.matmul %673, %674, %cst_269 {dimension_numbers = #tpu.dot_dimension_numbers<[1], [0], [0], [1], [0, 0, 1, 1], [], []>} : vector<16x128xbf16>, vector<128x256xbf16>, vector<16x256xf32> -> vector<16x256xf32>
    %c0_270 = arith.constant 0 : index
    %c0_271 = arith.constant 0 : index
    %676 = vector.load %arg18[%c0_270, %c0_271] : memref<1x256xf32, #tpu.memory_space<vmem>>, vector<1x256xf32>
    %677 = vector.broadcast %676 : vector<1x256xf32> to vector<16x256xf32>
    %678 = arith.addf %675, %677 : vector<16x256xf32>
    %cst_272 = arith.constant 0.000000e+00 : f32
    %679 = vector.broadcast %cst_272 : f32 to vector<16x256xf32>
    %680 = arith.maximumf %678, %679 : vector<16x256xf32>
    %681 = arith.truncf %680 : vector<16x256xf32> to vector<16x256xbf16>
    %c0_273 = arith.constant 0 : index
    %c0_274 = arith.constant 0 : index
    %682 = vector.load %arg19[%c0_273, %c0_274] : memref<256x128xbf16, #tpu.memory_space<vmem>>, vector<256x128xbf16>
    %cst_275 = arith.constant dense<0.000000e+00> : vector<16x128xf32>
    %683 = tpu.matmul %681, %682, %cst_275 {dimension_numbers = #tpu.dot_dimension_numbers<[1], [0], [0], [1], [0, 0, 1, 1], [], []>} : vector<16x256xbf16>, vector<256x128xbf16>, vector<16x128xf32> -> vector<16x128xf32>
    %c0_276 = arith.constant 0 : index
    %c0_277 = arith.constant 0 : index
    %684 = vector.load %arg20[%c0_276, %c0_277] : memref<1x128xf32, #tpu.memory_space<vmem>>, vector<1x128xf32>
    %685 = vector.broadcast %684 : vector<1x128xf32> to vector<16x128xf32>
    %686 = arith.addf %683, %685 : vector<16x128xf32>
    %687 = arith.addf %672, %686 : vector<16x128xf32>
    %cst_278 = arith.constant dense<0.000000e+00> : vector<16xf32>
    %688 = vector.multi_reduction <add>, %687, %cst_278 [1] : vector<16x128xf32> to vector<16xf32>
    %689 = vector.shape_cast %688 : vector<16xf32> to vector<16x1xf32>
    %cst_279 = arith.constant 1.280000e+02 : f32
    %690 = vector.broadcast %cst_279 : f32 to vector<16x1xf32>
    %691 = arith.divf %689, %690 : vector<16x1xf32>
    %692 = vector.broadcast %691 : vector<16x1xf32> to vector<16x128xf32>
    %693 = arith.subf %687, %692 : vector<16x128xf32>
    %694 = vector.broadcast %691 : vector<16x1xf32> to vector<16x128xf32>
    %695 = arith.subf %687, %694 : vector<16x128xf32>
    %696 = arith.mulf %693, %695 : vector<16x128xf32>
    %cst_280 = arith.constant dense<0.000000e+00> : vector<16xf32>
    %697 = vector.multi_reduction <add>, %696, %cst_280 [1] : vector<16x128xf32> to vector<16xf32>
    %698 = vector.shape_cast %697 : vector<16xf32> to vector<16x1xf32>
    %cst_281 = arith.constant 1.280000e+02 : f32
    %699 = vector.broadcast %cst_281 : f32 to vector<16x1xf32>
    %700 = arith.divf %698, %699 : vector<16x1xf32>
    %701 = vector.broadcast %691 : vector<16x1xf32> to vector<16x128xf32>
    %702 = arith.subf %687, %701 : vector<16x128xf32>
    %cst_282 = arith.constant 9.99999974E-6 : f32
    %703 = vector.broadcast %cst_282 : f32 to vector<16x1xf32>
    %704 = arith.addf %700, %703 : vector<16x1xf32>
    %705 = math.rsqrt %704 : vector<16x1xf32>
    %706 = vector.broadcast %705 : vector<16x1xf32> to vector<16x128xf32>
    %707 = arith.mulf %702, %706 : vector<16x128xf32>
    %c2 = arith.constant 2 : index
    %c0_283 = arith.constant 0 : index
    %708 = vector.load %arg21[%c2, %c0_283] : memref<3x128xf32, #tpu.memory_space<vmem>>, vector<1x128xf32>
    %709 = vector.shape_cast %708 : vector<1x128xf32> to vector<128xf32>
    %710 = vector.shape_cast %709 : vector<128xf32> to vector<1x128xf32>
    %711 = vector.broadcast %710 : vector<1x128xf32> to vector<16x128xf32>
    %712 = arith.mulf %707, %711 : vector<16x128xf32>
    %c2_284 = arith.constant 2 : index
    %c0_285 = arith.constant 0 : index
    %713 = vector.load %arg22[%c2_284, %c0_285] : memref<3x128xf32, #tpu.memory_space<vmem>>, vector<1x128xf32>
    %714 = vector.shape_cast %713 : vector<1x128xf32> to vector<128xf32>
    %715 = vector.shape_cast %714 : vector<128xf32> to vector<1x128xf32>
    %716 = vector.broadcast %715 : vector<1x128xf32> to vector<16x128xf32>
    %717 = arith.addf %712, %716 : vector<16x128xf32>
    %c0_286 = arith.constant 0 : index
    %c0_287 = arith.constant 0 : index
    %718 = vector.load %arg24[%c0_286, %c0_287] : memref<16x128xf32, #tpu.memory_space<vmem>>, vector<16x128xf32>
    tpu.vector_store %arg24[%c0_286, %c0_287], %717 {strides = array<i32>} : memref<16x128xf32, #tpu.memory_space<vmem>>, vector<16x128xf32>,
    %c0_i32_288 = arith.constant 0 : i32
    %719 = arith.cmpi eq, %arg1, %c0_i32_288 : i32
    %720 = arith.extui %719 : i1 to i32
    %c0_i32_289 = arith.constant 0 : i32
    %721 = arith.cmpi ne, %720, %c0_i32_289 : i32
    scf.if %721 {
      %c0_290 = arith.constant 0 : index
      %c0_291 = arith.constant 0 : index
      %c0_292 = arith.constant 0 : index
      %722 = vector.load %arg23[%c0_290, %c0_291, %c0_292] : memref<1x16x128xf32, #tpu.memory_space<vmem>>, vector<1x16x128xf32>
      %723 = vector.shape_cast %722 : vector<1x16x128xf32> to vector<16x128xf32>
      %724 = vector.shape_cast %717 : vector<16x128xf32> to vector<1x16x128xf32>
      tpu.vector_store %arg23[%c0_290, %c0_291, %c0_292], %724 {strides = array<i32>} : memref<1x16x128xf32, #tpu.memory_space<vmem>>, vector<1x16x128xf32>,
    } else {
    }
    return
  }
  func.func @transform_0(%arg0: i32, %arg1: i32) -> (i32, i32, i32) {
    %c0_i32 = arith.constant 0 : i32
    %c0_i32_0 = arith.constant 0 : i32
    %c0_i32_1 = arith.constant 0 : i32
    return %arg0, %c0_i32, %c0_i32_0 : i32, i32, i32
  }
  func.func @transform_1(%arg0: i32, %arg1: i32) -> (i32, i32, i32) {
    %c0_i32 = arith.constant 0 : i32
    %c0_i32_0 = arith.constant 0 : i32
    %c0_i32_1 = arith.constant 0 : i32
    return %arg0, %c0_i32, %c0_i32_0 : i32, i32, i32
  }
  func.func @transform_2(%arg0: i32, %arg1: i32) -> (i32, i32, i32) {
    %c0_i32 = arith.constant 0 : i32
    %c0_i32_0 = arith.constant 0 : i32
    %c0_i32_1 = arith.constant 0 : i32
    return %arg0, %c0_i32, %c0_i32_0 : i32, i32, i32
  }
  func.func @transform_3(%arg0: i32, %arg1: i32) -> (i32, i32) {
    %c0_i32 = arith.constant 0 : i32
    %c0_i32_0 = arith.constant 0 : i32
    %c0_i32_1 = arith.constant 0 : i32
    return %c0_i32, %c0_i32_0 : i32, i32
  }
  func.func @transform_4(%arg0: i32, %arg1: i32) -> (i32, i32) {
    %c0_i32 = arith.constant 0 : i32
    %c0_i32_0 = arith.constant 0 : i32
    %c0_i32_1 = arith.constant 0 : i32
    return %c0_i32, %c0_i32_0 : i32, i32
  }
  func.func @transform_5(%arg0: i32, %arg1: i32) -> (i32, i32) {
    %c0_i32 = arith.constant 0 : i32
    %c0_i32_0 = arith.constant 0 : i32
    %c0_i32_1 = arith.constant 0 : i32
    return %c0_i32, %c0_i32_0 : i32, i32
  }
  func.func @transform_6(%arg0: i32, %arg1: i32) -> (i32, i32) {
    %c0_i32 = arith.constant 0 : i32
    %c0_i32_0 = arith.constant 0 : i32
    %c0_i32_1 = arith.constant 0 : i32
    return %c0_i32, %c0_i32_0 : i32, i32
  }
  func.func @transform_7(%arg0: i32, %arg1: i32) -> (i32, i32) {
    %c0_i32 = arith.constant 0 : i32
    %c0_i32_0 = arith.constant 0 : i32
    %c0_i32_1 = arith.constant 0 : i32
    return %c0_i32, %c0_i32_0 : i32, i32
  }
  func.func @transform_8(%arg0: i32, %arg1: i32) -> (i32, i32) {
    %c0_i32 = arith.constant 0 : i32
    %c0_i32_0 = arith.constant 0 : i32
    %c0_i32_1 = arith.constant 0 : i32
    return %c0_i32, %c0_i32_0 : i32, i32
  }
  func.func @transform_9(%arg0: i32, %arg1: i32) -> (i32, i32) {
    %c0_i32 = arith.constant 0 : i32
    %c0_i32_0 = arith.constant 0 : i32
    %c0_i32_1 = arith.constant 0 : i32
    return %c0_i32, %c0_i32_0 : i32, i32
  }
  func.func @transform_10(%arg0: i32, %arg1: i32) -> (i32, i32) {
    %c0_i32 = arith.constant 0 : i32
    %c0_i32_0 = arith.constant 0 : i32
    %c0_i32_1 = arith.constant 0 : i32
    return %c0_i32, %c0_i32_0 : i32, i32
  }
  func.func @transform_11(%arg0: i32, %arg1: i32) -> (i32, i32) {
    %c0_i32 = arith.constant 0 : i32
    %c0_i32_0 = arith.constant 0 : i32
    %c0_i32_1 = arith.constant 0 : i32
    return %c0_i32, %c0_i32_0 : i32, i32
  }
  func.func @transform_12(%arg0: i32, %arg1: i32) -> (i32, i32) {
    %c0_i32 = arith.constant 0 : i32
    %c0_i32_0 = arith.constant 0 : i32
    %c0_i32_1 = arith.constant 0 : i32
    return %c0_i32, %c0_i32_0 : i32, i32
  }
  func.func @transform_13(%arg0: i32, %arg1: i32) -> (i32, i32) {
    %c0_i32 = arith.constant 0 : i32
    %c0_i32_0 = arith.constant 0 : i32
    %c0_i32_1 = arith.constant 0 : i32
    return %c0_i32, %c0_i32_0 : i32, i32
  }
  func.func @transform_14(%arg0: i32, %arg1: i32) -> (i32, i32) {
    %c0_i32 = arith.constant 0 : i32
    %c0_i32_0 = arith.constant 0 : i32
    %c0_i32_1 = arith.constant 0 : i32
    return %c0_i32, %c0_i32_0 : i32, i32
  }
  func.func @transform_15(%arg0: i32, %arg1: i32) -> (i32, i32) {
    %c0_i32 = arith.constant 0 : i32
    %c0_i32_0 = arith.constant 0 : i32
    %c0_i32_1 = arith.constant 0 : i32
    return %c0_i32, %c0_i32_0 : i32, i32
  }
  func.func @transform_16(%arg0: i32, %arg1: i32) -> (i32, i32) {
    %c0_i32 = arith.constant 0 : i32
    %c0_i32_0 = arith.constant 0 : i32
    %c0_i32_1 = arith.constant 0 : i32
    return %c0_i32, %c0_i32_0 : i32, i32
  }
  func.func @transform_17(%arg0: i32, %arg1: i32) -> (i32, i32) {
    %c0_i32 = arith.constant 0 : i32
    %c0_i32_0 = arith.constant 0 : i32
    %c0_i32_1 = arith.constant 0 : i32
    return %c0_i32, %c0_i32_0 : i32, i32
  }
  func.func @transform_18(%arg0: i32, %arg1: i32) -> (i32, i32) {
    %c0_i32 = arith.constant 0 : i32
    %c0_i32_0 = arith.constant 0 : i32
    %c0_i32_1 = arith.constant 0 : i32
    return %c0_i32, %c0_i32_0 : i32, i32
  }
  func.func @transform_19(%arg0: i32, %arg1: i32) -> (i32, i32) {
    %c0_i32 = arith.constant 0 : i32
    %c0_i32_0 = arith.constant 0 : i32
    %c0_i32_1 = arith.constant 0 : i32
    return %c0_i32, %c0_i32_0 : i32, i32
  }
  func.func @transform_20(%arg0: i32, %arg1: i32) -> (i32, i32) {
    %c0_i32 = arith.constant 0 : i32
    %c0_i32_0 = arith.constant 0 : i32
    %c0_i32_1 = arith.constant 0 : i32
    return %c0_i32, %c0_i32_0 : i32, i32
  }
  func.func @transform_21(%arg0: i32, %arg1: i32) -> (i32, i32, i32) {
    %c0_i32 = arith.constant 0 : i32
    %c0_i32_0 = arith.constant 0 : i32
    %c0_i32_1 = arith.constant 0 : i32
    return %arg0, %c0_i32, %c0_i32_0 : i32, i32, i32
  }
}

</mosaic_0001>

<llo_original>
// kernel: tpu_custom_call.1
$region0: #{tpu_custom_call.1}
  #allocation0 [shape = 'u32[]', space=smem, size = 0x4, offset = 0x4, fixed_abs, tag = 'smem constant byte address 0x4 - core index']
  #allocation1 [shape = 'u32[144,128]{1,0:T(1,128)}', space=vmem, size = 0x12000, scoped, tag = 'internal scratch']
  #allocation2 [shape = 'f32[16,128]{1,0:T(8,128)}', space=vmem, size = 0x2000, scoped, tag = 'scratch operand']
  #allocation3 [shape = 'f32[16,128]{1,0:T(8,128)}', space=vmem, size = 0x2000, scoped, tag = 'scratch operand']
  #allocation4 [shape = 'f32[16,384]{1,0:T(8,128)}', space=vmem, size = 0x6000, scoped, tag = 'scratch operand']
  #allocation5 [shape = 'f32[16,96]{1,0:T(8,128)}', space=vmem, size = 0x2000, scoped, tag = 'scratch operand']
  #allocation6 [shape = 'f32[16,128]{1,0:T(8,128)}', space=vmem, size = 0x2000, scoped, tag = 'scratch operand']
  %s0 = inlined_call_operand.vmem [shape: f32[2,16,128], index: 0, kind: input, shape index: {}]
  %s1 = inlined_call_operand.hbm [shape: f32[2,16,128], index: 1, kind: input, shape index: {}]
  %s2 = inlined_call_operand.hbm [shape: f32[2,16,128], index: 2, kind: input, shape index: {}]
  %s3 = inlined_call_operand.hbm [shape: bf16[128,256], index: 3, kind: input, shape index: {}]
  %s4 = inlined_call_operand.hbm [shape: f32[1,256], index: 4, kind: input, shape index: {}]
  %s5 = inlined_call_operand.hbm [shape: bf16[128,128], index: 5, kind: input, shape index: {}]
  %s6 = inlined_call_operand.hbm [shape: f32[1,128], index: 6, kind: input, shape index: {}]
  %s7 = inlined_call_operand.hbm [shape: bf16[128,128], index: 7, kind: input, shape index: {}]
  %s8 = inlined_call_operand.hbm [shape: f32[1,128], index: 8, kind: input, shape index: {}]
  %s9 = inlined_call_operand.hbm [shape: bf16[128,128], index: 9, kind: input, shape index: {}]
  %s10 = inlined_call_operand.hbm [shape: f32[1,128], index: 10, kind: input, shape index: {}]
  %s11 = inlined_call_operand.vmem [shape: bf16[128,96], index: 11, kind: input, shape index: {}]
  %s12 = inlined_call_operand.hbm [shape: f32[1,96], index: 12, kind: input, shape index: {}]
  %s13 = inlined_call_operand.hbm [shape: bf16[128,128], index: 13, kind: input, shape index: {}]
  %s14 = inlined_call_operand.hbm [shape: f32[1,128], index: 14, kind: input, shape index: {}]
  %s15 = inlined_call_operand.vmem [shape: bf16[128,256], index: 15, kind: input, shape index: {}]
  %s16 = inlined_call_operand.vmem [shape: f32[1,256], index: 16, kind: input, shape index: {}]
  %s17 = inlined_call_operand.hbm [shape: bf16[256,128], index: 17, kind: input, shape index: {}]
  %s18 = inlined_call_operand.vmem [shape: f32[1,128], index: 18, kind: input, shape index: {}]
  %s19 = inlined_call_operand.vmem [shape: f32[3,128], index: 19, kind: input, shape index: {}]
  %s20 = inlined_call_operand.vmem [shape: f32[3,128], index: 20, kind: input, shape index: {}]
  %s21 = inlined_call_operand.hbm [shape: f32[2,16,128], index: 21, kind: output, shape index: {}]
  %s22 = sld [smem:[#allocation0]]
  $region181: #{tpu_custom_call.1} parent=0
    _
  %s24 = ssub.s32 1, %s22
  %s25 = scalar_select 0, %s24, %s22
  $region1: #{tpu_custom_call.1} parent=0
    #allocation7 [shape = 'u8[16384]{0}', space=vmem, size = 0x4000, scoped, tag = 'input window, operand 1']
    #allocation8 [shape = 's32[2]{0}', space=sflag, size = 0x8, scoped, tag = 'scoped memory for tpu_custom_call.1']
    #allocation9 [shape = 's32[2]{0}', space=sflag, size = 0x8, scoped, tag = 'scoped memory for tpu_custom_call.1']
    #allocation10 [shape = 'u8[16384]{0}', space=vmem, size = 0x4000, scoped, tag = 'input window, operand 2']
    #allocation11 [shape = 's32[2]{0}', space=sflag, size = 0x8, scoped, tag = 'scoped memory for tpu_custom_call.1']
    #allocation12 [shape = 'u8[65536]{0}', space=vmem, size = 0x10000, scoped, tag = 'input window, operand 3, single buffered']
    #allocation13 [shape = 'u8[1024]{0}', space=vmem, size = 0x400, scoped, tag = 'input window, operand 4, single buffered']
    #allocation14 [shape = 's32[1]{0}', space=sflag, size = 0x4, scoped, tag = 'scoped memory for tpu_custom_call.1']
    #allocation15 [shape = 'u8[32768]{0}', space=vmem, size = 0x8000, scoped, tag = 'input window, operand 5, single buffered']
    #allocation16 [shape = 'u8[512]{0}', space=vmem, size = 0x400, scoped, tag = 'input window, operand 6, single buffered']
    #allocation17 [shape = 's32[1]{0}', space=sflag, size = 0x4, scoped, tag = 'scoped memory for tpu_custom_call.1']
    #allocation18 [shape = 'u8[32768]{0}', space=vmem, size = 0x8000, scoped, tag = 'input window, operand 7, single buffered']
    #allocation19 [shape = 'u8[512]{0}', space=vmem, size = 0x400, scoped, tag = 'input window, operand 8, single buffered']
    #allocation20 [shape = 's32[1]{0}', space=sflag, size = 0x4, scoped, tag = 'scoped memory for tpu_custom_call.1']
    #allocation21 [shape = 'u8[32768]{0}', space=vmem, size = 0x8000, scoped, tag = 'input window, operand 9, single buffered']
    #allocation22 [shape = 'u8[512]{0}', space=vmem, size = 0x400, scoped, tag = 'input window, operand 10, single buffered']
    #allocation23 [shape = 's32[1]{0}', space=sflag, size = 0x4, scoped, tag = 'scoped memory for tpu_custom_call.1']
    #allocation24 [shape = 'u8[512]{0}', space=vmem, size = 0x400, scoped, tag = 'input window, operand 12, single buffered']
    #allocation25 [shape = 'u8[32768]{0}', space=vmem, size = 0x8000, scoped, tag = 'input window, operand 13, single buffered']
    #allocation26 [shape = 's32[1]{0}', space=sflag, size = 0x4, scoped, tag = 'scoped memory for tpu_custom_call.1']
    #allocation27 [shape = 'u8[512]{0}', space=vmem, size = 0x400, scoped, tag = 'input window, operand 14, single buffered']
    #allocation28 [shape = 'u8[65536]{0}', space=vmem, size = 0x10000, scoped, tag = 'input window, operand 17, single buffered']
    #allocation29 [shape = 's32[1]{0}', space=sflag, size = 0x4, scoped, tag = 'scoped memory for tpu_custom_call.1']
    #allocation30 [shape = 'u8[16384]{0}', space=vmem, size = 0x4000, scoped, tag = 'output window, operand 0']
    %26 = vsyncpa [#allocation8], 0
    %s27 = scalar_lea.sflag [#allocation8], 1
    %28 = vsyncpa %s27, 0
    %29 = vsyncpa [#allocation11], 0
    %s30 = scalar_lea.sflag [#allocation11], 1
    %31 = vsyncpa %s30, 0
    %32 = vsyncpa [#allocation14], 0
    %33 = vsyncpa [#allocation17], 0
    %34 = vsyncpa [#allocation20], 0
    %35 = vsyncpa [#allocation23], 0
    %36 = vsyncpa [#allocation26], 0
    %37 = vsyncpa [#allocation29], 0
    %38 = vsyncpa [#allocation9], 0
    %s39 = scalar_lea.sflag [#allocation9], 1
    %40 = vsyncpa %s39, 0
    loop: start=0, step=1, limit=4
    $region2: #{tpu_custom_call.1} parent=1 // loop_pre_header
      _
    $region3: #{tpu_custom_call.1} parent=1 // loop_header
      %s42 = sphi 0, %s46
      %p43 = scmp.ge.s32.totalorder %s42, 4
      %s49 = sphi 0, %s61
      %s50 = sphi 0, %s57
      %s51 = sphi 0, %s49
      %s52 = sphi 0, %s50
      %s53 = sphi 0, %s51
      %s54 = sphi 0, %s52
      %s64 = sphi 0, %s66
      %s67 = sphi 0, %s64
      %s68 = sphi 0, %s67
      %s84 = sphi 0, %s68
      %s90 = sphi 0, %s92
      %s93 = sphi 0, %s90
      %s94 = sphi 0, %s93
      %s110 = sphi 0, %s94
      %s116 = sphi 0, %s118
      %s119 = sphi 0, %s116
      %s120 = sphi 0, %s119
      %s136 = sphi 0, %s120
      %s140 = sphi 0, %s140
      %s142 = sphi 0, %s140
      %s143 = sphi 0, %s142
      %s157 = sphi 0, %s143
      %s161 = sphi 0, %s161
      %s163 = sphi 0, %s161
      %s164 = sphi 0, %s163
      %s178 = sphi 0, %s164
      %s182 = sphi 0, %s182
      %s184 = sphi 0, %s182
      %s185 = sphi 0, %s184
      %s199 = sphi 0, %s185
      %s203 = sphi 0, %s203
      %s205 = sphi 0, %s203
      %s206 = sphi 0, %s205
      %s220 = sphi 0, %s206
      %s224 = sphi 0, %s224
      %s226 = sphi 0, %s224
      %s227 = sphi 0, %s226
      %s241 = sphi 0, %s227
      %s245 = sphi 0, %s245
      %s247 = sphi 0, %s245
      %s248 = sphi 0, %s247
      %s262 = sphi 0, %s248
      %s266 = sphi 0, %s266
      %s268 = sphi 0, %s266
      %s269 = sphi 0, %s268
      %s283 = sphi 0, %s269
      %s287 = sphi 0, %s287
      %s289 = sphi 0, %s287
      %s290 = sphi 0, %s289
      %s304 = sphi 0, %s290
      %s308 = sphi 0, %s308
      %s310 = sphi 0, %s308
      %s311 = sphi 0, %s310
      %s325 = sphi 0, %s311
      %s329 = sphi 0, %s329
      %s331 = sphi 0, %s329
      %s332 = sphi 0, %s331
      %s346 = sphi 0, %s332
      %s350 = sphi 0, %s350
      %s352 = sphi 0, %s350
      %s353 = sphi 0, %s352
      %s367 = sphi 0, %s353
      %s371 = sphi 0, %s371
      %s373 = sphi 0, %s371
      %s374 = sphi 0, %s373
      %s388 = sphi 0, %s374
      %s392 = sphi 0, %s392
      %s394 = sphi 0, %s392
      %s395 = sphi 0, %s394
      %s409 = sphi 0, %s395
      %s413 = sphi 0, %s413
      %s415 = sphi 0, %s413
      %s416 = sphi 0, %s415
      %s430 = sphi 0, %s416
      %s434 = sphi 0, %s434
      %s436 = sphi 0, %s434
      %s437 = sphi 0, %s436
      %s451 = sphi 0, %s437
      %s455 = sphi 0, %s455
      %s457 = sphi 0, %s455
      %s458 = sphi 0, %s457
      %s472 = sphi 0, %s458
      %s476 = sphi 0, %s476
      %s478 = sphi 0, %s476
      %s479 = sphi 0, %s478
      %s493 = sphi 0, %s479
      %s497 = sphi 0, %s497
      %s499 = sphi 0, %s497
      %s500 = sphi 0, %s499
      %s514 = sphi 0, %s500
      %s520 = sphi 0, %s522
      %s523 = sphi 0, %s520
      %s524 = sphi 0, %s523
      %s540 = sphi 0, %s524
    $region4: #{tpu_custom_call.1} parent=1 // loop_header_branch
      %45 = sbr.rel (%p43) target = $region8
    $region5: #{tpu_custom_call.1} parent=1 // loop_body
      %s47 = ssub.s32 %s42, 1
      %s48 = ssub.s32 %s42, 2
      %s55 = sadd.s32 1, %s50
      %p56 = scmp.ge.s32.totalorder %s55, 1
      %s57 = scalar_select %p56, 0, %s55
      %s58 = sadd.s32 1, %s49
      %s59 = scalar_select %p56, %s58, %s49
      %p60 = scmp.ge.s32.totalorder %s59, 2
      %s61 = scalar_select %p60, 0, %s59
      %s62 = ssub.s32 %s49, %s61
      %p63 = scmp.eq.s32.totalorder %s62, 0
      %s65 = sadd.s32 %s64, 1
      %s66 = scalar_select %p63, %s64, %s65
      %p69 = pneg %p63
      %p70 = scmp.eq.s32.totalorder %s42, 1
      %p71 = por %p69, %p70
      %p72 = scmp.ne.s32.totalorder %s64, %s67
      %p73 = scmp.eq.s32.totalorder %s42, 0
      %p74 = por %p72, %p73
      %p75 = scmp.ne.s32.totalorder %s64, %s67
      %p76 = scmp.eq.s32.totalorder %s47, 1
      %p77 = por %p75, %p76
      %p78 = scmp.ne.s32.totalorder %s67, %s68
      %p79 = scmp.eq.s32.totalorder %s47, 0
      %p80 = por %p78, %p79
      %p81 = scmp.ne.s32.totalorder %s67, %s68
      %p82 = scmp.eq.s32.totalorder %s48, 1
      %p83 = por %p81, %p82
      %p85 = scmp.ne.s32.totalorder %s68, %s84
      %p86 = scmp.eq.s32.totalorder %s48, 0
      %p87 = por %p85, %p86
      %s88 = ssub.s32 %s49, %s61
      %p89 = scmp.eq.s32.totalorder %s88, 0
      %s91 = sadd.s32 %s90, 1
      %s92 = scalar_select %p89, %s90, %s91
      %p95 = pneg %p89
      %p96 = scmp.eq.s32.totalorder %s42, 1
      %p97 = por %p95, %p96
      %p98 = scmp.ne.s32.totalorder %s90, %s93
      %p99 = scmp.eq.s32.totalorder %s42, 0
      %p100 = por %p98, %p99
      %p101 = scmp.ne.s32.totalorder %s90, %s93
      %p102 = scmp.eq.s32.totalorder %s47, 1
      %p103 = por %p101, %p102
      %p104 = scmp.ne.s32.totalorder %s93, %s94
      %p105 = scmp.eq.s32.totalorder %s47, 0
      %p106 = por %p104, %p105
      %p107 = scmp.ne.s32.totalorder %s93, %s94
      %p108 = scmp.eq.s32.totalorder %s48, 1
      %p109 = por %p107, %p108
      %p111 = scmp.ne.s32.totalorder %s94, %s110
      %p112 = scmp.eq.s32.totalorder %s48, 0
      %p113 = por %p111, %p112
      %s114 = ssub.s32 %s49, %s61
      %p115 = scmp.eq.s32.totalorder %s114, 0
      %s117 = sadd.s32 %s116, 1
      %s118 = scalar_select %p115, %s116, %s117
      %p121 = pneg %p115
      %p122 = scmp.eq.s32.totalorder %s42, 1
      %p123 = por %p121, %p122
      %p124 = scmp.ne.s32.totalorder %s116, %s119
      %p125 = scmp.eq.s32.totalorder %s42, 0
      %p126 = por %p124, %p125
      %p127 = scmp.ne.s32.totalorder %s116, %s119
      %p128 = scmp.eq.s32.totalorder %s47, 1
      %p129 = por %p127, %p128
      %p130 = scmp.ne.s32.totalorder %s119, %s120
      %p131 = scmp.eq.s32.totalorder %s47, 0
      %p132 = por %p130, %p131
      %p133 = scmp.ne.s32.totalorder %s119, %s120
      %p134 = scmp.eq.s32.totalorder %s48, 1
      %p135 = por %p133, %p134
      %p137 = scmp.ne.s32.totalorder %s120, %s136
      %p138 = scmp.eq.s32.totalorder %s48, 0
      %p139 = por %p137, %p138
      %s141 = sadd.s32 %s140, 1
      %p144 = scmp.eq.s32.totalorder %s42, 1
      %p145 = scmp.ne.s32.totalorder %s140, %s142
      %p146 = scmp.eq.s32.totalorder %s42, 0
      %p147 = por %p145, %p146
      %p148 = scmp.ne.s32.totalorder %s140, %s142
      %p149 = scmp.eq.s32.totalorder %s47, 1
      %p150 = por %p148, %p149
      %p151 = scmp.ne.s32.totalorder %s142, %s143
      %p152 = scmp.eq.s32.totalorder %s47, 0
      %p153 = por %p151, %p152
      %p154 = scmp.ne.s32.totalorder %s142, %s143
      %p155 = scmp.eq.s32.totalorder %s48, 1
      %p156 = por %p154, %p155
      %p158 = scmp.ne.s32.totalorder %s143, %s157
      %p159 = scmp.eq.s32.totalorder %s48, 0
      %p160 = por %p158, %p159
      %s162 = sadd.s32 %s161, 1
      %p165 = scmp.eq.s32.totalorder %s42, 1
      %p166 = scmp.ne.s32.totalorder %s161, %s163
      %p167 = scmp.eq.s32.totalorder %s42, 0
      %p168 = por %p166, %p167
      %p169 = scmp.ne.s32.totalorder %s161, %s163
      %p170 = scmp.eq.s32.totalorder %s47, 1
      %p171 = por %p169, %p170
      %p172 = scmp.ne.s32.totalorder %s163, %s164
      %p173 = scmp.eq.s32.totalorder %s47, 0
      %p174 = por %p172, %p173
      %p175 = scmp.ne.s32.totalorder %s163, %s164
      %p176 = scmp.eq.s32.totalorder %s48, 1
      %p177 = por %p175, %p176
      %p179 = scmp.ne.s32.totalorder %s164, %s178
      %p180 = scmp.eq.s32.totalorder %s48, 0
      %p181 = por %p179, %p180
      %s183 = sadd.s32 %s182, 1
      %p186 = scmp.eq.s32.totalorder %s42, 1
      %p187 = scmp.ne.s32.totalorder %s182, %s184
      %p188 = scmp.eq.s32.totalorder %s42, 0
      %p189 = por %p187, %p188
      %p190 = scmp.ne.s32.totalorder %s182, %s184
      %p191 = scmp.eq.s32.totalorder %s47, 1
      %p192 = por %p190, %p191
      %p193 = scmp.ne.s32.totalorder %s184, %s185
      %p194 = scmp.eq.s32.totalorder %s47, 0
      %p195 = por %p193, %p194
      %p196 = scmp.ne.s32.totalorder %s184, %s185
      %p197 = scmp.eq.s32.totalorder %s48, 1
      %p198 = por %p196, %p197
      %p200 = scmp.ne.s32.totalorder %s185, %s199
      %p201 = scmp.eq.s32.totalorder %s48, 0
      %p202 = por %p200, %p201
      %s204 = sadd.s32 %s203, 1
      %p207 = scmp.eq.s32.totalorder %s42, 1
      %p208 = scmp.ne.s32.totalorder %s203, %s205
      %p209 = scmp.eq.s32.totalorder %s42, 0
      %p210 = por %p208, %p209
      %p211 = scmp.ne.s32.totalorder %s203, %s205
      %p212 = scmp.eq.s32.totalorder %s47, 1
      %p213 = por %p211, %p212
      %p214 = scmp.ne.s32.totalorder %s205, %s206
      %p215 = scmp.eq.s32.totalorder %s47, 0
      %p216 = por %p214, %p215
      %p217 = scmp.ne.s32.totalorder %s205, %s206
      %p218 = scmp.eq.s32.totalorder %s48, 1
      %p219 = por %p217, %p218
      %p221 = scmp.ne.s32.totalorder %s206, %s220
      %p222 = scmp.eq.s32.totalorder %s48, 0
      %p223 = por %p221, %p222
      %s225 = sadd.s32 %s224, 1
      %p228 = scmp.eq.s32.totalorder %s42, 1
      %p229 = scmp.ne.s32.totalorder %s224, %s226
      %p230 = scmp.eq.s32.totalorder %s42, 0
      %p231 = por %p229, %p230
      %p232 = scmp.ne.s32.totalorder %s224, %s226
      %p233 = scmp.eq.s32.totalorder %s47, 1
      %p234 = por %p232, %p233
      %p235 = scmp.ne.s32.totalorder %s226, %s227
      %p236 = scmp.eq.s32.totalorder %s47, 0
      %p237 = por %p235, %p236
      %p238 = scmp.ne.s32.totalorder %s226, %s227
      %p239 = scmp.eq.s32.totalorder %s48, 1
      %p240 = por %p238, %p239
      %p242 = scmp.ne.s32.totalorder %s227, %s241
      %p243 = scmp.eq.s32.totalorder %s48, 0
      %p244 = por %p242, %p243
      %s246 = sadd.s32 %s245, 1
      %p249 = scmp.eq.s32.totalorder %s42, 1
      %p250 = scmp.ne.s32.totalorder %s245, %s247
      %p251 = scmp.eq.s32.totalorder %s42, 0
      %p252 = por %p250, %p251
      %p253 = scmp.ne.s32.totalorder %s245, %s247
      %p254 = scmp.eq.s32.totalorder %s47, 1
      %p255 = por %p253, %p254
      %p256 = scmp.ne.s32.totalorder %s247, %s248
      %p257 = scmp.eq.s32.totalorder %s47, 0
      %p258 = por %p256, %p257
      %p259 = scmp.ne.s32.totalorder %s247, %s248
      %p260 = scmp.eq.s32.totalorder %s48, 1
      %p261 = por %p259, %p260
      %p263 = scmp.ne.s32.totalorder %s248, %s262
      %p264 = scmp.eq.s32.totalorder %s48, 0
      %p265 = por %p263, %p264
      %s267 = sadd.s32 %s266, 1
      %p270 = scmp.eq.s32.totalorder %s42, 1
      %p271 = scmp.ne.s32.totalorder %s266, %s268
      %p272 = scmp.eq.s32.totalorder %s42, 0
      %p273 = por %p271, %p272
      %p274 = scmp.ne.s32.totalorder %s266, %s268
      %p275 = scmp.eq.s32.totalorder %s47, 1
      %p276 = por %p274, %p275
      %p277 = scmp.ne.s32.totalorder %s268, %s269
      %p278 = scmp.eq.s32.totalorder %s47, 0
      %p279 = por %p277, %p278
      %p280 = scmp.ne.s32.totalorder %s268, %s269
      %p281 = scmp.eq.s32.totalorder %s48, 1
      %p282 = por %p280, %p281
      %p284 = scmp.ne.s32.totalorder %s269, %s283
      %p285 = scmp.eq.s32.totalorder %s48, 0
      %p286 = por %p284, %p285
      %s288 = sadd.s32 %s287, 1
      %p291 = scmp.eq.s32.totalorder %s42, 1
      %p292 = scmp.ne.s32.totalorder %s287, %s289
      %p293 = scmp.eq.s32.totalorder %s42, 0
      %p294 = por %p292, %p293
      %p295 = scmp.ne.s32.totalorder %s287, %s289
      %p296 = scmp.eq.s32.totalorder %s47, 1
      %p297 = por %p295, %p296
      %p298 = scmp.ne.s32.totalorder %s289, %s290
      %p299 = scmp.eq.s32.totalorder %s47, 0
      %p300 = por %p298, %p299
      %p301 = scmp.ne.s32.totalorder %s289, %s290
      %p302 = scmp.eq.s32.totalorder %s48, 1
      %p303 = por %p301, %p302
      %p305 = scmp.ne.s32.totalorder %s290, %s304
      %p306 = scmp.eq.s32.totalorder %s48, 0
      %p307 = por %p305, %p306
      %s309 = sadd.s32 %s308, 1
      %p312 = scmp.eq.s32.totalorder %s42, 1
      %p313 = scmp.ne.s32.totalorder %s308, %s310
      %p314 = scmp.eq.s32.totalorder %s42, 0
      %p315 = por %p313, %p314
      %p316 = scmp.ne.s32.totalorder %s308, %s310
      %p317 = scmp.eq.s32.totalorder %s47, 1
      %p318 = por %p316, %p317
      %p319 = scmp.ne.s32.totalorder %s310, %s311
      %p320 = scmp.eq.s32.totalorder %s47, 0
      %p321 = por %p319, %p320
      %p322 = scmp.ne.s32.totalorder %s310, %s311
      %p323 = scmp.eq.s32.totalorder %s48, 1
      %p324 = por %p322, %p323
      %p326 = scmp.ne.s32.totalorder %s311, %s325
      %p327 = scmp.eq.s32.totalorder %s48, 0
      %p328 = por %p326, %p327
      %s330 = sadd.s32 %s329, 1
      %p333 = scmp.eq.s32.totalorder %s42, 1
      %p334 = scmp.ne.s32.totalorder %s329, %s331
      %p335 = scmp.eq.s32.totalorder %s42, 0
      %p336 = por %p334, %p335
      %p337 = scmp.ne.s32.totalorder %s329, %s331
      %p338 = scmp.eq.s32.totalorder %s47, 1
      %p339 = por %p337, %p338
      %p340 = scmp.ne.s32.totalorder %s331, %s332
      %p341 = scmp.eq.s32.totalorder %s47, 0
      %p342 = por %p340, %p341
      %p343 = scmp.ne.s32.totalorder %s331, %s332
      %p344 = scmp.eq.s32.totalorder %s48, 1
      %p345 = por %p343, %p344
      %p347 = scmp.ne.s32.totalorder %s332, %s346
      %p348 = scmp.eq.s32.totalorder %s48, 0
      %p349 = por %p347, %p348
      %s351 = sadd.s32 %s350, 1
      %p354 = scmp.eq.s32.totalorder %s42, 1
      %p355 = scmp.ne.s32.totalorder %s350, %s352
      %p356 = scmp.eq.s32.totalorder %s42, 0
      %p357 = por %p355, %p356
      %p358 = scmp.ne.s32.totalorder %s350, %s352
      %p359 = scmp.eq.s32.totalorder %s47, 1
      %p360 = por %p358, %p359
      %p361 = scmp.ne.s32.totalorder %s352, %s353
      %p362 = scmp.eq.s32.totalorder %s47, 0
      %p363 = por %p361, %p362
      %p364 = scmp.ne.s32.totalorder %s352, %s353
      %p365 = scmp.eq.s32.totalorder %s48, 1
      %p366 = por %p364, %p365
      %p368 = scmp.ne.s32.totalorder %s353, %s367
      %p369 = scmp.eq.s32.totalorder %s48, 0
      %p370 = por %p368, %p369
      %s372 = sadd.s32 %s371, 1
      %p375 = scmp.eq.s32.totalorder %s42, 1
      %p376 = scmp.ne.s32.totalorder %s371, %s373
      %p377 = scmp.eq.s32.totalorder %s42, 0
      %p378 = por %p376, %p377
      %p379 = scmp.ne.s32.totalorder %s371, %s373
      %p380 = scmp.eq.s32.totalorder %s47, 1
      %p381 = por %p379, %p380
      %p382 = scmp.ne.s32.totalorder %s373, %s374
      %p383 = scmp.eq.s32.totalorder %s47, 0
      %p384 = por %p382, %p383
      %p385 = scmp.ne.s32.totalorder %s373, %s374
      %p386 = scmp.eq.s32.totalorder %s48, 1
      %p387 = por %p385, %p386
      %p389 = scmp.ne.s32.totalorder %s374, %s388
      %p390 = scmp.eq.s32.totalorder %s48, 0
      %p391 = por %p389, %p390
      %s393 = sadd.s32 %s392, 1
      %p396 = scmp.eq.s32.totalorder %s42, 1
      %p397 = scmp.ne.s32.totalorder %s392, %s394
      %p398 = scmp.eq.s32.totalorder %s42, 0
      %p399 = por %p397, %p398
      %p400 = scmp.ne.s32.totalorder %s392, %s394
      %p401 = scmp.eq.s32.totalorder %s47, 1
      %p402 = por %p400, %p401
      %p403 = scmp.ne.s32.totalorder %s394, %s395
      %p404 = scmp.eq.s32.totalorder %s47, 0
      %p405 = por %p403, %p404
      %p406 = scmp.ne.s32.totalorder %s394, %s395
      %p407 = scmp.eq.s32.totalorder %s48, 1
      %p408 = por %p406, %p407
      %p410 = scmp.ne.s32.totalorder %s395, %s409
      %p411 = scmp.eq.s32.totalorder %s48, 0
      %p412 = por %p410, %p411
      %s414 = sadd.s32 %s413, 1
      %p417 = scmp.eq.s32.totalorder %s42, 1
      %p418 = scmp.ne.s32.totalorder %s413, %s415
      %p419 = scmp.eq.s32.totalorder %s42, 0
      %p420 = por %p418, %p419
      %p421 = scmp.ne.s32.totalorder %s413, %s415
      %p422 = scmp.eq.s32.totalorder %s47, 1
      %p423 = por %p421, %p422
      %p424 = scmp.ne.s32.totalorder %s415, %s416
      %p425 = scmp.eq.s32.totalorder %s47, 0
      %p426 = por %p424, %p425
      %p427 = scmp.ne.s32.totalorder %s415, %s416
      %p428 = scmp.eq.s32.totalorder %s48, 1
      %p429 = por %p427, %p428
      %p431 = scmp.ne.s32.totalorder %s416, %s430
      %p432 = scmp.eq.s32.totalorder %s48, 0
      %p433 = por %p431, %p432
      %s435 = sadd.s32 %s434, 1
      %p438 = scmp.eq.s32.totalorder %s42, 1
      %p439 = scmp.ne.s32.totalorder %s434, %s436
      %p440 = scmp.eq.s32.totalorder %s42, 0
      %p441 = por %p439, %p440
      %p442 = scmp.ne.s32.totalorder %s434, %s436
      %p443 = scmp.eq.s32.totalorder %s47, 1
      %p444 = por %p442, %p443
      %p445 = scmp.ne.s32.totalorder %s436, %s437
      %p446 = scmp.eq.s32.totalorder %s47, 0
      %p447 = por %p445, %p446
      %p448 = scmp.ne.s32.totalorder %s436, %s437
      %p449 = scmp.eq.s32.totalorder %s48, 1
      %p450 = por %p448, %p449
      %p452 = scmp.ne.s32.totalorder %s437, %s451
      %p453 = scmp.eq.s32.totalorder %s48, 0
      %p454 = por %p452, %p453
      %s456 = sadd.s32 %s455, 1
      %p459 = scmp.eq.s32.totalorder %s42, 1
      %p460 = scmp.ne.s32.totalorder %s455, %s457
      %p461 = scmp.eq.s32.totalorder %s42, 0
      %p462 = por %p460, %p461
      %p463 = scmp.ne.s32.totalorder %s455, %s457
      %p464 = scmp.eq.s32.totalorder %s47, 1
      %p465 = por %p463, %p464
      %p466 = scmp.ne.s32.totalorder %s457, %s458
      %p467 = scmp.eq.s32.totalorder %s47, 0
      %p468 = por %p466, %p467
      %p469 = scmp.ne.s32.totalorder %s457, %s458
      %p470 = scmp.eq.s32.totalorder %s48, 1
      %p471 = por %p469, %p470
      %p473 = scmp.ne.s32.totalorder %s458, %s472
      %p474 = scmp.eq.s32.totalorder %s48, 0
      %p475 = por %p473, %p474
      %s477 = sadd.s32 %s476, 1
      %p480 = scmp.eq.s32.totalorder %s42, 1
      %p481 = scmp.ne.s32.totalorder %s476, %s478
      %p482 = scmp.eq.s32.totalorder %s42, 0
      %p483 = por %p481, %p482
      %p484 = scmp.ne.s32.totalorder %s476, %s478
      %p485 = scmp.eq.s32.totalorder %s47, 1
      %p486 = por %p484, %p485
      %p487 = scmp.ne.s32.totalorder %s478, %s479
      %p488 = scmp.eq.s32.totalorder %s47, 0
      %p489 = por %p487, %p488
      %p490 = scmp.ne.s32.totalorder %s478, %s479
      %p491 = scmp.eq.s32.totalorder %s48, 1
      %p492 = por %p490, %p491
      %p494 = scmp.ne.s32.totalorder %s479, %s493
      %p495 = scmp.eq.s32.totalorder %s48, 0
      %p496 = por %p494, %p495
      %s498 = sadd.s32 %s497, 1
      %p501 = scmp.eq.s32.totalorder %s42, 1
      %p502 = scmp.ne.s32.totalorder %s497, %s499
      %p503 = scmp.eq.s32.totalorder %s42, 0
      %p504 = por %p502, %p503
      %p505 = scmp.ne.s32.totalorder %s497, %s499
      %p506 = scmp.eq.s32.totalorder %s47, 1
      %p507 = por %p505, %p506
      %p508 = scmp.ne.s32.totalorder %s499, %s500
      %p509 = scmp.eq.s32.totalorder %s47, 0
      %p510 = por %p508, %p509
      %p511 = scmp.ne.s32.totalorder %s499, %s500
      %p512 = scmp.eq.s32.totalorder %s48, 1
      %p513 = por %p511, %p512
      %p515 = scmp.ne.s32.totalorder %s500, %s514
      %p516 = scmp.eq.s32.totalorder %s48, 0
      %p517 = por %p515, %p516
      %s518 = ssub.s32 %s49, %s61
      %p519 = scmp.eq.s32.totalorder %s518, 0
      %s521 = sadd.s32 %s520, 1
      %s522 = scalar_select %p519, %s520, %s521
      %p525 = pneg %p519
      %p526 = scmp.eq.s32.totalorder %s42, 1
      %p527 = por %p525, %p526
      %p528 = scmp.ne.s32.totalorder %s520, %s523
      %p529 = scmp.eq.s32.totalorder %s42, 0
      %p530 = por %p528, %p529
      %p531 = scmp.ne.s32.totalorder %s520, %s523
      %p532 = scmp.eq.s32.totalorder %s47, 1
      %p533 = por %p531, %p532
      %p534 = scmp.ne.s32.totalorder %s523, %s524
      %p535 = scmp.eq.s32.totalorder %s47, 0
      %p536 = por %p534, %p535
      %p537 = scmp.ne.s32.totalorder %s523, %s524
      %p538 = scmp.eq.s32.totalorder %s48, 1
      %p539 = por %p537, %p538
      %p541 = scmp.ne.s32.totalorder %s524, %s540
      %p542 = scmp.eq.s32.totalorder %s48, 0
      %p543 = por %p541, %p542
      %p544 = scmp.le.s32.totalorder 1, %s42
      %p545 = scmp.lt.s32.totalorder %s42, 3
      %p546 = pnand %p544, %p545
      %p547 = pneg %p546
      // Predicated region
      $region9: #{tpu_custom_call.1} parent=5 // pred_check
        _
      $region10: #{tpu_custom_call.1} parent=5 // pred_check_branch
        %549 = sbr.rel (%p546) target = $region12
      $region11: #{tpu_custom_call.1} parent=5 // pred_region
        %s550 = ssub.s32 %s42, 1
        // Predicated region
        $region13: #{tpu_custom_call.1} parent=11 // pred_check
          %p551 = pneg %p153
        $region14: #{tpu_custom_call.1} parent=11 // pred_check_branch
          %553 = sbr.rel (%p551) target = $region16
        $region15: #{tpu_custom_call.1} parent=11 // pred_region
          %s555 = ssub.s32 2048, 2048
          %556 = vsyncadd [#allocation11], %s555
          %s557 = sshll.u32 [#allocation12], 4
          %s558 = int_to_ptr.vmem [resolvable:$true] %s557
          %563 = dma.hbm_to_vmem [thread:$0]  %s3, 2048, %s558, [#allocation11], 128, 128, 8
        $region16: #{tpu_custom_call.1} parent=11 // pred_fallthru
          _
        // Predicated region
        $region17: #{tpu_custom_call.1} parent=11 // pred_check
          %p564 = pneg %p174
        $region18: #{tpu_custom_call.1} parent=11 // pred_check_branch
          %566 = sbr.rel (%p564) target = $region20
        $region19: #{tpu_custom_call.1} parent=11 // pred_region
          %s568 = ssub.s32 32, 32
          %569 = vsyncadd [#allocation14], %s568
          %s571 = sshll.u32 [#allocation13], 4
          %s572 = int_to_ptr.vmem [resolvable:$true] %s571
          %574 = dma.hbm_to_vmem [thread:$0]  %s4, 32, %s572, [#allocation14]
        $region20: #{tpu_custom_call.1} parent=11 // pred_fallthru
          _
        // Predicated region
        $region21: #{tpu_custom_call.1} parent=11 // pred_check
          %p575 = pneg %p195
        $region22: #{tpu_custom_call.1} parent=11 // pred_check_branch
          %577 = sbr.rel (%p575) target = $region24
        $region23: #{tpu_custom_call.1} parent=11 // pred_region
          %s579 = ssub.s32 1024, 1024
          %580 = vsyncadd [#allocation14], %s579
          %s581 = sshll.u32 [#allocation15], 4
          %s582 = int_to_ptr.vmem [resolvable:$true] %s581
          %587 = dma.hbm_to_vmem [thread:$0]  %s5, 1024, %s582, [#allocation14], 64, 64, 4
        $region24: #{tpu_custom_call.1} parent=11 // pred_fallthru
          _
        // Predicated region
        $region25: #{tpu_custom_call.1} parent=11 // pred_check
          %p588 = pneg %p216
        $region26: #{tpu_custom_call.1} parent=11 // pred_check_branch
          %590 = sbr.rel (%p588) target = $region28
        $region27: #{tpu_custom_call.1} parent=11 // pred_region
          %s592 = ssub.s32 16, 16
          %593 = vsyncadd [#allocation17], %s592
          %s595 = sshll.u32 [#allocation16], 4
          %s596 = int_to_ptr.vmem [resolvable:$true] %s595
          %598 = dma.hbm_to_vmem [thread:$0]  %s6, 16, %s596, [#allocation17]
        $region28: #{tpu_custom_call.1} parent=11 // pred_fallthru
          _
        // Predicated region
        $region29: #{tpu_custom_call.1} parent=11 // pred_check
          %p599 = pneg %p237
        $region30: #{tpu_custom_call.1} parent=11 // pred_check_branch
          %601 = sbr.rel (%p599) target = $region32
        $region31: #{tpu_custom_call.1} parent=11 // pred_region
          %s603 = ssub.s32 1024, 1024
          %604 = vsyncadd [#allocation17], %s603
          %s605 = sshll.u32 [#allocation18], 4
          %s606 = int_to_ptr.vmem [resolvable:$true] %s605
          %611 = dma.hbm_to_vmem [thread:$0]  %s7, 1024, %s606, [#allocation17], 64, 64, 4
        $region32: #{tpu_custom_call.1} parent=11 // pred_fallthru
          _
        // Predicated region
        $region33: #{tpu_custom_call.1} parent=11 // pred_check
          %p612 = pneg %p258
        $region34: #{tpu_custom_call.1} parent=11 // pred_check_branch
          %614 = sbr.rel (%p612) target = $region36
        $region35: #{tpu_custom_call.1} parent=11 // pred_region
          %s616 = ssub.s32 16, 16
          %617 = vsyncadd [#allocation20], %s616
          %s619 = sshll.u32 [#allocation19], 4
          %s620 = int_to_ptr.vmem [resolvable:$true] %s619
          %622 = dma.hbm_to_vmem [thread:$0]  %s8, 16, %s620, [#allocation20]
        $region36: #{tpu_custom_call.1} parent=11 // pred_fallthru
          _
        // Predicated region
        $region37: #{tpu_custom_call.1} parent=11 // pred_check
          %p623 = pneg %p279
        $region38: #{tpu_custom_call.1} parent=11 // pred_check_branch
          %625 = sbr.rel (%p623) target = $region40
        $region39: #{tpu_custom_call.1} parent=11 // pred_region
          %s627 = ssub.s32 1024, 1024
          %628 = vsyncadd [#allocation20], %s627
          %s629 = sshll.u32 [#allocation21], 4
          %s630 = int_to_ptr.vmem [resolvable:$true] %s629
          %635 = dma.hbm_to_vmem [thread:$0]  %s9, 1024, %s630, [#allocation20], 64, 64, 4
        $region40: #{tpu_custom_call.1} parent=11 // pred_fallthru
          _
        // Predicated region
        $region41: #{tpu_custom_call.1} parent=11 // pred_check
          %p636 = pneg %p300
        $region42: #{tpu_custom_call.1} parent=11 // pred_check_branch
          %638 = sbr.rel (%p636) target = $region44
        $region43: #{tpu_custom_call.1} parent=11 // pred_region
          %s640 = ssub.s32 16, 16
          %641 = vsyncadd [#allocation23], %s640
          %s643 = sshll.u32 [#allocation22], 4
          %s644 = int_to_ptr.vmem [resolvable:$true] %s643
          %646 = dma.hbm_to_vmem [thread:$0]  %s10, 16, %s644, [#allocation23]
        $region44: #{tpu_custom_call.1} parent=11 // pred_fallthru
          _
        // Predicated region
        $region45: #{tpu_custom_call.1} parent=11 // pred_check
          %p647 = pneg %p321
        $region46: #{tpu_custom_call.1} parent=11 // pred_check_branch
          %649 = sbr.rel (%p647) target = $region48
        $region47: #{tpu_custom_call.1} parent=11 // pred_region
          _
        $region48: #{tpu_custom_call.1} parent=11 // pred_fallthru
          _
        // Predicated region
        $region49: #{tpu_custom_call.1} parent=11 // pred_check
          %p650 = pneg %p342
        $region50: #{tpu_custom_call.1} parent=11 // pred_check_branch
          %652 = sbr.rel (%p650) target = $region52
        $region51: #{tpu_custom_call.1} parent=11 // pred_region
          %s654 = ssub.s32 16, 16
          %655 = vsyncadd [#allocation23], %s654
          %s657 = sshll.u32 [#allocation24], 4
          %s658 = int_to_ptr.vmem [resolvable:$true] %s657
          %660 = dma.hbm_to_vmem [thread:$0]  %s12, 16, %s658, [#allocation23]
        $region52: #{tpu_custom_call.1} parent=11 // pred_fallthru
          _
        // Predicated region
        $region53: #{tpu_custom_call.1} parent=11 // pred_check
          %p661 = pneg %p363
        $region54: #{tpu_custom_call.1} parent=11 // pred_check_branch
          %663 = sbr.rel (%p661) target = $region56
        $region55: #{tpu_custom_call.1} parent=11 // pred_region
          %s665 = ssub.s32 1024, 1024
          %666 = vsyncadd [#allocation26], %s665
          %s667 = sshll.u32 [#allocation25], 4
          %s668 = int_to_ptr.vmem [resolvable:$true] %s667
          %673 = dma.hbm_to_vmem [thread:$0]  %s13, 1024, %s668, [#allocation26], 64, 64, 4
        $region56: #{tpu_custom_call.1} parent=11 // pred_fallthru
          _
        // Predicated region
        $region57: #{tpu_custom_call.1} parent=11 // pred_check
          %p674 = pneg %p384
        $region58: #{tpu_custom_call.1} parent=11 // pred_check_branch
          %676 = sbr.rel (%p674) target = $region60
        $region59: #{tpu_custom_call.1} parent=11 // pred_region
          %s678 = ssub.s32 16, 16
          %679 = vsyncadd [#allocation26], %s678
          %s681 = sshll.u32 [#allocation27], 4
          %s682 = int_to_ptr.vmem [resolvable:$true] %s681
          %684 = dma.hbm_to_vmem [thread:$0]  %s14, 16, %s682, [#allocation26]
        $region60: #{tpu_custom_call.1} parent=11 // pred_fallthru
          _
        // Predicated region
        $region61: #{tpu_custom_call.1} parent=11 // pred_check
          %p685 = pneg %p405
        $region62: #{tpu_custom_call.1} parent=11 // pred_check_branch
          %687 = sbr.rel (%p685) target = $region64
        $region63: #{tpu_custom_call.1} parent=11 // pred_region
          _
        $region64: #{tpu_custom_call.1} parent=11 // pred_fallthru
          _
        // Predicated region
        $region65: #{tpu_custom_call.1} parent=11 // pred_check
          %p688 = pneg %p426
        $region66: #{tpu_custom_call.1} parent=11 // pred_check_branch
          %690 = sbr.rel (%p688) target = $region68
        $region67: #{tpu_custom_call.1} parent=11 // pred_region
          _
        $region68: #{tpu_custom_call.1} parent=11 // pred_fallthru
          _
        // Predicated region
        $region69: #{tpu_custom_call.1} parent=11 // pred_check
          %p691 = pneg %p447
        $region70: #{tpu_custom_call.1} parent=11 // pred_check_branch
          %693 = sbr.rel (%p691) target = $region72
        $region71: #{tpu_custom_call.1} parent=11 // pred_region
          %s695 = ssub.s32 2048, 2048
          %696 = vsyncadd [#allocation29], %s695
          %s697 = sshll.u32 [#allocation28], 4
          %s698 = int_to_ptr.vmem [resolvable:$true] %s697
          %703 = dma.hbm_to_vmem [thread:$0]  %s17, 2048, %s698, [#allocation29], 64, 64, 4
        $region72: #{tpu_custom_call.1} parent=11 // pred_fallthru
          _
        // Predicated region
        $region73: #{tpu_custom_call.1} parent=11 // pred_check
          %p704 = pneg %p468
        $region74: #{tpu_custom_call.1} parent=11 // pred_check_branch
          %706 = sbr.rel (%p704) target = $region76
        $region75: #{tpu_custom_call.1} parent=11 // pred_region
          _
        $region76: #{tpu_custom_call.1} parent=11 // pred_fallthru
          _
        // Predicated region
        $region77: #{tpu_custom_call.1} parent=11 // pred_check
          %p707 = pneg %p489
        $region78: #{tpu_custom_call.1} parent=11 // pred_check_branch
          %709 = sbr.rel (%p707) target = $region80
        $region79: #{tpu_custom_call.1} parent=11 // pred_region
          _
        $region80: #{tpu_custom_call.1} parent=11 // pred_fallthru
          _
        // Predicated region
        $region81: #{tpu_custom_call.1} parent=11 // pred_check
          %p710 = pneg %p510
        $region82: #{tpu_custom_call.1} parent=11 // pred_check_branch
          %712 = sbr.rel (%p710) target = $region84
        $region83: #{tpu_custom_call.1} parent=11 // pred_region
          _
        $region84: #{tpu_custom_call.1} parent=11 // pred_fallthru
          _
      $region12: #{tpu_custom_call.1} parent=5 // pred_fallthru
        _
      %p713 = scmp.lt.s32.totalorder %s42, 2
      // Predicated region
      $region85: #{tpu_custom_call.1} parent=5 // pred_check
        %p714 = pneg %p713
      $region86: #{tpu_custom_call.1} parent=5 // pred_check_branch
        %716 = sbr.rel (%p714) target = $region88
      $region87: #{tpu_custom_call.1} parent=5 // pred_region
        // Predicated region
        $region89: #{tpu_custom_call.1} parent=87 // pred_check
          %p717 = pneg %p74
        $region90: #{tpu_custom_call.1} parent=87 // pred_check_branch
          %719 = sbr.rel (%p717) target = $region92
        $region91: #{tpu_custom_call.1} parent=87 // pred_region
          %p720 = scmp.lt.s32.totalorder %s49, 1
          %s721 = scalar_select %p720, %s49, 1
          %s722 = smul.addr %s721, 2
          %s723 = smul.addr %s722, 8
          %s724 = scalar_lea.vmem %s0, %s723
        $region92: #{tpu_custom_call.1} parent=87 // pred_fallthru
          _
        // Predicated region
        $region93: #{tpu_custom_call.1} parent=87 // pred_check
          %p725 = pneg %p100
        $region94: #{tpu_custom_call.1} parent=87 // pred_check_branch
          %727 = sbr.rel (%p725) target = $region96
        $region95: #{tpu_custom_call.1} parent=87 // pred_region
          %s728 = sand.u32 %s90, 1
          %s729 = scalar_lea.sflag [#allocation8], %s728
          %s730 = sand.u32 %s90, 1
          %s731 = smul.addr %s730, 16
          %s732 = scalar_lea.vmem [#allocation7], %s731
          %s734 = ssub.s32 256, 256
          %735 = vsyncadd %s729, %s734
          %s736 = smul.addr %s49, 2
          %s737 = smul.addr %s736, 128
          %s738 = scalar_lea.hbm %s1, %s737
          %s739 = sshll.u32 %s732, 4
          %s740 = int_to_ptr.vmem [resolvable:$true] %s739
          %745 = dma.hbm_to_vmem [thread:$0]  %s738, 256, %s740, %s729, 128, 128, 8
        $region96: #{tpu_custom_call.1} parent=87 // pred_fallthru
          _
        // Predicated region
        $region97: #{tpu_custom_call.1} parent=87 // pred_check
          %p746 = pneg %p126
        $region98: #{tpu_custom_call.1} parent=87 // pred_check_branch
          %748 = sbr.rel (%p746) target = $region100
        $region99: #{tpu_custom_call.1} parent=87 // pred_region
          %s749 = sand.u32 %s42, 1
          %s750 = scalar_lea.sflag [#allocation11], %s749
          %s751 = sand.u32 %s116, 1
          %s752 = smul.addr %s751, 16
          %s753 = scalar_lea.vmem [#allocation10], %s752
          %s755 = ssub.s32 256, 256
          %756 = vsyncadd %s750, %s755
          %s757 = smul.addr %s49, 2
          %s758 = smul.addr %s757, 128
          %s759 = scalar_lea.hbm %s2, %s758
          %s760 = sshll.u32 %s753, 4
          %s761 = int_to_ptr.vmem [resolvable:$true] %s760
          %766 = dma.hbm_to_vmem [thread:$0]  %s759, 256, %s761, %s750, 128, 128, 8
        $region100: #{tpu_custom_call.1} parent=87 // pred_fallthru
          _
      $region88: #{tpu_custom_call.1} parent=5 // pred_fallthru
        _
      %p767 = scmp.le.s32.totalorder 1, %s42
      %p768 = scmp.lt.s32.totalorder %s42, 3
      %p769 = pnand %p767, %p768
      %p770 = pneg %p769
      // Predicated region
      $region101: #{tpu_custom_call.1} parent=5 // pred_check
        _
      $region102: #{tpu_custom_call.1} parent=5 // pred_check_branch
        %772 = sbr.rel (%p769) target = $region104
      $region103: #{tpu_custom_call.1} parent=5 // pred_region
        %s773 = ssub.s32 %s42, 1
        %s774 = sand.u32 %s93, 1
        %s775 = scalar_lea.sflag [#allocation8], %s774
        %s776 = sand.u32 %s93, 1
        %s777 = smul.addr %s776, 16
        %s778 = scalar_lea.vmem [#allocation7], %s777
        // Predicated region
        $region105: #{tpu_custom_call.1} parent=103 // pred_check
          %p779 = pneg %p106
        $region106: #{tpu_custom_call.1} parent=103 // pred_check_branch
          %781 = sbr.rel (%p779) target = $region108
        $region107: #{tpu_custom_call.1} parent=103 // pred_region
          %782 = dma.done %s775, 256
        $region108: #{tpu_custom_call.1} parent=103 // pred_fallthru
          _
        %s783 = sand.u32 %s47, 1
        %s784 = scalar_lea.sflag [#allocation11], %s783
        %s785 = sand.u32 %s119, 1
        %s786 = smul.addr %s785, 16
        %s787 = scalar_lea.vmem [#allocation10], %s786
        // Predicated region
        $region109: #{tpu_custom_call.1} parent=103 // pred_check
          %p788 = pneg %p132
        $region110: #{tpu_custom_call.1} parent=103 // pred_check_branch
          %790 = sbr.rel (%p788) target = $region112
        $region111: #{tpu_custom_call.1} parent=103 // pred_region
          %791 = dma.done %s784, 256
        $region112: #{tpu_custom_call.1} parent=103 // pred_fallthru
          _
        // Predicated region
        $region113: #{tpu_custom_call.1} parent=103 // pred_check
          %p792 = pneg %p153
        $region114: #{tpu_custom_call.1} parent=103 // pred_check_branch
          %794 = sbr.rel (%p792) target = $region116
        $region115: #{tpu_custom_call.1} parent=103 // pred_region
          %795 = dma.done [#allocation11], 2048
        $region116: #{tpu_custom_call.1} parent=103 // pred_fallthru
          _
        // Predicated region
        $region117: #{tpu_custom_call.1} parent=103 // pred_check
          %p796 = pneg %p174
        $region118: #{tpu_custom_call.1} parent=103 // pred_check_branch
          %798 = sbr.rel (%p796) target = $region120
        $region119: #{tpu_custom_call.1} parent=103 // pred_region
          %799 = dma.done [#allocation14], 32
        $region120: #{tpu_custom_call.1} parent=103 // pred_fallthru
          _
        // Predicated region
        $region121: #{tpu_custom_call.1} parent=103 // pred_check
          %p800 = pneg %p195
        $region122: #{tpu_custom_call.1} parent=103 // pred_check_branch
          %802 = sbr.rel (%p800) target = $region124
        $region123: #{tpu_custom_call.1} parent=103 // pred_region
          %803 = dma.done [#allocation14], 1024
        $region124: #{tpu_custom_call.1} parent=103 // pred_fallthru
          _
        // Predicated region
        $region125: #{tpu_custom_call.1} parent=103 // pred_check
          %p804 = pneg %p216
        $region126: #{tpu_custom_call.1} parent=103 // pred_check_branch
          %806 = sbr.rel (%p804) target = $region128
        $region127: #{tpu_custom_call.1} parent=103 // pred_region
          %807 = dma.done [#allocation17], 16
        $region128: #{tpu_custom_call.1} parent=103 // pred_fallthru
          _
        // Predicated region
        $region129: #{tpu_custom_call.1} parent=103 // pred_check
          %p808 = pneg %p237
        $region130: #{tpu_custom_call.1} parent=103 // pred_check_branch
          %810 = sbr.rel (%p808) target = $region132
        $region131: #{tpu_custom_call.1} parent=103 // pred_region
          %811 = dma.done [#allocation17], 1024
        $region132: #{tpu_custom_call.1} parent=103 // pred_fallthru
          _
        // Predicated region
        $region133: #{tpu_custom_call.1} parent=103 // pred_check
          %p812 = pneg %p258
        $region134: #{tpu_custom_call.1} parent=103 // pred_check_branch
          %814 = sbr.rel (%p812) target = $region136
        $region135: #{tpu_custom_call.1} parent=103 // pred_region
          %815 = dma.done [#allocation20], 16
        $region136: #{tpu_custom_call.1} parent=103 // pred_fallthru
          _
        // Predicated region
        $region137: #{tpu_custom_call.1} parent=103 // pred_check
          %p816 = pneg %p279
        $region138: #{tpu_custom_call.1} parent=103 // pred_check_branch
          %818 = sbr.rel (%p816) target = $region140
        $region139: #{tpu_custom_call.1} parent=103 // pred_region
          %819 = dma.done [#allocation20], 1024
        $region140: #{tpu_custom_call.1} parent=103 // pred_fallthru
          _
        // Predicated region
        $region141: #{tpu_custom_call.1} parent=103 // pred_check
          %p820 = pneg %p300
        $region142: #{tpu_custom_call.1} parent=103 // pred_check_branch
          %822 = sbr.rel (%p820) target = $region144
        $region143: #{tpu_custom_call.1} parent=103 // pred_region
          %823 = dma.done [#allocation23], 16
        $region144: #{tpu_custom_call.1} parent=103 // pred_fallthru
          _
        // Predicated region
        $region145: #{tpu_custom_call.1} parent=103 // pred_check
          %p824 = pneg %p342
        $region146: #{tpu_custom_call.1} parent=103 // pred_check_branch
          %826 = sbr.rel (%p824) target = $region148
        $region147: #{tpu_custom_call.1} parent=103 // pred_region
          %827 = dma.done [#allocation23], 16
        $region148: #{tpu_custom_call.1} parent=103 // pred_fallthru
          _
        // Predicated region
        $region149: #{tpu_custom_call.1} parent=103 // pred_check
          %p828 = pneg %p363
        $region150: #{tpu_custom_call.1} parent=103 // pred_check_branch
          %830 = sbr.rel (%p828) target = $region152
        $region151: #{tpu_custom_call.1} parent=103 // pred_region
          %831 = dma.done [#allocation26], 1024
        $region152: #{tpu_custom_call.1} parent=103 // pred_fallthru
          _
        // Predicated region
        $region153: #{tpu_custom_call.1} parent=103 // pred_check
          %p832 = pneg %p384
        $region154: #{tpu_custom_call.1} parent=103 // pred_check_branch
          %834 = sbr.rel (%p832) target = $region156
        $region155: #{tpu_custom_call.1} parent=103 // pred_region
          %835 = dma.done [#allocation26], 16
        $region156: #{tpu_custom_call.1} parent=103 // pred_fallthru
          _
        // Predicated region
        $region157: #{tpu_custom_call.1} parent=103 // pred_check
          %p836 = pneg %p447
        $region158: #{tpu_custom_call.1} parent=103 // pred_check_branch
          %838 = sbr.rel (%p836) target = $region160
        $region159: #{tpu_custom_call.1} parent=103 // pred_region
          %839 = dma.done [#allocation29], 2048
        $region160: #{tpu_custom_call.1} parent=103 // pred_fallthru
          _
        %p840 = scmp.lt.s32.totalorder %s51, 1
        %s841 = scalar_select %p840, %s51, 1
        %s842 = smul.addr %s841, 2
        %s843 = smul.addr %s842, 8
        %s844 = scalar_lea.vmem %s0, %s843
        %p845 = pneg %p80
        %p846 = pneg %p77
        %s847 = sand.u32 %s93, 1
        %s848 = scalar_lea.sflag [#allocation8], %s847
        %s849 = sand.u32 %s93, 1
        %s850 = smul.addr %s849, 16
        %s851 = scalar_lea.vmem [#allocation7], %s850
        %p852 = pneg %p106
        %p853 = pneg %p103
        %s854 = sand.u32 %s47, 1
        %s855 = scalar_lea.sflag [#allocation11], %s854
        %s856 = sand.u32 %s119, 1
        %s857 = smul.addr %s856, 16
        %s858 = scalar_lea.vmem [#allocation10], %s857
        %p859 = pneg %p132
        %p860 = pneg %p129
        %p861 = pneg %p153
        %p862 = pneg %p150
        %p863 = pneg %p174
        %p864 = pneg %p171
        %p865 = pneg %p195
        %p866 = pneg %p192
        %p867 = pneg %p216
        %p868 = pneg %p213
        %p869 = pneg %p237
        %p870 = pneg %p234
        %p871 = pneg %p258
        %p872 = pneg %p255
        %p873 = pneg %p279
        %p874 = pneg %p276
        %p875 = pneg %p300
        %p876 = pneg %p297
        %p877 = pneg %p321
        %p878 = pneg %p318
        %p879 = pneg %p342
        %p880 = pneg %p339
        %p881 = pneg %p363
        %p882 = pneg %p360
        %p883 = pneg %p384
        %p884 = pneg %p381
        %p885 = pneg %p405
        %p886 = pneg %p402
        %p887 = pneg %p426
        %p888 = pneg %p423
        %p889 = pneg %p447
        %p890 = pneg %p444
        %p891 = pneg %p468
        %p892 = pneg %p465
        %p893 = pneg %p489
        %p894 = pneg %p486
        %p895 = pneg %p510
        %p896 = pneg %p507
        %p897 = pneg %p536
        %p898 = pneg %p533
        %s899 = sand.u32 %s523, 1
        %s900 = scalar_lea.sflag [#allocation9], %s899
        %s901 = sand.u32 %s523, 1
        %s902 = smul.addr %s901, 16
        %s903 = scalar_lea.vmem [#allocation30], %s902
        %p904 = scmp.lt.s32.totalorder %s51, 1
        %s905 = scalar_select %p904, %s51, 1
        %s906 = smul.addr %s905, 2
        %s907 = smul.addr %s906, 8
        %s908 = scalar_lea.vmem %s0, %s907
        %p910 = scmp.eq.s32.totalorder %s52, 0
        // Predicated region
        $region161: #{tpu_custom_call.1} parent=103 // pred_check
          %p911 = pneg %p910
        $region162: #{tpu_custom_call.1} parent=103 // pred_check_branch
          %913 = sbr.rel (%p911) target = $region164
        $region163: #{tpu_custom_call.1} parent=103 // pred_region
          %v914 = vld [vmem:[%s908] sm:$0xff]
          %v915 = vld [vmem:[%s908 + $0x8] sm:$0xff]
          %916 = vst [vmem:[#allocation2] sm:$0xff] %v914
          %917 = vst [vmem:[#allocation2 + $0x8] sm:$0xff] %v915
          %v918 = vld [vmem:[%s787] sm:$0xff]
          %v919 = vld [vmem:[%s787 + $0x8] sm:$0xff]
          %v920 = vpack.c.bf16 %v919, %v918
          %v921 = vld [vmem:[#allocation21] sm:$0xf]
          %v922 = vld [vmem:[#allocation21 + $0x4] sm:$0xf]
          %v923 = vld [vmem:[#allocation21 + $0x8] sm:$0xf]
          %v924 = vld [vmem:[#allocation21 + $0xc] sm:$0xf]
          %v925 = vld [vmem:[#allocation21 + $0x10] sm:$0xf]
          %v926 = vld [vmem:[#allocation21 + $0x14] sm:$0xf]
          %v927 = vld [vmem:[#allocation21 + $0x18] sm:$0xf]
          %v928 = vld [vmem:[#allocation21 + $0x1c] sm:$0xf]
          %v929 = vld [vmem:[#allocation21 + $0x20] sm:$0xf]
          %v930 = vld [vmem:[#allocation21 + $0x24] sm:$0xf]
          %v931 = vld [vmem:[#allocation21 + $0x28] sm:$0xf]
          %v932 = vld [vmem:[#allocation21 + $0x2c] sm:$0xf]
          %v933 = vld [vmem:[#allocation21 + $0x30] sm:$0xf]
          %v934 = vld [vmem:[#allocation21 + $0x34] sm:$0xf]
          %v935 = vld [vmem:[#allocation21 + $0x38] sm:$0xf]
          %v936 = vld [vmem:[#allocation21 + $0x3c] sm:$0xf]
          %v937 = vld [vmem:[#allocation22] sm:$0x1]
          %v939 = vlaneseq
          %v940 = vshrl.u32 %v939, 7
          %v941 = vsub.s32 0, %v940
          %v942 = vrot.slane %v937, %v941
          %v960 = vunpack.c.l.b16 %v921
          %v961 = vunpack.c.l.b16 %v922
          %v962 = vunpack.c.l.b16 %v923
          %v963 = vunpack.c.l.b16 %v924
          %v964 = vunpack.c.l.b16 %v925
          %v965 = vunpack.c.l.b16 %v926
          %v966 = vunpack.c.l.b16 %v927
          %v967 = vunpack.c.l.b16 %v928
          %v968 = vunpack.c.l.b16 %v929
          %v969 = vunpack.c.l.b16 %v930
          %v970 = vunpack.c.l.b16 %v931
          %v971 = vunpack.c.l.b16 %v932
          %v972 = vunpack.c.l.b16 %v933
          %v973 = vunpack.c.l.b16 %v934
          %v974 = vunpack.c.l.b16 %v935
          %v975 = vunpack.c.l.b16 %v936
          %v976 = vpack.c.b16 %v961, %v960
          %v977 = vpack.c.b16 %v963, %v962
          %v978 = vpack.c.b16 %v965, %v964
          %v979 = vpack.c.b16 %v967, %v966
          %v980 = vpack.c.b16 %v969, %v968
          %v981 = vpack.c.b16 %v971, %v970
          %v982 = vpack.c.b16 %v973, %v972
          %v983 = vpack.c.b16 %v975, %v974
          %992 = vmatprep.subr.bf16.mxu0 0
          %993 = vmatpush1.bf16.msra.mxu0 %v976
          %994 = vmatprep.subr.bf16.mxu0 0
          %995 = vmatpush1.bf16.msra.mxu0 %v977
          %996 = vmatprep.subr.bf16.mxu0 0
          %997 = vmatpush1.bf16.msra.mxu0 %v978
          %998 = vmatprep.subr.bf16.mxu0 0
          %999 = vmatpush1.bf16.msra.mxu0 %v979
          %1000 = vmatprep.subr.bf16.mxu0 0
          %1001 = vmatpush1.bf16.msra.mxu0 %v980
          %1002 = vmatprep.subr.bf16.mxu0 0
          %1003 = vmatpush1.bf16.msra.mxu0 %v981
          %1004 = vmatprep.subr.bf16.mxu0 0
          %1005 = vmatpush1.bf16.msra.mxu0 %v982
          %1006 = vmatprep.subr.bf16.mxu0 0
          %1007 = vmatpush1.bf16.msra.mxu0 %v983
          %1008 = vmatprep.subr.bf16.mxu0 0
          %1009 = vmatpush1.bf16.msra.mxu0 0
          %1010 = vmatprep.subr.bf16.mxu0 0
          %1011 = vmatpush1.bf16.msra.mxu0 0
          %1012 = vmatprep.subr.bf16.mxu0 0
          %1013 = vmatpush1.bf16.msra.mxu0 0
          %1014 = vmatprep.subr.bf16.mxu0 0
          %1015 = vmatpush1.bf16.msra.mxu0 0
          %1016 = vmatprep.subr.bf16.mxu0 0
          %1017 = vmatpush1.bf16.msra.mxu0 0
          %1018 = vmatprep.subr.bf16.mxu0 0
          %1019 = vmatpush1.bf16.msra.mxu0 0
          %1020 = vmatprep.subr.bf16.mxu0 0
          %1021 = vmatpush1.bf16.msra.mxu0 0
          %1022 = vmatprep.subr.bf16.mxu0 0
          %1023 = vmatpush1.bf16.msra.mxu0 0
          %1024 = vmatprep.mubr.bf16.mxu0 0
          %1025 = vmatmul.mubr.bf16.gmra.mrb[0].mxu0 %v920
          %v1026 = vpop.f32.mrb[0].mxu0
          %v1027 = vadd.f32 %v942, %v1026
          %v1028 = vpop.f32.mrb[0].mxu0
          %v1029 = vpop.f32.mrb[0].mxu0
          %v1030 = vadd.f32 %v942, %v1029
          %v1031 = vpop.f32.mrb[0].mxu0
          %1032 = vdwg.mxu0
          %1033 = vst [vmem:[#allocation3] sm:$0xff] %v1027
          %1034 = vst [vmem:[#allocation3 + $0x8] sm:$0xff] %v1030
        $region164: #{tpu_custom_call.1} parent=103 // pred_fallthru
          _
        %v1035 = vld [vmem:[#allocation2] sm:$0xff]
        %v1036 = vld [vmem:[#allocation2 + $0x8] sm:$0xff]
        %v1037 = vld [vmem:[%s778] sm:$0xff]
        %v1038 = vld [vmem:[%s778 + $0x8] sm:$0xff]
        %v1039 = vadd.f32 %v1035, %v1037
        %v1040 = vadd.f32 %v1036, %v1038
        %v1041 = vpack.c.bf16 %v1040, %v1039
        %v1042 = vld [vmem:[#allocation12] sm:$0xff]
        %v1043 = vld [vmem:[#allocation12 + $0x8] sm:$0xff]
        %v1044 = vld [vmem:[#allocation12 + $0x10] sm:$0xff]
        %v1045 = vld [vmem:[#allocation12 + $0x18] sm:$0xff]
        %v1046 = vld [vmem:[#allocation12 + $0x20] sm:$0xff]
        %v1047 = vld [vmem:[#allocation12 + $0x28] sm:$0xff]
        %v1048 = vld [vmem:[#allocation12 + $0x30] sm:$0xff]
        %v1049 = vld [vmem:[#allocation12 + $0x38] sm:$0xff]
        %v1050 = vld [vmem:[#allocation12 + $0x40] sm:$0xff]
        %v1051 = vld [vmem:[#allocation12 + $0x48] sm:$0xff]
        %v1052 = vld [vmem:[#allocation12 + $0x50] sm:$0xff]
        %v1053 = vld [vmem:[#allocation12 + $0x58] sm:$0xff]
        %v1054 = vld [vmem:[#allocation12 + $0x60] sm:$0xff]
        %v1055 = vld [vmem:[#allocation12 + $0x68] sm:$0xff]
        %v1056 = vld [vmem:[#allocation12 + $0x70] sm:$0xff]
        %v1057 = vld [vmem:[#allocation12 + $0x78] sm:$0xff]
        %v1058 = vld [vmem:[#allocation13] sm:$0x3]
        %v1060 = vlaneseq
        %v1061 = vshrl.u32 %v1060, 7
        %v1062 = vsub.s32 0, %v1061
        %v1063 = vrot.slane %v1058, %v1062
        %v1064 = vlaneseq
        %v1065 = vshrl.u32 %v1064, 7
        %v1066 = vsub.s32 1, %v1065
        %v1067 = vrot.slane %v1058, %v1066
        %v1086 = vunpack.c.l.b16 %v1042
        %v1087 = vunpack.c.h.b16 %v1042
        %v1088 = vunpack.c.l.b16 %v1043
        %v1089 = vunpack.c.h.b16 %v1043
        %v1090 = vunpack.c.l.b16 %v1044
        %v1091 = vunpack.c.h.b16 %v1044
        %v1092 = vunpack.c.l.b16 %v1045
        %v1093 = vunpack.c.h.b16 %v1045
        %v1094 = vunpack.c.l.b16 %v1046
        %v1095 = vunpack.c.h.b16 %v1046
        %v1096 = vunpack.c.l.b16 %v1047
        %v1097 = vunpack.c.h.b16 %v1047
        %v1098 = vunpack.c.l.b16 %v1048
        %v1099 = vunpack.c.h.b16 %v1048
        %v1100 = vunpack.c.l.b16 %v1049
        %v1101 = vunpack.c.h.b16 %v1049
        %v1102 = vunpack.c.l.b16 %v1050
        %v1103 = vunpack.c.h.b16 %v1050
        %v1104 = vunpack.c.l.b16 %v1051
        %v1105 = vunpack.c.h.b16 %v1051
        %v1106 = vunpack.c.l.b16 %v1052
        %v1107 = vunpack.c.h.b16 %v1052
        %v1108 = vunpack.c.l.b16 %v1053
        %v1109 = vunpack.c.h.b16 %v1053
        %v1110 = vunpack.c.l.b16 %v1054
        %v1111 = vunpack.c.h.b16 %v1054
        %v1112 = vunpack.c.l.b16 %v1055
        %v1113 = vunpack.c.h.b16 %v1055
        %v1114 = vunpack.c.l.b16 %v1056
        %v1115 = vunpack.c.h.b16 %v1056
        %v1116 = vunpack.c.l.b16 %v1057
        %v1117 = vunpack.c.h.b16 %v1057
        %v1118 = vpack.c.b16 %v1088, %v1086
        %v1119 = vpack.c.b16 %v1089, %v1087
        %v1120 = vpack.c.b16 %v1092, %v1090
        %v1121 = vpack.c.b16 %v1093, %v1091
        %v1122 = vpack.c.b16 %v1096, %v1094
        %v1123 = vpack.c.b16 %v1097, %v1095
        %v1124 = vpack.c.b16 %v1100, %v1098
        %v1125 = vpack.c.b16 %v1101, %v1099
        %v1126 = vpack.c.b16 %v1104, %v1102
        %v1127 = vpack.c.b16 %v1105, %v1103
        %v1128 = vpack.c.b16 %v1108, %v1106
        %v1129 = vpack.c.b16 %v1109, %v1107
        %v1130 = vpack.c.b16 %v1112, %v1110
        %v1131 = vpack.c.b16 %v1113, %v1111
        %v1132 = vpack.c.b16 %v1116, %v1114
        %v1133 = vpack.c.b16 %v1117, %v1115
        %1150 = vmatprep.subr.bf16.mxu0 %v1119
        %1151 = vmatpush1.bf16.msra.mxu0 %v1118
        %1152 = vmatprep.subr.bf16.mxu0 %v1121
        %1153 = vmatpush1.bf16.msra.mxu0 %v1120
        %1154 = vmatprep.subr.bf16.mxu0 %v1123
        %1155 = vmatpush1.bf16.msra.mxu0 %v1122
        %1156 = vmatprep.subr.bf16.mxu0 %v1125
        %1157 = vmatpush1.bf16.msra.mxu0 %v1124
        %1158 = vmatprep.subr.bf16.mxu0 %v1127
        %1159 = vmatpush1.bf16.msra.mxu0 %v1126
        %1160 = vmatprep.subr.bf16.mxu0 %v1129
        %1161 = vmatpush1.bf16.msra.mxu0 %v1128
        %1162 = vmatprep.subr.bf16.mxu0 %v1131
        %1163 = vmatpush1.bf16.msra.mxu0 %v1130
        %1164 = vmatprep.subr.bf16.mxu0 %v1133
        %1165 = vmatpush1.bf16.msra.mxu0 %v1132
        %1166 = vmatprep.subr.bf16.mxu0 0
        %1167 = vmatpush1.bf16.msra.mxu0 0
        %1168 = vmatprep.subr.bf16.mxu0 0
        %1169 = vmatpush1.bf16.msra.mxu0 0
        %1170 = vmatprep.subr.bf16.mxu0 0
        %1171 = vmatpush1.bf16.msra.mxu0 0
        %1172 = vmatprep.subr.bf16.mxu0 0
        %1173 = vmatpush1.bf16.msra.mxu0 0
        %1174 = vmatprep.subr.bf16.mxu0 0
        %1175 = vmatpush1.bf16.msra.mxu0 0
        %1176 = vmatprep.subr.bf16.mxu0 0
        %1177 = vmatpush1.bf16.msra.mxu0 0
        %1178 = vmatprep.subr.bf16.mxu0 0
        %1179 = vmatpush1.bf16.msra.mxu0 0
        %1180 = vmatprep.subr.bf16.mxu0 0
        %1181 = vmatpush1.bf16.msra.mxu0 0
        %1182 = vmatprep.mubr.bf16.mxu0 0
        %1183 = vmatmul.mubr.bf16.gmra.mrb[0].mxu0 %v1041
        %v1184 = vpop.f32.mrb[0].mxu0
        %v1185 = vadd.f32 %v1063, %v1184
        %v1186 = vpop.f32.mrb[0].mxu0
        %v1187 = vadd.f32 %v1067, %v1186
        %v1188 = vpop.f32.mrb[0].mxu0
        %v1189 = vadd.f32 %v1063, %v1188
        %v1190 = vpop.f32.mrb[0].mxu0
        %v1191 = vadd.f32 %v1067, %v1190
        %1192 = vdwg.mxu0
        %1193 = vst [vmem:[#allocation4] sm:$0xff] %v1185
        %1194 = vst [vmem:[#allocation4 + $0x8] sm:$0xff] %v1187
        %1195 = vst [vmem:[#allocation4 + $0x18] sm:$0xff] %v1189
        %1196 = vst [vmem:[#allocation4 + $0x20] sm:$0xff] %v1191
        %v1197 = vpack.c.bf16 %v1036, %v1035
        %v1198 = vld [vmem:[#allocation15] sm:$0xf]
        %v1199 = vld [vmem:[#allocation15 + $0x4] sm:$0xf]
        %v1200 = vld [vmem:[#allocation15 + $0x8] sm:$0xf]
        %v1201 = vld [vmem:[#allocation15 + $0xc] sm:$0xf]
        %v1202 = vld [vmem:[#allocation15 + $0x10] sm:$0xf]
        %v1203 = vld [vmem:[#allocation15 + $0x14] sm:$0xf]
        %v1204 = vld [vmem:[#allocation15 + $0x18] sm:$0xf]
        %v1205 = vld [vmem:[#allocation15 + $0x1c] sm:$0xf]
        %v1206 = vld [vmem:[#allocation15 + $0x20] sm:$0xf]
        %v1207 = vld [vmem:[#allocation15 + $0x24] sm:$0xf]
        %v1208 = vld [vmem:[#allocation15 + $0x28] sm:$0xf]
        %v1209 = vld [vmem:[#allocation15 + $0x2c] sm:$0xf]
        %v1210 = vld [vmem:[#allocation15 + $0x30] sm:$0xf]
        %v1211 = vld [vmem:[#allocation15 + $0x34] sm:$0xf]
        %v1212 = vld [vmem:[#allocation15 + $0x38] sm:$0xf]
        %v1213 = vld [vmem:[#allocation15 + $0x3c] sm:$0xf]
        %v1214 = vld [vmem:[#allocation16] sm:$0x1]
        %v1216 = vlaneseq
        %v1217 = vshrl.u32 %v1216, 7
        %v1218 = vsub.s32 0, %v1217
        %v1219 = vrot.slane %v1214, %v1218
        %v1237 = vunpack.c.l.b16 %v1198
        %v1238 = vunpack.c.l.b16 %v1199
        %v1239 = vunpack.c.l.b16 %v1200
        %v1240 = vunpack.c.l.b16 %v1201
        %v1241 = vunpack.c.l.b16 %v1202
        %v1242 = vunpack.c.l.b16 %v1203
        %v1243 = vunpack.c.l.b16 %v1204
        %v1244 = vunpack.c.l.b16 %v1205
        %v1245 = vunpack.c.l.b16 %v1206
        %v1246 = vunpack.c.l.b16 %v1207
        %v1247 = vunpack.c.l.b16 %v1208
        %v1248 = vunpack.c.l.b16 %v1209
        %v1249 = vunpack.c.l.b16 %v1210
        %v1250 = vunpack.c.l.b16 %v1211
        %v1251 = vunpack.c.l.b16 %v1212
        %v1252 = vunpack.c.l.b16 %v1213
        %v1253 = vpack.c.b16 %v1238, %v1237
        %v1254 = vpack.c.b16 %v1240, %v1239
        %v1255 = vpack.c.b16 %v1242, %v1241
        %v1256 = vpack.c.b16 %v1244, %v1243
        %v1257 = vpack.c.b16 %v1246, %v1245
        %v1258 = vpack.c.b16 %v1248, %v1247
        %v1259 = vpack.c.b16 %v1250, %v1249
        %v1260 = vpack.c.b16 %v1252, %v1251
        %1269 = vmatprep.subr.bf16.mxu0 0
        %1270 = vmatpush1.bf16.msra.mxu0 %v1253
        %1271 = vmatprep.subr.bf16.mxu0 0
        %1272 = vmatpush1.bf16.msra.mxu0 %v1254
        %1273 = vmatprep.subr.bf16.mxu0 0
        %1274 = vmatpush1.bf16.msra.mxu0 %v1255
        %1275 = vmatprep.subr.bf16.mxu0 0
        %1276 = vmatpush1.bf16.msra.mxu0 %v1256
        %1277 = vmatprep.subr.bf16.mxu0 0
        %1278 = vmatpush1.bf16.msra.mxu0 %v1257
        %1279 = vmatprep.subr.bf16.mxu0 0
        %1280 = vmatpush1.bf16.msra.mxu0 %v1258
        %1281 = vmatprep.subr.bf16.mxu0 0
        %1282 = vmatpush1.bf16.msra.mxu0 %v1259
        %1283 = vmatprep.subr.bf16.mxu0 0
        %1284 = vmatpush1.bf16.msra.mxu0 %v1260
        %1285 = vmatprep.subr.bf16.mxu0 0
        %1286 = vmatpush1.bf16.msra.mxu0 0
        %1287 = vmatprep.subr.bf16.mxu0 0
        %1288 = vmatpush1.bf16.msra.mxu0 0
        %1289 = vmatprep.subr.bf16.mxu0 0
        %1290 = vmatpush1.bf16.msra.mxu0 0
        %1291 = vmatprep.subr.bf16.mxu0 0
        %1292 = vmatpush1.bf16.msra.mxu0 0
        %1293 = vmatprep.subr.bf16.mxu0 0
        %1294 = vmatpush1.bf16.msra.mxu0 0
        %1295 = vmatprep.subr.bf16.mxu0 0
        %1296 = vmatpush1.bf16.msra.mxu0 0
        %1297 = vmatprep.subr.bf16.mxu0 0
        %1298 = vmatpush1.bf16.msra.mxu0 0
        %1299 = vmatprep.subr.bf16.mxu0 0
        %1300 = vmatpush1.bf16.msra.mxu0 0
        %1301 = vmatprep.mubr.bf16.mxu0 0
        %1302 = vmatmul.mubr.bf16.gmra.mrb[0].mxu0 %v1197
        %v1303 = vpop.f32.mrb[0].mxu0
        %v1304 = vadd.f32 %v1219, %v1303
        %v1305 = vpop.f32.mrb[0].mxu0
        %v1306 = vpop.f32.mrb[0].mxu0
        %v1307 = vadd.f32 %v1219, %v1306
        %v1308 = vpop.f32.mrb[0].mxu0
        %1309 = vdwg.mxu0
        %1310 = vst [vmem:[#allocation4 + $0x10] sm:$0xff] %v1304
        %1311 = vst [vmem:[#allocation4 + $0x28] sm:$0xff] %v1307
        %v1312 = vld [vmem:[#allocation4] sm:$0xff]
        %v1313 = vld [vmem:[#allocation4 + $0x18] sm:$0xff]
        %v1314 = vmul.f32 %v1312, 0.25
        %v1315 = vmul.f32 %v1313, 0.25
        %v1316 = vld [vmem:[#allocation4 + $0x8] sm:$0xff]
        %v1317 = vld [vmem:[#allocation4 + $0x20] sm:$0xff]
        %v1318 = vld [vmem:[#allocation4 + $0x10] sm:$0xff]
        %v1319 = vld [vmem:[#allocation4 + $0x28] sm:$0xff]
        %v1320 = vpack.c.bf16 %v1315, %v1314
        %v1321 = vpack.c.bf16 %v1317, %v1316
        %vm1322 = vcmask 130048
        %v1324 = vsel %vm1322, %v1320, 0
        %v1327 = vsel %vm1322, %v1321, 0
        %1329 = vmatprep.subr.bf16.mxu0 0
        %1330 = vmatpush1.bf16.xpose.msra.mxu0 %v1327
        %1331 = vmatprep.subr.bf16.mxu0 0
        %1332 = vmatpush1.bf16.xpose.msra.mxu0 0
        %1333 = vmatprep.subr.bf16.mxu0 0
        %1334 = vmatpush1.bf16.xpose.msra.mxu0 0
        %1335 = vmatprep.subr.bf16.mxu0 0
        %1336 = vmatpush1.bf16.xpose.msra.mxu0 0
        %1337 = vmatprep.subr.bf16.mxu0 0
        %1338 = vmatpush1.bf16.xpose.msra.mxu0 0
        %1339 = vmatprep.subr.bf16.mxu0 0
        %1340 = vmatpush1.bf16.xpose.msra.mxu0 0
        %1341 = vmatprep.subr.bf16.mxu0 0
        %1342 = vmatpush1.bf16.xpose.msra.mxu0 0
        %1343 = vmatprep.subr.bf16.mxu0 0
        %1344 = vmatpush1.bf16.xpose.msra.mxu0 0
        %1345 = vmatprep.subr.bf16.mxu0 0
        %1346 = vmatpush1.bf16.xpose.msra.mxu0 0
        %1347 = vmatprep.subr.bf16.mxu0 0
        %1348 = vmatpush1.bf16.xpose.msra.mxu0 0
        %1349 = vmatprep.subr.bf16.mxu0 0
        %1350 = vmatpush1.bf16.xpose.msra.mxu0 0
        %1351 = vmatprep.subr.bf16.mxu0 0
        %1352 = vmatpush1.bf16.xpose.msra.mxu0 0
        %1353 = vmatprep.subr.bf16.mxu0 0
        %1354 = vmatpush1.bf16.xpose.msra.mxu0 0
        %1355 = vmatprep.subr.bf16.mxu0 0
        %1356 = vmatpush1.bf16.xpose.msra.mxu0 0
        %1357 = vmatprep.subr.bf16.mxu0 0
        %1358 = vmatpush1.bf16.xpose.msra.mxu0 0
        %1359 = vmatprep.subr.bf16.mxu0 0
        %1360 = vmatpush1.bf16.xpose.msra.mxu0 0
        %1361 = vmatprep.mubr.bf16.mxu0 0
        %1362 = vmatmul.mubr.bf16.gmra.mrb[0].mxu0 %v1324
        %v1363 = vpop.f32.mrb[0].mxu0
        %v1364 = vadd.f32 0.0, %v1363
        %v1365 = vpop.f32.mrb[0].mxu0
        %v1366 = vpop.f32.mrb[0].mxu0
        %v1367 = vadd.f32 0.0, %v1366
        %v1368 = vpop.f32.mrb[0].mxu0
        %1369 = vdwg.mxu0
        %v1370 = vsel %vm1322, %v1364, -inf
        %1371 = vmax.xlane.f32.xlu0 %v1370
        %v1372 = vpop.xlane.xlu0 %1371
        %v1373 = vsel %vm1322, %v1367, -inf
        %1374 = vmax.xlane.f32.xlu0 %v1373
        %v1375 = vpop.xlane.xlu0 %1374
        %v1376 = vsub.f32 %v1364, %v1372
        %v1377 = vsub.f32 %v1367, %v1375
        %v1378 = vmul.f32 %v1376, 1.442695
        %v1379 = vpow.pop %v1378
        %v1380 = vmul.f32 %v1377, 1.442695
        %v1381 = vpow.pop %v1380
        %v1382 = vsel %vm1322, %v1379, 0.0
        %1383 = vadd.xlane.f32.xlu0 %v1382
        %v1384 = vpop.xlane.xlu0 %1383
        %v1385 = vsel %vm1322, %v1381, 0.0
        %1386 = vadd.xlane.f32.xlu0 %v1385
        %v1387 = vpop.xlane.xlu0 %1386
        %v1388 = vrcp.pop %v1384
        %v1389 = vrcp.pop %v1387
        %v1390 = vmul.f32 %v1379, %v1388
        %v1391 = vmul.f32 %v1381, %v1389
        %v1392 = vpack.c.bf16 %v1391, %v1390
        %v1393 = vpack.c.bf16 %v1319, %v1318
        %v1395 = vsel %vm1322, %v1392, 0
        %1397 = vmatprep.subr.bf16.mxu0 0
        %1398 = vmatpush1.bf16.msra.mxu0 %v1393
        %1399 = vmatprep.subr.bf16.mxu0 0
        %1400 = vmatpush1.bf16.msra.mxu0 0
        %1401 = vmatprep.subr.bf16.mxu0 0
        %1402 = vmatpush1.bf16.msra.mxu0 0
        %1403 = vmatprep.subr.bf16.mxu0 0
        %1404 = vmatpush1.bf16.msra.mxu0 0
        %1405 = vmatprep.subr.bf16.mxu0 0
        %1406 = vmatpush1.bf16.msra.mxu0 0
        %1407 = vmatprep.subr.bf16.mxu0 0
        %1408 = vmatpush1.bf16.msra.mxu0 0
        %1409 = vmatprep.subr.bf16.mxu0 0
        %1410 = vmatpush1.bf16.msra.mxu0 0
        %1411 = vmatprep.subr.bf16.mxu0 0
        %1412 = vmatpush1.bf16.msra.mxu0 0
        %1413 = vmatprep.subr.bf16.mxu0 0
        %1414 = vmatpush1.bf16.msra.mxu0 0
        %1415 = vmatprep.subr.bf16.mxu0 0
        %1416 = vmatpush1.bf16.msra.mxu0 0
        %1417 = vmatprep.subr.bf16.mxu0 0
        %1418 = vmatpush1.bf16.msra.mxu0 0
        %1419 = vmatprep.subr.bf16.mxu0 0
        %1420 = vmatpush1.bf16.msra.mxu0 0
        %1421 = vmatprep.subr.bf16.mxu0 0
        %1422 = vmatpush1.bf16.msra.mxu0 0
        %1423 = vmatprep.subr.bf16.mxu0 0
        %1424 = vmatpush1.bf16.msra.mxu0 0
        %1425 = vmatprep.subr.bf16.mxu0 0
        %1426 = vmatpush1.bf16.msra.mxu0 0
        %1427 = vmatprep.subr.bf16.mxu0 0
        %1428 = vmatpush1.bf16.msra.mxu0 0
        %1429 = vmatprep.mubr.bf16.mxu0 0
        %1430 = vmatmul.mubr.bf16.gmra.mrb[0].mxu0 %v1395
        %v1431 = vpop.f32.mrb[0].mxu0
        %v1432 = vadd.f32 0.0, %v1431
        %v1433 = vpop.f32.mrb[0].mxu0
        %v1434 = vpop.f32.mrb[0].mxu0
        %v1435 = vadd.f32 0.0, %v1434
        %v1436 = vpop.f32.mrb[0].mxu0
        %1437 = vdwg.mxu0
        %1438 = vst.msk [vmem:[#allocation6] sm:$0xff] %vm1322, %v1432
        %1439 = vst.msk [vmem:[#allocation6 + $0x8] sm:$0xff] %vm1322, %v1435
        %v1440 = vld [vmem:[#allocation4] sm:$0xff]
        %v1441 = vld [vmem:[#allocation4 + $0x18] sm:$0xff]
        %v1442 = vmul.f32 %v1440, 0.25
        %v1443 = vmul.f32 %v1441, 0.25
        %v1444 = vld [vmem:[#allocation4 + $0x8] sm:$0xff]
        %v1445 = vld [vmem:[#allocation4 + $0x20] sm:$0xff]
        %v1446 = vld [vmem:[#allocation4 + $0x10] sm:$0xff]
        %v1447 = vld [vmem:[#allocation4 + $0x28] sm:$0xff]
        %v1448 = vpack.c.bf16 %v1443, %v1442
        %v1449 = vpack.c.bf16 %v1445, %v1444
        %1451 = vrot.lane.b32.xlu0 %v1448, 112
        %v1452 = vpop.permute.xlu0 %1451
        %1454 = vrot.lane.b32.xlu0 %v1449, 112
        %v1455 = vpop.permute.xlu0 %1454
        %v1457 = vsel %vm1322, %v1452, 0
        %v1460 = vsel %vm1322, %v1455, 0
        %1462 = vmatprep.subr.bf16.mxu0 0
        %1463 = vmatpush1.bf16.xpose.msra.mxu0 %v1460
        %1464 = vmatprep.subr.bf16.mxu0 0
        %1465 = vmatpush1.bf16.xpose.msra.mxu0 0
        %1466 = vmatprep.subr.bf16.mxu0 0
        %1467 = vmatpush1.bf16.xpose.msra.mxu0 0
        %1468 = vmatprep.subr.bf16.mxu0 0
        %1469 = vmatpush1.bf16.xpose.msra.mxu0 0
        %1470 = vmatprep.subr.bf16.mxu0 0
        %1471 = vmatpush1.bf16.xpose.msra.mxu0 0
        %1472 = vmatprep.subr.bf16.mxu0 0
        %1473 = vmatpush1.bf16.xpose.msra.mxu0 0
        %1474 = vmatprep.subr.bf16.mxu0 0
        %1475 = vmatpush1.bf16.xpose.msra.mxu0 0
        %1476 = vmatprep.subr.bf16.mxu0 0
        %1477 = vmatpush1.bf16.xpose.msra.mxu0 0
        %1478 = vmatprep.subr.bf16.mxu0 0
        %1479 = vmatpush1.bf16.xpose.msra.mxu0 0
        %1480 = vmatprep.subr.bf16.mxu0 0
        %1481 = vmatpush1.bf16.xpose.msra.mxu0 0
        %1482 = vmatprep.subr.bf16.mxu0 0
        %1483 = vmatpush1.bf16.xpose.msra.mxu0 0
        %1484 = vmatprep.subr.bf16.mxu0 0
        %1485 = vmatpush1.bf16.xpose.msra.mxu0 0
        %1486 = vmatprep.subr.bf16.mxu0 0
        %1487 = vmatpush1.bf16.xpose.msra.mxu0 0
        %1488 = vmatprep.subr.bf16.mxu0 0
        %1489 = vmatpush1.bf16.xpose.msra.mxu0 0
        %1490 = vmatprep.subr.bf16.mxu0 0
        %1491 = vmatpush1.bf16.xpose.msra.mxu0 0
        %1492 = vmatprep.subr.bf16.mxu0 0
        %1493 = vmatpush1.bf16.xpose.msra.mxu0 0
        %1494 = vmatprep.mubr.bf16.mxu0 0
        %1495 = vmatmul.mubr.bf16.gmra.mrb[0].mxu0 %v1457
        %v1496 = vpop.f32.mrb[0].mxu0
        %v1497 = vadd.f32 0.0, %v1496
        %v1498 = vpop.f32.mrb[0].mxu0
        %v1499 = vpop.f32.mrb[0].mxu0
        %v1500 = vadd.f32 0.0, %v1499
        %v1501 = vpop.f32.mrb[0].mxu0
        %1502 = vdwg.mxu0
        %v1503 = vsel %vm1322, %v1497, -inf
        %1504 = vmax.xlane.f32.xlu0 %v1503
        %v1505 = vpop.xlane.xlu0 %1504
        %v1506 = vsel %vm1322, %v1500, -inf
        %1507 = vmax.xlane.f32.xlu0 %v1506
        %v1508 = vpop.xlane.xlu0 %1507
        %v1509 = vsub.f32 %v1497, %v1505
        %v1510 = vsub.f32 %v1500, %v1508
        %v1511 = vmul.f32 %v1509, 1.442695
        %v1512 = vpow.pop %v1511
        %v1513 = vmul.f32 %v1510, 1.442695
        %v1514 = vpow.pop %v1513
        %v1515 = vsel %vm1322, %v1512, 0.0
        %1516 = vadd.xlane.f32.xlu0 %v1515
        %v1517 = vpop.xlane.xlu0 %1516
        %v1518 = vsel %vm1322, %v1514, 0.0
        %1519 = vadd.xlane.f32.xlu0 %v1518
        %v1520 = vpop.xlane.xlu0 %1519
        %v1521 = vrcp.pop %v1517
        %v1522 = vrcp.pop %v1520
        %v1523 = vmul.f32 %v1512, %v1521
        %v1524 = vmul.f32 %v1514, %v1522
        %v1525 = vpack.c.bf16 %v1524, %v1523
        %v1526 = vpack.c.bf16 %v1447, %v1446
        %1528 = vrot.lane.b32.xlu0 %v1526, 112
        %v1529 = vpop.permute.xlu0 %1528
        %v1532 = vsel %vm1322, %v1525, 0
        %1534 = vmatprep.subr.bf16.mxu0 0
        %1535 = vmatpush1.bf16.msra.mxu0 %v1529
        %1536 = vmatprep.subr.bf16.mxu0 0
        %1537 = vmatpush1.bf16.msra.mxu0 0
        %1538 = vmatprep.subr.bf16.mxu0 0
        %1539 = vmatpush1.bf16.msra.mxu0 0
        %1540 = vmatprep.subr.bf16.mxu0 0
        %1541 = vmatpush1.bf16.msra.mxu0 0
        %1542 = vmatprep.subr.bf16.mxu0 0
        %1543 = vmatpush1.bf16.msra.mxu0 0
        %1544 = vmatprep.subr.bf16.mxu0 0
        %1545 = vmatpush1.bf16.msra.mxu0 0
        %1546 = vmatprep.subr.bf16.mxu0 0
        %1547 = vmatpush1.bf16.msra.mxu0 0
        %1548 = vmatprep.subr.bf16.mxu0 0
        %1549 = vmatpush1.bf16.msra.mxu0 0
        %1550 = vmatprep.subr.bf16.mxu0 0
        %1551 = vmatpush1.bf16.msra.mxu0 0
        %1552 = vmatprep.subr.bf16.mxu0 0
        %1553 = vmatpush1.bf16.msra.mxu0 0
        %1554 = vmatprep.subr.bf16.mxu0 0
        %1555 = vmatpush1.bf16.msra.mxu0 0
        %1556 = vmatprep.subr.bf16.mxu0 0
        %1557 = vmatpush1.bf16.msra.mxu0 0
        %1558 = vmatprep.subr.bf16.mxu0 0
        %1559 = vmatpush1.bf16.msra.mxu0 0
        %1560 = vmatprep.subr.bf16.mxu0 0
        %1561 = vmatpush1.bf16.msra.mxu0 0
        %1562 = vmatprep.subr.bf16.mxu0 0
        %1563 = vmatpush1.bf16.msra.mxu0 0
        %1564 = vmatprep.subr.bf16.mxu0 0
        %1565 = vmatpush1.bf16.msra.mxu0 0
        %1566 = vmatprep.mubr.bf16.mxu0 0
        %1567 = vmatmul.mubr.bf16.gmra.mrb[0].mxu0 %v1532
        %v1568 = vpop.f32.mrb[0].mxu0
        %v1569 = vadd.f32 0.0, %v1568
        %v1570 = vpop.f32.mrb[0].mxu0
        %v1571 = vpop.f32.mrb[0].mxu0
        %v1572 = vadd.f32 0.0, %v1571
        %v1573 = vpop.f32.mrb[0].mxu0
        %1574 = vdwg.mxu0
        %1577 = vrot.lane.b32.xlu0 %v1569, 16
        %v1578 = vpop.permute.xlu0 %1577
        %1579 = vrot.lane.b32.xlu0 %v1572, 16
        %v1580 = vpop.permute.xlu0 %1579
        %vm1583 = vcmask 261248
        %1584 = vst.msk [vmem:[#allocation6] sm:$0xff] %vm1583, %v1578
        %1585 = vst.msk [vmem:[#allocation6 + $0x8] sm:$0xff] %vm1583, %v1580
        %v1586 = vld [vmem:[#allocation4] sm:$0xff]
        %v1587 = vld [vmem:[#allocation4 + $0x18] sm:$0xff]
        %v1588 = vmul.f32 %v1586, 0.25
        %v1589 = vmul.f32 %v1587, 0.25
        %v1590 = vld [vmem:[#allocation4 + $0x8] sm:$0xff]
        %v1591 = vld [vmem:[#allocation4 + $0x20] sm:$0xff]
        %v1592 = vld [vmem:[#allocation4 + $0x10] sm:$0xff]
        %v1593 = vld [vmem:[#allocation4 + $0x28] sm:$0xff]
        %v1594 = vpack.c.bf16 %v1589, %v1588
        %v1595 = vpack.c.bf16 %v1591, %v1590
        %1597 = vrot.lane.b32.xlu0 %v1594, 96
        %v1598 = vpop.permute.xlu0 %1597
        %1600 = vrot.lane.b32.xlu0 %v1595, 96
        %v1601 = vpop.permute.xlu0 %1600
        %v1603 = vsel %vm1322, %v1598, 0
        %v1606 = vsel %vm1322, %v1601, 0
        %1608 = vmatprep.subr.bf16.mxu0 0
        %1609 = vmatpush1.bf16.xpose.msra.mxu0 %v1606
        %1610 = vmatprep.subr.bf16.mxu0 0
        %1611 = vmatpush1.bf16.xpose.msra.mxu0 0
        %1612 = vmatprep.subr.bf16.mxu0 0
        %1613 = vmatpush1.bf16.xpose.msra.mxu0 0
        %1614 = vmatprep.subr.bf16.mxu0 0
        %1615 = vmatpush1.bf16.xpose.msra.mxu0 0
        %1616 = vmatprep.subr.bf16.mxu0 0
        %1617 = vmatpush1.bf16.xpose.msra.mxu0 0
        %1618 = vmatprep.subr.bf16.mxu0 0
        %1619 = vmatpush1.bf16.xpose.msra.mxu0 0
        %1620 = vmatprep.subr.bf16.mxu0 0
        %1621 = vmatpush1.bf16.xpose.msra.mxu0 0
        %1622 = vmatprep.subr.bf16.mxu0 0
        %1623 = vmatpush1.bf16.xpose.msra.mxu0 0
        %1624 = vmatprep.subr.bf16.mxu0 0
        %1625 = vmatpush1.bf16.xpose.msra.mxu0 0
        %1626 = vmatprep.subr.bf16.mxu0 0
        %1627 = vmatpush1.bf16.xpose.msra.mxu0 0
        %1628 = vmatprep.subr.bf16.mxu0 0
        %1629 = vmatpush1.bf16.xpose.msra.mxu0 0
        %1630 = vmatprep.subr.bf16.mxu0 0
        %1631 = vmatpush1.bf16.xpose.msra.mxu0 0
        %1632 = vmatprep.subr.bf16.mxu0 0
        %1633 = vmatpush1.bf16.xpose.msra.mxu0 0
        %1634 = vmatprep.subr.bf16.mxu0 0
        %1635 = vmatpush1.bf16.xpose.msra.mxu0 0
        %1636 = vmatprep.subr.bf16.mxu0 0
        %1637 = vmatpush1.bf16.xpose.msra.mxu0 0
        %1638 = vmatprep.subr.bf16.mxu0 0
        %1639 = vmatpush1.bf16.xpose.msra.mxu0 0
        %1640 = vmatprep.mubr.bf16.mxu0 0
        %1641 = vmatmul.mubr.bf16.gmra.mrb[0].mxu0 %v1603
        %v1642 = vpop.f32.mrb[0].mxu0
        %v1643 = vadd.f32 0.0, %v1642
        %v1644 = vpop.f32.mrb[0].mxu0
        %v1645 = vpop.f32.mrb[0].mxu0
        %v1646 = vadd.f32 0.0, %v1645
        %v1647 = vpop.f32.mrb[0].mxu0
        %1648 = vdwg.mxu0
        %v1649 = vsel %vm1322, %v1643, -inf
        %1650 = vmax.xlane.f32.xlu0 %v1649
        %v1651 = vpop.xlane.xlu0 %1650
        %v1652 = vsel %vm1322, %v1646, -inf
        %1653 = vmax.xlane.f32.xlu0 %v1652
        %v1654 = vpop.xlane.xlu0 %1653
        %v1655 = vsub.f32 %v1643, %v1651
        %v1656 = vsub.f32 %v1646, %v1654
        %v1657 = vmul.f32 %v1655, 1.442695
        %v1658 = vpow.pop %v1657
        %v1659 = vmul.f32 %v1656, 1.442695
        %v1660 = vpow.pop %v1659
        %v1661 = vsel %vm1322, %v1658, 0.0
        %1662 = vadd.xlane.f32.xlu0 %v1661
        %v1663 = vpop.xlane.xlu0 %1662
        %v1664 = vsel %vm1322, %v1660, 0.0
        %1665 = vadd.xlane.f32.xlu0 %v1664
        %v1666 = vpop.xlane.xlu0 %1665
        %v1667 = vrcp.pop %v1663
        %v1668 = vrcp.pop %v1666
        %v1669 = vmul.f32 %v1658, %v1667
        %v1670 = vmul.f32 %v1660, %v1668
        %v1671 = vpack.c.bf16 %v1670, %v1669
        %v1672 = vpack.c.bf16 %v1593, %v1592
        %1674 = vrot.lane.b32.xlu0 %v1672, 96
        %v1675 = vpop.permute.xlu0 %1674
        %v1678 = vsel %vm1322, %v1671, 0
        %1680 = vmatprep.subr.bf16.mxu0 0
        %1681 = vmatpush1.bf16.msra.mxu0 %v1675
        %1682 = vmatprep.subr.bf16.mxu0 0
        %1683 = vmatpush1.bf16.msra.mxu0 0
        %1684 = vmatprep.subr.bf16.mxu0 0
        %1685 = vmatpush1.bf16.msra.mxu0 0
        %1686 = vmatprep.subr.bf16.mxu0 0
        %1687 = vmatpush1.bf16.msra.mxu0 0
        %1688 = vmatprep.subr.bf16.mxu0 0
        %1689 = vmatpush1.bf16.msra.mxu0 0
        %1690 = vmatprep.subr.bf16.mxu0 0
        %1691 = vmatpush1.bf16.msra.mxu0 0
        %1692 = vmatprep.subr.bf16.mxu0 0
        %1693 = vmatpush1.bf16.msra.mxu0 0
        %1694 = vmatprep.subr.bf16.mxu0 0
        %1695 = vmatpush1.bf16.msra.mxu0 0
        %1696 = vmatprep.subr.bf16.mxu0 0
        %1697 = vmatpush1.bf16.msra.mxu0 0
        %1698 = vmatprep.subr.bf16.mxu0 0
        %1699 = vmatpush1.bf16.msra.mxu0 0
        %1700 = vmatprep.subr.bf16.mxu0 0
        %1701 = vmatpush1.bf16.msra.mxu0 0
        %1702 = vmatprep.subr.bf16.mxu0 0
        %1703 = vmatpush1.bf16.msra.mxu0 0
        %1704 = vmatprep.subr.bf16.mxu0 0
        %1705 = vmatpush1.bf16.msra.mxu0 0
        %1706 = vmatprep.subr.bf16.mxu0 0
        %1707 = vmatpush1.bf16.msra.mxu0 0
        %1708 = vmatprep.subr.bf16.mxu0 0
        %1709 = vmatpush1.bf16.msra.mxu0 0
        %1710 = vmatprep.subr.bf16.mxu0 0
        %1711 = vmatpush1.bf16.msra.mxu0 0
        %1712 = vmatprep.mubr.bf16.mxu0 0
        %1713 = vmatmul.mubr.bf16.gmra.mrb[0].mxu0 %v1678
        %v1714 = vpop.f32.mrb[0].mxu0
        %v1715 = vadd.f32 0.0, %v1714
        %v1716 = vpop.f32.mrb[0].mxu0
        %v1717 = vpop.f32.mrb[0].mxu0
        %v1718 = vadd.f32 0.0, %v1717
        %v1719 = vpop.f32.mrb[0].mxu0
        %1720 = vdwg.mxu0
        %1723 = vrot.lane.b32.xlu0 %v1715, 32
        %v1724 = vpop.permute.xlu0 %1723
        %1725 = vrot.lane.b32.xlu0 %v1718, 32
        %v1726 = vpop.permute.xlu0 %1725
        %vm1729 = vcmask 392448
        %1730 = vst.msk [vmem:[#allocation6] sm:$0xff] %vm1729, %v1724
        %1731 = vst.msk [vmem:[#allocation6 + $0x8] sm:$0xff] %vm1729, %v1726
        %v1732 = vld [vmem:[#allocation4] sm:$0xff]
        %v1733 = vld [vmem:[#allocation4 + $0x18] sm:$0xff]
        %v1734 = vmul.f32 %v1732, 0.25
        %v1735 = vmul.f32 %v1733, 0.25
        %v1736 = vld [vmem:[#allocation4 + $0x8] sm:$0xff]
        %v1737 = vld [vmem:[#allocation4 + $0x20] sm:$0xff]
        %v1738 = vld [vmem:[#allocation4 + $0x10] sm:$0xff]
        %v1739 = vld [vmem:[#allocation4 + $0x28] sm:$0xff]
        %v1740 = vpack.c.bf16 %v1735, %v1734
        %v1741 = vpack.c.bf16 %v1737, %v1736
        %1743 = vrot.lane.b32.xlu0 %v1740, 80
        %v1744 = vpop.permute.xlu0 %1743
        %1746 = vrot.lane.b32.xlu0 %v1741, 80
        %v1747 = vpop.permute.xlu0 %1746
        %v1749 = vsel %vm1322, %v1744, 0
        %v1752 = vsel %vm1322, %v1747, 0
        %1754 = vmatprep.subr.bf16.mxu0 0
        %1755 = vmatpush1.bf16.xpose.msra.mxu0 %v1752
        %1756 = vmatprep.subr.bf16.mxu0 0
        %1757 = vmatpush1.bf16.xpose.msra.mxu0 0
        %1758 = vmatprep.subr.bf16.mxu0 0
        %1759 = vmatpush1.bf16.xpose.msra.mxu0 0
        %1760 = vmatprep.subr.bf16.mxu0 0
        %1761 = vmatpush1.bf16.xpose.msra.mxu0 0
        %1762 = vmatprep.subr.bf16.mxu0 0
        %1763 = vmatpush1.bf16.xpose.msra.mxu0 0
        %1764 = vmatprep.subr.bf16.mxu0 0
        %1765 = vmatpush1.bf16.xpose.msra.mxu0 0
        %1766 = vmatprep.subr.bf16.mxu0 0
        %1767 = vmatpush1.bf16.xpose.msra.mxu0 0
        %1768 = vmatprep.subr.bf16.mxu0 0
        %1769 = vmatpush1.bf16.xpose.msra.mxu0 0
        %1770 = vmatprep.subr.bf16.mxu0 0
        %1771 = vmatpush1.bf16.xpose.msra.mxu0 0
        %1772 = vmatprep.subr.bf16.mxu0 0
        %1773 = vmatpush1.bf16.xpose.msra.mxu0 0
        %1774 = vmatprep.subr.bf16.mxu0 0
        %1775 = vmatpush1.bf16.xpose.msra.mxu0 0
        %1776 = vmatprep.subr.bf16.mxu0 0
        %1777 = vmatpush1.bf16.xpose.msra.mxu0 0
        %1778 = vmatprep.subr.bf16.mxu0 0
        %1779 = vmatpush1.bf16.xpose.msra.mxu0 0
        %1780 = vmatprep.subr.bf16.mxu0 0
        %1781 = vmatpush1.bf16.xpose.msra.mxu0 0
        %1782 = vmatprep.subr.bf16.mxu0 0
        %1783 = vmatpush1.bf16.xpose.msra.mxu0 0
        %1784 = vmatprep.subr.bf16.mxu0 0
        %1785 = vmatpush1.bf16.xpose.msra.mxu0 0
        %1786 = vmatprep.mubr.bf16.mxu0 0
        %1787 = vmatmul.mubr.bf16.gmra.mrb[0].mxu0 %v1749
        %v1788 = vpop.f32.mrb[0].mxu0
        %v1789 = vadd.f32 0.0, %v1788
        %v1790 = vpop.f32.mrb[0].mxu0
        %v1791 = vpop.f32.mrb[0].mxu0
        %v1792 = vadd.f32 0.0, %v1791
        %v1793 = vpop.f32.mrb[0].mxu0
        %1794 = vdwg.mxu0
        %v1795 = vsel %vm1322, %v1789, -inf
        %1796 = vmax.xlane.f32.xlu0 %v1795
        %v1797 = vpop.xlane.xlu0 %1796
        %v1798 = vsel %vm1322, %v1792, -inf
        %1799 = vmax.xlane.f32.xlu0 %v1798
        %v1800 = vpop.xlane.xlu0 %1799
        %v1801 = vsub.f32 %v1789, %v1797
        %v1802 = vsub.f32 %v1792, %v1800
        %v1803 = vmul.f32 %v1801, 1.442695
        %v1804 = vpow.pop %v1803
        %v1805 = vmul.f32 %v1802, 1.442695
        %v1806 = vpow.pop %v1805
        %v1807 = vsel %vm1322, %v1804, 0.0
        %1808 = vadd.xlane.f32.xlu0 %v1807
        %v1809 = vpop.xlane.xlu0 %1808
        %v1810 = vsel %vm1322, %v1806, 0.0
        %1811 = vadd.xlane.f32.xlu0 %v1810
        %v1812 = vpop.xlane.xlu0 %1811
        %v1813 = vrcp.pop %v1809
        %v1814 = vrcp.pop %v1812
        %v1815 = vmul.f32 %v1804, %v1813
        %v1816 = vmul.f32 %v1806, %v1814
        %v1817 = vpack.c.bf16 %v1816, %v1815
        %v1818 = vpack.c.bf16 %v1739, %v1738
        %1820 = vrot.lane.b32.xlu0 %v1818, 80
        %v1821 = vpop.permute.xlu0 %1820
        %v1824 = vsel %vm1322, %v1817, 0
        %1826 = vmatprep.subr.bf16.mxu0 0
        %1827 = vmatpush1.bf16.msra.mxu0 %v1821
        %1828 = vmatprep.subr.bf16.mxu0 0
        %1829 = vmatpush1.bf16.msra.mxu0 0
        %1830 = vmatprep.subr.bf16.mxu0 0
        %1831 = vmatpush1.bf16.msra.mxu0 0
        %1832 = vmatprep.subr.bf16.mxu0 0
        %1833 = vmatpush1.bf16.msra.mxu0 0
        %1834 = vmatprep.subr.bf16.mxu0 0
        %1835 = vmatpush1.bf16.msra.mxu0 0
        %1836 = vmatprep.subr.bf16.mxu0 0
        %1837 = vmatpush1.bf16.msra.mxu0 0
        %1838 = vmatprep.subr.bf16.mxu0 0
        %1839 = vmatpush1.bf16.msra.mxu0 0
        %1840 = vmatprep.subr.bf16.mxu0 0
        %1841 = vmatpush1.bf16.msra.mxu0 0
        %1842 = vmatprep.subr.bf16.mxu0 0
        %1843 = vmatpush1.bf16.msra.mxu0 0
        %1844 = vmatprep.subr.bf16.mxu0 0
        %1845 = vmatpush1.bf16.msra.mxu0 0
        %1846 = vmatprep.subr.bf16.mxu0 0
        %1847 = vmatpush1.bf16.msra.mxu0 0
        %1848 = vmatprep.subr.bf16.mxu0 0
        %1849 = vmatpush1.bf16.msra.mxu0 0
        %1850 = vmatprep.subr.bf16.mxu0 0
        %1851 = vmatpush1.bf16.msra.mxu0 0
        %1852 = vmatprep.subr.bf16.mxu0 0
        %1853 = vmatpush1.bf16.msra.mxu0 0
        %1854 = vmatprep.subr.bf16.mxu0 0
        %1855 = vmatpush1.bf16.msra.mxu0 0
        %1856 = vmatprep.subr.bf16.mxu0 0
        %1857 = vmatpush1.bf16.msra.mxu0 0
        %1858 = vmatprep.mubr.bf16.mxu0 0
        %1859 = vmatmul.mubr.bf16.gmra.mrb[0].mxu0 %v1824
        %v1860 = vpop.f32.mrb[0].mxu0
        %v1861 = vadd.f32 0.0, %v1860
        %v1862 = vpop.f32.mrb[0].mxu0
        %v1863 = vpop.f32.mrb[0].mxu0
        %v1864 = vadd.f32 0.0, %v1863
        %v1865 = vpop.f32.mrb[0].mxu0
        %1866 = vdwg.mxu0
        %1869 = vrot.lane.b32.xlu0 %v1861, 48
        %v1870 = vpop.permute.xlu0 %1869
        %1871 = vrot.lane.b32.xlu0 %v1864, 48
        %v1872 = vpop.permute.xlu0 %1871
        %vm1875 = vcmask 523648
        %1876 = vst.msk [vmem:[#allocation6] sm:$0xff] %vm1875, %v1870
        %1877 = vst.msk [vmem:[#allocation6 + $0x8] sm:$0xff] %vm1875, %v1872
        %v1878 = vld [vmem:[#allocation4] sm:$0xff]
        %v1879 = vld [vmem:[#allocation4 + $0x18] sm:$0xff]
        %v1880 = vmul.f32 %v1878, 0.25
        %v1881 = vmul.f32 %v1879, 0.25
        %v1882 = vld [vmem:[#allocation4 + $0x8] sm:$0xff]
        %v1883 = vld [vmem:[#allocation4 + $0x20] sm:$0xff]
        %v1884 = vld [vmem:[#allocation4 + $0x10] sm:$0xff]
        %v1885 = vld [vmem:[#allocation4 + $0x28] sm:$0xff]
        %v1886 = vpack.c.bf16 %v1881, %v1880
        %v1887 = vpack.c.bf16 %v1883, %v1882
        %1889 = vrot.lane.b32.xlu0 %v1886, 64
        %v1890 = vpop.permute.xlu0 %1889
        %1892 = vrot.lane.b32.xlu0 %v1887, 64
        %v1893 = vpop.permute.xlu0 %1892
        %v1895 = vsel %vm1322, %v1890, 0
        %v1898 = vsel %vm1322, %v1893, 0
        %1900 = vmatprep.subr.bf16.mxu0 0
        %1901 = vmatpush1.bf16.xpose.msra.mxu0 %v1898
        %1902 = vmatprep.subr.bf16.mxu0 0
        %1903 = vmatpush1.bf16.xpose.msra.mxu0 0
        %1904 = vmatprep.subr.bf16.mxu0 0
        %1905 = vmatpush1.bf16.xpose.msra.mxu0 0
        %1906 = vmatprep.subr.bf16.mxu0 0
        %1907 = vmatpush1.bf16.xpose.msra.mxu0 0
        %1908 = vmatprep.subr.bf16.mxu0 0
        %1909 = vmatpush1.bf16.xpose.msra.mxu0 0
        %1910 = vmatprep.subr.bf16.mxu0 0
        %1911 = vmatpush1.bf16.xpose.msra.mxu0 0
        %1912 = vmatprep.subr.bf16.mxu0 0
        %1913 = vmatpush1.bf16.xpose.msra.mxu0 0
        %1914 = vmatprep.subr.bf16.mxu0 0
        %1915 = vmatpush1.bf16.xpose.msra.mxu0 0
        %1916 = vmatprep.subr.bf16.mxu0 0
        %1917 = vmatpush1.bf16.xpose.msra.mxu0 0
        %1918 = vmatprep.subr.bf16.mxu0 0
        %1919 = vmatpush1.bf16.xpose.msra.mxu0 0
        %1920 = vmatprep.subr.bf16.mxu0 0
        %1921 = vmatpush1.bf16.xpose.msra.mxu0 0
        %1922 = vmatprep.subr.bf16.mxu0 0
        %1923 = vmatpush1.bf16.xpose.msra.mxu0 0
        %1924 = vmatprep.subr.bf16.mxu0 0
        %1925 = vmatpush1.bf16.xpose.msra.mxu0 0
        %1926 = vmatprep.subr.bf16.mxu0 0
        %1927 = vmatpush1.bf16.xpose.msra.mxu0 0
        %1928 = vmatprep.subr.bf16.mxu0 0
        %1929 = vmatpush1.bf16.xpose.msra.mxu0 0
        %1930 = vmatprep.subr.bf16.mxu0 0
        %1931 = vmatpush1.bf16.xpose.msra.mxu0 0
        %1932 = vmatprep.mubr.bf16.mxu0 0
        %1933 = vmatmul.mubr.bf16.gmra.mrb[0].mxu0 %v1895
        %v1934 = vpop.f32.mrb[0].mxu0
        %v1935 = vadd.f32 0.0, %v1934
        %v1936 = vpop.f32.mrb[0].mxu0
        %v1937 = vpop.f32.mrb[0].mxu0
        %v1938 = vadd.f32 0.0, %v1937
        %v1939 = vpop.f32.mrb[0].mxu0
        %1940 = vdwg.mxu0
        %v1941 = vsel %vm1322, %v1935, -inf
        %1942 = vmax.xlane.f32.xlu0 %v1941
        %v1943 = vpop.xlane.xlu0 %1942
        %v1944 = vsel %vm1322, %v1938, -inf
        %1945 = vmax.xlane.f32.xlu0 %v1944
        %v1946 = vpop.xlane.xlu0 %1945
        %v1947 = vsub.f32 %v1935, %v1943
        %v1948 = vsub.f32 %v1938, %v1946
        %v1949 = vmul.f32 %v1947, 1.442695
        %v1950 = vpow.pop %v1949
        %v1951 = vmul.f32 %v1948, 1.442695
        %v1952 = vpow.pop %v1951
        %v1953 = vsel %vm1322, %v1950, 0.0
        %1954 = vadd.xlane.f32.xlu0 %v1953
        %v1955 = vpop.xlane.xlu0 %1954
        %v1956 = vsel %vm1322, %v1952, 0.0
        %1957 = vadd.xlane.f32.xlu0 %v1956
        %v1958 = vpop.xlane.xlu0 %1957
        %v1959 = vrcp.pop %v1955
        %v1960 = vrcp.pop %v1958
        %v1961 = vmul.f32 %v1950, %v1959
        %v1962 = vmul.f32 %v1952, %v1960
        %v1963 = vpack.c.bf16 %v1962, %v1961
        %v1964 = vpack.c.bf16 %v1885, %v1884
        %1966 = vrot.lane.b32.xlu0 %v1964, 64
        %v1967 = vpop.permute.xlu0 %1966
        %v1970 = vsel %vm1322, %v1963, 0
        %1972 = vmatprep.subr.bf16.mxu0 0
        %1973 = vmatpush1.bf16.msra.mxu0 %v1967
        %1974 = vmatprep.subr.bf16.mxu0 0
        %1975 = vmatpush1.bf16.msra.mxu0 0
        %1976 = vmatprep.subr.bf16.mxu0 0
        %1977 = vmatpush1.bf16.msra.mxu0 0
        %1978 = vmatprep.subr.bf16.mxu0 0
        %1979 = vmatpush1.bf16.msra.mxu0 0
        %1980 = vmatprep.subr.bf16.mxu0 0
        %1981 = vmatpush1.bf16.msra.mxu0 0
        %1982 = vmatprep.subr.bf16.mxu0 0
        %1983 = vmatpush1.bf16.msra.mxu0 0
        %1984 = vmatprep.subr.bf16.mxu0 0
        %1985 = vmatpush1.bf16.msra.mxu0 0
        %1986 = vmatprep.subr.bf16.mxu0 0
        %1987 = vmatpush1.bf16.msra.mxu0 0
        %1988 = vmatprep.subr.bf16.mxu0 0
        %1989 = vmatpush1.bf16.msra.mxu0 0
        %1990 = vmatprep.subr.bf16.mxu0 0
        %1991 = vmatpush1.bf16.msra.mxu0 0
        %1992 = vmatprep.subr.bf16.mxu0 0
        %1993 = vmatpush1.bf16.msra.mxu0 0
        %1994 = vmatprep.subr.bf16.mxu0 0
        %1995 = vmatpush1.bf16.msra.mxu0 0
        %1996 = vmatprep.subr.bf16.mxu0 0
        %1997 = vmatpush1.bf16.msra.mxu0 0
        %1998 = vmatprep.subr.bf16.mxu0 0
        %1999 = vmatpush1.bf16.msra.mxu0 0
        %2000 = vmatprep.subr.bf16.mxu0 0
        %2001 = vmatpush1.bf16.msra.mxu0 0
        %2002 = vmatprep.subr.bf16.mxu0 0
        %2003 = vmatpush1.bf16.msra.mxu0 0
        %2004 = vmatprep.mubr.bf16.mxu0 0
        %2005 = vmatmul.mubr.bf16.gmra.mrb[0].mxu0 %v1970
        %v2006 = vpop.f32.mrb[0].mxu0
        %v2007 = vadd.f32 0.0, %v2006
        %v2008 = vpop.f32.mrb[0].mxu0
        %v2009 = vpop.f32.mrb[0].mxu0
        %v2010 = vadd.f32 0.0, %v2009
        %v2011 = vpop.f32.mrb[0].mxu0
        %2012 = vdwg.mxu0
        %2015 = vrot.lane.b32.xlu0 %v2007, 64
        %v2016 = vpop.permute.xlu0 %2015
        %2017 = vrot.lane.b32.xlu0 %v2010, 64
        %v2018 = vpop.permute.xlu0 %2017
        %vm2021 = vcmask 654848
        %2022 = vst.msk [vmem:[#allocation6] sm:$0xff] %vm2021, %v2016
        %2023 = vst.msk [vmem:[#allocation6 + $0x8] sm:$0xff] %vm2021, %v2018
        %v2024 = vld [vmem:[#allocation4] sm:$0xff]
        %v2025 = vld [vmem:[#allocation4 + $0x18] sm:$0xff]
        %v2026 = vmul.f32 %v2024, 0.25
        %v2027 = vmul.f32 %v2025, 0.25
        %v2028 = vld [vmem:[#allocation4 + $0x8] sm:$0xff]
        %v2029 = vld [vmem:[#allocation4 + $0x20] sm:$0xff]
        %v2030 = vld [vmem:[#allocation4 + $0x10] sm:$0xff]
        %v2031 = vld [vmem:[#allocation4 + $0x28] sm:$0xff]
        %v2032 = vpack.c.bf16 %v2027, %v2026
        %v2033 = vpack.c.bf16 %v2029, %v2028
        %2035 = vrot.lane.b32.xlu0 %v2032, 48
        %v2036 = vpop.permute.xlu0 %2035
        %2038 = vrot.lane.b32.xlu0 %v2033, 48
        %v2039 = vpop.permute.xlu0 %2038
        %v2041 = vsel %vm1322, %v2036, 0
        %v2044 = vsel %vm1322, %v2039, 0
        %2046 = vmatprep.subr.bf16.mxu0 0
        %2047 = vmatpush1.bf16.xpose.msra.mxu0 %v2044
        %2048 = vmatprep.subr.bf16.mxu0 0
        %2049 = vmatpush1.bf16.xpose.msra.mxu0 0
        %2050 = vmatprep.subr.bf16.mxu0 0
        %2051 = vmatpush1.bf16.xpose.msra.mxu0 0
        %2052 = vmatprep.subr.bf16.mxu0 0
        %2053 = vmatpush1.bf16.xpose.msra.mxu0 0
        %2054 = vmatprep.subr.bf16.mxu0 0
        %2055 = vmatpush1.bf16.xpose.msra.mxu0 0
        %2056 = vmatprep.subr.bf16.mxu0 0
        %2057 = vmatpush1.bf16.xpose.msra.mxu0 0
        %2058 = vmatprep.subr.bf16.mxu0 0
        %2059 = vmatpush1.bf16.xpose.msra.mxu0 0
        %2060 = vmatprep.subr.bf16.mxu0 0
        %2061 = vmatpush1.bf16.xpose.msra.mxu0 0
        %2062 = vmatprep.subr.bf16.mxu0 0
        %2063 = vmatpush1.bf16.xpose.msra.mxu0 0
        %2064 = vmatprep.subr.bf16.mxu0 0
        %2065 = vmatpush1.bf16.xpose.msra.mxu0 0
        %2066 = vmatprep.subr.bf16.mxu0 0
        %2067 = vmatpush1.bf16.xpose.msra.mxu0 0
        %2068 = vmatprep.subr.bf16.mxu0 0
        %2069 = vmatpush1.bf16.xpose.msra.mxu0 0
        %2070 = vmatprep.subr.bf16.mxu0 0
        %2071 = vmatpush1.bf16.xpose.msra.mxu0 0
        %2072 = vmatprep.subr.bf16.mxu0 0
        %2073 = vmatpush1.bf16.xpose.msra.mxu0 0
        %2074 = vmatprep.subr.bf16.mxu0 0
        %2075 = vmatpush1.bf16.xpose.msra.mxu0 0
        %2076 = vmatprep.subr.bf16.mxu0 0
        %2077 = vmatpush1.bf16.xpose.msra.mxu0 0
        %2078 = vmatprep.mubr.bf16.mxu0 0
        %2079 = vmatmul.mubr.bf16.gmra.mrb[0].mxu0 %v2041
        %v2080 = vpop.f32.mrb[0].mxu0
        %v2081 = vadd.f32 0.0, %v2080
        %v2082 = vpop.f32.mrb[0].mxu0
        %v2083 = vpop.f32.mrb[0].mxu0
        %v2084 = vadd.f32 0.0, %v2083
        %v2085 = vpop.f32.mrb[0].mxu0
        %2086 = vdwg.mxu0
        %v2087 = vsel %vm1322, %v2081, -inf
        %2088 = vmax.xlane.f32.xlu0 %v2087
        %v2089 = vpop.xlane.xlu0 %2088
        %v2090 = vsel %vm1322, %v2084, -inf
        %2091 = vmax.xlane.f32.xlu0 %v2090
        %v2092 = vpop.xlane.xlu0 %2091
        %v2093 = vsub.f32 %v2081, %v2089
        %v2094 = vsub.f32 %v2084, %v2092
        %v2095 = vmul.f32 %v2093, 1.442695
        %v2096 = vpow.pop %v2095
        %v2097 = vmul.f32 %v2094, 1.442695
        %v2098 = vpow.pop %v2097
        %v2099 = vsel %vm1322, %v2096, 0.0
        %2100 = vadd.xlane.f32.xlu0 %v2099
        %v2101 = vpop.xlane.xlu0 %2100
        %v2102 = vsel %vm1322, %v2098, 0.0
        %2103 = vadd.xlane.f32.xlu0 %v2102
        %v2104 = vpop.xlane.xlu0 %2103
        %v2105 = vrcp.pop %v2101
        %v2106 = vrcp.pop %v2104
        %v2107 = vmul.f32 %v2096, %v2105
        %v2108 = vmul.f32 %v2098, %v2106
        %v2109 = vpack.c.bf16 %v2108, %v2107
        %v2110 = vpack.c.bf16 %v2031, %v2030
        %2112 = vrot.lane.b32.xlu0 %v2110, 48
        %v2113 = vpop.permute.xlu0 %2112
        %v2116 = vsel %vm1322, %v2109, 0
        %2118 = vmatprep.subr.bf16.mxu0 0
        %2119 = vmatpush1.bf16.msra.mxu0 %v2113
        %2120 = vmatprep.subr.bf16.mxu0 0
        %2121 = vmatpush1.bf16.msra.mxu0 0
        %2122 = vmatprep.subr.bf16.mxu0 0
        %2123 = vmatpush1.bf16.msra.mxu0 0
        %2124 = vmatprep.subr.bf16.mxu0 0
        %2125 = vmatpush1.bf16.msra.mxu0 0
        %2126 = vmatprep.subr.bf16.mxu0 0
        %2127 = vmatpush1.bf16.msra.mxu0 0
        %2128 = vmatprep.subr.bf16.mxu0 0
        %2129 = vmatpush1.bf16.msra.mxu0 0
        %2130 = vmatprep.subr.bf16.mxu0 0
        %2131 = vmatpush1.bf16.msra.mxu0 0
        %2132 = vmatprep.subr.bf16.mxu0 0
        %2133 = vmatpush1.bf16.msra.mxu0 0
        %2134 = vmatprep.subr.bf16.mxu0 0
        %2135 = vmatpush1.bf16.msra.mxu0 0
        %2136 = vmatprep.subr.bf16.mxu0 0
        %2137 = vmatpush1.bf16.msra.mxu0 0
        %2138 = vmatprep.subr.bf16.mxu0 0
        %2139 = vmatpush1.bf16.msra.mxu0 0
        %2140 = vmatprep.subr.bf16.mxu0 0
        %2141 = vmatpush1.bf16.msra.mxu0 0
        %2142 = vmatprep.subr.bf16.mxu0 0
        %2143 = vmatpush1.bf16.msra.mxu0 0
        %2144 = vmatprep.subr.bf16.mxu0 0
        %2145 = vmatpush1.bf16.msra.mxu0 0
        %2146 = vmatprep.subr.bf16.mxu0 0
        %2147 = vmatpush1.bf16.msra.mxu0 0
        %2148 = vmatprep.subr.bf16.mxu0 0
        %2149 = vmatpush1.bf16.msra.mxu0 0
        %2150 = vmatprep.mubr.bf16.mxu0 0
        %2151 = vmatmul.mubr.bf16.gmra.mrb[0].mxu0 %v2116
        %v2152 = vpop.f32.mrb[0].mxu0
        %v2153 = vadd.f32 0.0, %v2152
        %v2154 = vpop.f32.mrb[0].mxu0
        %v2155 = vpop.f32.mrb[0].mxu0
        %v2156 = vadd.f32 0.0, %v2155
        %v2157 = vpop.f32.mrb[0].mxu0
        %2158 = vdwg.mxu0
        %2161 = vrot.lane.b32.xlu0 %v2153, 80
        %v2162 = vpop.permute.xlu0 %2161
        %2163 = vrot.lane.b32.xlu0 %v2156, 80
        %v2164 = vpop.permute.xlu0 %2163
        %vm2167 = vcmask 786048
        %2168 = vst.msk [vmem:[#allocation6] sm:$0xff] %vm2167, %v2162
        %2169 = vst.msk [vmem:[#allocation6 + $0x8] sm:$0xff] %vm2167, %v2164
        %v2170 = vld [vmem:[#allocation4] sm:$0xff]
        %v2171 = vld [vmem:[#allocation4 + $0x18] sm:$0xff]
        %v2172 = vmul.f32 %v2170, 0.25
        %v2173 = vmul.f32 %v2171, 0.25
        %v2174 = vld [vmem:[#allocation4 + $0x8] sm:$0xff]
        %v2175 = vld [vmem:[#allocation4 + $0x20] sm:$0xff]
        %v2176 = vld [vmem:[#allocation4 + $0x10] sm:$0xff]
        %v2177 = vld [vmem:[#allocation4 + $0x28] sm:$0xff]
        %v2178 = vpack.c.bf16 %v2173, %v2172
        %v2179 = vpack.c.bf16 %v2175, %v2174
        %2181 = vrot.lane.b32.xlu0 %v2178, 32
        %v2182 = vpop.permute.xlu0 %2181
        %2184 = vrot.lane.b32.xlu0 %v2179, 32
        %v2185 = vpop.permute.xlu0 %2184
        %v2187 = vsel %vm1322, %v2182, 0
        %v2190 = vsel %vm1322, %v2185, 0
        %2192 = vmatprep.subr.bf16.mxu0 0
        %2193 = vmatpush1.bf16.xpose.msra.mxu0 %v2190
        %2194 = vmatprep.subr.bf16.mxu0 0
        %2195 = vmatpush1.bf16.xpose.msra.mxu0 0
        %2196 = vmatprep.subr.bf16.mxu0 0
        %2197 = vmatpush1.bf16.xpose.msra.mxu0 0
        %2198 = vmatprep.subr.bf16.mxu0 0
        %2199 = vmatpush1.bf16.xpose.msra.mxu0 0
        %2200 = vmatprep.subr.bf16.mxu0 0
        %2201 = vmatpush1.bf16.xpose.msra.mxu0 0
        %2202 = vmatprep.subr.bf16.mxu0 0
        %2203 = vmatpush1.bf16.xpose.msra.mxu0 0
        %2204 = vmatprep.subr.bf16.mxu0 0
        %2205 = vmatpush1.bf16.xpose.msra.mxu0 0
        %2206 = vmatprep.subr.bf16.mxu0 0
        %2207 = vmatpush1.bf16.xpose.msra.mxu0 0
        %2208 = vmatprep.subr.bf16.mxu0 0
        %2209 = vmatpush1.bf16.xpose.msra.mxu0 0
        %2210 = vmatprep.subr.bf16.mxu0 0
        %2211 = vmatpush1.bf16.xpose.msra.mxu0 0
        %2212 = vmatprep.subr.bf16.mxu0 0
        %2213 = vmatpush1.bf16.xpose.msra.mxu0 0
        %2214 = vmatprep.subr.bf16.mxu0 0
        %2215 = vmatpush1.bf16.xpose.msra.mxu0 0
        %2216 = vmatprep.subr.bf16.mxu0 0
        %2217 = vmatpush1.bf16.xpose.msra.mxu0 0
        %2218 = vmatprep.subr.bf16.mxu0 0
        %2219 = vmatpush1.bf16.xpose.msra.mxu0 0
        %2220 = vmatprep.subr.bf16.mxu0 0
        %2221 = vmatpush1.bf16.xpose.msra.mxu0 0
        %2222 = vmatprep.subr.bf16.mxu0 0
        %2223 = vmatpush1.bf16.xpose.msra.mxu0 0
        %2224 = vmatprep.mubr.bf16.mxu0 0
        %2225 = vmatmul.mubr.bf16.gmra.mrb[0].mxu0 %v2187
        %v2226 = vpop.f32.mrb[0].mxu0
        %v2227 = vadd.f32 0.0, %v2226
        %v2228 = vpop.f32.mrb[0].mxu0
        %v2229 = vpop.f32.mrb[0].mxu0
        %v2230 = vadd.f32 0.0, %v2229
        %v2231 = vpop.f32.mrb[0].mxu0
        %2232 = vdwg.mxu0
        %v2233 = vsel %vm1322, %v2227, -inf
        %2234 = vmax.xlane.f32.xlu0 %v2233
        %v2235 = vpop.xlane.xlu0 %2234
        %v2236 = vsel %vm1322, %v2230, -inf
        %2237 = vmax.xlane.f32.xlu0 %v2236
        %v2238 = vpop.xlane.xlu0 %2237
        %v2239 = vsub.f32 %v2227, %v2235
        %v2240 = vsub.f32 %v2230, %v2238
        %v2241 = vmul.f32 %v2239, 1.442695
        %v2242 = vpow.pop %v2241
        %v2243 = vmul.f32 %v2240, 1.442695
        %v2244 = vpow.pop %v2243
        %v2245 = vsel %vm1322, %v2242, 0.0
        %2246 = vadd.xlane.f32.xlu0 %v2245
        %v2247 = vpop.xlane.xlu0 %2246
        %v2248 = vsel %vm1322, %v2244, 0.0
        %2249 = vadd.xlane.f32.xlu0 %v2248
        %v2250 = vpop.xlane.xlu0 %2249
        %v2251 = vrcp.pop %v2247
        %v2252 = vrcp.pop %v2250
        %v2253 = vmul.f32 %v2242, %v2251
        %v2254 = vmul.f32 %v2244, %v2252
        %v2255 = vpack.c.bf16 %v2254, %v2253
        %v2256 = vpack.c.bf16 %v2177, %v2176
        %2258 = vrot.lane.b32.xlu0 %v2256, 32
        %v2259 = vpop.permute.xlu0 %2258
        %v2262 = vsel %vm1322, %v2255, 0
        %2264 = vmatprep.subr.bf16.mxu0 0
        %2265 = vmatpush1.bf16.msra.mxu0 %v2259
        %2266 = vmatprep.subr.bf16.mxu0 0
        %2267 = vmatpush1.bf16.msra.mxu0 0
        %2268 = vmatprep.subr.bf16.mxu0 0
        %2269 = vmatpush1.bf16.msra.mxu0 0
        %2270 = vmatprep.subr.bf16.mxu0 0
        %2271 = vmatpush1.bf16.msra.mxu0 0
        %2272 = vmatprep.subr.bf16.mxu0 0
        %2273 = vmatpush1.bf16.msra.mxu0 0
        %2274 = vmatprep.subr.bf16.mxu0 0
        %2275 = vmatpush1.bf16.msra.mxu0 0
        %2276 = vmatprep.subr.bf16.mxu0 0
        %2277 = vmatpush1.bf16.msra.mxu0 0
        %2278 = vmatprep.subr.bf16.mxu0 0
        %2279 = vmatpush1.bf16.msra.mxu0 0
        %2280 = vmatprep.subr.bf16.mxu0 0
        %2281 = vmatpush1.bf16.msra.mxu0 0
        %2282 = vmatprep.subr.bf16.mxu0 0
        %2283 = vmatpush1.bf16.msra.mxu0 0
        %2284 = vmatprep.subr.bf16.mxu0 0
        %2285 = vmatpush1.bf16.msra.mxu0 0
        %2286 = vmatprep.subr.bf16.mxu0 0
        %2287 = vmatpush1.bf16.msra.mxu0 0
        %2288 = vmatprep.subr.bf16.mxu0 0
        %2289 = vmatpush1.bf16.msra.mxu0 0
        %2290 = vmatprep.subr.bf16.mxu0 0
        %2291 = vmatpush1.bf16.msra.mxu0 0
        %2292 = vmatprep.subr.bf16.mxu0 0
        %2293 = vmatpush1.bf16.msra.mxu0 0
        %2294 = vmatprep.subr.bf16.mxu0 0
        %2295 = vmatpush1.bf16.msra.mxu0 0
        %2296 = vmatprep.mubr.bf16.mxu0 0
        %2297 = vmatmul.mubr.bf16.gmra.mrb[0].mxu0 %v2262
        %v2298 = vpop.f32.mrb[0].mxu0
        %v2299 = vadd.f32 0.0, %v2298
        %v2300 = vpop.f32.mrb[0].mxu0
        %v2301 = vpop.f32.mrb[0].mxu0
        %v2302 = vadd.f32 0.0, %v2301
        %v2303 = vpop.f32.mrb[0].mxu0
        %2304 = vdwg.mxu0
        %2307 = vrot.lane.b32.xlu0 %v2299, 96
        %v2308 = vpop.permute.xlu0 %2307
        %2309 = vrot.lane.b32.xlu0 %v2302, 96
        %v2310 = vpop.permute.xlu0 %2309
        %vm2313 = vcmask 917248
        %2314 = vst.msk [vmem:[#allocation6] sm:$0xff] %vm2313, %v2308
        %2315 = vst.msk [vmem:[#allocation6 + $0x8] sm:$0xff] %vm2313, %v2310
        %v2316 = vld [vmem:[#allocation4] sm:$0xff]
        %v2317 = vld [vmem:[#allocation4 + $0x18] sm:$0xff]
        %v2318 = vmul.f32 %v2316, 0.25
        %v2319 = vmul.f32 %v2317, 0.25
        %v2320 = vld [vmem:[#allocation4 + $0x8] sm:$0xff]
        %v2321 = vld [vmem:[#allocation4 + $0x20] sm:$0xff]
        %v2322 = vld [vmem:[#allocation4 + $0x10] sm:$0xff]
        %v2323 = vld [vmem:[#allocation4 + $0x28] sm:$0xff]
        %v2324 = vpack.c.bf16 %v2319, %v2318
        %v2325 = vpack.c.bf16 %v2321, %v2320
        %2327 = vrot.lane.b32.xlu0 %v2324, 16
        %v2328 = vpop.permute.xlu0 %2327
        %2330 = vrot.lane.b32.xlu0 %v2325, 16
        %v2331 = vpop.permute.xlu0 %2330
        %v2333 = vsel %vm1322, %v2328, 0
        %v2336 = vsel %vm1322, %v2331, 0
        %2338 = vmatprep.subr.bf16.mxu0 0
        %2339 = vmatpush1.bf16.xpose.msra.mxu0 %v2336
        %2340 = vmatprep.subr.bf16.mxu0 0
        %2341 = vmatpush1.bf16.xpose.msra.mxu0 0
        %2342 = vmatprep.subr.bf16.mxu0 0
        %2343 = vmatpush1.bf16.xpose.msra.mxu0 0
        %2344 = vmatprep.subr.bf16.mxu0 0
        %2345 = vmatpush1.bf16.xpose.msra.mxu0 0
        %2346 = vmatprep.subr.bf16.mxu0 0
        %2347 = vmatpush1.bf16.xpose.msra.mxu0 0
        %2348 = vmatprep.subr.bf16.mxu0 0
        %2349 = vmatpush1.bf16.xpose.msra.mxu0 0
        %2350 = vmatprep.subr.bf16.mxu0 0
        %2351 = vmatpush1.bf16.xpose.msra.mxu0 0
        %2352 = vmatprep.subr.bf16.mxu0 0
        %2353 = vmatpush1.bf16.xpose.msra.mxu0 0
        %2354 = vmatprep.subr.bf16.mxu0 0
        %2355 = vmatpush1.bf16.xpose.msra.mxu0 0
        %2356 = vmatprep.subr.bf16.mxu0 0
        %2357 = vmatpush1.bf16.xpose.msra.mxu0 0
        %2358 = vmatprep.subr.bf16.mxu0 0
        %2359 = vmatpush1.bf16.xpose.msra.mxu0 0
        %2360 = vmatprep.subr.bf16.mxu0 0
        %2361 = vmatpush1.bf16.xpose.msra.mxu0 0
        %2362 = vmatprep.subr.bf16.mxu0 0
        %2363 = vmatpush1.bf16.xpose.msra.mxu0 0
        %2364 = vmatprep.subr.bf16.mxu0 0
        %2365 = vmatpush1.bf16.xpose.msra.mxu0 0
        %2366 = vmatprep.subr.bf16.mxu0 0
        %2367 = vmatpush1.bf16.xpose.msra.mxu0 0
        %2368 = vmatprep.subr.bf16.mxu0 0
        %2369 = vmatpush1.bf16.xpose.msra.mxu0 0
        %2370 = vmatprep.mubr.bf16.mxu0 0
        %2371 = vmatmul.mubr.bf16.gmra.mrb[0].mxu0 %v2333
        %v2372 = vpop.f32.mrb[0].mxu0
        %v2373 = vadd.f32 0.0, %v2372
        %v2374 = vpop.f32.mrb[0].mxu0
        %v2375 = vpop.f32.mrb[0].mxu0
        %v2376 = vadd.f32 0.0, %v2375
        %v2377 = vpop.f32.mrb[0].mxu0
        %2378 = vdwg.mxu0
        %v2379 = vsel %vm1322, %v2373, -inf
        %2380 = vmax.xlane.f32.xlu0 %v2379
        %v2381 = vpop.xlane.xlu0 %2380
        %v2382 = vsel %vm1322, %v2376, -inf
        %2383 = vmax.xlane.f32.xlu0 %v2382
        %v2384 = vpop.xlane.xlu0 %2383
        %v2385 = vsub.f32 %v2373, %v2381
        %v2386 = vsub.f32 %v2376, %v2384
        %v2387 = vmul.f32 %v2385, 1.442695
        %v2388 = vpow.pop %v2387
        %v2389 = vmul.f32 %v2386, 1.442695
        %v2390 = vpow.pop %v2389
        %v2391 = vsel %vm1322, %v2388, 0.0
        %2392 = vadd.xlane.f32.xlu0 %v2391
        %v2393 = vpop.xlane.xlu0 %2392
        %v2394 = vsel %vm1322, %v2390, 0.0
        %2395 = vadd.xlane.f32.xlu0 %v2394
        %v2396 = vpop.xlane.xlu0 %2395
        %v2397 = vrcp.pop %v2393
        %v2398 = vrcp.pop %v2396
        %v2399 = vmul.f32 %v2388, %v2397
        %v2400 = vmul.f32 %v2390, %v2398
        %v2401 = vpack.c.bf16 %v2400, %v2399
        %v2402 = vpack.c.bf16 %v2323, %v2322
        %2404 = vrot.lane.b32.xlu0 %v2402, 16
        %v2405 = vpop.permute.xlu0 %2404
        %v2408 = vsel %vm1322, %v2401, 0
        %2410 = vmatprep.subr.bf16.mxu0 0
        %2411 = vmatpush1.bf16.msra.mxu0 %v2405
        %2412 = vmatprep.subr.bf16.mxu0 0
        %2413 = vmatpush1.bf16.msra.mxu0 0
        %2414 = vmatprep.subr.bf16.mxu0 0
        %2415 = vmatpush1.bf16.msra.mxu0 0
        %2416 = vmatprep.subr.bf16.mxu0 0
        %2417 = vmatpush1.bf16.msra.mxu0 0
        %2418 = vmatprep.subr.bf16.mxu0 0
        %2419 = vmatpush1.bf16.msra.mxu0 0
        %2420 = vmatprep.subr.bf16.mxu0 0
        %2421 = vmatpush1.bf16.msra.mxu0 0
        %2422 = vmatprep.subr.bf16.mxu0 0
        %2423 = vmatpush1.bf16.msra.mxu0 0
        %2424 = vmatprep.subr.bf16.mxu0 0
        %2425 = vmatpush1.bf16.msra.mxu0 0
        %2426 = vmatprep.subr.bf16.mxu0 0
        %2427 = vmatpush1.bf16.msra.mxu0 0
        %2428 = vmatprep.subr.bf16.mxu0 0
        %2429 = vmatpush1.bf16.msra.mxu0 0
        %2430 = vmatprep.subr.bf16.mxu0 0
        %2431 = vmatpush1.bf16.msra.mxu0 0
        %2432 = vmatprep.subr.bf16.mxu0 0
        %2433 = vmatpush1.bf16.msra.mxu0 0
        %2434 = vmatprep.subr.bf16.mxu0 0
        %2435 = vmatpush1.bf16.msra.mxu0 0
        %2436 = vmatprep.subr.bf16.mxu0 0
        %2437 = vmatpush1.bf16.msra.mxu0 0
        %2438 = vmatprep.subr.bf16.mxu0 0
        %2439 = vmatpush1.bf16.msra.mxu0 0
        %2440 = vmatprep.subr.bf16.mxu0 0
        %2441 = vmatpush1.bf16.msra.mxu0 0
        %2442 = vmatprep.mubr.bf16.mxu0 0
        %2443 = vmatmul.mubr.bf16.gmra.mrb[0].mxu0 %v2408
        %v2444 = vpop.f32.mrb[0].mxu0
        %v2445 = vadd.f32 0.0, %v2444
        %v2446 = vpop.f32.mrb[0].mxu0
        %v2447 = vpop.f32.mrb[0].mxu0
        %v2448 = vadd.f32 0.0, %v2447
        %v2449 = vpop.f32.mrb[0].mxu0
        %2450 = vdwg.mxu0
        %2453 = vrot.lane.b32.xlu0 %v2445, 112
        %v2454 = vpop.permute.xlu0 %2453
        %2455 = vrot.lane.b32.xlu0 %v2448, 112
        %v2456 = vpop.permute.xlu0 %2455
        %vm2459 = vcmask 1048448
        %2460 = vst.msk [vmem:[#allocation6] sm:$0xff] %vm2459, %v2454
        %2461 = vst.msk [vmem:[#allocation6 + $0x8] sm:$0xff] %vm2459, %v2456
        %v2462 = vld [vmem:[#allocation6] sm:$0xff]
        %v2463 = vld [vmem:[#allocation6 + $0x8] sm:$0xff]
        %v2464 = vpack.c.bf16 %v2463, %v2462
        %v2465 = vld [vmem:[#allocation18] sm:$0xf]
        %v2466 = vld [vmem:[#allocation18 + $0x4] sm:$0xf]
        %v2467 = vld [vmem:[#allocation18 + $0x8] sm:$0xf]
        %v2468 = vld [vmem:[#allocation18 + $0xc] sm:$0xf]
        %v2469 = vld [vmem:[#allocation18 + $0x10] sm:$0xf]
        %v2470 = vld [vmem:[#allocation18 + $0x14] sm:$0xf]
        %v2471 = vld [vmem:[#allocation18 + $0x18] sm:$0xf]
        %v2472 = vld [vmem:[#allocation18 + $0x1c] sm:$0xf]
        %v2473 = vld [vmem:[#allocation18 + $0x20] sm:$0xf]
        %v2474 = vld [vmem:[#allocation18 + $0x24] sm:$0xf]
        %v2475 = vld [vmem:[#allocation18 + $0x28] sm:$0xf]
        %v2476 = vld [vmem:[#allocation18 + $0x2c] sm:$0xf]
        %v2477 = vld [vmem:[#allocation18 + $0x30] sm:$0xf]
        %v2478 = vld [vmem:[#allocation18 + $0x34] sm:$0xf]
        %v2479 = vld [vmem:[#allocation18 + $0x38] sm:$0xf]
        %v2480 = vld [vmem:[#allocation18 + $0x3c] sm:$0xf]
        %v2481 = vld [vmem:[#allocation19] sm:$0x1]
        %v2483 = vlaneseq
        %v2484 = vshrl.u32 %v2483, 7
        %v2485 = vsub.s32 0, %v2484
        %v2486 = vrot.slane %v2481, %v2485
        %v2504 = vunpack.c.l.b16 %v2465
        %v2505 = vunpack.c.l.b16 %v2466
        %v2506 = vunpack.c.l.b16 %v2467
        %v2507 = vunpack.c.l.b16 %v2468
        %v2508 = vunpack.c.l.b16 %v2469
        %v2509 = vunpack.c.l.b16 %v2470
        %v2510 = vunpack.c.l.b16 %v2471
        %v2511 = vunpack.c.l.b16 %v2472
        %v2512 = vunpack.c.l.b16 %v2473
        %v2513 = vunpack.c.l.b16 %v2474
        %v2514 = vunpack.c.l.b16 %v2475
        %v2515 = vunpack.c.l.b16 %v2476
        %v2516 = vunpack.c.l.b16 %v2477
        %v2517 = vunpack.c.l.b16 %v2478
        %v2518 = vunpack.c.l.b16 %v2479
        %v2519 = vunpack.c.l.b16 %v2480
        %v2520 = vpack.c.b16 %v2505, %v2504
        %v2521 = vpack.c.b16 %v2507, %v2506
        %v2522 = vpack.c.b16 %v2509, %v2508
        %v2523 = vpack.c.b16 %v2511, %v2510
        %v2524 = vpack.c.b16 %v2513, %v2512
        %v2525 = vpack.c.b16 %v2515, %v2514
        %v2526 = vpack.c.b16 %v2517, %v2516
        %v2527 = vpack.c.b16 %v2519, %v2518
        %2536 = vmatprep.subr.bf16.mxu0 0
        %2537 = vmatpush1.bf16.msra.mxu0 %v2520
        %2538 = vmatprep.subr.bf16.mxu0 0
        %2539 = vmatpush1.bf16.msra.mxu0 %v2521
        %2540 = vmatprep.subr.bf16.mxu0 0
        %2541 = vmatpush1.bf16.msra.mxu0 %v2522
        %2542 = vmatprep.subr.bf16.mxu0 0
        %2543 = vmatpush1.bf16.msra.mxu0 %v2523
        %2544 = vmatprep.subr.bf16.mxu0 0
        %2545 = vmatpush1.bf16.msra.mxu0 %v2524
        %2546 = vmatprep.subr.bf16.mxu0 0
        %2547 = vmatpush1.bf16.msra.mxu0 %v2525
        %2548 = vmatprep.subr.bf16.mxu0 0
        %2549 = vmatpush1.bf16.msra.mxu0 %v2526
        %2550 = vmatprep.subr.bf16.mxu0 0
        %2551 = vmatpush1.bf16.msra.mxu0 %v2527
        %2552 = vmatprep.subr.bf16.mxu0 0
        %2553 = vmatpush1.bf16.msra.mxu0 0
        %2554 = vmatprep.subr.bf16.mxu0 0
        %2555 = vmatpush1.bf16.msra.mxu0 0
        %2556 = vmatprep.subr.bf16.mxu0 0
        %2557 = vmatpush1.bf16.msra.mxu0 0
        %2558 = vmatprep.subr.bf16.mxu0 0
        %2559 = vmatpush1.bf16.msra.mxu0 0
        %2560 = vmatprep.subr.bf16.mxu0 0
        %2561 = vmatpush1.bf16.msra.mxu0 0
        %2562 = vmatprep.subr.bf16.mxu0 0
        %2563 = vmatpush1.bf16.msra.mxu0 0
        %2564 = vmatprep.subr.bf16.mxu0 0
        %2565 = vmatpush1.bf16.msra.mxu0 0
        %2566 = vmatprep.subr.bf16.mxu0 0
        %2567 = vmatpush1.bf16.msra.mxu0 0
        %2568 = vmatprep.mubr.bf16.mxu0 0
        %2569 = vmatmul.mubr.bf16.gmra.mrb[0].mxu0 %v2464
        %v2570 = vpop.f32.mrb[0].mxu0
        %v2571 = vadd.f32 %v2486, %v2570
        %v2572 = vpop.f32.mrb[0].mxu0
        %v2573 = vpop.f32.mrb[0].mxu0
        %v2574 = vadd.f32 %v2486, %v2573
        %v2575 = vpop.f32.mrb[0].mxu0
        %2576 = vdwg.mxu0
        %v2577 = vadd.f32 %v1035, %v2571
        %v2578 = vadd.f32 %v1036, %v2574
        %2579 = vadd.xlane.f32.xlu0 %v2577
        %v2580 = vpop.xlane.xlu0 %2579
        %2581 = vadd.xlane.f32.xlu0 %v2578
        %v2582 = vpop.xlane.xlu0 %2581
        %v2583 = vrcp.pop 128.0
        %v2584 = vmul.f32 %v2580, %v2583
        %v2585 = vmul.f32 %v2582, %v2583
        %v2586 = vsub.f32 %v2577, %v2584
        %v2587 = vsub.f32 %v2578, %v2585
        %v2588 = vmul.f32 %v2586, %v2586
        %v2589 = vmul.f32 %v2587, %v2587
        %2590 = vadd.xlane.f32.xlu0 %v2588
        %v2591 = vpop.xlane.xlu0 %2590
        %2592 = vadd.xlane.f32.xlu0 %v2589
        %v2593 = vpop.xlane.xlu0 %2592
        %v2594 = vmul.f32 %v2591, %v2583
        %v2595 = vmul.f32 %v2593, %v2583
        %v2596 = vadd.f32 %v2594, 1e-05
        %v2597 = vadd.f32 %v2595, 1e-05
        %v2598 = vrsqrt.pop %v2596
        %v2599 = vrsqrt.pop %v2597
        %v2600 = vmul.f32 %v2586, %v2598
        %v2601 = vmul.f32 %v2587, %v2599
        %v2602 = vld [vmem:[%s19] sm:$0x1]
        %v2603 = vlaneseq
        %v2604 = vshrl.u32 %v2603, 7
        %v2605 = vsub.s32 0, %v2604
        %v2606 = vrot.slane %v2602, %v2605
        %v2607 = vmul.f32 %v2600, %v2606
        %v2608 = vmul.f32 %v2601, %v2606
        %v2609 = vld [vmem:[%s20] sm:$0x1]
        %v2610 = vlaneseq
        %v2611 = vshrl.u32 %v2610, 7
        %v2612 = vsub.s32 0, %v2611
        %v2613 = vrot.slane %v2609, %v2612
        %v2614 = vadd.f32 %v2607, %v2613
        %v2615 = vadd.f32 %v2608, %v2613
        %v2616 = vadd.f32 %v2614, %v1037
        %v2617 = vadd.f32 %v2615, %v1038
        %v2618 = vpack.c.bf16 %v2617, %v2616
        %v2619 = vld [vmem:[%s11] sm:$0xf]
        %v2620 = vld [vmem:[%s11 + $0x4] sm:$0xf]
        %v2621 = vld [vmem:[%s11 + $0x8] sm:$0xf]
        %v2622 = vld [vmem:[%s11 + $0xc] sm:$0xf]
        %v2623 = vld [vmem:[%s11 + $0x10] sm:$0xf]
        %v2624 = vld [vmem:[%s11 + $0x14] sm:$0xf]
        %v2625 = vld [vmem:[%s11 + $0x18] sm:$0xf]
        %v2626 = vld [vmem:[%s11 + $0x1c] sm:$0xf]
        %v2627 = vld [vmem:[%s11 + $0x20] sm:$0xf]
        %v2628 = vld [vmem:[%s11 + $0x24] sm:$0xf]
        %v2629 = vld [vmem:[%s11 + $0x28] sm:$0xf]
        %v2630 = vld [vmem:[%s11 + $0x2c] sm:$0xf]
        %v2631 = vld [vmem:[%s11 + $0x30] sm:$0xf]
        %v2632 = vld [vmem:[%s11 + $0x34] sm:$0xf]
        %v2633 = vld [vmem:[%s11 + $0x38] sm:$0xf]
        %v2634 = vld [vmem:[%s11 + $0x3c] sm:$0xf]
        %v2635 = vld [vmem:[#allocation24] sm:$0x1]
        %v2637 = vlaneseq
        %v2638 = vshrl.u32 %v2637, 7
        %v2639 = vsub.s32 0, %v2638
        %v2640 = vrot.slane %v2635, %v2639
        %v2658 = vunpack.c.l.b16 %v2619
        %v2659 = vunpack.c.l.b16 %v2620
        %v2660 = vunpack.c.l.b16 %v2621
        %v2661 = vunpack.c.l.b16 %v2622
        %v2662 = vunpack.c.l.b16 %v2623
        %v2663 = vunpack.c.l.b16 %v2624
        %v2664 = vunpack.c.l.b16 %v2625
        %v2665 = vunpack.c.l.b16 %v2626
        %v2666 = vunpack.c.l.b16 %v2627
        %v2667 = vunpack.c.l.b16 %v2628
        %v2668 = vunpack.c.l.b16 %v2629
        %v2669 = vunpack.c.l.b16 %v2630
        %v2670 = vunpack.c.l.b16 %v2631
        %v2671 = vunpack.c.l.b16 %v2632
        %v2672 = vunpack.c.l.b16 %v2633
        %v2673 = vunpack.c.l.b16 %v2634
        %v2674 = vpack.c.b16 %v2659, %v2658
        %v2675 = vpack.c.b16 %v2661, %v2660
        %v2676 = vpack.c.b16 %v2663, %v2662
        %v2677 = vpack.c.b16 %v2665, %v2664
        %v2678 = vpack.c.b16 %v2667, %v2666
        %v2679 = vpack.c.b16 %v2669, %v2668
        %v2680 = vpack.c.b16 %v2671, %v2670
        %v2681 = vpack.c.b16 %v2673, %v2672
        %2690 = vmatprep.subr.bf16.mxu0 0
        %2691 = vmatpush1.bf16.msra.mxu0 %v2674
        %2692 = vmatprep.subr.bf16.mxu0 0
        %2693 = vmatpush1.bf16.msra.mxu0 %v2675
        %2694 = vmatprep.subr.bf16.mxu0 0
        %2695 = vmatpush1.bf16.msra.mxu0 %v2676
        %2696 = vmatprep.subr.bf16.mxu0 0
        %2697 = vmatpush1.bf16.msra.mxu0 %v2677
        %2698 = vmatprep.subr.bf16.mxu0 0
        %2699 = vmatpush1.bf16.msra.mxu0 %v2678
        %2700 = vmatprep.subr.bf16.mxu0 0
        %2701 = vmatpush1.bf16.msra.mxu0 %v2679
        %2702 = vmatprep.subr.bf16.mxu0 0
        %2703 = vmatpush1.bf16.msra.mxu0 %v2680
        %2704 = vmatprep.subr.bf16.mxu0 0
        %2705 = vmatpush1.bf16.msra.mxu0 %v2681
        %2706 = vmatprep.subr.bf16.mxu0 0
        %2707 = vmatpush1.bf16.msra.mxu0 0
        %2708 = vmatprep.subr.bf16.mxu0 0
        %2709 = vmatpush1.bf16.msra.mxu0 0
        %2710 = vmatprep.subr.bf16.mxu0 0
        %2711 = vmatpush1.bf16.msra.mxu0 0
        %2712 = vmatprep.subr.bf16.mxu0 0
        %2713 = vmatpush1.bf16.msra.mxu0 0
        %2714 = vmatprep.subr.bf16.mxu0 0
        %2715 = vmatpush1.bf16.msra.mxu0 0
        %2716 = vmatprep.subr.bf16.mxu0 0
        %2717 = vmatpush1.bf16.msra.mxu0 0
        %2718 = vmatprep.subr.bf16.mxu0 0
        %2719 = vmatpush1.bf16.msra.mxu0 0
        %2720 = vmatprep.subr.bf16.mxu0 0
        %2721 = vmatpush1.bf16.msra.mxu0 0
        %2722 = vmatprep.mubr.bf16.mxu0 0
        %2723 = vmatmul.mubr.bf16.gmra.mrb[0].mxu0 %v2618
        %v2724 = vpop.f32.mrb[0].mxu0
        %v2725 = vadd.f32 %v2640, %v2724
        %v2726 = vpop.f32.mrb[0].mxu0
        %v2727 = vpop.f32.mrb[0].mxu0
        %v2728 = vadd.f32 %v2640, %v2727
        %v2729 = vpop.f32.mrb[0].mxu0
        %2730 = vdwg.mxu0
        %vm2731 = vcmask 785408
        %2732 = vst.msk [vmem:[#allocation5] sm:$0xff] %vm2731, %v2725
        %2733 = vst.msk [vmem:[#allocation5 + $0x8] sm:$0xff] %vm2731, %v2728
        %v2734 = vlaneseq
        %v2735 = vshrl.u32 %v2734, 7
        %v2736 = vadd.s32 %v2735, 8
        %v2737 = vcvt.s32.f32 %v2735
        %v2738 = vcvt.s32.f32 %v2736
        %v2739 = vlaneseq
        %v2740 = vand.u32 %v2739, 127
        %v2741 = vcvt.s32.f32 %v2740
        %v2742 = vrcp.pop 4.0
        %v2743 = vmul.f32 %v2737, %v2742
        %v2744 = vmul.f32 %v2738, %v2742
        %v2745 = vfloor.f32 %v2743
        %v2746 = vfloor.f32 %v2744
        %v2747 = vmul.f32 %v2745, 4.0
        %v2748 = vmul.f32 %v2746, 4.0
        %v2749 = vsub.f32 %v2737, %v2747
        %v2750 = vsub.f32 %v2738, %v2748
        %v2751 = vmul.f32 %v2741, %v2742
        %v2752 = vfloor.f32 %v2751
        %v2753 = vmul.f32 %v2752, 4.0
        %v2754 = vsub.f32 %v2741, %v2753
        %v2755 = vld [vmem:[#allocation5] sm:$0xff]
        %v2756 = vld [vmem:[#allocation5 + $0x8] sm:$0xff]
        %vm2757 = vcmask 556544
        %v2758 = vsel %vm2757, %v2755, -inf
        %2759 = vmax.xlane.f32.xlu0 %v2758
        %v2760 = vpop.xlane.xlu0 %2759
        %v2761 = vsel %vm2757, %v2756, -inf
        %2762 = vmax.xlane.f32.xlu0 %v2761
        %v2763 = vpop.xlane.xlu0 %2762
        %v2764 = vsub.f32 %v2755, %v2760
        %v2765 = vsub.f32 %v2756, %v2763
        %v2766 = vmul.f32 %v2764, 1.442695
        %v2767 = vpow.pop %v2766
        %v2768 = vmul.f32 %v2765, 1.442695
        %v2769 = vpow.pop %v2768
        %2772 = vrot.lane.b32.xlu0 %v2767, 64
        %v2773 = vpop.permute.xlu0 %2772
        %2774 = vrot.lane.b32.xlu0 %v2769, 64
        %v2775 = vpop.permute.xlu0 %2774
        %vm2778 = vcmask 31744
        %v2779 = vsel %vm2778, %v2773, 0.0
        %2780 = vadd.xlane.f32.xlu0 %v2779
        %v2781 = vpop.xlane.xlu0 %2780
        %v2782 = vsel %vm2778, %v2775, 0.0
        %2783 = vadd.xlane.f32.xlu0 %v2782
        %v2784 = vpop.xlane.xlu0 %2783
        %v2785 = vrcp.pop %v2781
        %v2786 = vrcp.pop %v2784
        %v2787 = vmul.f32 %v2767, %v2785
        %v2788 = vmul.f32 %v2769, %v2786
        %v2789 = vadd.f32 %v2749, %v2755
        %v2790 = vadd.f32 %v2750, %v2756
        %v2791 = vadd.f32 %v2745, %v2755
        %v2792 = vadd.f32 %v2746, %v2756
        %v2793 = vlaneseq
        %v2794 = vshrl.u32 %v2793, 7
        %v2795 = vsub.s32 0, %v2794
        %v2796 = vrot.slane %v2789, %v2795
        %2798 = vbcast.lane.b32.xlu0 %v2796, 256
        %v2799 = vpop.permute.xlu0 %2798
        %v2800 = vlaneseq
        %v2801 = vshrl.u32 %v2800, 7
        %v2802 = vsub.s32 1, %v2801
        %v2803 = vrot.slane %v2789, %v2802
        %2805 = vbcast.lane.b32.xlu0 %v2803, 256
        %v2806 = vpop.permute.xlu0 %2805
        %v2807 = vlaneseq
        %v2808 = vshrl.u32 %v2807, 7
        %v2809 = vsub.s32 2, %v2808
        %v2810 = vrot.slane %v2789, %v2809
        %2812 = vbcast.lane.b32.xlu0 %v2810, 256
        %v2813 = vpop.permute.xlu0 %2812
        %v2814 = vlaneseq
        %v2815 = vshrl.u32 %v2814, 7
        %v2816 = vsub.s32 3, %v2815
        %v2817 = vrot.slane %v2789, %v2816
        %2819 = vbcast.lane.b32.xlu0 %v2817, 256
        %v2820 = vpop.permute.xlu0 %2819
        %v2821 = vlaneseq
        %v2822 = vshrl.u32 %v2821, 7
        %v2823 = vsub.s32 4, %v2822
        %v2824 = vrot.slane %v2789, %v2823
        %2826 = vbcast.lane.b32.xlu0 %v2824, 256
        %v2827 = vpop.permute.xlu0 %2826
        %v2828 = vlaneseq
        %v2829 = vshrl.u32 %v2828, 7
        %v2830 = vsub.s32 5, %v2829
        %v2831 = vrot.slane %v2789, %v2830
        %2833 = vbcast.lane.b32.xlu0 %v2831, 256
        %v2834 = vpop.permute.xlu0 %2833
        %v2835 = vlaneseq
        %v2836 = vshrl.u32 %v2835, 7
        %v2837 = vsub.s32 6, %v2836
        %v2838 = vrot.slane %v2789, %v2837
        %2840 = vbcast.lane.b32.xlu0 %v2838, 256
        %v2841 = vpop.permute.xlu0 %2840
        %v2842 = vlaneseq
        %v2843 = vshrl.u32 %v2842, 7
        %v2844 = vsub.s32 7, %v2843
        %v2845 = vrot.slane %v2789, %v2844
        %2847 = vbcast.lane.b32.xlu0 %v2845, 256
        %v2848 = vpop.permute.xlu0 %2847
        %v2849 = vlaneseq
        %v2850 = vshrl.u32 %v2849, 7
        %v2851 = vsub.s32 0, %v2850
        %v2852 = vrot.slane %v2790, %v2851
        %2854 = vbcast.lane.b32.xlu0 %v2852, 256
        %v2855 = vpop.permute.xlu0 %2854
        %v2856 = vlaneseq
        %v2857 = vshrl.u32 %v2856, 7
        %v2858 = vsub.s32 1, %v2857
        %v2859 = vrot.slane %v2790, %v2858
        %2861 = vbcast.lane.b32.xlu0 %v2859, 256
        %v2862 = vpop.permute.xlu0 %2861
        %v2863 = vlaneseq
        %v2864 = vshrl.u32 %v2863, 7
        %v2865 = vsub.s32 2, %v2864
        %v2866 = vrot.slane %v2790, %v2865
        %2868 = vbcast.lane.b32.xlu0 %v2866, 256
        %v2869 = vpop.permute.xlu0 %2868
        %v2870 = vlaneseq
        %v2871 = vshrl.u32 %v2870, 7
        %v2872 = vsub.s32 3, %v2871
        %v2873 = vrot.slane %v2790, %v2872
        %2875 = vbcast.lane.b32.xlu0 %v2873, 256
        %v2876 = vpop.permute.xlu0 %2875
        %v2877 = vlaneseq
        %v2878 = vshrl.u32 %v2877, 7
        %v2879 = vsub.s32 4, %v2878
        %v2880 = vrot.slane %v2790, %v2879
        %2882 = vbcast.lane.b32.xlu0 %v2880, 256
        %v2883 = vpop.permute.xlu0 %2882
        %v2884 = vlaneseq
        %v2885 = vshrl.u32 %v2884, 7
        %v2886 = vsub.s32 5, %v2885
        %v2887 = vrot.slane %v2790, %v2886
        %2889 = vbcast.lane.b32.xlu0 %v2887, 256
        %v2890 = vpop.permute.xlu0 %2889
        %v2891 = vlaneseq
        %v2892 = vshrl.u32 %v2891, 7
        %v2893 = vsub.s32 6, %v2892
        %v2894 = vrot.slane %v2790, %v2893
        %2896 = vbcast.lane.b32.xlu0 %v2894, 256
        %v2897 = vpop.permute.xlu0 %2896
        %v2898 = vlaneseq
        %v2899 = vshrl.u32 %v2898, 7
        %v2900 = vsub.s32 7, %v2899
        %v2901 = vrot.slane %v2790, %v2900
        %2903 = vbcast.lane.b32.xlu0 %v2901, 256
        %v2904 = vpop.permute.xlu0 %2903
        %v2905 = vsub.f32 %v2799, %v2754
        %v2906 = vsub.f32 %v2806, %v2754
        %v2907 = vsub.f32 %v2813, %v2754
        %v2908 = vsub.f32 %v2820, %v2754
        %v2909 = vsub.f32 %v2827, %v2754
        %v2910 = vsub.f32 %v2834, %v2754
        %v2911 = vsub.f32 %v2841, %v2754
        %v2912 = vsub.f32 %v2848, %v2754
        %v2913 = vsub.f32 %v2855, %v2754
        %v2914 = vsub.f32 %v2862, %v2754
        %v2915 = vsub.f32 %v2869, %v2754
        %v2916 = vsub.f32 %v2876, %v2754
        %v2917 = vsub.f32 %v2883, %v2754
        %v2918 = vsub.f32 %v2890, %v2754
        %v2919 = vsub.f32 %v2897, %v2754
        %v2920 = vsub.f32 %v2904, %v2754
        %v2921 = vand.u32 2147483647, %v2905
        %v2922 = vand.u32 2147483647, %v2906
        %v2923 = vand.u32 2147483647, %v2907
        %v2924 = vand.u32 2147483647, %v2908
        %v2925 = vand.u32 2147483647, %v2909
        %v2926 = vand.u32 2147483647, %v2910
        %v2927 = vand.u32 2147483647, %v2911
        %v2928 = vand.u32 2147483647, %v2912
        %v2929 = vand.u32 2147483647, %v2913
        %v2930 = vand.u32 2147483647, %v2914
        %v2931 = vand.u32 2147483647, %v2915
        %v2932 = vand.u32 2147483647, %v2916
        %v2933 = vand.u32 2147483647, %v2917
        %v2934 = vand.u32 2147483647, %v2918
        %v2935 = vand.u32 2147483647, %v2919
        %v2936 = vand.u32 2147483647, %v2920
        %v2937 = vsub.f32 1.0, %v2921
        %v2938 = vsub.f32 1.0, %v2922
        %v2939 = vsub.f32 1.0, %v2923
        %v2940 = vsub.f32 1.0, %v2924
        %v2941 = vsub.f32 1.0, %v2925
        %v2942 = vsub.f32 1.0, %v2926
        %v2943 = vsub.f32 1.0, %v2927
        %v2944 = vsub.f32 1.0, %v2928
        %v2945 = vsub.f32 1.0, %v2929
        %v2946 = vsub.f32 1.0, %v2930
        %v2947 = vsub.f32 1.0, %v2931
        %v2948 = vsub.f32 1.0, %v2932
        %v2949 = vsub.f32 1.0, %v2933
        %v2950 = vsub.f32 1.0, %v2934
        %v2951 = vsub.f32 1.0, %v2935
        %v2952 = vsub.f32 1.0, %v2936
        %v2953 = vmax.f32 %v2937, 0.0
        %v2954 = vmax.f32 %v2938, 0.0
        %v2955 = vmax.f32 %v2939, 0.0
        %v2956 = vmax.f32 %v2940, 0.0
        %v2957 = vmax.f32 %v2941, 0.0
        %v2958 = vmax.f32 %v2942, 0.0
        %v2959 = vmax.f32 %v2943, 0.0
        %v2960 = vmax.f32 %v2944, 0.0
        %v2961 = vmax.f32 %v2945, 0.0
        %v2962 = vmax.f32 %v2946, 0.0
        %v2963 = vmax.f32 %v2947, 0.0
        %v2964 = vmax.f32 %v2948, 0.0
        %v2965 = vmax.f32 %v2949, 0.0
        %v2966 = vmax.f32 %v2950, 0.0
        %v2967 = vmax.f32 %v2951, 0.0
        %v2968 = vmax.f32 %v2952, 0.0
        %v2969 = vlaneseq
        %v2970 = vshrl.u32 %v2969, 7
        %v2971 = vsub.s32 0, %v2970
        %v2972 = vrot.slane %v2791, %v2971
        %s2974 = sor.u32 256, 32
        %2975 = vbcast.lane.b32.xlu0 %v2972, %s2974
        %v2976 = vpop.permute.xlu0 %2975
        %v2977 = vlaneseq
        %v2978 = vshrl.u32 %v2977, 7
        %v2979 = vsub.s32 1, %v2978
        %v2980 = vrot.slane %v2791, %v2979
        %s2982 = sor.u32 256, 32
        %2983 = vbcast.lane.b32.xlu0 %v2980, %s2982
        %v2984 = vpop.permute.xlu0 %2983
        %v2985 = vlaneseq
        %v2986 = vshrl.u32 %v2985, 7
        %v2987 = vsub.s32 2, %v2986
        %v2988 = vrot.slane %v2791, %v2987
        %s2990 = sor.u32 256, 32
        %2991 = vbcast.lane.b32.xlu0 %v2988, %s2990
        %v2992 = vpop.permute.xlu0 %2991
        %v2993 = vlaneseq
        %v2994 = vshrl.u32 %v2993, 7
        %v2995 = vsub.s32 3, %v2994
        %v2996 = vrot.slane %v2791, %v2995
        %s2998 = sor.u32 256, 32
        %2999 = vbcast.lane.b32.xlu0 %v2996, %s2998
        %v3000 = vpop.permute.xlu0 %2999
        %v3001 = vlaneseq
        %v3002 = vshrl.u32 %v3001, 7
        %v3003 = vsub.s32 4, %v3002
        %v3004 = vrot.slane %v2791, %v3003
        %s3006 = sor.u32 256, 32
        %3007 = vbcast.lane.b32.xlu0 %v3004, %s3006
        %v3008 = vpop.permute.xlu0 %3007
        %v3009 = vlaneseq
        %v3010 = vshrl.u32 %v3009, 7
        %v3011 = vsub.s32 5, %v3010
        %v3012 = vrot.slane %v2791, %v3011
        %s3014 = sor.u32 256, 32
        %3015 = vbcast.lane.b32.xlu0 %v3012, %s3014
        %v3016 = vpop.permute.xlu0 %3015
        %v3017 = vlaneseq
        %v3018 = vshrl.u32 %v3017, 7
        %v3019 = vsub.s32 6, %v3018
        %v3020 = vrot.slane %v2791, %v3019
        %s3022 = sor.u32 256, 32
        %3023 = vbcast.lane.b32.xlu0 %v3020, %s3022
        %v3024 = vpop.permute.xlu0 %3023
        %v3025 = vlaneseq
        %v3026 = vshrl.u32 %v3025, 7
        %v3027 = vsub.s32 7, %v3026
        %v3028 = vrot.slane %v2791, %v3027
        %s3030 = sor.u32 256, 32
        %3031 = vbcast.lane.b32.xlu0 %v3028, %s3030
        %v3032 = vpop.permute.xlu0 %3031
        %v3033 = vlaneseq
        %v3034 = vshrl.u32 %v3033, 7
        %v3035 = vsub.s32 0, %v3034
        %v3036 = vrot.slane %v2792, %v3035
        %s3038 = sor.u32 256, 32
        %3039 = vbcast.lane.b32.xlu0 %v3036, %s3038
        %v3040 = vpop.permute.xlu0 %3039
        %v3041 = vlaneseq
        %v3042 = vshrl.u32 %v3041, 7
        %v3043 = vsub.s32 1, %v3042
        %v3044 = vrot.slane %v2792, %v3043
        %s3046 = sor.u32 256, 32
        %3047 = vbcast.lane.b32.xlu0 %v3044, %s3046
        %v3048 = vpop.permute.xlu0 %3047
        %v3049 = vlaneseq
        %v3050 = vshrl.u32 %v3049, 7
        %v3051 = vsub.s32 2, %v3050
        %v3052 = vrot.slane %v2792, %v3051
        %s3054 = sor.u32 256, 32
        %3055 = vbcast.lane.b32.xlu0 %v3052, %s3054
        %v3056 = vpop.permute.xlu0 %3055
        %v3057 = vlaneseq
        %v3058 = vshrl.u32 %v3057, 7
        %v3059 = vsub.s32 3, %v3058
        %v3060 = vrot.slane %v2792, %v3059
        %s3062 = sor.u32 256, 32
        %3063 = vbcast.lane.b32.xlu0 %v3060, %s3062
        %v3064 = vpop.permute.xlu0 %3063
        %v3065 = vlaneseq
        %v3066 = vshrl.u32 %v3065, 7
        %v3067 = vsub.s32 4, %v3066
        %v3068 = vrot.slane %v2792, %v3067
        %s3070 = sor.u32 256, 32
        %3071 = vbcast.lane.b32.xlu0 %v3068, %s3070
        %v3072 = vpop.permute.xlu0 %3071
        %v3073 = vlaneseq
        %v3074 = vshrl.u32 %v3073, 7
        %v3075 = vsub.s32 5, %v3074
        %v3076 = vrot.slane %v2792, %v3075
        %s3078 = sor.u32 256, 32
        %3079 = vbcast.lane.b32.xlu0 %v3076, %s3078
        %v3080 = vpop.permute.xlu0 %3079
        %v3081 = vlaneseq
        %v3082 = vshrl.u32 %v3081, 7
        %v3083 = vsub.s32 6, %v3082
        %v3084 = vrot.slane %v2792, %v3083
        %s3086 = sor.u32 256, 32
        %3087 = vbcast.lane.b32.xlu0 %v3084, %s3086
        %v3088 = vpop.permute.xlu0 %3087
        %v3089 = vlaneseq
        %v3090 = vshrl.u32 %v3089, 7
        %v3091 = vsub.s32 7, %v3090
        %v3092 = vrot.slane %v2792, %v3091
        %s3094 = sor.u32 256, 32
        %3095 = vbcast.lane.b32.xlu0 %v3092, %s3094
        %v3096 = vpop.permute.xlu0 %3095
        %v3097 = vsub.f32 %v2976, %v2752
        %v3098 = vsub.f32 %v2984, %v2752
        %v3099 = vsub.f32 %v2992, %v2752
        %v3100 = vsub.f32 %v3000, %v2752
        %v3101 = vsub.f32 %v3008, %v2752
        %v3102 = vsub.f32 %v3016, %v2752
        %v3103 = vsub.f32 %v3024, %v2752
        %v3104 = vsub.f32 %v3032, %v2752
        %v3105 = vsub.f32 %v3040, %v2752
        %v3106 = vsub.f32 %v3048, %v2752
        %v3107 = vsub.f32 %v3056, %v2752
        %v3108 = vsub.f32 %v3064, %v2752
        %v3109 = vsub.f32 %v3072, %v2752
        %v3110 = vsub.f32 %v3080, %v2752
        %v3111 = vsub.f32 %v3088, %v2752
        %v3112 = vsub.f32 %v3096, %v2752
        %v3113 = vand.u32 2147483647, %v3097
        %v3114 = vand.u32 2147483647, %v3098
        %v3115 = vand.u32 2147483647, %v3099
        %v3116 = vand.u32 2147483647, %v3100
        %v3117 = vand.u32 2147483647, %v3101
        %v3118 = vand.u32 2147483647, %v3102
        %v3119 = vand.u32 2147483647, %v3103
        %v3120 = vand.u32 2147483647, %v3104
        %v3121 = vand.u32 2147483647, %v3105
        %v3122 = vand.u32 2147483647, %v3106
        %v3123 = vand.u32 2147483647, %v3107
        %v3124 = vand.u32 2147483647, %v3108
        %v3125 = vand.u32 2147483647, %v3109
        %v3126 = vand.u32 2147483647, %v3110
        %v3127 = vand.u32 2147483647, %v3111
        %v3128 = vand.u32 2147483647, %v3112
        %v3129 = vsub.f32 1.0, %v3113
        %v3130 = vsub.f32 1.0, %v3114
        %v3131 = vsub.f32 1.0, %v3115
        %v3132 = vsub.f32 1.0, %v3116
        %v3133 = vsub.f32 1.0, %v3117
        %v3134 = vsub.f32 1.0, %v3118
        %v3135 = vsub.f32 1.0, %v3119
        %v3136 = vsub.f32 1.0, %v3120
        %v3137 = vsub.f32 1.0, %v3121
        %v3138 = vsub.f32 1.0, %v3122
        %v3139 = vsub.f32 1.0, %v3123
        %v3140 = vsub.f32 1.0, %v3124
        %v3141 = vsub.f32 1.0, %v3125
        %v3142 = vsub.f32 1.0, %v3126
        %v3143 = vsub.f32 1.0, %v3127
        %v3144 = vsub.f32 1.0, %v3128
        %v3145 = vmax.f32 %v3129, 0.0
        %v3146 = vmax.f32 %v3130, 0.0
        %v3147 = vmax.f32 %v3131, 0.0
        %v3148 = vmax.f32 %v3132, 0.0
        %v3149 = vmax.f32 %v3133, 0.0
        %v3150 = vmax.f32 %v3134, 0.0
        %v3151 = vmax.f32 %v3135, 0.0
        %v3152 = vmax.f32 %v3136, 0.0
        %v3153 = vmax.f32 %v3137, 0.0
        %v3154 = vmax.f32 %v3138, 0.0
        %v3155 = vmax.f32 %v3139, 0.0
        %v3156 = vmax.f32 %v3140, 0.0
        %v3157 = vmax.f32 %v3141, 0.0
        %v3158 = vmax.f32 %v3142, 0.0
        %v3159 = vmax.f32 %v3143, 0.0
        %v3160 = vmax.f32 %v3144, 0.0
        %v3161 = vlaneseq
        %v3162 = vshrl.u32 %v3161, 7
        %v3163 = vsub.s32 0, %v3162
        %v3164 = vrot.slane %v2787, %v3163
        %s3166 = sor.u32 256, 64
        %3167 = vbcast.lane.b32.xlu0 %v3164, %s3166
        %v3168 = vpop.permute.xlu0 %3167
        %v3169 = vlaneseq
        %v3170 = vshrl.u32 %v3169, 7
        %v3171 = vsub.s32 1, %v3170
        %v3172 = vrot.slane %v2787, %v3171
        %s3174 = sor.u32 256, 64
        %3175 = vbcast.lane.b32.xlu0 %v3172, %s3174
        %v3176 = vpop.permute.xlu0 %3175
        %v3177 = vlaneseq
        %v3178 = vshrl.u32 %v3177, 7
        %v3179 = vsub.s32 2, %v3178
        %v3180 = vrot.slane %v2787, %v3179
        %s3182 = sor.u32 256, 64
        %3183 = vbcast.lane.b32.xlu0 %v3180, %s3182
        %v3184 = vpop.permute.xlu0 %3183
        %v3185 = vlaneseq
        %v3186 = vshrl.u32 %v3185, 7
        %v3187 = vsub.s32 3, %v3186
        %v3188 = vrot.slane %v2787, %v3187
        %s3190 = sor.u32 256, 64
        %3191 = vbcast.lane.b32.xlu0 %v3188, %s3190
        %v3192 = vpop.permute.xlu0 %3191
        %v3193 = vlaneseq
        %v3194 = vshrl.u32 %v3193, 7
        %v3195 = vsub.s32 4, %v3194
        %v3196 = vrot.slane %v2787, %v3195
        %s3198 = sor.u32 256, 64
        %3199 = vbcast.lane.b32.xlu0 %v3196, %s3198
        %v3200 = vpop.permute.xlu0 %3199
        %v3201 = vlaneseq
        %v3202 = vshrl.u32 %v3201, 7
        %v3203 = vsub.s32 5, %v3202
        %v3204 = vrot.slane %v2787, %v3203
        %s3206 = sor.u32 256, 64
        %3207 = vbcast.lane.b32.xlu0 %v3204, %s3206
        %v3208 = vpop.permute.xlu0 %3207
        %v3209 = vlaneseq
        %v3210 = vshrl.u32 %v3209, 7
        %v3211 = vsub.s32 6, %v3210
        %v3212 = vrot.slane %v2787, %v3211
        %s3214 = sor.u32 256, 64
        %3215 = vbcast.lane.b32.xlu0 %v3212, %s3214
        %v3216 = vpop.permute.xlu0 %3215
        %v3217 = vlaneseq
        %v3218 = vshrl.u32 %v3217, 7
        %v3219 = vsub.s32 7, %v3218
        %v3220 = vrot.slane %v2787, %v3219
        %s3222 = sor.u32 256, 64
        %3223 = vbcast.lane.b32.xlu0 %v3220, %s3222
        %v3224 = vpop.permute.xlu0 %3223
        %v3225 = vlaneseq
        %v3226 = vshrl.u32 %v3225, 7
        %v3227 = vsub.s32 0, %v3226
        %v3228 = vrot.slane %v2788, %v3227
        %s3230 = sor.u32 256, 64
        %3231 = vbcast.lane.b32.xlu0 %v3228, %s3230
        %v3232 = vpop.permute.xlu0 %3231
        %v3233 = vlaneseq
        %v3234 = vshrl.u32 %v3233, 7
        %v3235 = vsub.s32 1, %v3234
        %v3236 = vrot.slane %v2788, %v3235
        %s3238 = sor.u32 256, 64
        %3239 = vbcast.lane.b32.xlu0 %v3236, %s3238
        %v3240 = vpop.permute.xlu0 %3239
        %v3241 = vlaneseq
        %v3242 = vshrl.u32 %v3241, 7
        %v3243 = vsub.s32 2, %v3242
        %v3244 = vrot.slane %v2788, %v3243
        %s3246 = sor.u32 256, 64
        %3247 = vbcast.lane.b32.xlu0 %v3244, %s3246
        %v3248 = vpop.permute.xlu0 %3247
        %v3249 = vlaneseq
        %v3250 = vshrl.u32 %v3249, 7
        %v3251 = vsub.s32 3, %v3250
        %v3252 = vrot.slane %v2788, %v3251
        %s3254 = sor.u32 256, 64
        %3255 = vbcast.lane.b32.xlu0 %v3252, %s3254
        %v3256 = vpop.permute.xlu0 %3255
        %v3257 = vlaneseq
        %v3258 = vshrl.u32 %v3257, 7
        %v3259 = vsub.s32 4, %v3258
        %v3260 = vrot.slane %v2788, %v3259
        %s3262 = sor.u32 256, 64
        %3263 = vbcast.lane.b32.xlu0 %v3260, %s3262
        %v3264 = vpop.permute.xlu0 %3263
        %v3265 = vlaneseq
        %v3266 = vshrl.u32 %v3265, 7
        %v3267 = vsub.s32 5, %v3266
        %v3268 = vrot.slane %v2788, %v3267
        %s3270 = sor.u32 256, 64
        %3271 = vbcast.lane.b32.xlu0 %v3268, %s3270
        %v3272 = vpop.permute.xlu0 %3271
        %v3273 = vlaneseq
        %v3274 = vshrl.u32 %v3273, 7
        %v3275 = vsub.s32 6, %v3274
        %v3276 = vrot.slane %v2788, %v3275
        %s3278 = sor.u32 256, 64
        %3279 = vbcast.lane.b32.xlu0 %v3276, %s3278
        %v3280 = vpop.permute.xlu0 %3279
        %v3281 = vlaneseq
        %v3282 = vshrl.u32 %v3281, 7
        %v3283 = vsub.s32 7, %v3282
        %v3284 = vrot.slane %v2788, %v3283
        %s3286 = sor.u32 256, 64
        %3287 = vbcast.lane.b32.xlu0 %v3284, %s3286
        %v3288 = vpop.permute.xlu0 %3287
        %v3289 = vmul.f32 %v3168, %v2953
        %v3290 = vmul.f32 %v3176, %v2954
        %v3291 = vmul.f32 %v3184, %v2955
        %v3292 = vmul.f32 %v3192, %v2956
        %v3293 = vmul.f32 %v3200, %v2957
        %v3294 = vmul.f32 %v3208, %v2958
        %v3295 = vmul.f32 %v3216, %v2959
        %v3296 = vmul.f32 %v3224, %v2960
        %v3297 = vmul.f32 %v3232, %v2961
        %v3298 = vmul.f32 %v3240, %v2962
        %v3299 = vmul.f32 %v3248, %v2963
        %v3300 = vmul.f32 %v3256, %v2964
        %v3301 = vmul.f32 %v3264, %v2965
        %v3302 = vmul.f32 %v3272, %v2966
        %v3303 = vmul.f32 %v3280, %v2967
        %v3304 = vmul.f32 %v3288, %v2968
        %v3305 = vmul.f32 %v3289, %v3145
        %v3306 = vmul.f32 %v3290, %v3146
        %v3307 = vmul.f32 %v3291, %v3147
        %v3308 = vmul.f32 %v3292, %v3148
        %v3309 = vmul.f32 %v3293, %v3149
        %v3310 = vmul.f32 %v3294, %v3150
        %v3311 = vmul.f32 %v3295, %v3151
        %v3312 = vmul.f32 %v3296, %v3152
        %v3313 = vmul.f32 %v3297, %v3153
        %v3314 = vmul.f32 %v3298, %v3154
        %v3315 = vmul.f32 %v3299, %v3155
        %v3316 = vmul.f32 %v3300, %v3156
        %v3317 = vmul.f32 %v3301, %v3157
        %v3318 = vmul.f32 %v3302, %v3158
        %v3319 = vmul.f32 %v3303, %v3159
        %v3320 = vmul.f32 %v3304, %v3160
        %vm3321 = vcmask 125952
        %v3322 = vsel %vm3321, %v3305, 0.0
        %v3323 = vrot.slane %v3322, 4
        %v3324 = vadd.f32 %v3322, %v3323
        %v3325 = vrot.slane %v3324, 2
        %v3326 = vadd.f32 %v3324, %v3325
        %v3327 = vrot.slane %v3326, 1
        %v3328 = vadd.f32 %v3326, %v3327
        %v3329 = vsel %vm3321, %v3306, 0.0
        %v3330 = vrot.slane %v3329, 4
        %v3331 = vadd.f32 %v3329, %v3330
        %v3332 = vrot.slane %v3331, 2
        %v3333 = vadd.f32 %v3331, %v3332
        %v3334 = vrot.slane %v3333, 1
        %v3335 = vadd.f32 %v3333, %v3334
        %v3336 = vsel %vm3321, %v3307, 0.0
        %v3337 = vrot.slane %v3336, 4
        %v3338 = vadd.f32 %v3336, %v3337
        %v3339 = vrot.slane %v3338, 2
        %v3340 = vadd.f32 %v3338, %v3339
        %v3341 = vrot.slane %v3340, 1
        %v3342 = vadd.f32 %v3340, %v3341
        %v3343 = vsel %vm3321, %v3308, 0.0
        %v3344 = vrot.slane %v3343, 4
        %v3345 = vadd.f32 %v3343, %v3344
        %v3346 = vrot.slane %v3345, 2
        %v3347 = vadd.f32 %v3345, %v3346
        %v3348 = vrot.slane %v3347, 1
        %v3349 = vadd.f32 %v3347, %v3348
        %v3350 = vsel %vm3321, %v3309, 0.0
        %v3351 = vrot.slane %v3350, 4
        %v3352 = vadd.f32 %v3350, %v3351
        %v3353 = vrot.slane %v3352, 2
        %v3354 = vadd.f32 %v3352, %v3353
        %v3355 = vrot.slane %v3354, 1
        %v3356 = vadd.f32 %v3354, %v3355
        %v3357 = vsel %vm3321, %v3310, 0.0
        %v3358 = vrot.slane %v3357, 4
        %v3359 = vadd.f32 %v3357, %v3358
        %v3360 = vrot.slane %v3359, 2
        %v3361 = vadd.f32 %v3359, %v3360
        %v3362 = vrot.slane %v3361, 1
        %v3363 = vadd.f32 %v3361, %v3362
        %v3364 = vsel %vm3321, %v3311, 0.0
        %v3365 = vrot.slane %v3364, 4
        %v3366 = vadd.f32 %v3364, %v3365
        %v3367 = vrot.slane %v3366, 2
        %v3368 = vadd.f32 %v3366, %v3367
        %v3369 = vrot.slane %v3368, 1
        %v3370 = vadd.f32 %v3368, %v3369
        %v3371 = vsel %vm3321, %v3312, 0.0
        %v3372 = vrot.slane %v3371, 4
        %v3373 = vadd.f32 %v3371, %v3372
        %v3374 = vrot.slane %v3373, 2
        %v3375 = vadd.f32 %v3373, %v3374
        %v3376 = vrot.slane %v3375, 1
        %v3377 = vadd.f32 %v3375, %v3376
        %v3378 = vsel %vm3321, %v3313, 0.0
        %v3379 = vrot.slane %v3378, 4
        %v3380 = vadd.f32 %v3378, %v3379
        %v3381 = vrot.slane %v3380, 2
        %v3382 = vadd.f32 %v3380, %v3381
        %v3383 = vrot.slane %v3382, 1
        %v3384 = vadd.f32 %v3382, %v3383
        %v3385 = vsel %vm3321, %v3314, 0.0
        %v3386 = vrot.slane %v3385, 4
        %v3387 = vadd.f32 %v3385, %v3386
        %v3388 = vrot.slane %v3387, 2
        %v3389 = vadd.f32 %v3387, %v3388
        %v3390 = vrot.slane %v3389, 1
        %v3391 = vadd.f32 %v3389, %v3390
        %v3392 = vsel %vm3321, %v3315, 0.0
        %v3393 = vrot.slane %v3392, 4
        %v3394 = vadd.f32 %v3392, %v3393
        %v3395 = vrot.slane %v3394, 2
        %v3396 = vadd.f32 %v3394, %v3395
        %v3397 = vrot.slane %v3396, 1
        %v3398 = vadd.f32 %v3396, %v3397
        %v3399 = vsel %vm3321, %v3316, 0.0
        %v3400 = vrot.slane %v3399, 4
        %v3401 = vadd.f32 %v3399, %v3400
        %v3402 = vrot.slane %v3401, 2
        %v3403 = vadd.f32 %v3401, %v3402
        %v3404 = vrot.slane %v3403, 1
        %v3405 = vadd.f32 %v3403, %v3404
        %v3406 = vsel %vm3321, %v3317, 0.0
        %v3407 = vrot.slane %v3406, 4
        %v3408 = vadd.f32 %v3406, %v3407
        %v3409 = vrot.slane %v3408, 2
        %v3410 = vadd.f32 %v3408, %v3409
        %v3411 = vrot.slane %v3410, 1
        %v3412 = vadd.f32 %v3410, %v3411
        %v3413 = vsel %vm3321, %v3318, 0.0
        %v3414 = vrot.slane %v3413, 4
        %v3415 = vadd.f32 %v3413, %v3414
        %v3416 = vrot.slane %v3415, 2
        %v3417 = vadd.f32 %v3415, %v3416
        %v3418 = vrot.slane %v3417, 1
        %v3419 = vadd.f32 %v3417, %v3418
        %v3420 = vsel %vm3321, %v3319, 0.0
        %v3421 = vrot.slane %v3420, 4
        %v3422 = vadd.f32 %v3420, %v3421
        %v3423 = vrot.slane %v3422, 2
        %v3424 = vadd.f32 %v3422, %v3423
        %v3425 = vrot.slane %v3424, 1
        %v3426 = vadd.f32 %v3424, %v3425
        %v3427 = vsel %vm3321, %v3320, 0.0
        %v3428 = vrot.slane %v3427, 4
        %v3429 = vadd.f32 %v3427, %v3428
        %v3430 = vrot.slane %v3429, 2
        %v3431 = vadd.f32 %v3429, %v3430
        %v3432 = vrot.slane %v3431, 1
        %v3433 = vadd.f32 %v3431, %v3432
        %v3434 = vpack.c.bf16 %v3328, %v3328
        %v3435 = vpack.c.bf16 %v3335, %v3335
        %v3436 = vpack.c.bf16 %v3342, %v3342
        %v3437 = vpack.c.bf16 %v3349, %v3349
        %v3438 = vpack.c.bf16 %v3356, %v3356
        %v3439 = vpack.c.bf16 %v3363, %v3363
        %v3440 = vpack.c.bf16 %v3370, %v3370
        %v3441 = vpack.c.bf16 %v3377, %v3377
        %v3442 = vpack.c.bf16 %v3384, %v3384
        %v3443 = vpack.c.bf16 %v3391, %v3391
        %v3444 = vpack.c.bf16 %v3398, %v3398
        %v3445 = vpack.c.bf16 %v3405, %v3405
        %v3446 = vpack.c.bf16 %v3412, %v3412
        %v3447 = vpack.c.bf16 %v3419, %v3419
        %v3448 = vpack.c.bf16 %v3426, %v3426
        %v3449 = vpack.c.bf16 %v3433, %v3433
        %v3450 = vld [vmem:[#allocation3] sm:$0xff]
        %v3451 = vld [vmem:[#allocation3 + $0x8] sm:$0xff]
        %v3452 = vpack.c.bf16 %v3451, %v3450
        %v3469 = vunpack.c.l.b16 %v3434
        %v3470 = vunpack.c.l.b16 %v3435
        %v3471 = vunpack.c.l.b16 %v3436
        %v3472 = vunpack.c.l.b16 %v3437
        %v3473 = vunpack.c.l.b16 %v3438
        %v3474 = vunpack.c.l.b16 %v3439
        %v3475 = vunpack.c.l.b16 %v3440
        %v3476 = vunpack.c.l.b16 %v3441
        %v3477 = vunpack.c.l.b16 %v3442
        %v3478 = vunpack.c.l.b16 %v3443
        %v3479 = vunpack.c.l.b16 %v3444
        %v3480 = vunpack.c.l.b16 %v3445
        %v3481 = vunpack.c.l.b16 %v3446
        %v3482 = vunpack.c.l.b16 %v3447
        %v3483 = vunpack.c.l.b16 %v3448
        %v3484 = vunpack.c.l.b16 %v3449
        %vm3485 = vcmask 1041409
        %v3486 = vsel %vm3485, %v3470, %v3469
        %vm3487 = vcmask 1042434
        %v3488 = vsel %vm3487, %v3471, %v3486
        %vm3489 = vcmask 1043459
        %v3490 = vsel %vm3489, %v3472, %v3488
        %vm3491 = vcmask 1044484
        %v3492 = vsel %vm3491, %v3473, %v3490
        %vm3493 = vcmask 1045509
        %v3494 = vsel %vm3493, %v3474, %v3492
        %vm3495 = vcmask 1046534
        %v3496 = vsel %vm3495, %v3475, %v3494
        %vm3497 = vcmask 1047559
        %v3498 = vsel %vm3497, %v3476, %v3496
        %v3499 = vsel %vm3485, %v3478, %v3477
        %v3500 = vsel %vm3487, %v3479, %v3499
        %v3501 = vsel %vm3489, %v3480, %v3500
        %v3502 = vsel %vm3491, %v3481, %v3501
        %v3503 = vsel %vm3493, %v3482, %v3502
        %v3504 = vsel %vm3495, %v3483, %v3503
        %v3505 = vsel %vm3497, %v3484, %v3504
        %v3506 = vpack.c.b16 %v3505, %v3498
        %v3508 = vsel %vm1322, %v3506, 0
        %3510 = vmatprep.subr.bf16.mxu0 0
        %3511 = vmatpush1.bf16.msra.mxu0 %v3452
        %3512 = vmatprep.subr.bf16.mxu0 0
        %3513 = vmatpush1.bf16.msra.mxu0 0
        %3514 = vmatprep.subr.bf16.mxu0 0
        %3515 = vmatpush1.bf16.msra.mxu0 0
        %3516 = vmatprep.subr.bf16.mxu0 0
        %3517 = vmatpush1.bf16.msra.mxu0 0
        %3518 = vmatprep.subr.bf16.mxu0 0
        %3519 = vmatpush1.bf16.msra.mxu0 0
        %3520 = vmatprep.subr.bf16.mxu0 0
        %3521 = vmatpush1.bf16.msra.mxu0 0
        %3522 = vmatprep.subr.bf16.mxu0 0
        %3523 = vmatpush1.bf16.msra.mxu0 0
        %3524 = vmatprep.subr.bf16.mxu0 0
        %3525 = vmatpush1.bf16.msra.mxu0 0
        %3526 = vmatprep.subr.bf16.mxu0 0
        %3527 = vmatpush1.bf16.msra.mxu0 0
        %3528 = vmatprep.subr.bf16.mxu0 0
        %3529 = vmatpush1.bf16.msra.mxu0 0
        %3530 = vmatprep.subr.bf16.mxu0 0
        %3531 = vmatpush1.bf16.msra.mxu0 0
        %3532 = vmatprep.subr.bf16.mxu0 0
        %3533 = vmatpush1.bf16.msra.mxu0 0
        %3534 = vmatprep.subr.bf16.mxu0 0
        %3535 = vmatpush1.bf16.msra.mxu0 0
        %3536 = vmatprep.subr.bf16.mxu0 0
        %3537 = vmatpush1.bf16.msra.mxu0 0
        %3538 = vmatprep.subr.bf16.mxu0 0
        %3539 = vmatpush1.bf16.msra.mxu0 0
        %3540 = vmatprep.subr.bf16.mxu0 0
        %3541 = vmatpush1.bf16.msra.mxu0 0
        %3542 = vmatprep.mubr.bf16.mxu0 0
        %3543 = vmatmul.mubr.bf16.gmra.mrb[0].mxu0 %v3508
        %v3544 = vpop.f32.mrb[0].mxu0
        %v3545 = vadd.f32 0.0, %v3544
        %v3546 = vpop.f32.mrb[0].mxu0
        %v3547 = vpop.f32.mrb[0].mxu0
        %v3548 = vadd.f32 0.0, %v3547
        %v3549 = vpop.f32.mrb[0].mxu0
        %3550 = vdwg.mxu0
        %3551 = vst.msk [vmem:[#allocation6] sm:$0xff] %vm1322, %v3545
        %3552 = vst.msk [vmem:[#allocation6 + $0x8] sm:$0xff] %vm1322, %v3548
        %v3553 = vld [vmem:[#allocation5] sm:$0xff]
        %v3554 = vld [vmem:[#allocation5 + $0x8] sm:$0xff]
        %vm3555 = vcmask 589344
        %v3556 = vsel %vm3555, %v3553, -inf
        %3557 = vmax.xlane.f32.xlu0 %v3556
        %v3558 = vpop.xlane.xlu0 %3557
        %v3559 = vsel %vm3555, %v3554, -inf
        %3560 = vmax.xlane.f32.xlu0 %v3559
        %v3561 = vpop.xlane.xlu0 %3560
        %v3562 = vsub.f32 %v3553, %v3558
        %v3563 = vsub.f32 %v3554, %v3561
        %v3564 = vmul.f32 %v3562, 1.442695
        %v3565 = vpow.pop %v3564
        %v3566 = vmul.f32 %v3563, 1.442695
        %v3567 = vpow.pop %v3566
        %3570 = vrot.lane.b32.xlu0 %v3565, 60
        %v3571 = vpop.permute.xlu0 %3570
        %3572 = vrot.lane.b32.xlu0 %v3567, 60
        %v3573 = vpop.permute.xlu0 %3572
        %v3576 = vsel %vm2778, %v3571, 0.0
        %3577 = vadd.xlane.f32.xlu0 %v3576
        %v3578 = vpop.xlane.xlu0 %3577
        %v3579 = vsel %vm2778, %v3573, 0.0
        %3580 = vadd.xlane.f32.xlu0 %v3579
        %v3581 = vpop.xlane.xlu0 %3580
        %v3582 = vrcp.pop %v3578
        %v3583 = vrcp.pop %v3581
        %v3584 = vmul.f32 %v3565, %v3582
        %v3585 = vmul.f32 %v3567, %v3583
        %v3586 = vadd.f32 %v2749, %v3553
        %v3587 = vadd.f32 %v2750, %v3554
        %v3588 = vadd.f32 %v2745, %v3553
        %v3589 = vadd.f32 %v2746, %v3554
        %v3590 = vlaneseq
        %v3591 = vshrl.u32 %v3590, 7
        %v3592 = vsub.s32 0, %v3591
        %v3593 = vrot.slane %v3586, %v3592
        %s3595 = sor.u32 256, 4
        %3596 = vbcast.lane.b32.xlu0 %v3593, %s3595
        %v3597 = vpop.permute.xlu0 %3596
        %v3598 = vlaneseq
        %v3599 = vshrl.u32 %v3598, 7
        %v3600 = vsub.s32 1, %v3599
        %v3601 = vrot.slane %v3586, %v3600
        %s3603 = sor.u32 256, 4
        %3604 = vbcast.lane.b32.xlu0 %v3601, %s3603
        %v3605 = vpop.permute.xlu0 %3604
        %v3606 = vlaneseq
        %v3607 = vshrl.u32 %v3606, 7
        %v3608 = vsub.s32 2, %v3607
        %v3609 = vrot.slane %v3586, %v3608
        %s3611 = sor.u32 256, 4
        %3612 = vbcast.lane.b32.xlu0 %v3609, %s3611
        %v3613 = vpop.permute.xlu0 %3612
        %v3614 = vlaneseq
        %v3615 = vshrl.u32 %v3614, 7
        %v3616 = vsub.s32 3, %v3615
        %v3617 = vrot.slane %v3586, %v3616
        %s3619 = sor.u32 256, 4
        %3620 = vbcast.lane.b32.xlu0 %v3617, %s3619
        %v3621 = vpop.permute.xlu0 %3620
        %v3622 = vlaneseq
        %v3623 = vshrl.u32 %v3622, 7
        %v3624 = vsub.s32 4, %v3623
        %v3625 = vrot.slane %v3586, %v3624
        %s3627 = sor.u32 256, 4
        %3628 = vbcast.lane.b32.xlu0 %v3625, %s3627
        %v3629 = vpop.permute.xlu0 %3628
        %v3630 = vlaneseq
        %v3631 = vshrl.u32 %v3630, 7
        %v3632 = vsub.s32 5, %v3631
        %v3633 = vrot.slane %v3586, %v3632
        %s3635 = sor.u32 256, 4
        %3636 = vbcast.lane.b32.xlu0 %v3633, %s3635
        %v3637 = vpop.permute.xlu0 %3636
        %v3638 = vlaneseq
        %v3639 = vshrl.u32 %v3638, 7
        %v3640 = vsub.s32 6, %v3639
        %v3641 = vrot.slane %v3586, %v3640
        %s3643 = sor.u32 256, 4
        %3644 = vbcast.lane.b32.xlu0 %v3641, %s3643
        %v3645 = vpop.permute.xlu0 %3644
        %v3646 = vlaneseq
        %v3647 = vshrl.u32 %v3646, 7
        %v3648 = vsub.s32 7, %v3647
        %v3649 = vrot.slane %v3586, %v3648
        %s3651 = sor.u32 256, 4
        %3652 = vbcast.lane.b32.xlu0 %v3649, %s3651
        %v3653 = vpop.permute.xlu0 %3652
        %v3654 = vlaneseq
        %v3655 = vshrl.u32 %v3654, 7
        %v3656 = vsub.s32 0, %v3655
        %v3657 = vrot.slane %v3587, %v3656
        %s3659 = sor.u32 256, 4
        %3660 = vbcast.lane.b32.xlu0 %v3657, %s3659
        %v3661 = vpop.permute.xlu0 %3660
        %v3662 = vlaneseq
        %v3663 = vshrl.u32 %v3662, 7
        %v3664 = vsub.s32 1, %v3663
        %v3665 = vrot.slane %v3587, %v3664
        %s3667 = sor.u32 256, 4
        %3668 = vbcast.lane.b32.xlu0 %v3665, %s3667
        %v3669 = vpop.permute.xlu0 %3668
        %v3670 = vlaneseq
        %v3671 = vshrl.u32 %v3670, 7
        %v3672 = vsub.s32 2, %v3671
        %v3673 = vrot.slane %v3587, %v3672
        %s3675 = sor.u32 256, 4
        %3676 = vbcast.lane.b32.xlu0 %v3673, %s3675
        %v3677 = vpop.permute.xlu0 %3676
        %v3678 = vlaneseq
        %v3679 = vshrl.u32 %v3678, 7
        %v3680 = vsub.s32 3, %v3679
        %v3681 = vrot.slane %v3587, %v3680
        %s3683 = sor.u32 256, 4
        %3684 = vbcast.lane.b32.xlu0 %v3681, %s3683
        %v3685 = vpop.permute.xlu0 %3684
        %v3686 = vlaneseq
        %v3687 = vshrl.u32 %v3686, 7
        %v3688 = vsub.s32 4, %v3687
        %v3689 = vrot.slane %v3587, %v3688
        %s3691 = sor.u32 256, 4
        %3692 = vbcast.lane.b32.xlu0 %v3689, %s3691
        %v3693 = vpop.permute.xlu0 %3692
        %v3694 = vlaneseq
        %v3695 = vshrl.u32 %v3694, 7
        %v3696 = vsub.s32 5, %v3695
        %v3697 = vrot.slane %v3587, %v3696
        %s3699 = sor.u32 256, 4
        %3700 = vbcast.lane.b32.xlu0 %v3697, %s3699
        %v3701 = vpop.permute.xlu0 %3700
        %v3702 = vlaneseq
        %v3703 = vshrl.u32 %v3702, 7
        %v3704 = vsub.s32 6, %v3703
        %v3705 = vrot.slane %v3587, %v3704
        %s3707 = sor.u32 256, 4
        %3708 = vbcast.lane.b32.xlu0 %v3705, %s3707
        %v3709 = vpop.permute.xlu0 %3708
        %v3710 = vlaneseq
        %v3711 = vshrl.u32 %v3710, 7
        %v3712 = vsub.s32 7, %v3711
        %v3713 = vrot.slane %v3587, %v3712
        %s3715 = sor.u32 256, 4
        %3716 = vbcast.lane.b32.xlu0 %v3713, %s3715
        %v3717 = vpop.permute.xlu0 %3716
        %v3718 = vsub.f32 %v3597, %v2754
        %v3719 = vsub.f32 %v3605, %v2754
        %v3720 = vsub.f32 %v3613, %v2754
        %v3721 = vsub.f32 %v3621, %v2754
        %v3722 = vsub.f32 %v3629, %v2754
        %v3723 = vsub.f32 %v3637, %v2754
        %v3724 = vsub.f32 %v3645, %v2754
        %v3725 = vsub.f32 %v3653, %v2754
        %v3726 = vsub.f32 %v3661, %v2754
        %v3727 = vsub.f32 %v3669, %v2754
        %v3728 = vsub.f32 %v3677, %v2754
        %v3729 = vsub.f32 %v3685, %v2754
        %v3730 = vsub.f32 %v3693, %v2754
        %v3731 = vsub.f32 %v3701, %v2754
        %v3732 = vsub.f32 %v3709, %v2754
        %v3733 = vsub.f32 %v3717, %v2754
        %v3734 = vand.u32 2147483647, %v3718
        %v3735 = vand.u32 2147483647, %v3719
        %v3736 = vand.u32 2147483647, %v3720
        %v3737 = vand.u32 2147483647, %v3721
        %v3738 = vand.u32 2147483647, %v3722
        %v3739 = vand.u32 2147483647, %v3723
        %v3740 = vand.u32 2147483647, %v3724
        %v3741 = vand.u32 2147483647, %v3725
        %v3742 = vand.u32 2147483647, %v3726
        %v3743 = vand.u32 2147483647, %v3727
        %v3744 = vand.u32 2147483647, %v3728
        %v3745 = vand.u32 2147483647, %v3729
        %v3746 = vand.u32 2147483647, %v3730
        %v3747 = vand.u32 2147483647, %v3731
        %v3748 = vand.u32 2147483647, %v3732
        %v3749 = vand.u32 2147483647, %v3733
        %v3750 = vsub.f32 1.0, %v3734
        %v3751 = vsub.f32 1.0, %v3735
        %v3752 = vsub.f32 1.0, %v3736
        %v3753 = vsub.f32 1.0, %v3737
        %v3754 = vsub.f32 1.0, %v3738
        %v3755 = vsub.f32 1.0, %v3739
        %v3756 = vsub.f32 1.0, %v3740
        %v3757 = vsub.f32 1.0, %v3741
        %v3758 = vsub.f32 1.0, %v3742
        %v3759 = vsub.f32 1.0, %v3743
        %v3760 = vsub.f32 1.0, %v3744
        %v3761 = vsub.f32 1.0, %v3745
        %v3762 = vsub.f32 1.0, %v3746
        %v3763 = vsub.f32 1.0, %v3747
        %v3764 = vsub.f32 1.0, %v3748
        %v3765 = vsub.f32 1.0, %v3749
        %v3766 = vmax.f32 %v3750, 0.0
        %v3767 = vmax.f32 %v3751, 0.0
        %v3768 = vmax.f32 %v3752, 0.0
        %v3769 = vmax.f32 %v3753, 0.0
        %v3770 = vmax.f32 %v3754, 0.0
        %v3771 = vmax.f32 %v3755, 0.0
        %v3772 = vmax.f32 %v3756, 0.0
        %v3773 = vmax.f32 %v3757, 0.0
        %v3774 = vmax.f32 %v3758, 0.0
        %v3775 = vmax.f32 %v3759, 0.0
        %v3776 = vmax.f32 %v3760, 0.0
        %v3777 = vmax.f32 %v3761, 0.0
        %v3778 = vmax.f32 %v3762, 0.0
        %v3779 = vmax.f32 %v3763, 0.0
        %v3780 = vmax.f32 %v3764, 0.0
        %v3781 = vmax.f32 %v3765, 0.0
        %v3782 = vlaneseq
        %v3783 = vshrl.u32 %v3782, 7
        %v3784 = vsub.s32 0, %v3783
        %v3785 = vrot.slane %v3588, %v3784
        %s3787 = sor.u32 256, 36
        %3788 = vbcast.lane.b32.xlu0 %v3785, %s3787
        %v3789 = vpop.permute.xlu0 %3788
        %v3790 = vlaneseq
        %v3791 = vshrl.u32 %v3790, 7
        %v3792 = vsub.s32 1, %v3791
        %v3793 = vrot.slane %v3588, %v3792
        %s3795 = sor.u32 256, 36
        %3796 = vbcast.lane.b32.xlu0 %v3793, %s3795
        %v3797 = vpop.permute.xlu0 %3796
        %v3798 = vlaneseq
        %v3799 = vshrl.u32 %v3798, 7
        %v3800 = vsub.s32 2, %v3799
        %v3801 = vrot.slane %v3588, %v3800
        %s3803 = sor.u32 256, 36
        %3804 = vbcast.lane.b32.xlu0 %v3801, %s3803
        %v3805 = vpop.permute.xlu0 %3804
        %v3806 = vlaneseq
        %v3807 = vshrl.u32 %v3806, 7
        %v3808 = vsub.s32 3, %v3807
        %v3809 = vrot.slane %v3588, %v3808
        %s3811 = sor.u32 256, 36
        %3812 = vbcast.lane.b32.xlu0 %v3809, %s3811
        %v3813 = vpop.permute.xlu0 %3812
        %v3814 = vlaneseq
        %v3815 = vshrl.u32 %v3814, 7
        %v3816 = vsub.s32 4, %v3815
        %v3817 = vrot.slane %v3588, %v3816
        %s3819 = sor.u32 256, 36
        %3820 = vbcast.lane.b32.xlu0 %v3817, %s3819
        %v3821 = vpop.permute.xlu0 %3820
        %v3822 = vlaneseq
        %v3823 = vshrl.u32 %v3822, 7
        %v3824 = vsub.s32 5, %v3823
        %v3825 = vrot.slane %v3588, %v3824
        %s3827 = sor.u32 256, 36
        %3828 = vbcast.lane.b32.xlu0 %v3825, %s3827
        %v3829 = vpop.permute.xlu0 %3828
        %v3830 = vlaneseq
        %v3831 = vshrl.u32 %v3830, 7
        %v3832 = vsub.s32 6, %v3831
        %v3833 = vrot.slane %v3588, %v3832
        %s3835 = sor.u32 256, 36
        %3836 = vbcast.lane.b32.xlu0 %v3833, %s3835
        %v3837 = vpop.permute.xlu0 %3836
        %v3838 = vlaneseq
        %v3839 = vshrl.u32 %v3838, 7
        %v3840 = vsub.s32 7, %v3839
        %v3841 = vrot.slane %v3588, %v3840
        %s3843 = sor.u32 256, 36
        %3844 = vbcast.lane.b32.xlu0 %v3841, %s3843
        %v3845 = vpop.permute.xlu0 %3844
        %v3846 = vlaneseq
        %v3847 = vshrl.u32 %v3846, 7
        %v3848 = vsub.s32 0, %v3847
        %v3849 = vrot.slane %v3589, %v3848
        %s3851 = sor.u32 256, 36
        %3852 = vbcast.lane.b32.xlu0 %v3849, %s3851
        %v3853 = vpop.permute.xlu0 %3852
        %v3854 = vlaneseq
        %v3855 = vshrl.u32 %v3854, 7
        %v3856 = vsub.s32 1, %v3855
        %v3857 = vrot.slane %v3589, %v3856
        %s3859 = sor.u32 256, 36
        %3860 = vbcast.lane.b32.xlu0 %v3857, %s3859
        %v3861 = vpop.permute.xlu0 %3860
        %v3862 = vlaneseq
        %v3863 = vshrl.u32 %v3862, 7
        %v3864 = vsub.s32 2, %v3863
        %v3865 = vrot.slane %v3589, %v3864
        %s3867 = sor.u32 256, 36
        %3868 = vbcast.lane.b32.xlu0 %v3865, %s3867
        %v3869 = vpop.permute.xlu0 %3868
        %v3870 = vlaneseq
        %v3871 = vshrl.u32 %v3870, 7
        %v3872 = vsub.s32 3, %v3871
        %v3873 = vrot.slane %v3589, %v3872
        %s3875 = sor.u32 256, 36
        %3876 = vbcast.lane.b32.xlu0 %v3873, %s3875
        %v3877 = vpop.permute.xlu0 %3876
        %v3878 = vlaneseq
        %v3879 = vshrl.u32 %v3878, 7
        %v3880 = vsub.s32 4, %v3879
        %v3881 = vrot.slane %v3589, %v3880
        %s3883 = sor.u32 256, 36
        %3884 = vbcast.lane.b32.xlu0 %v3881, %s3883
        %v3885 = vpop.permute.xlu0 %3884
        %v3886 = vlaneseq
        %v3887 = vshrl.u32 %v3886, 7
        %v3888 = vsub.s32 5, %v3887
        %v3889 = vrot.slane %v3589, %v3888
        %s3891 = sor.u32 256, 36
        %3892 = vbcast.lane.b32.xlu0 %v3889, %s3891
        %v3893 = vpop.permute.xlu0 %3892
        %v3894 = vlaneseq
        %v3895 = vshrl.u32 %v3894, 7
        %v3896 = vsub.s32 6, %v3895
        %v3897 = vrot.slane %v3589, %v3896
        %s3899 = sor.u32 256, 36
        %3900 = vbcast.lane.b32.xlu0 %v3897, %s3899
        %v3901 = vpop.permute.xlu0 %3900
        %v3902 = vlaneseq
        %v3903 = vshrl.u32 %v3902, 7
        %v3904 = vsub.s32 7, %v3903
        %v3905 = vrot.slane %v3589, %v3904
        %s3907 = sor.u32 256, 36
        %3908 = vbcast.lane.b32.xlu0 %v3905, %s3907
        %v3909 = vpop.permute.xlu0 %3908
        %v3910 = vsub.f32 %v3789, %v2752
        %v3911 = vsub.f32 %v3797, %v2752
        %v3912 = vsub.f32 %v3805, %v2752
        %v3913 = vsub.f32 %v3813, %v2752
        %v3914 = vsub.f32 %v3821, %v2752
        %v3915 = vsub.f32 %v3829, %v2752
        %v3916 = vsub.f32 %v3837, %v2752
        %v3917 = vsub.f32 %v3845, %v2752
        %v3918 = vsub.f32 %v3853, %v2752
        %v3919 = vsub.f32 %v3861, %v2752
        %v3920 = vsub.f32 %v3869, %v2752
        %v3921 = vsub.f32 %v3877, %v2752
        %v3922 = vsub.f32 %v3885, %v2752
        %v3923 = vsub.f32 %v3893, %v2752
        %v3924 = vsub.f32 %v3901, %v2752
        %v3925 = vsub.f32 %v3909, %v2752
        %v3926 = vand.u32 2147483647, %v3910
        %v3927 = vand.u32 2147483647, %v3911
        %v3928 = vand.u32 2147483647, %v3912
        %v3929 = vand.u32 2147483647, %v3913
        %v3930 = vand.u32 2147483647, %v3914
        %v3931 = vand.u32 2147483647, %v3915
        %v3932 = vand.u32 2147483647, %v3916
        %v3933 = vand.u32 2147483647, %v3917
        %v3934 = vand.u32 2147483647, %v3918
        %v3935 = vand.u32 2147483647, %v3919
        %v3936 = vand.u32 2147483647, %v3920
        %v3937 = vand.u32 2147483647, %v3921
        %v3938 = vand.u32 2147483647, %v3922
        %v3939 = vand.u32 2147483647, %v3923
        %v3940 = vand.u32 2147483647, %v3924
        %v3941 = vand.u32 2147483647, %v3925
        %v3942 = vsub.f32 1.0, %v3926
        %v3943 = vsub.f32 1.0, %v3927
        %v3944 = vsub.f32 1.0, %v3928
        %v3945 = vsub.f32 1.0, %v3929
        %v3946 = vsub.f32 1.0, %v3930
        %v3947 = vsub.f32 1.0, %v3931
        %v3948 = vsub.f32 1.0, %v3932
        %v3949 = vsub.f32 1.0, %v3933
        %v3950 = vsub.f32 1.0, %v3934
        %v3951 = vsub.f32 1.0, %v3935
        %v3952 = vsub.f32 1.0, %v3936
        %v3953 = vsub.f32 1.0, %v3937
        %v3954 = vsub.f32 1.0, %v3938
        %v3955 = vsub.f32 1.0, %v3939
        %v3956 = vsub.f32 1.0, %v3940
        %v3957 = vsub.f32 1.0, %v3941
        %v3958 = vmax.f32 %v3942, 0.0
        %v3959 = vmax.f32 %v3943, 0.0
        %v3960 = vmax.f32 %v3944, 0.0
        %v3961 = vmax.f32 %v3945, 0.0
        %v3962 = vmax.f32 %v3946, 0.0
        %v3963 = vmax.f32 %v3947, 0.0
        %v3964 = vmax.f32 %v3948, 0.0
        %v3965 = vmax.f32 %v3949, 0.0
        %v3966 = vmax.f32 %v3950, 0.0
        %v3967 = vmax.f32 %v3951, 0.0
        %v3968 = vmax.f32 %v3952, 0.0
        %v3969 = vmax.f32 %v3953, 0.0
        %v3970 = vmax.f32 %v3954, 0.0
        %v3971 = vmax.f32 %v3955, 0.0
        %v3972 = vmax.f32 %v3956, 0.0
        %v3973 = vmax.f32 %v3957, 0.0
        %v3974 = vlaneseq
        %v3975 = vshrl.u32 %v3974, 7
        %v3976 = vsub.s32 0, %v3975
        %v3977 = vrot.slane %v3584, %v3976
        %s3979 = sor.u32 256, 68
        %3980 = vbcast.lane.b32.xlu0 %v3977, %s3979
        %v3981 = vpop.permute.xlu0 %3980
        %v3982 = vlaneseq
        %v3983 = vshrl.u32 %v3982, 7
        %v3984 = vsub.s32 1, %v3983
        %v3985 = vrot.slane %v3584, %v3984
        %s3987 = sor.u32 256, 68
        %3988 = vbcast.lane.b32.xlu0 %v3985, %s3987
        %v3989 = vpop.permute.xlu0 %3988
        %v3990 = vlaneseq
        %v3991 = vshrl.u32 %v3990, 7
        %v3992 = vsub.s32 2, %v3991
        %v3993 = vrot.slane %v3584, %v3992
        %s3995 = sor.u32 256, 68
        %3996 = vbcast.lane.b32.xlu0 %v3993, %s3995
        %v3997 = vpop.permute.xlu0 %3996
        %v3998 = vlaneseq
        %v3999 = vshrl.u32 %v3998, 7
        %v4000 = vsub.s32 3, %v3999
        %v4001 = vrot.slane %v3584, %v4000
        %s4003 = sor.u32 256, 68
        %4004 = vbcast.lane.b32.xlu0 %v4001, %s4003
        %v4005 = vpop.permute.xlu0 %4004
        %v4006 = vlaneseq
        %v4007 = vshrl.u32 %v4006, 7
        %v4008 = vsub.s32 4, %v4007
        %v4009 = vrot.slane %v3584, %v4008
        %s4011 = sor.u32 256, 68
        %4012 = vbcast.lane.b32.xlu0 %v4009, %s4011
        %v4013 = vpop.permute.xlu0 %4012
        %v4014 = vlaneseq
        %v4015 = vshrl.u32 %v4014, 7
        %v4016 = vsub.s32 5, %v4015
        %v4017 = vrot.slane %v3584, %v4016
        %s4019 = sor.u32 256, 68
        %4020 = vbcast.lane.b32.xlu0 %v4017, %s4019
        %v4021 = vpop.permute.xlu0 %4020
        %v4022 = vlaneseq
        %v4023 = vshrl.u32 %v4022, 7
        %v4024 = vsub.s32 6, %v4023
        %v4025 = vrot.slane %v3584, %v4024
        %s4027 = sor.u32 256, 68
        %4028 = vbcast.lane.b32.xlu0 %v4025, %s4027
        %v4029 = vpop.permute.xlu0 %4028
        %v4030 = vlaneseq
        %v4031 = vshrl.u32 %v4030, 7
        %v4032 = vsub.s32 7, %v4031
        %v4033 = vrot.slane %v3584, %v4032
        %s4035 = sor.u32 256, 68
        %4036 = vbcast.lane.b32.xlu0 %v4033, %s4035
        %v4037 = vpop.permute.xlu0 %4036
        %v4038 = vlaneseq
        %v4039 = vshrl.u32 %v4038, 7
        %v4040 = vsub.s32 0, %v4039
        %v4041 = vrot.slane %v3585, %v4040
        %s4043 = sor.u32 256, 68
        %4044 = vbcast.lane.b32.xlu0 %v4041, %s4043
        %v4045 = vpop.permute.xlu0 %4044
        %v4046 = vlaneseq
        %v4047 = vshrl.u32 %v4046, 7
        %v4048 = vsub.s32 1, %v4047
        %v4049 = vrot.slane %v3585, %v4048
        %s4051 = sor.u32 256, 68
        %4052 = vbcast.lane.b32.xlu0 %v4049, %s4051
        %v4053 = vpop.permute.xlu0 %4052
        %v4054 = vlaneseq
        %v4055 = vshrl.u32 %v4054, 7
        %v4056 = vsub.s32 2, %v4055
        %v4057 = vrot.slane %v3585, %v4056
        %s4059 = sor.u32 256, 68
        %4060 = vbcast.lane.b32.xlu0 %v4057, %s4059
        %v4061 = vpop.permute.xlu0 %4060
        %v4062 = vlaneseq
        %v4063 = vshrl.u32 %v4062, 7
        %v4064 = vsub.s32 3, %v4063
        %v4065 = vrot.slane %v3585, %v4064
        %s4067 = sor.u32 256, 68
        %4068 = vbcast.lane.b32.xlu0 %v4065, %s4067
        %v4069 = vpop.permute.xlu0 %4068
        %v4070 = vlaneseq
        %v4071 = vshrl.u32 %v4070, 7
        %v4072 = vsub.s32 4, %v4071
        %v4073 = vrot.slane %v3585, %v4072
        %s4075 = sor.u32 256, 68
        %4076 = vbcast.lane.b32.xlu0 %v4073, %s4075
        %v4077 = vpop.permute.xlu0 %4076
        %v4078 = vlaneseq
        %v4079 = vshrl.u32 %v4078, 7
        %v4080 = vsub.s32 5, %v4079
        %v4081 = vrot.slane %v3585, %v4080
        %s4083 = sor.u32 256, 68
        %4084 = vbcast.lane.b32.xlu0 %v4081, %s4083
        %v4085 = vpop.permute.xlu0 %4084
        %v4086 = vlaneseq
        %v4087 = vshrl.u32 %v4086, 7
        %v4088 = vsub.s32 6, %v4087
        %v4089 = vrot.slane %v3585, %v4088
        %s4091 = sor.u32 256, 68
        %4092 = vbcast.lane.b32.xlu0 %v4089, %s4091
        %v4093 = vpop.permute.xlu0 %4092
        %v4094 = vlaneseq
        %v4095 = vshrl.u32 %v4094, 7
        %v4096 = vsub.s32 7, %v4095
        %v4097 = vrot.slane %v3585, %v4096
        %s4099 = sor.u32 256, 68
        %4100 = vbcast.lane.b32.xlu0 %v4097, %s4099
        %v4101 = vpop.permute.xlu0 %4100
        %v4102 = vmul.f32 %v3981, %v3766
        %v4103 = vmul.f32 %v3989, %v3767
        %v4104 = vmul.f32 %v3997, %v3768
        %v4105 = vmul.f32 %v4005, %v3769
        %v4106 = vmul.f32 %v4013, %v3770
        %v4107 = vmul.f32 %v4021, %v3771
        %v4108 = vmul.f32 %v4029, %v3772
        %v4109 = vmul.f32 %v4037, %v3773
        %v4110 = vmul.f32 %v4045, %v3774
        %v4111 = vmul.f32 %v4053, %v3775
        %v4112 = vmul.f32 %v4061, %v3776
        %v4113 = vmul.f32 %v4069, %v3777
        %v4114 = vmul.f32 %v4077, %v3778
        %v4115 = vmul.f32 %v4085, %v3779
        %v4116 = vmul.f32 %v4093, %v3780
        %v4117 = vmul.f32 %v4101, %v3781
        %v4118 = vmul.f32 %v4102, %v3958
        %v4119 = vmul.f32 %v4103, %v3959
        %v4120 = vmul.f32 %v4104, %v3960
        %v4121 = vmul.f32 %v4105, %v3961
        %v4122 = vmul.f32 %v4106, %v3962
        %v4123 = vmul.f32 %v4107, %v3963
        %v4124 = vmul.f32 %v4108, %v3964
        %v4125 = vmul.f32 %v4109, %v3965
        %v4126 = vmul.f32 %v4110, %v3966
        %v4127 = vmul.f32 %v4111, %v3967
        %v4128 = vmul.f32 %v4112, %v3968
        %v4129 = vmul.f32 %v4113, %v3969
        %v4130 = vmul.f32 %v4114, %v3970
        %v4131 = vmul.f32 %v4115, %v3971
        %v4132 = vmul.f32 %v4116, %v3972
        %v4133 = vmul.f32 %v4117, %v3973
        %v4134 = vsel %vm3321, %v4118, 0.0
        %v4135 = vrot.slane %v4134, 4
        %v4136 = vadd.f32 %v4134, %v4135
        %v4137 = vrot.slane %v4136, 2
        %v4138 = vadd.f32 %v4136, %v4137
        %v4139 = vrot.slane %v4138, 1
        %v4140 = vadd.f32 %v4138, %v4139
        %v4141 = vsel %vm3321, %v4119, 0.0
        %v4142 = vrot.slane %v4141, 4
        %v4143 = vadd.f32 %v4141, %v4142
        %v4144 = vrot.slane %v4143, 2
        %v4145 = vadd.f32 %v4143, %v4144
        %v4146 = vrot.slane %v4145, 1
        %v4147 = vadd.f32 %v4145, %v4146
        %v4148 = vsel %vm3321, %v4120, 0.0
        %v4149 = vrot.slane %v4148, 4
        %v4150 = vadd.f32 %v4148, %v4149
        %v4151 = vrot.slane %v4150, 2
        %v4152 = vadd.f32 %v4150, %v4151
        %v4153 = vrot.slane %v4152, 1
        %v4154 = vadd.f32 %v4152, %v4153
        %v4155 = vsel %vm3321, %v4121, 0.0
        %v4156 = vrot.slane %v4155, 4
        %v4157 = vadd.f32 %v4155, %v4156
        %v4158 = vrot.slane %v4157, 2
        %v4159 = vadd.f32 %v4157, %v4158
        %v4160 = vrot.slane %v4159, 1
        %v4161 = vadd.f32 %v4159, %v4160
        %v4162 = vsel %vm3321, %v4122, 0.0
        %v4163 = vrot.slane %v4162, 4
        %v4164 = vadd.f32 %v4162, %v4163
        %v4165 = vrot.slane %v4164, 2
        %v4166 = vadd.f32 %v4164, %v4165
        %v4167 = vrot.slane %v4166, 1
        %v4168 = vadd.f32 %v4166, %v4167
        %v4169 = vsel %vm3321, %v4123, 0.0
        %v4170 = vrot.slane %v4169, 4
        %v4171 = vadd.f32 %v4169, %v4170
        %v4172 = vrot.slane %v4171, 2
        %v4173 = vadd.f32 %v4171, %v4172
        %v4174 = vrot.slane %v4173, 1
        %v4175 = vadd.f32 %v4173, %v4174
        %v4176 = vsel %vm3321, %v4124, 0.0
        %v4177 = vrot.slane %v4176, 4
        %v4178 = vadd.f32 %v4176, %v4177
        %v4179 = vrot.slane %v4178, 2
        %v4180 = vadd.f32 %v4178, %v4179
        %v4181 = vrot.slane %v4180, 1
        %v4182 = vadd.f32 %v4180, %v4181
        %v4183 = vsel %vm3321, %v4125, 0.0
        %v4184 = vrot.slane %v4183, 4
        %v4185 = vadd.f32 %v4183, %v4184
        %v4186 = vrot.slane %v4185, 2
        %v4187 = vadd.f32 %v4185, %v4186
        %v4188 = vrot.slane %v4187, 1
        %v4189 = vadd.f32 %v4187, %v4188
        %v4190 = vsel %vm3321, %v4126, 0.0
        %v4191 = vrot.slane %v4190, 4
        %v4192 = vadd.f32 %v4190, %v4191
        %v4193 = vrot.slane %v4192, 2
        %v4194 = vadd.f32 %v4192, %v4193
        %v4195 = vrot.slane %v4194, 1
        %v4196 = vadd.f32 %v4194, %v4195
        %v4197 = vsel %vm3321, %v4127, 0.0
        %v4198 = vrot.slane %v4197, 4
        %v4199 = vadd.f32 %v4197, %v4198
        %v4200 = vrot.slane %v4199, 2
        %v4201 = vadd.f32 %v4199, %v4200
        %v4202 = vrot.slane %v4201, 1
        %v4203 = vadd.f32 %v4201, %v4202
        %v4204 = vsel %vm3321, %v4128, 0.0
        %v4205 = vrot.slane %v4204, 4
        %v4206 = vadd.f32 %v4204, %v4205
        %v4207 = vrot.slane %v4206, 2
        %v4208 = vadd.f32 %v4206, %v4207
        %v4209 = vrot.slane %v4208, 1
        %v4210 = vadd.f32 %v4208, %v4209
        %v4211 = vsel %vm3321, %v4129, 0.0
        %v4212 = vrot.slane %v4211, 4
        %v4213 = vadd.f32 %v4211, %v4212
        %v4214 = vrot.slane %v4213, 2
        %v4215 = vadd.f32 %v4213, %v4214
        %v4216 = vrot.slane %v4215, 1
        %v4217 = vadd.f32 %v4215, %v4216
        %v4218 = vsel %vm3321, %v4130, 0.0
        %v4219 = vrot.slane %v4218, 4
        %v4220 = vadd.f32 %v4218, %v4219
        %v4221 = vrot.slane %v4220, 2
        %v4222 = vadd.f32 %v4220, %v4221
        %v4223 = vrot.slane %v4222, 1
        %v4224 = vadd.f32 %v4222, %v4223
        %v4225 = vsel %vm3321, %v4131, 0.0
        %v4226 = vrot.slane %v4225, 4
        %v4227 = vadd.f32 %v4225, %v4226
        %v4228 = vrot.slane %v4227, 2
        %v4229 = vadd.f32 %v4227, %v4228
        %v4230 = vrot.slane %v4229, 1
        %v4231 = vadd.f32 %v4229, %v4230
        %v4232 = vsel %vm3321, %v4132, 0.0
        %v4233 = vrot.slane %v4232, 4
        %v4234 = vadd.f32 %v4232, %v4233
        %v4235 = vrot.slane %v4234, 2
        %v4236 = vadd.f32 %v4234, %v4235
        %v4237 = vrot.slane %v4236, 1
        %v4238 = vadd.f32 %v4236, %v4237
        %v4239 = vsel %vm3321, %v4133, 0.0
        %v4240 = vrot.slane %v4239, 4
        %v4241 = vadd.f32 %v4239, %v4240
        %v4242 = vrot.slane %v4241, 2
        %v4243 = vadd.f32 %v4241, %v4242
        %v4244 = vrot.slane %v4243, 1
        %v4245 = vadd.f32 %v4243, %v4244
        %v4246 = vpack.c.bf16 %v4140, %v4140
        %v4247 = vpack.c.bf16 %v4147, %v4147
        %v4248 = vpack.c.bf16 %v4154, %v4154
        %v4249 = vpack.c.bf16 %v4161, %v4161
        %v4250 = vpack.c.bf16 %v4168, %v4168
        %v4251 = vpack.c.bf16 %v4175, %v4175
        %v4252 = vpack.c.bf16 %v4182, %v4182
        %v4253 = vpack.c.bf16 %v4189, %v4189
        %v4254 = vpack.c.bf16 %v4196, %v4196
        %v4255 = vpack.c.bf16 %v4203, %v4203
        %v4256 = vpack.c.bf16 %v4210, %v4210
        %v4257 = vpack.c.bf16 %v4217, %v4217
        %v4258 = vpack.c.bf16 %v4224, %v4224
        %v4259 = vpack.c.bf16 %v4231, %v4231
        %v4260 = vpack.c.bf16 %v4238, %v4238
        %v4261 = vpack.c.bf16 %v4245, %v4245
        %v4262 = vld [vmem:[#allocation3] sm:$0xff]
        %v4263 = vld [vmem:[#allocation3 + $0x8] sm:$0xff]
        %v4264 = vpack.c.bf16 %v4263, %v4262
        %v4281 = vunpack.c.l.b16 %v4246
        %v4282 = vunpack.c.l.b16 %v4247
        %v4283 = vunpack.c.l.b16 %v4248
        %v4284 = vunpack.c.l.b16 %v4249
        %v4285 = vunpack.c.l.b16 %v4250
        %v4286 = vunpack.c.l.b16 %v4251
        %v4287 = vunpack.c.l.b16 %v4252
        %v4288 = vunpack.c.l.b16 %v4253
        %v4289 = vunpack.c.l.b16 %v4254
        %v4290 = vunpack.c.l.b16 %v4255
        %v4291 = vunpack.c.l.b16 %v4256
        %v4292 = vunpack.c.l.b16 %v4257
        %v4293 = vunpack.c.l.b16 %v4258
        %v4294 = vunpack.c.l.b16 %v4259
        %v4295 = vunpack.c.l.b16 %v4260
        %v4296 = vunpack.c.l.b16 %v4261
        %v4297 = vsel %vm3485, %v4282, %v4281
        %v4298 = vsel %vm3487, %v4283, %v4297
        %v4299 = vsel %vm3489, %v4284, %v4298
        %v4300 = vsel %vm3491, %v4285, %v4299
        %v4301 = vsel %vm3493, %v4286, %v4300
        %v4302 = vsel %vm3495, %v4287, %v4301
        %v4303 = vsel %vm3497, %v4288, %v4302
        %v4304 = vsel %vm3485, %v4290, %v4289
        %v4305 = vsel %vm3487, %v4291, %v4304
        %v4306 = vsel %vm3489, %v4292, %v4305
        %v4307 = vsel %vm3491, %v4293, %v4306
        %v4308 = vsel %vm3493, %v4294, %v4307
        %v4309 = vsel %vm3495, %v4295, %v4308
        %v4310 = vsel %vm3497, %v4296, %v4309
        %v4311 = vpack.c.b16 %v4310, %v4303
        %4313 = vrot.lane.b32.xlu0 %v4264, 112
        %v4314 = vpop.permute.xlu0 %4313
        %v4317 = vsel %vm1322, %v4311, 0
        %4319 = vmatprep.subr.bf16.mxu0 0
        %4320 = vmatpush1.bf16.msra.mxu0 %v4314
        %4321 = vmatprep.subr.bf16.mxu0 0
        %4322 = vmatpush1.bf16.msra.mxu0 0
        %4323 = vmatprep.subr.bf16.mxu0 0
        %4324 = vmatpush1.bf16.msra.mxu0 0
        %4325 = vmatprep.subr.bf16.mxu0 0
        %4326 = vmatpush1.bf16.msra.mxu0 0
        %4327 = vmatprep.subr.bf16.mxu0 0
        %4328 = vmatpush1.bf16.msra.mxu0 0
        %4329 = vmatprep.subr.bf16.mxu0 0
        %4330 = vmatpush1.bf16.msra.mxu0 0
        %4331 = vmatprep.subr.bf16.mxu0 0
        %4332 = vmatpush1.bf16.msra.mxu0 0
        %4333 = vmatprep.subr.bf16.mxu0 0
        %4334 = vmatpush1.bf16.msra.mxu0 0
        %4335 = vmatprep.subr.bf16.mxu0 0
        %4336 = vmatpush1.bf16.msra.mxu0 0
        %4337 = vmatprep.subr.bf16.mxu0 0
        %4338 = vmatpush1.bf16.msra.mxu0 0
        %4339 = vmatprep.subr.bf16.mxu0 0
        %4340 = vmatpush1.bf16.msra.mxu0 0
        %4341 = vmatprep.subr.bf16.mxu0 0
        %4342 = vmatpush1.bf16.msra.mxu0 0
        %4343 = vmatprep.subr.bf16.mxu0 0
        %4344 = vmatpush1.bf16.msra.mxu0 0
        %4345 = vmatprep.subr.bf16.mxu0 0
        %4346 = vmatpush1.bf16.msra.mxu0 0
        %4347 = vmatprep.subr.bf16.mxu0 0
        %4348 = vmatpush1.bf16.msra.mxu0 0
        %4349 = vmatprep.subr.bf16.mxu0 0
        %4350 = vmatpush1.bf16.msra.mxu0 0
        %4351 = vmatprep.mubr.bf16.mxu0 0
        %4352 = vmatmul.mubr.bf16.gmra.mrb[0].mxu0 %v4317
        %v4353 = vpop.f32.mrb[0].mxu0
        %v4354 = vadd.f32 0.0, %v4353
        %v4355 = vpop.f32.mrb[0].mxu0
        %v4356 = vpop.f32.mrb[0].mxu0
        %v4357 = vadd.f32 0.0, %v4356
        %v4358 = vpop.f32.mrb[0].mxu0
        %4359 = vdwg.mxu0
        %4362 = vrot.lane.b32.xlu0 %v4354, 16
        %v4363 = vpop.permute.xlu0 %4362
        %4364 = vrot.lane.b32.xlu0 %v4357, 16
        %v4365 = vpop.permute.xlu0 %4364
        %4368 = vst.msk [vmem:[#allocation6] sm:$0xff] %vm1583, %v4363
        %4369 = vst.msk [vmem:[#allocation6 + $0x8] sm:$0xff] %vm1583, %v4365
        %v4370 = vld [vmem:[#allocation5] sm:$0xff]
        %v4371 = vld [vmem:[#allocation5 + $0x8] sm:$0xff]
        %vm4372 = vcmask 622144
        %v4373 = vsel %vm4372, %v4370, -inf
        %4374 = vmax.xlane.f32.xlu0 %v4373
        %v4375 = vpop.xlane.xlu0 %4374
        %v4376 = vsel %vm4372, %v4371, -inf
        %4377 = vmax.xlane.f32.xlu0 %v4376
        %v4378 = vpop.xlane.xlu0 %4377
        %v4379 = vsub.f32 %v4370, %v4375
        %v4380 = vsub.f32 %v4371, %v4378
        %v4381 = vmul.f32 %v4379, 1.442695
        %v4382 = vpow.pop %v4381
        %v4383 = vmul.f32 %v4380, 1.442695
        %v4384 = vpow.pop %v4383
        %4387 = vrot.lane.b32.xlu0 %v4382, 56
        %v4388 = vpop.permute.xlu0 %4387
        %4389 = vrot.lane.b32.xlu0 %v4384, 56
        %v4390 = vpop.permute.xlu0 %4389
        %v4393 = vsel %vm2778, %v4388, 0.0
        %4394 = vadd.xlane.f32.xlu0 %v4393
        %v4395 = vpop.xlane.xlu0 %4394
        %v4396 = vsel %vm2778, %v4390, 0.0
        %4397 = vadd.xlane.f32.xlu0 %v4396
        %v4398 = vpop.xlane.xlu0 %4397
        %v4399 = vrcp.pop %v4395
        %v4400 = vrcp.pop %v4398
        %v4401 = vmul.f32 %v4382, %v4399
        %v4402 = vmul.f32 %v4384, %v4400
        %v4403 = vadd.f32 %v2749, %v4370
        %v4404 = vadd.f32 %v2750, %v4371
        %v4405 = vadd.f32 %v2745, %v4370
        %v4406 = vadd.f32 %v2746, %v4371
        %v4407 = vlaneseq
        %v4408 = vshrl.u32 %v4407, 7
        %v4409 = vsub.s32 0, %v4408
        %v4410 = vrot.slane %v4403, %v4409
        %s4412 = sor.u32 256, 8
        %4413 = vbcast.lane.b32.xlu0 %v4410, %s4412
        %v4414 = vpop.permute.xlu0 %4413
        %v4415 = vlaneseq
        %v4416 = vshrl.u32 %v4415, 7
        %v4417 = vsub.s32 1, %v4416
        %v4418 = vrot.slane %v4403, %v4417
        %s4420 = sor.u32 256, 8
        %4421 = vbcast.lane.b32.xlu0 %v4418, %s4420
        %v4422 = vpop.permute.xlu0 %4421
        %v4423 = vlaneseq
        %v4424 = vshrl.u32 %v4423, 7
        %v4425 = vsub.s32 2, %v4424
        %v4426 = vrot.slane %v4403, %v4425
        %s4428 = sor.u32 256, 8
        %4429 = vbcast.lane.b32.xlu0 %v4426, %s4428
        %v4430 = vpop.permute.xlu0 %4429
        %v4431 = vlaneseq
        %v4432 = vshrl.u32 %v4431, 7
        %v4433 = vsub.s32 3, %v4432
        %v4434 = vrot.slane %v4403, %v4433
        %s4436 = sor.u32 256, 8
        %4437 = vbcast.lane.b32.xlu0 %v4434, %s4436
        %v4438 = vpop.permute.xlu0 %4437
        %v4439 = vlaneseq
        %v4440 = vshrl.u32 %v4439, 7
        %v4441 = vsub.s32 4, %v4440
        %v4442 = vrot.slane %v4403, %v4441
        %s4444 = sor.u32 256, 8
        %4445 = vbcast.lane.b32.xlu0 %v4442, %s4444
        %v4446 = vpop.permute.xlu0 %4445
        %v4447 = vlaneseq
        %v4448 = vshrl.u32 %v4447, 7
        %v4449 = vsub.s32 5, %v4448
        %v4450 = vrot.slane %v4403, %v4449
        %s4452 = sor.u32 256, 8
        %4453 = vbcast.lane.b32.xlu0 %v4450, %s4452
        %v4454 = vpop.permute.xlu0 %4453
        %v4455 = vlaneseq
        %v4456 = vshrl.u32 %v4455, 7
        %v4457 = vsub.s32 6, %v4456
        %v4458 = vrot.slane %v4403, %v4457
        %s4460 = sor.u32 256, 8
        %4461 = vbcast.lane.b32.xlu0 %v4458, %s4460
        %v4462 = vpop.permute.xlu0 %4461
        %v4463 = vlaneseq
        %v4464 = vshrl.u32 %v4463, 7
        %v4465 = vsub.s32 7, %v4464
        %v4466 = vrot.slane %v4403, %v4465
        %s4468 = sor.u32 256, 8
        %4469 = vbcast.lane.b32.xlu0 %v4466, %s4468
        %v4470 = vpop.permute.xlu0 %4469
        %v4471 = vlaneseq
        %v4472 = vshrl.u32 %v4471, 7
        %v4473 = vsub.s32 0, %v4472
        %v4474 = vrot.slane %v4404, %v4473
        %s4476 = sor.u32 256, 8
        %4477 = vbcast.lane.b32.xlu0 %v4474, %s4476
        %v4478 = vpop.permute.xlu0 %4477
        %v4479 = vlaneseq
        %v4480 = vshrl.u32 %v4479, 7
        %v4481 = vsub.s32 1, %v4480
        %v4482 = vrot.slane %v4404, %v4481
        %s4484 = sor.u32 256, 8
        %4485 = vbcast.lane.b32.xlu0 %v4482, %s4484
        %v4486 = vpop.permute.xlu0 %4485
        %v4487 = vlaneseq
        %v4488 = vshrl.u32 %v4487, 7
        %v4489 = vsub.s32 2, %v4488
        %v4490 = vrot.slane %v4404, %v4489
        %s4492 = sor.u32 256, 8
        %4493 = vbcast.lane.b32.xlu0 %v4490, %s4492
        %v4494 = vpop.permute.xlu0 %4493
        %v4495 = vlaneseq
        %v4496 = vshrl.u32 %v4495, 7
        %v4497 = vsub.s32 3, %v4496
        %v4498 = vrot.slane %v4404, %v4497
        %s4500 = sor.u32 256, 8
        %4501 = vbcast.lane.b32.xlu0 %v4498, %s4500
        %v4502 = vpop.permute.xlu0 %4501
        %v4503 = vlaneseq
        %v4504 = vshrl.u32 %v4503, 7
        %v4505 = vsub.s32 4, %v4504
        %v4506 = vrot.slane %v4404, %v4505
        %s4508 = sor.u32 256, 8
        %4509 = vbcast.lane.b32.xlu0 %v4506, %s4508
        %v4510 = vpop.permute.xlu0 %4509
        %v4511 = vlaneseq
        %v4512 = vshrl.u32 %v4511, 7
        %v4513 = vsub.s32 5, %v4512
        %v4514 = vrot.slane %v4404, %v4513
        %s4516 = sor.u32 256, 8
        %4517 = vbcast.lane.b32.xlu0 %v4514, %s4516
        %v4518 = vpop.permute.xlu0 %4517
        %v4519 = vlaneseq
        %v4520 = vshrl.u32 %v4519, 7
        %v4521 = vsub.s32 6, %v4520
        %v4522 = vrot.slane %v4404, %v4521
        %s4524 = sor.u32 256, 8
        %4525 = vbcast.lane.b32.xlu0 %v4522, %s4524
        %v4526 = vpop.permute.xlu0 %4525
        %v4527 = vlaneseq
        %v4528 = vshrl.u32 %v4527, 7
        %v4529 = vsub.s32 7, %v4528
        %v4530 = vrot.slane %v4404, %v4529
        %s4532 = sor.u32 256, 8
        %4533 = vbcast.lane.b32.xlu0 %v4530, %s4532
        %v4534 = vpop.permute.xlu0 %4533
        %v4535 = vsub.f32 %v4414, %v2754
        %v4536 = vsub.f32 %v4422, %v2754
        %v4537 = vsub.f32 %v4430, %v2754
        %v4538 = vsub.f32 %v4438, %v2754
        %v4539 = vsub.f32 %v4446, %v2754
        %v4540 = vsub.f32 %v4454, %v2754
        %v4541 = vsub.f32 %v4462, %v2754
        %v4542 = vsub.f32 %v4470, %v2754
        %v4543 = vsub.f32 %v4478, %v2754
        %v4544 = vsub.f32 %v4486, %v2754
        %v4545 = vsub.f32 %v4494, %v2754
        %v4546 = vsub.f32 %v4502, %v2754
        %v4547 = vsub.f32 %v4510, %v2754
        %v4548 = vsub.f32 %v4518, %v2754
        %v4549 = vsub.f32 %v4526, %v2754
        %v4550 = vsub.f32 %v4534, %v2754
        %v4551 = vand.u32 2147483647, %v4535
        %v4552 = vand.u32 2147483647, %v4536
        %v4553 = vand.u32 2147483647, %v4537
        %v4554 = vand.u32 2147483647, %v4538
        %v4555 = vand.u32 2147483647, %v4539
        %v4556 = vand.u32 2147483647, %v4540
        %v4557 = vand.u32 2147483647, %v4541
        %v4558 = vand.u32 2147483647, %v4542
        %v4559 = vand.u32 2147483647, %v4543
        %v4560 = vand.u32 2147483647, %v4544
        %v4561 = vand.u32 2147483647, %v4545
        %v4562 = vand.u32 2147483647, %v4546
        %v4563 = vand.u32 2147483647, %v4547
        %v4564 = vand.u32 2147483647, %v4548
        %v4565 = vand.u32 2147483647, %v4549
        %v4566 = vand.u32 2147483647, %v4550
        %v4567 = vsub.f32 1.0, %v4551
        %v4568 = vsub.f32 1.0, %v4552
        %v4569 = vsub.f32 1.0, %v4553
        %v4570 = vsub.f32 1.0, %v4554
        %v4571 = vsub.f32 1.0, %v4555
        %v4572 = vsub.f32 1.0, %v4556
        %v4573 = vsub.f32 1.0, %v4557
        %v4574 = vsub.f32 1.0, %v4558
        %v4575 = vsub.f32 1.0, %v4559
        %v4576 = vsub.f32 1.0, %v4560
        %v4577 = vsub.f32 1.0, %v4561
        %v4578 = vsub.f32 1.0, %v4562
        %v4579 = vsub.f32 1.0, %v4563
        %v4580 = vsub.f32 1.0, %v4564
        %v4581 = vsub.f32 1.0, %v4565
        %v4582 = vsub.f32 1.0, %v4566
        %v4583 = vmax.f32 %v4567, 0.0
        %v4584 = vmax.f32 %v4568, 0.0
        %v4585 = vmax.f32 %v4569, 0.0
        %v4586 = vmax.f32 %v4570, 0.0
        %v4587 = vmax.f32 %v4571, 0.0
        %v4588 = vmax.f32 %v4572, 0.0
        %v4589 = vmax.f32 %v4573, 0.0
        %v4590 = vmax.f32 %v4574, 0.0
        %v4591 = vmax.f32 %v4575, 0.0
        %v4592 = vmax.f32 %v4576, 0.0
        %v4593 = vmax.f32 %v4577, 0.0
        %v4594 = vmax.f32 %v4578, 0.0
        %v4595 = vmax.f32 %v4579, 0.0
        %v4596 = vmax.f32 %v4580, 0.0
        %v4597 = vmax.f32 %v4581, 0.0
        %v4598 = vmax.f32 %v4582, 0.0
        %v4599 = vlaneseq
        %v4600 = vshrl.u32 %v4599, 7
        %v4601 = vsub.s32 0, %v4600
        %v4602 = vrot.slane %v4405, %v4601
        %s4604 = sor.u32 256, 40
        %4605 = vbcast.lane.b32.xlu0 %v4602, %s4604
        %v4606 = vpop.permute.xlu0 %4605
        %v4607 = vlaneseq
        %v4608 = vshrl.u32 %v4607, 7
        %v4609 = vsub.s32 1, %v4608
        %v4610 = vrot.slane %v4405, %v4609
        %s4612 = sor.u32 256, 40
        %4613 = vbcast.lane.b32.xlu0 %v4610, %s4612
        %v4614 = vpop.permute.xlu0 %4613
        %v4615 = vlaneseq
        %v4616 = vshrl.u32 %v4615, 7
        %v4617 = vsub.s32 2, %v4616
        %v4618 = vrot.slane %v4405, %v4617
        %s4620 = sor.u32 256, 40
        %4621 = vbcast.lane.b32.xlu0 %v4618, %s4620
        %v4622 = vpop.permute.xlu0 %4621
        %v4623 = vlaneseq
        %v4624 = vshrl.u32 %v4623, 7
        %v4625 = vsub.s32 3, %v4624
        %v4626 = vrot.slane %v4405, %v4625
        %s4628 = sor.u32 256, 40
        %4629 = vbcast.lane.b32.xlu0 %v4626, %s4628
        %v4630 = vpop.permute.xlu0 %4629
        %v4631 = vlaneseq
        %v4632 = vshrl.u32 %v4631, 7
        %v4633 = vsub.s32 4, %v4632
        %v4634 = vrot.slane %v4405, %v4633
        %s4636 = sor.u32 256, 40
        %4637 = vbcast.lane.b32.xlu0 %v4634, %s4636
        %v4638 = vpop.permute.xlu0 %4637
        %v4639 = vlaneseq
        %v4640 = vshrl.u32 %v4639, 7
        %v4641 = vsub.s32 5, %v4640
        %v4642 = vrot.slane %v4405, %v4641
        %s4644 = sor.u32 256, 40
        %4645 = vbcast.lane.b32.xlu0 %v4642, %s4644
        %v4646 = vpop.permute.xlu0 %4645
        %v4647 = vlaneseq
        %v4648 = vshrl.u32 %v4647, 7
        %v4649 = vsub.s32 6, %v4648
        %v4650 = vrot.slane %v4405, %v4649
        %s4652 = sor.u32 256, 40
        %4653 = vbcast.lane.b32.xlu0 %v4650, %s4652
        %v4654 = vpop.permute.xlu0 %4653
        %v4655 = vlaneseq
        %v4656 = vshrl.u32 %v4655, 7
        %v4657 = vsub.s32 7, %v4656
        %v4658 = vrot.slane %v4405, %v4657
        %s4660 = sor.u32 256, 40
        %4661 = vbcast.lane.b32.xlu0 %v4658, %s4660
        %v4662 = vpop.permute.xlu0 %4661
        %v4663 = vlaneseq
        %v4664 = vshrl.u32 %v4663, 7
        %v4665 = vsub.s32 0, %v4664
        %v4666 = vrot.slane %v4406, %v4665
        %s4668 = sor.u32 256, 40
        %4669 = vbcast.lane.b32.xlu0 %v4666, %s4668
        %v4670 = vpop.permute.xlu0 %4669
        %v4671 = vlaneseq
        %v4672 = vshrl.u32 %v4671, 7
        %v4673 = vsub.s32 1, %v4672
        %v4674 = vrot.slane %v4406, %v4673
        %s4676 = sor.u32 256, 40
        %4677 = vbcast.lane.b32.xlu0 %v4674, %s4676
        %v4678 = vpop.permute.xlu0 %4677
        %v4679 = vlaneseq
        %v4680 = vshrl.u32 %v4679, 7
        %v4681 = vsub.s32 2, %v4680
        %v4682 = vrot.slane %v4406, %v4681
        %s4684 = sor.u32 256, 40
        %4685 = vbcast.lane.b32.xlu0 %v4682, %s4684
        %v4686 = vpop.permute.xlu0 %4685
        %v4687 = vlaneseq
        %v4688 = vshrl.u32 %v4687, 7
        %v4689 = vsub.s32 3, %v4688
        %v4690 = vrot.slane %v4406, %v4689
        %s4692 = sor.u32 256, 40
        %4693 = vbcast.lane.b32.xlu0 %v4690, %s4692
        %v4694 = vpop.permute.xlu0 %4693
        %v4695 = vlaneseq
        %v4696 = vshrl.u32 %v4695, 7
        %v4697 = vsub.s32 4, %v4696
        %v4698 = vrot.slane %v4406, %v4697
        %s4700 = sor.u32 256, 40
        %4701 = vbcast.lane.b32.xlu0 %v4698, %s4700
        %v4702 = vpop.permute.xlu0 %4701
        %v4703 = vlaneseq
        %v4704 = vshrl.u32 %v4703, 7
        %v4705 = vsub.s32 5, %v4704
        %v4706 = vrot.slane %v4406, %v4705
        %s4708 = sor.u32 256, 40
        %4709 = vbcast.lane.b32.xlu0 %v4706, %s4708
        %v4710 = vpop.permute.xlu0 %4709
        %v4711 = vlaneseq
        %v4712 = vshrl.u32 %v4711, 7
        %v4713 = vsub.s32 6, %v4712
        %v4714 = vrot.slane %v4406, %v4713
        %s4716 = sor.u32 256, 40
        %4717 = vbcast.lane.b32.xlu0 %v4714, %s4716
        %v4718 = vpop.permute.xlu0 %4717
        %v4719 = vlaneseq
        %v4720 = vshrl.u32 %v4719, 7
        %v4721 = vsub.s32 7, %v4720
        %v4722 = vrot.slane %v4406, %v4721
        %s4724 = sor.u32 256, 40
        %4725 = vbcast.lane.b32.xlu0 %v4722, %s4724
        %v4726 = vpop.permute.xlu0 %4725
        %v4727 = vsub.f32 %v4606, %v2752
        %v4728 = vsub.f32 %v4614, %v2752
        %v4729 = vsub.f32 %v4622, %v2752
        %v4730 = vsub.f32 %v4630, %v2752
        %v4731 = vsub.f32 %v4638, %v2752
        %v4732 = vsub.f32 %v4646, %v2752
        %v4733 = vsub.f32 %v4654, %v2752
        %v4734 = vsub.f32 %v4662, %v2752
        %v4735 = vsub.f32 %v4670, %v2752
        %v4736 = vsub.f32 %v4678, %v2752
        %v4737 = vsub.f32 %v4686, %v2752
        %v4738 = vsub.f32 %v4694, %v2752
        %v4739 = vsub.f32 %v4702, %v2752
        %v4740 = vsub.f32 %v4710, %v2752
        %v4741 = vsub.f32 %v4718, %v2752
        %v4742 = vsub.f32 %v4726, %v2752
        %v4743 = vand.u32 2147483647, %v4727
        %v4744 = vand.u32 2147483647, %v4728
        %v4745 = vand.u32 2147483647, %v4729
        %v4746 = vand.u32 2147483647, %v4730
        %v4747 = vand.u32 2147483647, %v4731
        %v4748 = vand.u32 2147483647, %v4732
        %v4749 = vand.u32 2147483647, %v4733
        %v4750 = vand.u32 2147483647, %v4734
        %v4751 = vand.u32 2147483647, %v4735
        %v4752 = vand.u32 2147483647, %v4736
        %v4753 = vand.u32 2147483647, %v4737
        %v4754 = vand.u32 2147483647, %v4738
        %v4755 = vand.u32 2147483647, %v4739
        %v4756 = vand.u32 2147483647, %v4740
        %v4757 = vand.u32 2147483647, %v4741
        %v4758 = vand.u32 2147483647, %v4742
        %v4759 = vsub.f32 1.0, %v4743
        %v4760 = vsub.f32 1.0, %v4744
        %v4761 = vsub.f32 1.0, %v4745
        %v4762 = vsub.f32 1.0, %v4746
        %v4763 = vsub.f32 1.0, %v4747
        %v4764 = vsub.f32 1.0, %v4748
        %v4765 = vsub.f32 1.0, %v4749
        %v4766 = vsub.f32 1.0, %v4750
        %v4767 = vsub.f32 1.0, %v4751
        %v4768 = vsub.f32 1.0, %v4752
        %v4769 = vsub.f32 1.0, %v4753
        %v4770 = vsub.f32 1.0, %v4754
        %v4771 = vsub.f32 1.0, %v4755
        %v4772 = vsub.f32 1.0, %v4756
        %v4773 = vsub.f32 1.0, %v4757
        %v4774 = vsub.f32 1.0, %v4758
        %v4775 = vmax.f32 %v4759, 0.0
        %v4776 = vmax.f32 %v4760, 0.0
        %v4777 = vmax.f32 %v4761, 0.0
        %v4778 = vmax.f32 %v4762, 0.0
        %v4779 = vmax.f32 %v4763, 0.0
        %v4780 = vmax.f32 %v4764, 0.0
        %v4781 = vmax.f32 %v4765, 0.0
        %v4782 = vmax.f32 %v4766, 0.0
        %v4783 = vmax.f32 %v4767, 0.0
        %v4784 = vmax.f32 %v4768, 0.0
        %v4785 = vmax.f32 %v4769, 0.0
        %v4786 = vmax.f32 %v4770, 0.0
        %v4787 = vmax.f32 %v4771, 0.0
        %v4788 = vmax.f32 %v4772, 0.0
        %v4789 = vmax.f32 %v4773, 0.0
        %v4790 = vmax.f32 %v4774, 0.0
        %v4791 = vlaneseq
        %v4792 = vshrl.u32 %v4791, 7
        %v4793 = vsub.s32 0, %v4792
        %v4794 = vrot.slane %v4401, %v4793
        %s4796 = sor.u32 256, 72
        %4797 = vbcast.lane.b32.xlu0 %v4794, %s4796
        %v4798 = vpop.permute.xlu0 %4797
        %v4799 = vlaneseq
        %v4800 = vshrl.u32 %v4799, 7
        %v4801 = vsub.s32 1, %v4800
        %v4802 = vrot.slane %v4401, %v4801
        %s4804 = sor.u32 256, 72
        %4805 = vbcast.lane.b32.xlu0 %v4802, %s4804
        %v4806 = vpop.permute.xlu0 %4805
        %v4807 = vlaneseq
        %v4808 = vshrl.u32 %v4807, 7
        %v4809 = vsub.s32 2, %v4808
        %v4810 = vrot.slane %v4401, %v4809
        %s4812 = sor.u32 256, 72
        %4813 = vbcast.lane.b32.xlu0 %v4810, %s4812
        %v4814 = vpop.permute.xlu0 %4813
        %v4815 = vlaneseq
        %v4816 = vshrl.u32 %v4815, 7
        %v4817 = vsub.s32 3, %v4816
        %v4818 = vrot.slane %v4401, %v4817
        %s4820 = sor.u32 256, 72
        %4821 = vbcast.lane.b32.xlu0 %v4818, %s4820
        %v4822 = vpop.permute.xlu0 %4821
        %v4823 = vlaneseq
        %v4824 = vshrl.u32 %v4823, 7
        %v4825 = vsub.s32 4, %v4824
        %v4826 = vrot.slane %v4401, %v4825
        %s4828 = sor.u32 256, 72
        %4829 = vbcast.lane.b32.xlu0 %v4826, %s4828
        %v4830 = vpop.permute.xlu0 %4829
        %v4831 = vlaneseq
        %v4832 = vshrl.u32 %v4831, 7
        %v4833 = vsub.s32 5, %v4832
        %v4834 = vrot.slane %v4401, %v4833
        %s4836 = sor.u32 256, 72
        %4837 = vbcast.lane.b32.xlu0 %v4834, %s4836
        %v4838 = vpop.permute.xlu0 %4837
        %v4839 = vlaneseq
        %v4840 = vshrl.u32 %v4839, 7
        %v4841 = vsub.s32 6, %v4840
        %v4842 = vrot.slane %v4401, %v4841
        %s4844 = sor.u32 256, 72
        %4845 = vbcast.lane.b32.xlu0 %v4842, %s4844
        %v4846 = vpop.permute.xlu0 %4845
        %v4847 = vlaneseq
        %v4848 = vshrl.u32 %v4847, 7
        %v4849 = vsub.s32 7, %v4848
        %v4850 = vrot.slane %v4401, %v4849
        %s4852 = sor.u32 256, 72
        %4853 = vbcast.lane.b32.xlu0 %v4850, %s4852
        %v4854 = vpop.permute.xlu0 %4853
        %v4855 = vlaneseq
        %v4856 = vshrl.u32 %v4855, 7
        %v4857 = vsub.s32 0, %v4856
        %v4858 = vrot.slane %v4402, %v4857
        %s4860 = sor.u32 256, 72
        %4861 = vbcast.lane.b32.xlu0 %v4858, %s4860
        %v4862 = vpop.permute.xlu0 %4861
        %v4863 = vlaneseq
        %v4864 = vshrl.u32 %v4863, 7
        %v4865 = vsub.s32 1, %v4864
        %v4866 = vrot.slane %v4402, %v4865
        %s4868 = sor.u32 256, 72
        %4869 = vbcast.lane.b32.xlu0 %v4866, %s4868
        %v4870 = vpop.permute.xlu0 %4869
        %v4871 = vlaneseq
        %v4872 = vshrl.u32 %v4871, 7
        %v4873 = vsub.s32 2, %v4872
        %v4874 = vrot.slane %v4402, %v4873
        %s4876 = sor.u32 256, 72
        %4877 = vbcast.lane.b32.xlu0 %v4874, %s4876
        %v4878 = vpop.permute.xlu0 %4877
        %v4879 = vlaneseq
        %v4880 = vshrl.u32 %v4879, 7
        %v4881 = vsub.s32 3, %v4880
        %v4882 = vrot.slane %v4402, %v4881
        %s4884 = sor.u32 256, 72
        %4885 = vbcast.lane.b32.xlu0 %v4882, %s4884
        %v4886 = vpop.permute.xlu0 %4885
        %v4887 = vlaneseq
        %v4888 = vshrl.u32 %v4887, 7
        %v4889 = vsub.s32 4, %v4888
        %v4890 = vrot.slane %v4402, %v4889
        %s4892 = sor.u32 256, 72
        %4893 = vbcast.lane.b32.xlu0 %v4890, %s4892
        %v4894 = vpop.permute.xlu0 %4893
        %v4895 = vlaneseq
        %v4896 = vshrl.u32 %v4895, 7
        %v4897 = vsub.s32 5, %v4896
        %v4898 = vrot.slane %v4402, %v4897
        %s4900 = sor.u32 256, 72
        %4901 = vbcast.lane.b32.xlu0 %v4898, %s4900
        %v4902 = vpop.permute.xlu0 %4901
        %v4903 = vlaneseq
        %v4904 = vshrl.u32 %v4903, 7
        %v4905 = vsub.s32 6, %v4904
        %v4906 = vrot.slane %v4402, %v4905
        %s4908 = sor.u32 256, 72
        %4909 = vbcast.lane.b32.xlu0 %v4906, %s4908
        %v4910 = vpop.permute.xlu0 %4909
        %v4911 = vlaneseq
        %v4912 = vshrl.u32 %v4911, 7
        %v4913 = vsub.s32 7, %v4912
        %v4914 = vrot.slane %v4402, %v4913
        %s4916 = sor.u32 256, 72
        %4917 = vbcast.lane.b32.xlu0 %v4914, %s4916
        %v4918 = vpop.permute.xlu0 %4917
        %v4919 = vmul.f32 %v4798, %v4583
        %v4920 = vmul.f32 %v4806, %v4584
        %v4921 = vmul.f32 %v4814, %v4585
        %v4922 = vmul.f32 %v4822, %v4586
        %v4923 = vmul.f32 %v4830, %v4587
        %v4924 = vmul.f32 %v4838, %v4588
        %v4925 = vmul.f32 %v4846, %v4589
        %v4926 = vmul.f32 %v4854, %v4590
        %v4927 = vmul.f32 %v4862, %v4591
        %v4928 = vmul.f32 %v4870, %v4592
        %v4929 = vmul.f32 %v4878, %v4593
        %v4930 = vmul.f32 %v4886, %v4594
        %v4931 = vmul.f32 %v4894, %v4595
        %v4932 = vmul.f32 %v4902, %v4596
        %v4933 = vmul.f32 %v4910, %v4597
        %v4934 = vmul.f32 %v4918, %v4598
        %v4935 = vmul.f32 %v4919, %v4775
        %v4936 = vmul.f32 %v4920, %v4776
        %v4937 = vmul.f32 %v4921, %v4777
        %v4938 = vmul.f32 %v4922, %v4778
        %v4939 = vmul.f32 %v4923, %v4779
        %v4940 = vmul.f32 %v4924, %v4780
        %v4941 = vmul.f32 %v4925, %v4781
        %v4942 = vmul.f32 %v4926, %v4782
        %v4943 = vmul.f32 %v4927, %v4783
        %v4944 = vmul.f32 %v4928, %v4784
        %v4945 = vmul.f32 %v4929, %v4785
        %v4946 = vmul.f32 %v4930, %v4786
        %v4947 = vmul.f32 %v4931, %v4787
        %v4948 = vmul.f32 %v4932, %v4788
        %v4949 = vmul.f32 %v4933, %v4789
        %v4950 = vmul.f32 %v4934, %v4790
        %v4951 = vsel %vm3321, %v4935, 0.0
        %v4952 = vrot.slane %v4951, 4
        %v4953 = vadd.f32 %v4951, %v4952
        %v4954 = vrot.slane %v4953, 2
        %v4955 = vadd.f32 %v4953, %v4954
        %v4956 = vrot.slane %v4955, 1
        %v4957 = vadd.f32 %v4955, %v4956
        %v4958 = vsel %vm3321, %v4936, 0.0
        %v4959 = vrot.slane %v4958, 4
        %v4960 = vadd.f32 %v4958, %v4959
        %v4961 = vrot.slane %v4960, 2
        %v4962 = vadd.f32 %v4960, %v4961
        %v4963 = vrot.slane %v4962, 1
        %v4964 = vadd.f32 %v4962, %v4963
        %v4965 = vsel %vm3321, %v4937, 0.0
        %v4966 = vrot.slane %v4965, 4
        %v4967 = vadd.f32 %v4965, %v4966
        %v4968 = vrot.slane %v4967, 2
        %v4969 = vadd.f32 %v4967, %v4968
        %v4970 = vrot.slane %v4969, 1
        %v4971 = vadd.f32 %v4969, %v4970
        %v4972 = vsel %vm3321, %v4938, 0.0
        %v4973 = vrot.slane %v4972, 4
        %v4974 = vadd.f32 %v4972, %v4973
        %v4975 = vrot.slane %v4974, 2
        %v4976 = vadd.f32 %v4974, %v4975
        %v4977 = vrot.slane %v4976, 1
        %v4978 = vadd.f32 %v4976, %v4977
        %v4979 = vsel %vm3321, %v4939, 0.0
        %v4980 = vrot.slane %v4979, 4
        %v4981 = vadd.f32 %v4979, %v4980
        %v4982 = vrot.slane %v4981, 2
        %v4983 = vadd.f32 %v4981, %v4982
        %v4984 = vrot.slane %v4983, 1
        %v4985 = vadd.f32 %v4983, %v4984
        %v4986 = vsel %vm3321, %v4940, 0.0
        %v4987 = vrot.slane %v4986, 4
        %v4988 = vadd.f32 %v4986, %v4987
        %v4989 = vrot.slane %v4988, 2
        %v4990 = vadd.f32 %v4988, %v4989
        %v4991 = vrot.slane %v4990, 1
        %v4992 = vadd.f32 %v4990, %v4991
        %v4993 = vsel %vm3321, %v4941, 0.0
        %v4994 = vrot.slane %v4993, 4
        %v4995 = vadd.f32 %v4993, %v4994
        %v4996 = vrot.slane %v4995, 2
        %v4997 = vadd.f32 %v4995, %v4996
        %v4998 = vrot.slane %v4997, 1
        %v4999 = vadd.f32 %v4997, %v4998
        %v5000 = vsel %vm3321, %v4942, 0.0
        %v5001 = vrot.slane %v5000, 4
        %v5002 = vadd.f32 %v5000, %v5001
        %v5003 = vrot.slane %v5002, 2
        %v5004 = vadd.f32 %v5002, %v5003
        %v5005 = vrot.slane %v5004, 1
        %v5006 = vadd.f32 %v5004, %v5005
        %v5007 = vsel %vm3321, %v4943, 0.0
        %v5008 = vrot.slane %v5007, 4
        %v5009 = vadd.f32 %v5007, %v5008
        %v5010 = vrot.slane %v5009, 2
        %v5011 = vadd.f32 %v5009, %v5010
        %v5012 = vrot.slane %v5011, 1
        %v5013 = vadd.f32 %v5011, %v5012
        %v5014 = vsel %vm3321, %v4944, 0.0
        %v5015 = vrot.slane %v5014, 4
        %v5016 = vadd.f32 %v5014, %v5015
        %v5017 = vrot.slane %v5016, 2
        %v5018 = vadd.f32 %v5016, %v5017
        %v5019 = vrot.slane %v5018, 1
        %v5020 = vadd.f32 %v5018, %v5019
        %v5021 = vsel %vm3321, %v4945, 0.0
        %v5022 = vrot.slane %v5021, 4
        %v5023 = vadd.f32 %v5021, %v5022
        %v5024 = vrot.slane %v5023, 2
        %v5025 = vadd.f32 %v5023, %v5024
        %v5026 = vrot.slane %v5025, 1
        %v5027 = vadd.f32 %v5025, %v5026
        %v5028 = vsel %vm3321, %v4946, 0.0
        %v5029 = vrot.slane %v5028, 4
        %v5030 = vadd.f32 %v5028, %v5029
        %v5031 = vrot.slane %v5030, 2
        %v5032 = vadd.f32 %v5030, %v5031
        %v5033 = vrot.slane %v5032, 1
        %v5034 = vadd.f32 %v5032, %v5033
        %v5035 = vsel %vm3321, %v4947, 0.0
        %v5036 = vrot.slane %v5035, 4
        %v5037 = vadd.f32 %v5035, %v5036
        %v5038 = vrot.slane %v5037, 2
        %v5039 = vadd.f32 %v5037, %v5038
        %v5040 = vrot.slane %v5039, 1
        %v5041 = vadd.f32 %v5039, %v5040
        %v5042 = vsel %vm3321, %v4948, 0.0
        %v5043 = vrot.slane %v5042, 4
        %v5044 = vadd.f32 %v5042, %v5043
        %v5045 = vrot.slane %v5044, 2
        %v5046 = vadd.f32 %v5044, %v5045
        %v5047 = vrot.slane %v5046, 1
        %v5048 = vadd.f32 %v5046, %v5047
        %v5049 = vsel %vm3321, %v4949, 0.0
        %v5050 = vrot.slane %v5049, 4
        %v5051 = vadd.f32 %v5049, %v5050
        %v5052 = vrot.slane %v5051, 2
        %v5053 = vadd.f32 %v5051, %v5052
        %v5054 = vrot.slane %v5053, 1
        %v5055 = vadd.f32 %v5053, %v5054
        %v5056 = vsel %vm3321, %v4950, 0.0
        %v5057 = vrot.slane %v5056, 4
        %v5058 = vadd.f32 %v5056, %v5057
        %v5059 = vrot.slane %v5058, 2
        %v5060 = vadd.f32 %v5058, %v5059
        %v5061 = vrot.slane %v5060, 1
        %v5062 = vadd.f32 %v5060, %v5061
        %v5063 = vpack.c.bf16 %v4957, %v4957
        %v5064 = vpack.c.bf16 %v4964, %v4964
        %v5065 = vpack.c.bf16 %v4971, %v4971
        %v5066 = vpack.c.bf16 %v4978, %v4978
        %v5067 = vpack.c.bf16 %v4985, %v4985
        %v5068 = vpack.c.bf16 %v4992, %v4992
        %v5069 = vpack.c.bf16 %v4999, %v4999
        %v5070 = vpack.c.bf16 %v5006, %v5006
        %v5071 = vpack.c.bf16 %v5013, %v5013
        %v5072 = vpack.c.bf16 %v5020, %v5020
        %v5073 = vpack.c.bf16 %v5027, %v5027
        %v5074 = vpack.c.bf16 %v5034, %v5034
        %v5075 = vpack.c.bf16 %v5041, %v5041
        %v5076 = vpack.c.bf16 %v5048, %v5048
        %v5077 = vpack.c.bf16 %v5055, %v5055
        %v5078 = vpack.c.bf16 %v5062, %v5062
        %v5079 = vld [vmem:[#allocation3] sm:$0xff]
        %v5080 = vld [vmem:[#allocation3 + $0x8] sm:$0xff]
        %v5081 = vpack.c.bf16 %v5080, %v5079
        %v5098 = vunpack.c.l.b16 %v5063
        %v5099 = vunpack.c.l.b16 %v5064
        %v5100 = vunpack.c.l.b16 %v5065
        %v5101 = vunpack.c.l.b16 %v5066
        %v5102 = vunpack.c.l.b16 %v5067
        %v5103 = vunpack.c.l.b16 %v5068
        %v5104 = vunpack.c.l.b16 %v5069
        %v5105 = vunpack.c.l.b16 %v5070
        %v5106 = vunpack.c.l.b16 %v5071
        %v5107 = vunpack.c.l.b16 %v5072
        %v5108 = vunpack.c.l.b16 %v5073
        %v5109 = vunpack.c.l.b16 %v5074
        %v5110 = vunpack.c.l.b16 %v5075
        %v5111 = vunpack.c.l.b16 %v5076
        %v5112 = vunpack.c.l.b16 %v5077
        %v5113 = vunpack.c.l.b16 %v5078
        %v5114 = vsel %vm3485, %v5099, %v5098
        %v5115 = vsel %vm3487, %v5100, %v5114
        %v5116 = vsel %vm3489, %v5101, %v5115
        %v5117 = vsel %vm3491, %v5102, %v5116
        %v5118 = vsel %vm3493, %v5103, %v5117
        %v5119 = vsel %vm3495, %v5104, %v5118
        %v5120 = vsel %vm3497, %v5105, %v5119
        %v5121 = vsel %vm3485, %v5107, %v5106
        %v5122 = vsel %vm3487, %v5108, %v5121
        %v5123 = vsel %vm3489, %v5109, %v5122
        %v5124 = vsel %vm3491, %v5110, %v5123
        %v5125 = vsel %vm3493, %v5111, %v5124
        %v5126 = vsel %vm3495, %v5112, %v5125
        %v5127 = vsel %vm3497, %v5113, %v5126
        %v5128 = vpack.c.b16 %v5127, %v5120
        %5130 = vrot.lane.b32.xlu0 %v5081, 96
        %v5131 = vpop.permute.xlu0 %5130
        %v5134 = vsel %vm1322, %v5128, 0
        %5136 = vmatprep.subr.bf16.mxu0 0
        %5137 = vmatpush1.bf16.msra.mxu0 %v5131
        %5138 = vmatprep.subr.bf16.mxu0 0
        %5139 = vmatpush1.bf16.msra.mxu0 0
        %5140 = vmatprep.subr.bf16.mxu0 0
        %5141 = vmatpush1.bf16.msra.mxu0 0
        %5142 = vmatprep.subr.bf16.mxu0 0
        %5143 = vmatpush1.bf16.msra.mxu0 0
        %5144 = vmatprep.subr.bf16.mxu0 0
        %5145 = vmatpush1.bf16.msra.mxu0 0
        %5146 = vmatprep.subr.bf16.mxu0 0
        %5147 = vmatpush1.bf16.msra.mxu0 0
        %5148 = vmatprep.subr.bf16.mxu0 0
        %5149 = vmatpush1.bf16.msra.mxu0 0
        %5150 = vmatprep.subr.bf16.mxu0 0
        %5151 = vmatpush1.bf16.msra.mxu0 0
        %5152 = vmatprep.subr.bf16.mxu0 0
        %5153 = vmatpush1.bf16.msra.mxu0 0
        %5154 = vmatprep.subr.bf16.mxu0 0
        %5155 = vmatpush1.bf16.msra.mxu0 0
        %5156 = vmatprep.subr.bf16.mxu0 0
        %5157 = vmatpush1.bf16.msra.mxu0 0
        %5158 = vmatprep.subr.bf16.mxu0 0
        %5159 = vmatpush1.bf16.msra.mxu0 0
        %5160 = vmatprep.subr.bf16.mxu0 0
        %5161 = vmatpush1.bf16.msra.mxu0 0
        %5162 = vmatprep.subr.bf16.mxu0 0
        %5163 = vmatpush1.bf16.msra.mxu0 0
        %5164 = vmatprep.subr.bf16.mxu0 0
        %5165 = vmatpush1.bf16.msra.mxu0 0
        %5166 = vmatprep.subr.bf16.mxu0 0
        %5167 = vmatpush1.bf16.msra.mxu0 0
        %5168 = vmatprep.mubr.bf16.mxu0 0
        %5169 = vmatmul.mubr.bf16.gmra.mrb[0].mxu0 %v5134
        %v5170 = vpop.f32.mrb[0].mxu0
        %v5171 = vadd.f32 0.0, %v5170
        %v5172 = vpop.f32.mrb[0].mxu0
        %v5173 = vpop.f32.mrb[0].mxu0
        %v5174 = vadd.f32 0.0, %v5173
        %v5175 = vpop.f32.mrb[0].mxu0
        %5176 = vdwg.mxu0
        %5179 = vrot.lane.b32.xlu0 %v5171, 32
        %v5180 = vpop.permute.xlu0 %5179
        %5181 = vrot.lane.b32.xlu0 %v5174, 32
        %v5182 = vpop.permute.xlu0 %5181
        %5185 = vst.msk [vmem:[#allocation6] sm:$0xff] %vm1729, %v5180
        %5186 = vst.msk [vmem:[#allocation6 + $0x8] sm:$0xff] %vm1729, %v5182
        %v5187 = vld [vmem:[#allocation5] sm:$0xff]
        %v5188 = vld [vmem:[#allocation5 + $0x8] sm:$0xff]
        %vm5189 = vcmask 654944
        %v5190 = vsel %vm5189, %v5187, -inf
        %5191 = vmax.xlane.f32.xlu0 %v5190
        %v5192 = vpop.xlane.xlu0 %5191
        %v5193 = vsel %vm5189, %v5188, -inf
        %5194 = vmax.xlane.f32.xlu0 %v5193
        %v5195 = vpop.xlane.xlu0 %5194
        %v5196 = vsub.f32 %v5187, %v5192
        %v5197 = vsub.f32 %v5188, %v5195
        %v5198 = vmul.f32 %v5196, 1.442695
        %v5199 = vpow.pop %v5198
        %v5200 = vmul.f32 %v5197, 1.442695
        %v5201 = vpow.pop %v5200
        %5204 = vrot.lane.b32.xlu0 %v5199, 52
        %v5205 = vpop.permute.xlu0 %5204
        %5206 = vrot.lane.b32.xlu0 %v5201, 52
        %v5207 = vpop.permute.xlu0 %5206
        %v5210 = vsel %vm2778, %v5205, 0.0
        %5211 = vadd.xlane.f32.xlu0 %v5210
        %v5212 = vpop.xlane.xlu0 %5211
        %v5213 = vsel %vm2778, %v5207, 0.0
        %5214 = vadd.xlane.f32.xlu0 %v5213
        %v5215 = vpop.xlane.xlu0 %5214
        %v5216 = vrcp.pop %v5212
        %v5217 = vrcp.pop %v5215
        %v5218 = vmul.f32 %v5199, %v5216
        %v5219 = vmul.f32 %v5201, %v5217
        %v5220 = vadd.f32 %v2749, %v5187
        %v5221 = vadd.f32 %v2750, %v5188
        %v5222 = vadd.f32 %v2745, %v5187
        %v5223 = vadd.f32 %v2746, %v5188
        %v5224 = vlaneseq
        %v5225 = vshrl.u32 %v5224, 7
        %v5226 = vsub.s32 0, %v5225
        %v5227 = vrot.slane %v5220, %v5226
        %s5229 = sor.u32 256, 12
        %5230 = vbcast.lane.b32.xlu0 %v5227, %s5229
        %v5231 = vpop.permute.xlu0 %5230
        %v5232 = vlaneseq
        %v5233 = vshrl.u32 %v5232, 7
        %v5234 = vsub.s32 1, %v5233
        %v5235 = vrot.slane %v5220, %v5234
        %s5237 = sor.u32 256, 12
        %5238 = vbcast.lane.b32.xlu0 %v5235, %s5237
        %v5239 = vpop.permute.xlu0 %5238
        %v5240 = vlaneseq
        %v5241 = vshrl.u32 %v5240, 7
        %v5242 = vsub.s32 2, %v5241
        %v5243 = vrot.slane %v5220, %v5242
        %s5245 = sor.u32 256, 12
        %5246 = vbcast.lane.b32.xlu0 %v5243, %s5245
        %v5247 = vpop.permute.xlu0 %5246
        %v5248 = vlaneseq
        %v5249 = vshrl.u32 %v5248, 7
        %v5250 = vsub.s32 3, %v5249
        %v5251 = vrot.slane %v5220, %v5250
        %s5253 = sor.u32 256, 12
        %5254 = vbcast.lane.b32.xlu0 %v5251, %s5253
        %v5255 = vpop.permute.xlu0 %5254
        %v5256 = vlaneseq
        %v5257 = vshrl.u32 %v5256, 7
        %v5258 = vsub.s32 4, %v5257
        %v5259 = vrot.slane %v5220, %v5258
        %s5261 = sor.u32 256, 12
        %5262 = vbcast.lane.b32.xlu0 %v5259, %s5261
        %v5263 = vpop.permute.xlu0 %5262
        %v5264 = vlaneseq
        %v5265 = vshrl.u32 %v5264, 7
        %v5266 = vsub.s32 5, %v5265
        %v5267 = vrot.slane %v5220, %v5266
        %s5269 = sor.u32 256, 12
        %5270 = vbcast.lane.b32.xlu0 %v5267, %s5269
        %v5271 = vpop.permute.xlu0 %5270
        %v5272 = vlaneseq
        %v5273 = vshrl.u32 %v5272, 7
        %v5274 = vsub.s32 6, %v5273
        %v5275 = vrot.slane %v5220, %v5274
        %s5277 = sor.u32 256, 12
        %5278 = vbcast.lane.b32.xlu0 %v5275, %s5277
        %v5279 = vpop.permute.xlu0 %5278
        %v5280 = vlaneseq
        %v5281 = vshrl.u32 %v5280, 7
        %v5282 = vsub.s32 7, %v5281
        %v5283 = vrot.slane %v5220, %v5282
        %s5285 = sor.u32 256, 12
        %5286 = vbcast.lane.b32.xlu0 %v5283, %s5285
        %v5287 = vpop.permute.xlu0 %5286
        %v5288 = vlaneseq
        %v5289 = vshrl.u32 %v5288, 7
        %v5290 = vsub.s32 0, %v5289
        %v5291 = vrot.slane %v5221, %v5290
        %s5293 = sor.u32 256, 12
        %5294 = vbcast.lane.b32.xlu0 %v5291, %s5293
        %v5295 = vpop.permute.xlu0 %5294
        %v5296 = vlaneseq
        %v5297 = vshrl.u32 %v5296, 7
        %v5298 = vsub.s32 1, %v5297
        %v5299 = vrot.slane %v5221, %v5298
        %s5301 = sor.u32 256, 12
        %5302 = vbcast.lane.b32.xlu0 %v5299, %s5301
        %v5303 = vpop.permute.xlu0 %5302
        %v5304 = vlaneseq
        %v5305 = vshrl.u32 %v5304, 7
        %v5306 = vsub.s32 2, %v5305
        %v5307 = vrot.slane %v5221, %v5306
        %s5309 = sor.u32 256, 12
        %5310 = vbcast.lane.b32.xlu0 %v5307, %s5309
        %v5311 = vpop.permute.xlu0 %5310
        %v5312 = vlaneseq
        %v5313 = vshrl.u32 %v5312, 7
        %v5314 = vsub.s32 3, %v5313
        %v5315 = vrot.slane %v5221, %v5314
        %s5317 = sor.u32 256, 12
        %5318 = vbcast.lane.b32.xlu0 %v5315, %s5317
        %v5319 = vpop.permute.xlu0 %5318
        %v5320 = vlaneseq
        %v5321 = vshrl.u32 %v5320, 7
        %v5322 = vsub.s32 4, %v5321
        %v5323 = vrot.slane %v5221, %v5322
        %s5325 = sor.u32 256, 12
        %5326 = vbcast.lane.b32.xlu0 %v5323, %s5325
        %v5327 = vpop.permute.xlu0 %5326
        %v5328 = vlaneseq
        %v5329 = vshrl.u32 %v5328, 7
        %v5330 = vsub.s32 5, %v5329
        %v5331 = vrot.slane %v5221, %v5330
        %s5333 = sor.u32 256, 12
        %5334 = vbcast.lane.b32.xlu0 %v5331, %s5333
        %v5335 = vpop.permute.xlu0 %5334
        %v5336 = vlaneseq
        %v5337 = vshrl.u32 %v5336, 7
        %v5338 = vsub.s32 6, %v5337
        %v5339 = vrot.slane %v5221, %v5338
        %s5341 = sor.u32 256, 12
        %5342 = vbcast.lane.b32.xlu0 %v5339, %s5341
        %v5343 = vpop.permute.xlu0 %5342
        %v5344 = vlaneseq
        %v5345 = vshrl.u32 %v5344, 7
        %v5346 = vsub.s32 7, %v5345
        %v5347 = vrot.slane %v5221, %v5346
        %s5349 = sor.u32 256, 12
        %5350 = vbcast.lane.b32.xlu0 %v5347, %s5349
        %v5351 = vpop.permute.xlu0 %5350
        %v5352 = vsub.f32 %v5231, %v2754
        %v5353 = vsub.f32 %v5239, %v2754
        %v5354 = vsub.f32 %v5247, %v2754
        %v5355 = vsub.f32 %v5255, %v2754
        %v5356 = vsub.f32 %v5263, %v2754
        %v5357 = vsub.f32 %v5271, %v2754
        %v5358 = vsub.f32 %v5279, %v2754
        %v5359 = vsub.f32 %v5287, %v2754
        %v5360 = vsub.f32 %v5295, %v2754
        %v5361 = vsub.f32 %v5303, %v2754
        %v5362 = vsub.f32 %v5311, %v2754
        %v5363 = vsub.f32 %v5319, %v2754
        %v5364 = vsub.f32 %v5327, %v2754
        %v5365 = vsub.f32 %v5335, %v2754
        %v5366 = vsub.f32 %v5343, %v2754
        %v5367 = vsub.f32 %v5351, %v2754
        %v5368 = vand.u32 2147483647, %v5352
        %v5369 = vand.u32 2147483647, %v5353
        %v5370 = vand.u32 2147483647, %v5354
        %v5371 = vand.u32 2147483647, %v5355
        %v5372 = vand.u32 2147483647, %v5356
        %v5373 = vand.u32 2147483647, %v5357
        %v5374 = vand.u32 2147483647, %v5358
        %v5375 = vand.u32 2147483647, %v5359
        %v5376 = vand.u32 2147483647, %v5360
        %v5377 = vand.u32 2147483647, %v5361
        %v5378 = vand.u32 2147483647, %v5362
        %v5379 = vand.u32 2147483647, %v5363
        %v5380 = vand.u32 2147483647, %v5364
        %v5381 = vand.u32 2147483647, %v5365
        %v5382 = vand.u32 2147483647, %v5366
        %v5383 = vand.u32 2147483647, %v5367
        %v5384 = vsub.f32 1.0, %v5368
        %v5385 = vsub.f32 1.0, %v5369
        %v5386 = vsub.f32 1.0, %v5370
        %v5387 = vsub.f32 1.0, %v5371
        %v5388 = vsub.f32 1.0, %v5372
        %v5389 = vsub.f32 1.0, %v5373
        %v5390 = vsub.f32 1.0, %v5374
        %v5391 = vsub.f32 1.0, %v5375
        %v5392 = vsub.f32 1.0, %v5376
        %v5393 = vsub.f32 1.0, %v5377
        %v5394 = vsub.f32 1.0, %v5378
        %v5395 = vsub.f32 1.0, %v5379
        %v5396 = vsub.f32 1.0, %v5380
        %v5397 = vsub.f32 1.0, %v5381
        %v5398 = vsub.f32 1.0, %v5382
        %v5399 = vsub.f32 1.0, %v5383
        %v5400 = vmax.f32 %v5384, 0.0
        %v5401 = vmax.f32 %v5385, 0.0
        %v5402 = vmax.f32 %v5386, 0.0
        %v5403 = vmax.f32 %v5387, 0.0
        %v5404 = vmax.f32 %v5388, 0.0
        %v5405 = vmax.f32 %v5389, 0.0
        %v5406 = vmax.f32 %v5390, 0.0
        %v5407 = vmax.f32 %v5391, 0.0
        %v5408 = vmax.f32 %v5392, 0.0
        %v5409 = vmax.f32 %v5393, 0.0
        %v5410 = vmax.f32 %v5394, 0.0
        %v5411 = vmax.f32 %v5395, 0.0
        %v5412 = vmax.f32 %v5396, 0.0
        %v5413 = vmax.f32 %v5397, 0.0
        %v5414 = vmax.f32 %v5398, 0.0
        %v5415 = vmax.f32 %v5399, 0.0
        %v5416 = vlaneseq
        %v5417 = vshrl.u32 %v5416, 7
        %v5418 = vsub.s32 0, %v5417
        %v5419 = vrot.slane %v5222, %v5418
        %s5421 = sor.u32 256, 44
        %5422 = vbcast.lane.b32.xlu0 %v5419, %s5421
        %v5423 = vpop.permute.xlu0 %5422
        %v5424 = vlaneseq
        %v5425 = vshrl.u32 %v5424, 7
        %v5426 = vsub.s32 1, %v5425
        %v5427 = vrot.slane %v5222, %v5426
        %s5429 = sor.u32 256, 44
        %5430 = vbcast.lane.b32.xlu0 %v5427, %s5429
        %v5431 = vpop.permute.xlu0 %5430
        %v5432 = vlaneseq
        %v5433 = vshrl.u32 %v5432, 7
        %v5434 = vsub.s32 2, %v5433
        %v5435 = vrot.slane %v5222, %v5434
        %s5437 = sor.u32 256, 44
        %5438 = vbcast.lane.b32.xlu0 %v5435, %s5437
        %v5439 = vpop.permute.xlu0 %5438
        %v5440 = vlaneseq
        %v5441 = vshrl.u32 %v5440, 7
        %v5442 = vsub.s32 3, %v5441
        %v5443 = vrot.slane %v5222, %v5442
        %s5445 = sor.u32 256, 44
        %5446 = vbcast.lane.b32.xlu0 %v5443, %s5445
        %v5447 = vpop.permute.xlu0 %5446
        %v5448 = vlaneseq
        %v5449 = vshrl.u32 %v5448, 7
        %v5450 = vsub.s32 4, %v5449
        %v5451 = vrot.slane %v5222, %v5450
        %s5453 = sor.u32 256, 44
        %5454 = vbcast.lane.b32.xlu0 %v5451, %s5453
        %v5455 = vpop.permute.xlu0 %5454
        %v5456 = vlaneseq
        %v5457 = vshrl.u32 %v5456, 7
        %v5458 = vsub.s32 5, %v5457
        %v5459 = vrot.slane %v5222, %v5458
        %s5461 = sor.u32 256, 44
        %5462 = vbcast.lane.b32.xlu0 %v5459, %s5461
        %v5463 = vpop.permute.xlu0 %5462
        %v5464 = vlaneseq
        %v5465 = vshrl.u32 %v5464, 7
        %v5466 = vsub.s32 6, %v5465
        %v5467 = vrot.slane %v5222, %v5466
        %s5469 = sor.u32 256, 44
        %5470 = vbcast.lane.b32.xlu0 %v5467, %s5469
        %v5471 = vpop.permute.xlu0 %5470
        %v5472 = vlaneseq
        %v5473 = vshrl.u32 %v5472, 7
        %v5474 = vsub.s32 7, %v5473
        %v5475 = vrot.slane %v5222, %v5474
        %s5477 = sor.u32 256, 44
        %5478 = vbcast.lane.b32.xlu0 %v5475, %s5477
        %v5479 = vpop.permute.xlu0 %5478
        %v5480 = vlaneseq
        %v5481 = vshrl.u32 %v5480, 7
        %v5482 = vsub.s32 0, %v5481
        %v5483 = vrot.slane %v5223, %v5482
        %s5485 = sor.u32 256, 44
        %5486 = vbcast.lane.b32.xlu0 %v5483, %s5485
        %v5487 = vpop.permute.xlu0 %5486
        %v5488 = vlaneseq
        %v5489 = vshrl.u32 %v5488, 7
        %v5490 = vsub.s32 1, %v5489
        %v5491 = vrot.slane %v5223, %v5490
        %s5493 = sor.u32 256, 44
        %5494 = vbcast.lane.b32.xlu0 %v5491, %s5493
        %v5495 = vpop.permute.xlu0 %5494
        %v5496 = vlaneseq
        %v5497 = vshrl.u32 %v5496, 7
        %v5498 = vsub.s32 2, %v5497
        %v5499 = vrot.slane %v5223, %v5498
        %s5501 = sor.u32 256, 44
        %5502 = vbcast.lane.b32.xlu0 %v5499, %s5501
        %v5503 = vpop.permute.xlu0 %5502
        %v5504 = vlaneseq
        %v5505 = vshrl.u32 %v5504, 7
        %v5506 = vsub.s32 3, %v5505
        %v5507 = vrot.slane %v5223, %v5506
        %s5509 = sor.u32 256, 44
        %5510 = vbcast.lane.b32.xlu0 %v5507, %s5509
        %v5511 = vpop.permute.xlu0 %5510
        %v5512 = vlaneseq
        %v5513 = vshrl.u32 %v5512, 7
        %v5514 = vsub.s32 4, %v5513
        %v5515 = vrot.slane %v5223, %v5514
        %s5517 = sor.u32 256, 44
        %5518 = vbcast.lane.b32.xlu0 %v5515, %s5517
        %v5519 = vpop.permute.xlu0 %5518
        %v5520 = vlaneseq
        %v5521 = vshrl.u32 %v5520, 7
        %v5522 = vsub.s32 5, %v5521
        %v5523 = vrot.slane %v5223, %v5522
        %s5525 = sor.u32 256, 44
        %5526 = vbcast.lane.b32.xlu0 %v5523, %s5525
        %v5527 = vpop.permute.xlu0 %5526
        %v5528 = vlaneseq
        %v5529 = vshrl.u32 %v5528, 7
        %v5530 = vsub.s32 6, %v5529
        %v5531 = vrot.slane %v5223, %v5530
        %s5533 = sor.u32 256, 44
        %5534 = vbcast.lane.b32.xlu0 %v5531, %s5533
        %v5535 = vpop.permute.xlu0 %5534
        %v5536 = vlaneseq
        %v5537 = vshrl.u32 %v5536, 7
        %v5538 = vsub.s32 7, %v5537
        %v5539 = vrot.slane %v5223, %v5538
        %s5541 = sor.u32 256, 44
        %5542 = vbcast.lane.b32.xlu0 %v5539, %s5541
        %v5543 = vpop.permute.xlu0 %5542
        %v5544 = vsub.f32 %v5423, %v2752
        %v5545 = vsub.f32 %v5431, %v2752
        %v5546 = vsub.f32 %v5439, %v2752
        %v5547 = vsub.f32 %v5447, %v2752
        %v5548 = vsub.f32 %v5455, %v2752
        %v5549 = vsub.f32 %v5463, %v2752
        %v5550 = vsub.f32 %v5471, %v2752
        %v5551 = vsub.f32 %v5479, %v2752
        %v5552 = vsub.f32 %v5487, %v2752
        %v5553 = vsub.f32 %v5495, %v2752
        %v5554 = vsub.f32 %v5503, %v2752
        %v5555 = vsub.f32 %v5511, %v2752
        %v5556 = vsub.f32 %v5519, %v2752
        %v5557 = vsub.f32 %v5527, %v2752
        %v5558 = vsub.f32 %v5535, %v2752
        %v5559 = vsub.f32 %v5543, %v2752
        %v5560 = vand.u32 2147483647, %v5544
        %v5561 = vand.u32 2147483647, %v5545
        %v5562 = vand.u32 2147483647, %v5546
        %v5563 = vand.u32 2147483647, %v5547
        %v5564 = vand.u32 2147483647, %v5548
        %v5565 = vand.u32 2147483647, %v5549
        %v5566 = vand.u32 2147483647, %v5550
        %v5567 = vand.u32 2147483647, %v5551
        %v5568 = vand.u32 2147483647, %v5552
        %v5569 = vand.u32 2147483647, %v5553
        %v5570 = vand.u32 2147483647, %v5554
        %v5571 = vand.u32 2147483647, %v5555
        %v5572 = vand.u32 2147483647, %v5556
        %v5573 = vand.u32 2147483647, %v5557
        %v5574 = vand.u32 2147483647, %v5558
        %v5575 = vand.u32 2147483647, %v5559
        %v5576 = vsub.f32 1.0, %v5560
        %v5577 = vsub.f32 1.0, %v5561
        %v5578 = vsub.f32 1.0, %v5562
        %v5579 = vsub.f32 1.0, %v5563
        %v5580 = vsub.f32 1.0, %v5564
        %v5581 = vsub.f32 1.0, %v5565
        %v5582 = vsub.f32 1.0, %v5566
        %v5583 = vsub.f32 1.0, %v5567
        %v5584 = vsub.f32 1.0, %v5568
        %v5585 = vsub.f32 1.0, %v5569
        %v5586 = vsub.f32 1.0, %v5570
        %v5587 = vsub.f32 1.0, %v5571
        %v5588 = vsub.f32 1.0, %v5572
        %v5589 = vsub.f32 1.0, %v5573
        %v5590 = vsub.f32 1.0, %v5574
        %v5591 = vsub.f32 1.0, %v5575
        %v5592 = vmax.f32 %v5576, 0.0
        %v5593 = vmax.f32 %v5577, 0.0
        %v5594 = vmax.f32 %v5578, 0.0
        %v5595 = vmax.f32 %v5579, 0.0
        %v5596 = vmax.f32 %v5580, 0.0
        %v5597 = vmax.f32 %v5581, 0.0
        %v5598 = vmax.f32 %v5582, 0.0
        %v5599 = vmax.f32 %v5583, 0.0
        %v5600 = vmax.f32 %v5584, 0.0
        %v5601 = vmax.f32 %v5585, 0.0
        %v5602 = vmax.f32 %v5586, 0.0
        %v5603 = vmax.f32 %v5587, 0.0
        %v5604 = vmax.f32 %v5588, 0.0
        %v5605 = vmax.f32 %v5589, 0.0
        %v5606 = vmax.f32 %v5590, 0.0
        %v5607 = vmax.f32 %v5591, 0.0
        %v5608 = vlaneseq
        %v5609 = vshrl.u32 %v5608, 7
        %v5610 = vsub.s32 0, %v5609
        %v5611 = vrot.slane %v5218, %v5610
        %s5613 = sor.u32 256, 76
        %5614 = vbcast.lane.b32.xlu0 %v5611, %s5613
        %v5615 = vpop.permute.xlu0 %5614
        %v5616 = vlaneseq
        %v5617 = vshrl.u32 %v5616, 7
        %v5618 = vsub.s32 1, %v5617
        %v5619 = vrot.slane %v5218, %v5618
        %s5621 = sor.u32 256, 76
        %5622 = vbcast.lane.b32.xlu0 %v5619, %s5621
        %v5623 = vpop.permute.xlu0 %5622
        %v5624 = vlaneseq
        %v5625 = vshrl.u32 %v5624, 7
        %v5626 = vsub.s32 2, %v5625
        %v5627 = vrot.slane %v5218, %v5626
        %s5629 = sor.u32 256, 76
        %5630 = vbcast.lane.b32.xlu0 %v5627, %s5629
        %v5631 = vpop.permute.xlu0 %5630
        %v5632 = vlaneseq
        %v5633 = vshrl.u32 %v5632, 7
        %v5634 = vsub.s32 3, %v5633
        %v5635 = vrot.slane %v5218, %v5634
        %s5637 = sor.u32 256, 76
        %5638 = vbcast.lane.b32.xlu0 %v5635, %s5637
        %v5639 = vpop.permute.xlu0 %5638
        %v5640 = vlaneseq
        %v5641 = vshrl.u32 %v5640, 7
        %v5642 = vsub.s32 4, %v5641
        %v5643 = vrot.slane %v5218, %v5642
        %s5645 = sor.u32 256, 76
        %5646 = vbcast.lane.b32.xlu0 %v5643, %s5645
        %v5647 = vpop.permute.xlu0 %5646
        %v5648 = vlaneseq
        %v5649 = vshrl.u32 %v5648, 7
        %v5650 = vsub.s32 5, %v5649
        %v5651 = vrot.slane %v5218, %v5650
        %s5653 = sor.u32 256, 76
        %5654 = vbcast.lane.b32.xlu0 %v5651, %s5653
        %v5655 = vpop.permute.xlu0 %5654
        %v5656 = vlaneseq
        %v5657 = vshrl.u32 %v5656, 7
        %v5658 = vsub.s32 6, %v5657
        %v5659 = vrot.slane %v5218, %v5658
        %s5661 = sor.u32 256, 76
        %5662 = vbcast.lane.b32.xlu0 %v5659, %s5661
        %v5663 = vpop.permute.xlu0 %5662
        %v5664 = vlaneseq
        %v5665 = vshrl.u32 %v5664, 7
        %v5666 = vsub.s32 7, %v5665
        %v5667 = vrot.slane %v5218, %v5666
        %s5669 = sor.u32 256, 76
        %5670 = vbcast.lane.b32.xlu0 %v5667, %s5669
        %v5671 = vpop.permute.xlu0 %5670
        %v5672 = vlaneseq
        %v5673 = vshrl.u32 %v5672, 7
        %v5674 = vsub.s32 0, %v5673
        %v5675 = vrot.slane %v5219, %v5674
        %s5677 = sor.u32 256, 76
        %5678 = vbcast.lane.b32.xlu0 %v5675, %s5677
        %v5679 = vpop.permute.xlu0 %5678
        %v5680 = vlaneseq
        %v5681 = vshrl.u32 %v5680, 7
        %v5682 = vsub.s32 1, %v5681
        %v5683 = vrot.slane %v5219, %v5682
        %s5685 = sor.u32 256, 76
        %5686 = vbcast.lane.b32.xlu0 %v5683, %s5685
        %v5687 = vpop.permute.xlu0 %5686
        %v5688 = vlaneseq
        %v5689 = vshrl.u32 %v5688, 7
        %v5690 = vsub.s32 2, %v5689
        %v5691 = vrot.slane %v5219, %v5690
        %s5693 = sor.u32 256, 76
        %5694 = vbcast.lane.b32.xlu0 %v5691, %s5693
        %v5695 = vpop.permute.xlu0 %5694
        %v5696 = vlaneseq
        %v5697 = vshrl.u32 %v5696, 7
        %v5698 = vsub.s32 3, %v5697
        %v5699 = vrot.slane %v5219, %v5698
        %s5701 = sor.u32 256, 76
        %5702 = vbcast.lane.b32.xlu0 %v5699, %s5701
        %v5703 = vpop.permute.xlu0 %5702
        %v5704 = vlaneseq
        %v5705 = vshrl.u32 %v5704, 7
        %v5706 = vsub.s32 4, %v5705
        %v5707 = vrot.slane %v5219, %v5706
        %s5709 = sor.u32 256, 76
        %5710 = vbcast.lane.b32.xlu0 %v5707, %s5709
        %v5711 = vpop.permute.xlu0 %5710
        %v5712 = vlaneseq
        %v5713 = vshrl.u32 %v5712, 7
        %v5714 = vsub.s32 5, %v5713
        %v5715 = vrot.slane %v5219, %v5714
        %s5717 = sor.u32 256, 76
        %5718 = vbcast.lane.b32.xlu0 %v5715, %s5717
        %v5719 = vpop.permute.xlu0 %5718
        %v5720 = vlaneseq
        %v5721 = vshrl.u32 %v5720, 7
        %v5722 = vsub.s32 6, %v5721
        %v5723 = vrot.slane %v5219, %v5722
        %s5725 = sor.u32 256, 76
        %5726 = vbcast.lane.b32.xlu0 %v5723, %s5725
        %v5727 = vpop.permute.xlu0 %5726
        %v5728 = vlaneseq
        %v5729 = vshrl.u32 %v5728, 7
        %v5730 = vsub.s32 7, %v5729
        %v5731 = vrot.slane %v5219, %v5730
        %s5733 = sor.u32 256, 76
        %5734 = vbcast.lane.b32.xlu0 %v5731, %s5733
        %v5735 = vpop.permute.xlu0 %5734
        %v5736 = vmul.f32 %v5615, %v5400
        %v5737 = vmul.f32 %v5623, %v5401
        %v5738 = vmul.f32 %v5631, %v5402
        %v5739 = vmul.f32 %v5639, %v5403
        %v5740 = vmul.f32 %v5647, %v5404
        %v5741 = vmul.f32 %v5655, %v5405
        %v5742 = vmul.f32 %v5663, %v5406
        %v5743 = vmul.f32 %v5671, %v5407
        %v5744 = vmul.f32 %v5679, %v5408
        %v5745 = vmul.f32 %v5687, %v5409
        %v5746 = vmul.f32 %v5695, %v5410
        %v5747 = vmul.f32 %v5703, %v5411
        %v5748 = vmul.f32 %v5711, %v5412
        %v5749 = vmul.f32 %v5719, %v5413
        %v5750 = vmul.f32 %v5727, %v5414
        %v5751 = vmul.f32 %v5735, %v5415
        %v5752 = vmul.f32 %v5736, %v5592
        %v5753 = vmul.f32 %v5737, %v5593
        %v5754 = vmul.f32 %v5738, %v5594
        %v5755 = vmul.f32 %v5739, %v5595
        %v5756 = vmul.f32 %v5740, %v5596
        %v5757 = vmul.f32 %v5741, %v5597
        %v5758 = vmul.f32 %v5742, %v5598
        %v5759 = vmul.f32 %v5743, %v5599
        %v5760 = vmul.f32 %v5744, %v5600
        %v5761 = vmul.f32 %v5745, %v5601
        %v5762 = vmul.f32 %v5746, %v5602
        %v5763 = vmul.f32 %v5747, %v5603
        %v5764 = vmul.f32 %v5748, %v5604
        %v5765 = vmul.f32 %v5749, %v5605
        %v5766 = vmul.f32 %v5750, %v5606
        %v5767 = vmul.f32 %v5751, %v5607
        %v5768 = vsel %vm3321, %v5752, 0.0
        %v5769 = vrot.slane %v5768, 4
        %v5770 = vadd.f32 %v5768, %v5769
        %v5771 = vrot.slane %v5770, 2
        %v5772 = vadd.f32 %v5770, %v5771
        %v5773 = vrot.slane %v5772, 1
        %v5774 = vadd.f32 %v5772, %v5773
        %v5775 = vsel %vm3321, %v5753, 0.0
        %v5776 = vrot.slane %v5775, 4
        %v5777 = vadd.f32 %v5775, %v5776
        %v5778 = vrot.slane %v5777, 2
        %v5779 = vadd.f32 %v5777, %v5778
        %v5780 = vrot.slane %v5779, 1
        %v5781 = vadd.f32 %v5779, %v5780
        %v5782 = vsel %vm3321, %v5754, 0.0
        %v5783 = vrot.slane %v5782, 4
        %v5784 = vadd.f32 %v5782, %v5783
        %v5785 = vrot.slane %v5784, 2
        %v5786 = vadd.f32 %v5784, %v5785
        %v5787 = vrot.slane %v5786, 1
        %v5788 = vadd.f32 %v5786, %v5787
        %v5789 = vsel %vm3321, %v5755, 0.0
        %v5790 = vrot.slane %v5789, 4
        %v5791 = vadd.f32 %v5789, %v5790
        %v5792 = vrot.slane %v5791, 2
        %v5793 = vadd.f32 %v5791, %v5792
        %v5794 = vrot.slane %v5793, 1
        %v5795 = vadd.f32 %v5793, %v5794
        %v5796 = vsel %vm3321, %v5756, 0.0
        %v5797 = vrot.slane %v5796, 4
        %v5798 = vadd.f32 %v5796, %v5797
        %v5799 = vrot.slane %v5798, 2
        %v5800 = vadd.f32 %v5798, %v5799
        %v5801 = vrot.slane %v5800, 1
        %v5802 = vadd.f32 %v5800, %v5801
        %v5803 = vsel %vm3321, %v5757, 0.0
        %v5804 = vrot.slane %v5803, 4
        %v5805 = vadd.f32 %v5803, %v5804
        %v5806 = vrot.slane %v5805, 2
        %v5807 = vadd.f32 %v5805, %v5806
        %v5808 = vrot.slane %v5807, 1
        %v5809 = vadd.f32 %v5807, %v5808
        %v5810 = vsel %vm3321, %v5758, 0.0
        %v5811 = vrot.slane %v5810, 4
        %v5812 = vadd.f32 %v5810, %v5811
        %v5813 = vrot.slane %v5812, 2
        %v5814 = vadd.f32 %v5812, %v5813
        %v5815 = vrot.slane %v5814, 1
        %v5816 = vadd.f32 %v5814, %v5815
        %v5817 = vsel %vm3321, %v5759, 0.0
        %v5818 = vrot.slane %v5817, 4
        %v5819 = vadd.f32 %v5817, %v5818
        %v5820 = vrot.slane %v5819, 2
        %v5821 = vadd.f32 %v5819, %v5820
        %v5822 = vrot.slane %v5821, 1
        %v5823 = vadd.f32 %v5821, %v5822
        %v5824 = vsel %vm3321, %v5760, 0.0
        %v5825 = vrot.slane %v5824, 4
        %v5826 = vadd.f32 %v5824, %v5825
        %v5827 = vrot.slane %v5826, 2
        %v5828 = vadd.f32 %v5826, %v5827
        %v5829 = vrot.slane %v5828, 1
        %v5830 = vadd.f32 %v5828, %v5829
        %v5831 = vsel %vm3321, %v5761, 0.0
        %v5832 = vrot.slane %v5831, 4
        %v5833 = vadd.f32 %v5831, %v5832
        %v5834 = vrot.slane %v5833, 2
        %v5835 = vadd.f32 %v5833, %v5834
        %v5836 = vrot.slane %v5835, 1
        %v5837 = vadd.f32 %v5835, %v5836
        %v5838 = vsel %vm3321, %v5762, 0.0
        %v5839 = vrot.slane %v5838, 4
        %v5840 = vadd.f32 %v5838, %v5839
        %v5841 = vrot.slane %v5840, 2
        %v5842 = vadd.f32 %v5840, %v5841
        %v5843 = vrot.slane %v5842, 1
        %v5844 = vadd.f32 %v5842, %v5843
        %v5845 = vsel %vm3321, %v5763, 0.0
        %v5846 = vrot.slane %v5845, 4
        %v5847 = vadd.f32 %v5845, %v5846
        %v5848 = vrot.slane %v5847, 2
        %v5849 = vadd.f32 %v5847, %v5848
        %v5850 = vrot.slane %v5849, 1
        %v5851 = vadd.f32 %v5849, %v5850
        %v5852 = vsel %vm3321, %v5764, 0.0
        %v5853 = vrot.slane %v5852, 4
        %v5854 = vadd.f32 %v5852, %v5853
        %v5855 = vrot.slane %v5854, 2
        %v5856 = vadd.f32 %v5854, %v5855
        %v5857 = vrot.slane %v5856, 1
        %v5858 = vadd.f32 %v5856, %v5857
        %v5859 = vsel %vm3321, %v5765, 0.0
        %v5860 = vrot.slane %v5859, 4
        %v5861 = vadd.f32 %v5859, %v5860
        %v5862 = vrot.slane %v5861, 2
        %v5863 = vadd.f32 %v5861, %v5862
        %v5864 = vrot.slane %v5863, 1
        %v5865 = vadd.f32 %v5863, %v5864
        %v5866 = vsel %vm3321, %v5766, 0.0
        %v5867 = vrot.slane %v5866, 4
        %v5868 = vadd.f32 %v5866, %v5867
        %v5869 = vrot.slane %v5868, 2
        %v5870 = vadd.f32 %v5868, %v5869
        %v5871 = vrot.slane %v5870, 1
        %v5872 = vadd.f32 %v5870, %v5871
        %v5873 = vsel %vm3321, %v5767, 0.0
        %v5874 = vrot.slane %v5873, 4
        %v5875 = vadd.f32 %v5873, %v5874
        %v5876 = vrot.slane %v5875, 2
        %v5877 = vadd.f32 %v5875, %v5876
        %v5878 = vrot.slane %v5877, 1
        %v5879 = vadd.f32 %v5877, %v5878
        %v5880 = vpack.c.bf16 %v5774, %v5774
        %v5881 = vpack.c.bf16 %v5781, %v5781
        %v5882 = vpack.c.bf16 %v5788, %v5788
        %v5883 = vpack.c.bf16 %v5795, %v5795
        %v5884 = vpack.c.bf16 %v5802, %v5802
        %v5885 = vpack.c.bf16 %v5809, %v5809
        %v5886 = vpack.c.bf16 %v5816, %v5816
        %v5887 = vpack.c.bf16 %v5823, %v5823
        %v5888 = vpack.c.bf16 %v5830, %v5830
        %v5889 = vpack.c.bf16 %v5837, %v5837
        %v5890 = vpack.c.bf16 %v5844, %v5844
        %v5891 = vpack.c.bf16 %v5851, %v5851
        %v5892 = vpack.c.bf16 %v5858, %v5858
        %v5893 = vpack.c.bf16 %v5865, %v5865
        %v5894 = vpack.c.bf16 %v5872, %v5872
        %v5895 = vpack.c.bf16 %v5879, %v5879
        %v5896 = vld [vmem:[#allocation3] sm:$0xff]
        %v5897 = vld [vmem:[#allocation3 + $0x8] sm:$0xff]
        %v5898 = vpack.c.bf16 %v5897, %v5896
        %v5915 = vunpack.c.l.b16 %v5880
        %v5916 = vunpack.c.l.b16 %v5881
        %v5917 = vunpack.c.l.b16 %v5882
        %v5918 = vunpack.c.l.b16 %v5883
        %v5919 = vunpack.c.l.b16 %v5884
        %v5920 = vunpack.c.l.b16 %v5885
        %v5921 = vunpack.c.l.b16 %v5886
        %v5922 = vunpack.c.l.b16 %v5887
        %v5923 = vunpack.c.l.b16 %v5888
        %v5924 = vunpack.c.l.b16 %v5889
        %v5925 = vunpack.c.l.b16 %v5890
        %v5926 = vunpack.c.l.b16 %v5891
        %v5927 = vunpack.c.l.b16 %v5892
        %v5928 = vunpack.c.l.b16 %v5893
        %v5929 = vunpack.c.l.b16 %v5894
        %v5930 = vunpack.c.l.b16 %v5895
        %v5931 = vsel %vm3485, %v5916, %v5915
        %v5932 = vsel %vm3487, %v5917, %v5931
        %v5933 = vsel %vm3489, %v5918, %v5932
        %v5934 = vsel %vm3491, %v5919, %v5933
        %v5935 = vsel %vm3493, %v5920, %v5934
        %v5936 = vsel %vm3495, %v5921, %v5935
        %v5937 = vsel %vm3497, %v5922, %v5936
        %v5938 = vsel %vm3485, %v5924, %v5923
        %v5939 = vsel %vm3487, %v5925, %v5938
        %v5940 = vsel %vm3489, %v5926, %v5939
        %v5941 = vsel %vm3491, %v5927, %v5940
        %v5942 = vsel %vm3493, %v5928, %v5941
        %v5943 = vsel %vm3495, %v5929, %v5942
        %v5944 = vsel %vm3497, %v5930, %v5943
        %v5945 = vpack.c.b16 %v5944, %v5937
        %5947 = vrot.lane.b32.xlu0 %v5898, 80
        %v5948 = vpop.permute.xlu0 %5947
        %v5951 = vsel %vm1322, %v5945, 0
        %5953 = vmatprep.subr.bf16.mxu0 0
        %5954 = vmatpush1.bf16.msra.mxu0 %v5948
        %5955 = vmatprep.subr.bf16.mxu0 0
        %5956 = vmatpush1.bf16.msra.mxu0 0
        %5957 = vmatprep.subr.bf16.mxu0 0
        %5958 = vmatpush1.bf16.msra.mxu0 0
        %5959 = vmatprep.subr.bf16.mxu0 0
        %5960 = vmatpush1.bf16.msra.mxu0 0
        %5961 = vmatprep.subr.bf16.mxu0 0
        %5962 = vmatpush1.bf16.msra.mxu0 0
        %5963 = vmatprep.subr.bf16.mxu0 0
        %5964 = vmatpush1.bf16.msra.mxu0 0
        %5965 = vmatprep.subr.bf16.mxu0 0
        %5966 = vmatpush1.bf16.msra.mxu0 0
        %5967 = vmatprep.subr.bf16.mxu0 0
        %5968 = vmatpush1.bf16.msra.mxu0 0
        %5969 = vmatprep.subr.bf16.mxu0 0
        %5970 = vmatpush1.bf16.msra.mxu0 0
        %5971 = vmatprep.subr.bf16.mxu0 0
        %5972 = vmatpush1.bf16.msra.mxu0 0
        %5973 = vmatprep.subr.bf16.mxu0 0
        %5974 = vmatpush1.bf16.msra.mxu0 0
        %5975 = vmatprep.subr.bf16.mxu0 0
        %5976 = vmatpush1.bf16.msra.mxu0 0
        %5977 = vmatprep.subr.bf16.mxu0 0
        %5978 = vmatpush1.bf16.msra.mxu0 0
        %5979 = vmatprep.subr.bf16.mxu0 0
        %5980 = vmatpush1.bf16.msra.mxu0 0
        %5981 = vmatprep.subr.bf16.mxu0 0
        %5982 = vmatpush1.bf16.msra.mxu0 0
        %5983 = vmatprep.subr.bf16.mxu0 0
        %5984 = vmatpush1.bf16.msra.mxu0 0
        %5985 = vmatprep.mubr.bf16.mxu0 0
        %5986 = vmatmul.mubr.bf16.gmra.mrb[0].mxu0 %v5951
        %v5987 = vpop.f32.mrb[0].mxu0
        %v5988 = vadd.f32 0.0, %v5987
        %v5989 = vpop.f32.mrb[0].mxu0
        %v5990 = vpop.f32.mrb[0].mxu0
        %v5991 = vadd.f32 0.0, %v5990
        %v5992 = vpop.f32.mrb[0].mxu0
        %5993 = vdwg.mxu0
        %5996 = vrot.lane.b32.xlu0 %v5988, 48
        %v5997 = vpop.permute.xlu0 %5996
        %5998 = vrot.lane.b32.xlu0 %v5991, 48
        %v5999 = vpop.permute.xlu0 %5998
        %6002 = vst.msk [vmem:[#allocation6] sm:$0xff] %vm1875, %v5997
        %6003 = vst.msk [vmem:[#allocation6 + $0x8] sm:$0xff] %vm1875, %v5999
        %v6004 = vld [vmem:[#allocation5] sm:$0xff]
        %v6005 = vld [vmem:[#allocation5 + $0x8] sm:$0xff]
        %vm6006 = vcmask 687744
        %v6007 = vsel %vm6006, %v6004, -inf
        %6008 = vmax.xlane.f32.xlu0 %v6007
        %v6009 = vpop.xlane.xlu0 %6008
        %v6010 = vsel %vm6006, %v6005, -inf
        %6011 = vmax.xlane.f32.xlu0 %v6010
        %v6012 = vpop.xlane.xlu0 %6011
        %v6013 = vsub.f32 %v6004, %v6009
        %v6014 = vsub.f32 %v6005, %v6012
        %v6015 = vmul.f32 %v6013, 1.442695
        %v6016 = vpow.pop %v6015
        %v6017 = vmul.f32 %v6014, 1.442695
        %v6018 = vpow.pop %v6017
        %6021 = vrot.lane.b32.xlu0 %v6016, 48
        %v6022 = vpop.permute.xlu0 %6021
        %6023 = vrot.lane.b32.xlu0 %v6018, 48
        %v6024 = vpop.permute.xlu0 %6023
        %v6027 = vsel %vm2778, %v6022, 0.0
        %6028 = vadd.xlane.f32.xlu0 %v6027
        %v6029 = vpop.xlane.xlu0 %6028
        %v6030 = vsel %vm2778, %v6024, 0.0
        %6031 = vadd.xlane.f32.xlu0 %v6030
        %v6032 = vpop.xlane.xlu0 %6031
        %v6033 = vrcp.pop %v6029
        %v6034 = vrcp.pop %v6032
        %v6035 = vmul.f32 %v6016, %v6033
        %v6036 = vmul.f32 %v6018, %v6034
        %v6037 = vadd.f32 %v2749, %v6004
        %v6038 = vadd.f32 %v2750, %v6005
        %v6039 = vadd.f32 %v2745, %v6004
        %v6040 = vadd.f32 %v2746, %v6005
        %v6041 = vlaneseq
        %v6042 = vshrl.u32 %v6041, 7
        %v6043 = vsub.s32 0, %v6042
        %v6044 = vrot.slane %v6037, %v6043
        %s6046 = sor.u32 256, 16
        %6047 = vbcast.lane.b32.xlu0 %v6044, %s6046
        %v6048 = vpop.permute.xlu0 %6047
        %v6049 = vlaneseq
        %v6050 = vshrl.u32 %v6049, 7
        %v6051 = vsub.s32 1, %v6050
        %v6052 = vrot.slane %v6037, %v6051
        %s6054 = sor.u32 256, 16
        %6055 = vbcast.lane.b32.xlu0 %v6052, %s6054
        %v6056 = vpop.permute.xlu0 %6055
        %v6057 = vlaneseq
        %v6058 = vshrl.u32 %v6057, 7
        %v6059 = vsub.s32 2, %v6058
        %v6060 = vrot.slane %v6037, %v6059
        %s6062 = sor.u32 256, 16
        %6063 = vbcast.lane.b32.xlu0 %v6060, %s6062
        %v6064 = vpop.permute.xlu0 %6063
        %v6065 = vlaneseq
        %v6066 = vshrl.u32 %v6065, 7
        %v6067 = vsub.s32 3, %v6066
        %v6068 = vrot.slane %v6037, %v6067
        %s6070 = sor.u32 256, 16
        %6071 = vbcast.lane.b32.xlu0 %v6068, %s6070
        %v6072 = vpop.permute.xlu0 %6071
        %v6073 = vlaneseq
        %v6074 = vshrl.u32 %v6073, 7
        %v6075 = vsub.s32 4, %v6074
        %v6076 = vrot.slane %v6037, %v6075
        %s6078 = sor.u32 256, 16
        %6079 = vbcast.lane.b32.xlu0 %v6076, %s6078
        %v6080 = vpop.permute.xlu0 %6079
        %v6081 = vlaneseq
        %v6082 = vshrl.u32 %v6081, 7
        %v6083 = vsub.s32 5, %v6082
        %v6084 = vrot.slane %v6037, %v6083
        %s6086 = sor.u32 256, 16
        %6087 = vbcast.lane.b32.xlu0 %v6084, %s6086
        %v6088 = vpop.permute.xlu0 %6087
        %v6089 = vlaneseq
        %v6090 = vshrl.u32 %v6089, 7
        %v6091 = vsub.s32 6, %v6090
        %v6092 = vrot.slane %v6037, %v6091
        %s6094 = sor.u32 256, 16
        %6095 = vbcast.lane.b32.xlu0 %v6092, %s6094
        %v6096 = vpop.permute.xlu0 %6095
        %v6097 = vlaneseq
        %v6098 = vshrl.u32 %v6097, 7
        %v6099 = vsub.s32 7, %v6098
        %v6100 = vrot.slane %v6037, %v6099
        %s6102 = sor.u32 256, 16
        %6103 = vbcast.lane.b32.xlu0 %v6100, %s6102
        %v6104 = vpop.permute.xlu0 %6103
        %v6105 = vlaneseq
        %v6106 = vshrl.u32 %v6105, 7
        %v6107 = vsub.s32 0, %v6106
        %v6108 = vrot.slane %v6038, %v6107
        %s6110 = sor.u32 256, 16
        %6111 = vbcast.lane.b32.xlu0 %v6108, %s6110
        %v6112 = vpop.permute.xlu0 %6111
        %v6113 = vlaneseq
        %v6114 = vshrl.u32 %v6113, 7
        %v6115 = vsub.s32 1, %v6114
        %v6116 = vrot.slane %v6038, %v6115
        %s6118 = sor.u32 256, 16
        %6119 = vbcast.lane.b32.xlu0 %v6116, %s6118
        %v6120 = vpop.permute.xlu0 %6119
        %v6121 = vlaneseq
        %v6122 = vshrl.u32 %v6121, 7
        %v6123 = vsub.s32 2, %v6122
        %v6124 = vrot.slane %v6038, %v6123
        %s6126 = sor.u32 256, 16
        %6127 = vbcast.lane.b32.xlu0 %v6124, %s6126
        %v6128 = vpop.permute.xlu0 %6127
        %v6129 = vlaneseq
        %v6130 = vshrl.u32 %v6129, 7
        %v6131 = vsub.s32 3, %v6130
        %v6132 = vrot.slane %v6038, %v6131
        %s6134 = sor.u32 256, 16
        %6135 = vbcast.lane.b32.xlu0 %v6132, %s6134
        %v6136 = vpop.permute.xlu0 %6135
        %v6137 = vlaneseq
        %v6138 = vshrl.u32 %v6137, 7
        %v6139 = vsub.s32 4, %v6138
        %v6140 = vrot.slane %v6038, %v6139
        %s6142 = sor.u32 256, 16
        %6143 = vbcast.lane.b32.xlu0 %v6140, %s6142
        %v6144 = vpop.permute.xlu0 %6143
        %v6145 = vlaneseq
        %v6146 = vshrl.u32 %v6145, 7
        %v6147 = vsub.s32 5, %v6146
        %v6148 = vrot.slane %v6038, %v6147
        %s6150 = sor.u32 256, 16
        %6151 = vbcast.lane.b32.xlu0 %v6148, %s6150
        %v6152 = vpop.permute.xlu0 %6151
        %v6153 = vlaneseq
        %v6154 = vshrl.u32 %v6153, 7
        %v6155 = vsub.s32 6, %v6154
        %v6156 = vrot.slane %v6038, %v6155
        %s6158 = sor.u32 256, 16
        %6159 = vbcast.lane.b32.xlu0 %v6156, %s6158
        %v6160 = vpop.permute.xlu0 %6159
        %v6161 = vlaneseq
        %v6162 = vshrl.u32 %v6161, 7
        %v6163 = vsub.s32 7, %v6162
        %v6164 = vrot.slane %v6038, %v6163
        %s6166 = sor.u32 256, 16
        %6167 = vbcast.lane.b32.xlu0 %v6164, %s6166
        %v6168 = vpop.permute.xlu0 %6167
        %v6169 = vsub.f32 %v6048, %v2754
        %v6170 = vsub.f32 %v6056, %v2754
        %v6171 = vsub.f32 %v6064, %v2754
        %v6172 = vsub.f32 %v6072, %v2754
        %v6173 = vsub.f32 %v6080, %v2754
        %v6174 = vsub.f32 %v6088, %v2754
        %v6175 = vsub.f32 %v6096, %v2754
        %v6176 = vsub.f32 %v6104, %v2754
        %v6177 = vsub.f32 %v6112, %v2754
        %v6178 = vsub.f32 %v6120, %v2754
        %v6179 = vsub.f32 %v6128, %v2754
        %v6180 = vsub.f32 %v6136, %v2754
        %v6181 = vsub.f32 %v6144, %v2754
        %v6182 = vsub.f32 %v6152, %v2754
        %v6183 = vsub.f32 %v6160, %v2754
        %v6184 = vsub.f32 %v6168, %v2754
        %v6185 = vand.u32 2147483647, %v6169
        %v6186 = vand.u32 2147483647, %v6170
        %v6187 = vand.u32 2147483647, %v6171
        %v6188 = vand.u32 2147483647, %v6172
        %v6189 = vand.u32 2147483647, %v6173
        %v6190 = vand.u32 2147483647, %v6174
        %v6191 = vand.u32 2147483647, %v6175
        %v6192 = vand.u32 2147483647, %v6176
        %v6193 = vand.u32 2147483647, %v6177
        %v6194 = vand.u32 2147483647, %v6178
        %v6195 = vand.u32 2147483647, %v6179
        %v6196 = vand.u32 2147483647, %v6180
        %v6197 = vand.u32 2147483647, %v6181
        %v6198 = vand.u32 2147483647, %v6182
        %v6199 = vand.u32 2147483647, %v6183
        %v6200 = vand.u32 2147483647, %v6184
        %v6201 = vsub.f32 1.0, %v6185
        %v6202 = vsub.f32 1.0, %v6186
        %v6203 = vsub.f32 1.0, %v6187
        %v6204 = vsub.f32 1.0, %v6188
        %v6205 = vsub.f32 1.0, %v6189
        %v6206 = vsub.f32 1.0, %v6190
        %v6207 = vsub.f32 1.0, %v6191
        %v6208 = vsub.f32 1.0, %v6192
        %v6209 = vsub.f32 1.0, %v6193
        %v6210 = vsub.f32 1.0, %v6194
        %v6211 = vsub.f32 1.0, %v6195
        %v6212 = vsub.f32 1.0, %v6196
        %v6213 = vsub.f32 1.0, %v6197
        %v6214 = vsub.f32 1.0, %v6198
        %v6215 = vsub.f32 1.0, %v6199
        %v6216 = vsub.f32 1.0, %v6200
        %v6217 = vmax.f32 %v6201, 0.0
        %v6218 = vmax.f32 %v6202, 0.0
        %v6219 = vmax.f32 %v6203, 0.0
        %v6220 = vmax.f32 %v6204, 0.0
        %v6221 = vmax.f32 %v6205, 0.0
        %v6222 = vmax.f32 %v6206, 0.0
        %v6223 = vmax.f32 %v6207, 0.0
        %v6224 = vmax.f32 %v6208, 0.0
        %v6225 = vmax.f32 %v6209, 0.0
        %v6226 = vmax.f32 %v6210, 0.0
        %v6227 = vmax.f32 %v6211, 0.0
        %v6228 = vmax.f32 %v6212, 0.0
        %v6229 = vmax.f32 %v6213, 0.0
        %v6230 = vmax.f32 %v6214, 0.0
        %v6231 = vmax.f32 %v6215, 0.0
        %v6232 = vmax.f32 %v6216, 0.0
        %v6233 = vlaneseq
        %v6234 = vshrl.u32 %v6233, 7
        %v6235 = vsub.s32 0, %v6234
        %v6236 = vrot.slane %v6039, %v6235
        %s6238 = sor.u32 256, 48
        %6239 = vbcast.lane.b32.xlu0 %v6236, %s6238
        %v6240 = vpop.permute.xlu0 %6239
        %v6241 = vlaneseq
        %v6242 = vshrl.u32 %v6241, 7
        %v6243 = vsub.s32 1, %v6242
        %v6244 = vrot.slane %v6039, %v6243
        %s6246 = sor.u32 256, 48
        %6247 = vbcast.lane.b32.xlu0 %v6244, %s6246
        %v6248 = vpop.permute.xlu0 %6247
        %v6249 = vlaneseq
        %v6250 = vshrl.u32 %v6249, 7
        %v6251 = vsub.s32 2, %v6250
        %v6252 = vrot.slane %v6039, %v6251
        %s6254 = sor.u32 256, 48
        %6255 = vbcast.lane.b32.xlu0 %v6252, %s6254
        %v6256 = vpop.permute.xlu0 %6255
        %v6257 = vlaneseq
        %v6258 = vshrl.u32 %v6257, 7
        %v6259 = vsub.s32 3, %v6258
        %v6260 = vrot.slane %v6039, %v6259
        %s6262 = sor.u32 256, 48
        %6263 = vbcast.lane.b32.xlu0 %v6260, %s6262
        %v6264 = vpop.permute.xlu0 %6263
        %v6265 = vlaneseq
        %v6266 = vshrl.u32 %v6265, 7
        %v6267 = vsub.s32 4, %v6266
        %v6268 = vrot.slane %v6039, %v6267
        %s6270 = sor.u32 256, 48
        %6271 = vbcast.lane.b32.xlu0 %v6268, %s6270
        %v6272 = vpop.permute.xlu0 %6271
        %v6273 = vlaneseq
        %v6274 = vshrl.u32 %v6273, 7
        %v6275 = vsub.s32 5, %v6274
        %v6276 = vrot.slane %v6039, %v6275
        %s6278 = sor.u32 256, 48
        %6279 = vbcast.lane.b32.xlu0 %v6276, %s6278
        %v6280 = vpop.permute.xlu0 %6279
        %v6281 = vlaneseq
        %v6282 = vshrl.u32 %v6281, 7
        %v6283 = vsub.s32 6, %v6282
        %v6284 = vrot.slane %v6039, %v6283
        %s6286 = sor.u32 256, 48
        %6287 = vbcast.lane.b32.xlu0 %v6284, %s6286
        %v6288 = vpop.permute.xlu0 %6287
        %v6289 = vlaneseq
        %v6290 = vshrl.u32 %v6289, 7
        %v6291 = vsub.s32 7, %v6290
        %v6292 = vrot.slane %v6039, %v6291
        %s6294 = sor.u32 256, 48
        %6295 = vbcast.lane.b32.xlu0 %v6292, %s6294
        %v6296 = vpop.permute.xlu0 %6295
        %v6297 = vlaneseq
        %v6298 = vshrl.u32 %v6297, 7
        %v6299 = vsub.s32 0, %v6298
        %v6300 = vrot.slane %v6040, %v6299
        %s6302 = sor.u32 256, 48
        %6303 = vbcast.lane.b32.xlu0 %v6300, %s6302
        %v6304 = vpop.permute.xlu0 %6303
        %v6305 = vlaneseq
        %v6306 = vshrl.u32 %v6305, 7
        %v6307 = vsub.s32 1, %v6306
        %v6308 = vrot.slane %v6040, %v6307
        %s6310 = sor.u32 256, 48
        %6311 = vbcast.lane.b32.xlu0 %v6308, %s6310
        %v6312 = vpop.permute.xlu0 %6311
        %v6313 = vlaneseq
        %v6314 = vshrl.u32 %v6313, 7
        %v6315 = vsub.s32 2, %v6314
        %v6316 = vrot.slane %v6040, %v6315
        %s6318 = sor.u32 256, 48
        %6319 = vbcast.lane.b32.xlu0 %v6316, %s6318
        %v6320 = vpop.permute.xlu0 %6319
        %v6321 = vlaneseq
        %v6322 = vshrl.u32 %v6321, 7
        %v6323 = vsub.s32 3, %v6322
        %v6324 = vrot.slane %v6040, %v6323
        %s6326 = sor.u32 256, 48
        %6327 = vbcast.lane.b32.xlu0 %v6324, %s6326
        %v6328 = vpop.permute.xlu0 %6327
        %v6329 = vlaneseq
        %v6330 = vshrl.u32 %v6329, 7
        %v6331 = vsub.s32 4, %v6330
        %v6332 = vrot.slane %v6040, %v6331
        %s6334 = sor.u32 256, 48
        %6335 = vbcast.lane.b32.xlu0 %v6332, %s6334
        %v6336 = vpop.permute.xlu0 %6335
        %v6337 = vlaneseq
        %v6338 = vshrl.u32 %v6337, 7
        %v6339 = vsub.s32 5, %v6338
        %v6340 = vrot.slane %v6040, %v6339
        %s6342 = sor.u32 256, 48
        %6343 = vbcast.lane.b32.xlu0 %v6340, %s6342
        %v6344 = vpop.permute.xlu0 %6343
        %v6345 = vlaneseq
        %v6346 = vshrl.u32 %v6345, 7
        %v6347 = vsub.s32 6, %v6346
        %v6348 = vrot.slane %v6040, %v6347
        %s6350 = sor.u32 256, 48
        %6351 = vbcast.lane.b32.xlu0 %v6348, %s6350
        %v6352 = vpop.permute.xlu0 %6351
        %v6353 = vlaneseq
        %v6354 = vshrl.u32 %v6353, 7
        %v6355 = vsub.s32 7, %v6354
        %v6356 = vrot.slane %v6040, %v6355
        %s6358 = sor.u32 256, 48
        %6359 = vbcast.lane.b32.xlu0 %v6356, %s6358
        %v6360 = vpop.permute.xlu0 %6359
        %v6361 = vsub.f32 %v6240, %v2752
        %v6362 = vsub.f32 %v6248, %v2752
        %v6363 = vsub.f32 %v6256, %v2752
        %v6364 = vsub.f32 %v6264, %v2752
        %v6365 = vsub.f32 %v6272, %v2752
        %v6366 = vsub.f32 %v6280, %v2752
        %v6367 = vsub.f32 %v6288, %v2752
        %v6368 = vsub.f32 %v6296, %v2752
        %v6369 = vsub.f32 %v6304, %v2752
        %v6370 = vsub.f32 %v6312, %v2752
        %v6371 = vsub.f32 %v6320, %v2752
        %v6372 = vsub.f32 %v6328, %v2752
        %v6373 = vsub.f32 %v6336, %v2752
        %v6374 = vsub.f32 %v6344, %v2752
        %v6375 = vsub.f32 %v6352, %v2752
        %v6376 = vsub.f32 %v6360, %v2752
        %v6377 = vand.u32 2147483647, %v6361
        %v6378 = vand.u32 2147483647, %v6362
        %v6379 = vand.u32 2147483647, %v6363
        %v6380 = vand.u32 2147483647, %v6364
        %v6381 = vand.u32 2147483647, %v6365
        %v6382 = vand.u32 2147483647, %v6366
        %v6383 = vand.u32 2147483647, %v6367
        %v6384 = vand.u32 2147483647, %v6368
        %v6385 = vand.u32 2147483647, %v6369
        %v6386 = vand.u32 2147483647, %v6370
        %v6387 = vand.u32 2147483647, %v6371
        %v6388 = vand.u32 2147483647, %v6372
        %v6389 = vand.u32 2147483647, %v6373
        %v6390 = vand.u32 2147483647, %v6374
        %v6391 = vand.u32 2147483647, %v6375
        %v6392 = vand.u32 2147483647, %v6376
        %v6393 = vsub.f32 1.0, %v6377
        %v6394 = vsub.f32 1.0, %v6378
        %v6395 = vsub.f32 1.0, %v6379
        %v6396 = vsub.f32 1.0, %v6380
        %v6397 = vsub.f32 1.0, %v6381
        %v6398 = vsub.f32 1.0, %v6382
        %v6399 = vsub.f32 1.0, %v6383
        %v6400 = vsub.f32 1.0, %v6384
        %v6401 = vsub.f32 1.0, %v6385
        %v6402 = vsub.f32 1.0, %v6386
        %v6403 = vsub.f32 1.0, %v6387
        %v6404 = vsub.f32 1.0, %v6388
        %v6405 = vsub.f32 1.0, %v6389
        %v6406 = vsub.f32 1.0, %v6390
        %v6407 = vsub.f32 1.0, %v6391
        %v6408 = vsub.f32 1.0, %v6392
        %v6409 = vmax.f32 %v6393, 0.0
        %v6410 = vmax.f32 %v6394, 0.0
        %v6411 = vmax.f32 %v6395, 0.0
        %v6412 = vmax.f32 %v6396, 0.0
        %v6413 = vmax.f32 %v6397, 0.0
        %v6414 = vmax.f32 %v6398, 0.0
        %v6415 = vmax.f32 %v6399, 0.0
        %v6416 = vmax.f32 %v6400, 0.0
        %v6417 = vmax.f32 %v6401, 0.0
        %v6418 = vmax.f32 %v6402, 0.0
        %v6419 = vmax.f32 %v6403, 0.0
        %v6420 = vmax.f32 %v6404, 0.0
        %v6421 = vmax.f32 %v6405, 0.0
        %v6422 = vmax.f32 %v6406, 0.0
        %v6423 = vmax.f32 %v6407, 0.0
        %v6424 = vmax.f32 %v6408, 0.0
        %v6425 = vlaneseq
        %v6426 = vshrl.u32 %v6425, 7
        %v6427 = vsub.s32 0, %v6426
        %v6428 = vrot.slane %v6035, %v6427
        %s6430 = sor.u32 256, 80
        %6431 = vbcast.lane.b32.xlu0 %v6428, %s6430
        %v6432 = vpop.permute.xlu0 %6431
        %v6433 = vlaneseq
        %v6434 = vshrl.u32 %v6433, 7
        %v6435 = vsub.s32 1, %v6434
        %v6436 = vrot.slane %v6035, %v6435
        %s6438 = sor.u32 256, 80
        %6439 = vbcast.lane.b32.xlu0 %v6436, %s6438
        %v6440 = vpop.permute.xlu0 %6439
        %v6441 = vlaneseq
        %v6442 = vshrl.u32 %v6441, 7
        %v6443 = vsub.s32 2, %v6442
        %v6444 = vrot.slane %v6035, %v6443
        %s6446 = sor.u32 256, 80
        %6447 = vbcast.lane.b32.xlu0 %v6444, %s6446
        %v6448 = vpop.permute.xlu0 %6447
        %v6449 = vlaneseq
        %v6450 = vshrl.u32 %v6449, 7
        %v6451 = vsub.s32 3, %v6450
        %v6452 = vrot.slane %v6035, %v6451
        %s6454 = sor.u32 256, 80
        %6455 = vbcast.lane.b32.xlu0 %v6452, %s6454
        %v6456 = vpop.permute.xlu0 %6455
        %v6457 = vlaneseq
        %v6458 = vshrl.u32 %v6457, 7
        %v6459 = vsub.s32 4, %v6458
        %v6460 = vrot.slane %v6035, %v6459
        %s6462 = sor.u32 256, 80
        %6463 = vbcast.lane.b32.xlu0 %v6460, %s6462
        %v6464 = vpop.permute.xlu0 %6463
        %v6465 = vlaneseq
        %v6466 = vshrl.u32 %v6465, 7
        %v6467 = vsub.s32 5, %v6466
        %v6468 = vrot.slane %v6035, %v6467
        %s6470 = sor.u32 256, 80
        %6471 = vbcast.lane.b32.xlu0 %v6468, %s6470
        %v6472 = vpop.permute.xlu0 %6471
        %v6473 = vlaneseq
        %v6474 = vshrl.u32 %v6473, 7
        %v6475 = vsub.s32 6, %v6474
        %v6476 = vrot.slane %v6035, %v6475
        %s6478 = sor.u32 256, 80
        %6479 = vbcast.lane.b32.xlu0 %v6476, %s6478
        %v6480 = vpop.permute.xlu0 %6479
        %v6481 = vlaneseq
        %v6482 = vshrl.u32 %v6481, 7
        %v6483 = vsub.s32 7, %v6482
        %v6484 = vrot.slane %v6035, %v6483
        %s6486 = sor.u32 256, 80
        %6487 = vbcast.lane.b32.xlu0 %v6484, %s6486
        %v6488 = vpop.permute.xlu0 %6487
        %v6489 = vlaneseq
        %v6490 = vshrl.u32 %v6489, 7
        %v6491 = vsub.s32 0, %v6490
        %v6492 = vrot.slane %v6036, %v6491
        %s6494 = sor.u32 256, 80
        %6495 = vbcast.lane.b32.xlu0 %v6492, %s6494
        %v6496 = vpop.permute.xlu0 %6495
        %v6497 = vlaneseq
        %v6498 = vshrl.u32 %v6497, 7
        %v6499 = vsub.s32 1, %v6498
        %v6500 = vrot.slane %v6036, %v6499
        %s6502 = sor.u32 256, 80
        %6503 = vbcast.lane.b32.xlu0 %v6500, %s6502
        %v6504 = vpop.permute.xlu0 %6503
        %v6505 = vlaneseq
        %v6506 = vshrl.u32 %v6505, 7
        %v6507 = vsub.s32 2, %v6506
        %v6508 = vrot.slane %v6036, %v6507
        %s6510 = sor.u32 256, 80
        %6511 = vbcast.lane.b32.xlu0 %v6508, %s6510
        %v6512 = vpop.permute.xlu0 %6511
        %v6513 = vlaneseq
        %v6514 = vshrl.u32 %v6513, 7
        %v6515 = vsub.s32 3, %v6514
        %v6516 = vrot.slane %v6036, %v6515
        %s6518 = sor.u32 256, 80
        %6519 = vbcast.lane.b32.xlu0 %v6516, %s6518
        %v6520 = vpop.permute.xlu0 %6519
        %v6521 = vlaneseq
        %v6522 = vshrl.u32 %v6521, 7
        %v6523 = vsub.s32 4, %v6522
        %v6524 = vrot.slane %v6036, %v6523
        %s6526 = sor.u32 256, 80
        %6527 = vbcast.lane.b32.xlu0 %v6524, %s6526
        %v6528 = vpop.permute.xlu0 %6527
        %v6529 = vlaneseq
        %v6530 = vshrl.u32 %v6529, 7
        %v6531 = vsub.s32 5, %v6530
        %v6532 = vrot.slane %v6036, %v6531
        %s6534 = sor.u32 256, 80
        %6535 = vbcast.lane.b32.xlu0 %v6532, %s6534
        %v6536 = vpop.permute.xlu0 %6535
        %v6537 = vlaneseq
        %v6538 = vshrl.u32 %v6537, 7
        %v6539 = vsub.s32 6, %v6538
        %v6540 = vrot.slane %v6036, %v6539
        %s6542 = sor.u32 256, 80
        %6543 = vbcast.lane.b32.xlu0 %v6540, %s6542
        %v6544 = vpop.permute.xlu0 %6543
        %v6545 = vlaneseq
        %v6546 = vshrl.u32 %v6545, 7
        %v6547 = vsub.s32 7, %v6546
        %v6548 = vrot.slane %v6036, %v6547
        %s6550 = sor.u32 256, 80
        %6551 = vbcast.lane.b32.xlu0 %v6548, %s6550
        %v6552 = vpop.permute.xlu0 %6551
        %v6553 = vmul.f32 %v6432, %v6217
        %v6554 = vmul.f32 %v6440, %v6218
        %v6555 = vmul.f32 %v6448, %v6219
        %v6556 = vmul.f32 %v6456, %v6220
        %v6557 = vmul.f32 %v6464, %v6221
        %v6558 = vmul.f32 %v6472, %v6222
        %v6559 = vmul.f32 %v6480, %v6223
        %v6560 = vmul.f32 %v6488, %v6224
        %v6561 = vmul.f32 %v6496, %v6225
        %v6562 = vmul.f32 %v6504, %v6226
        %v6563 = vmul.f32 %v6512, %v6227
        %v6564 = vmul.f32 %v6520, %v6228
        %v6565 = vmul.f32 %v6528, %v6229
        %v6566 = vmul.f32 %v6536, %v6230
        %v6567 = vmul.f32 %v6544, %v6231
        %v6568 = vmul.f32 %v6552, %v6232
        %v6569 = vmul.f32 %v6553, %v6409
        %v6570 = vmul.f32 %v6554, %v6410
        %v6571 = vmul.f32 %v6555, %v6411
        %v6572 = vmul.f32 %v6556, %v6412
        %v6573 = vmul.f32 %v6557, %v6413
        %v6574 = vmul.f32 %v6558, %v6414
        %v6575 = vmul.f32 %v6559, %v6415
        %v6576 = vmul.f32 %v6560, %v6416
        %v6577 = vmul.f32 %v6561, %v6417
        %v6578 = vmul.f32 %v6562, %v6418
        %v6579 = vmul.f32 %v6563, %v6419
        %v6580 = vmul.f32 %v6564, %v6420
        %v6581 = vmul.f32 %v6565, %v6421
        %v6582 = vmul.f32 %v6566, %v6422
        %v6583 = vmul.f32 %v6567, %v6423
        %v6584 = vmul.f32 %v6568, %v6424
        %v6585 = vsel %vm3321, %v6569, 0.0
        %v6586 = vrot.slane %v6585, 4
        %v6587 = vadd.f32 %v6585, %v6586
        %v6588 = vrot.slane %v6587, 2
        %v6589 = vadd.f32 %v6587, %v6588
        %v6590 = vrot.slane %v6589, 1
        %v6591 = vadd.f32 %v6589, %v6590
        %v6592 = vsel %vm3321, %v6570, 0.0
        %v6593 = vrot.slane %v6592, 4
        %v6594 = vadd.f32 %v6592, %v6593
        %v6595 = vrot.slane %v6594, 2
        %v6596 = vadd.f32 %v6594, %v6595
        %v6597 = vrot.slane %v6596, 1
        %v6598 = vadd.f32 %v6596, %v6597
        %v6599 = vsel %vm3321, %v6571, 0.0
        %v6600 = vrot.slane %v6599, 4
        %v6601 = vadd.f32 %v6599, %v6600
        %v6602 = vrot.slane %v6601, 2
        %v6603 = vadd.f32 %v6601, %v6602
        %v6604 = vrot.slane %v6603, 1
        %v6605 = vadd.f32 %v6603, %v6604
        %v6606 = vsel %vm3321, %v6572, 0.0
        %v6607 = vrot.slane %v6606, 4
        %v6608 = vadd.f32 %v6606, %v6607
        %v6609 = vrot.slane %v6608, 2
        %v6610 = vadd.f32 %v6608, %v6609
        %v6611 = vrot.slane %v6610, 1
        %v6612 = vadd.f32 %v6610, %v6611
        %v6613 = vsel %vm3321, %v6573, 0.0
        %v6614 = vrot.slane %v6613, 4
        %v6615 = vadd.f32 %v6613, %v6614
        %v6616 = vrot.slane %v6615, 2
        %v6617 = vadd.f32 %v6615, %v6616
        %v6618 = vrot.slane %v6617, 1
        %v6619 = vadd.f32 %v6617, %v6618
        %v6620 = vsel %vm3321, %v6574, 0.0
        %v6621 = vrot.slane %v6620, 4
        %v6622 = vadd.f32 %v6620, %v6621
        %v6623 = vrot.slane %v6622, 2
        %v6624 = vadd.f32 %v6622, %v6623
        %v6625 = vrot.slane %v6624, 1
        %v6626 = vadd.f32 %v6624, %v6625
        %v6627 = vsel %vm3321, %v6575, 0.0
        %v6628 = vrot.slane %v6627, 4
        %v6629 = vadd.f32 %v6627, %v6628
        %v6630 = vrot.slane %v6629, 2
        %v6631 = vadd.f32 %v6629, %v6630
        %v6632 = vrot.slane %v6631, 1
        %v6633 = vadd.f32 %v6631, %v6632
        %v6634 = vsel %vm3321, %v6576, 0.0
        %v6635 = vrot.slane %v6634, 4
        %v6636 = vadd.f32 %v6634, %v6635
        %v6637 = vrot.slane %v6636, 2
        %v6638 = vadd.f32 %v6636, %v6637
        %v6639 = vrot.slane %v6638, 1
        %v6640 = vadd.f32 %v6638, %v6639
        %v6641 = vsel %vm3321, %v6577, 0.0
        %v6642 = vrot.slane %v6641, 4
        %v6643 = vadd.f32 %v6641, %v6642
        %v6644 = vrot.slane %v6643, 2
        %v6645 = vadd.f32 %v6643, %v6644
        %v6646 = vrot.slane %v6645, 1
        %v6647 = vadd.f32 %v6645, %v6646
        %v6648 = vsel %vm3321, %v6578, 0.0
        %v6649 = vrot.slane %v6648, 4
        %v6650 = vadd.f32 %v6648, %v6649
        %v6651 = vrot.slane %v6650, 2
        %v6652 = vadd.f32 %v6650, %v6651
        %v6653 = vrot.slane %v6652, 1
        %v6654 = vadd.f32 %v6652, %v6653
        %v6655 = vsel %vm3321, %v6579, 0.0
        %v6656 = vrot.slane %v6655, 4
        %v6657 = vadd.f32 %v6655, %v6656
        %v6658 = vrot.slane %v6657, 2
        %v6659 = vadd.f32 %v6657, %v6658
        %v6660 = vrot.slane %v6659, 1
        %v6661 = vadd.f32 %v6659, %v6660
        %v6662 = vsel %vm3321, %v6580, 0.0
        %v6663 = vrot.slane %v6662, 4
        %v6664 = vadd.f32 %v6662, %v6663
        %v6665 = vrot.slane %v6664, 2
        %v6666 = vadd.f32 %v6664, %v6665
        %v6667 = vrot.slane %v6666, 1
        %v6668 = vadd.f32 %v6666, %v6667
        %v6669 = vsel %vm3321, %v6581, 0.0
        %v6670 = vrot.slane %v6669, 4
        %v6671 = vadd.f32 %v6669, %v6670
        %v6672 = vrot.slane %v6671, 2
        %v6673 = vadd.f32 %v6671, %v6672
        %v6674 = vrot.slane %v6673, 1
        %v6675 = vadd.f32 %v6673, %v6674
        %v6676 = vsel %vm3321, %v6582, 0.0
        %v6677 = vrot.slane %v6676, 4
        %v6678 = vadd.f32 %v6676, %v6677
        %v6679 = vrot.slane %v6678, 2
        %v6680 = vadd.f32 %v6678, %v6679
        %v6681 = vrot.slane %v6680, 1
        %v6682 = vadd.f32 %v6680, %v6681
        %v6683 = vsel %vm3321, %v6583, 0.0
        %v6684 = vrot.slane %v6683, 4
        %v6685 = vadd.f32 %v6683, %v6684
        %v6686 = vrot.slane %v6685, 2
        %v6687 = vadd.f32 %v6685, %v6686
        %v6688 = vrot.slane %v6687, 1
        %v6689 = vadd.f32 %v6687, %v6688
        %v6690 = vsel %vm3321, %v6584, 0.0
        %v6691 = vrot.slane %v6690, 4
        %v6692 = vadd.f32 %v6690, %v6691
        %v6693 = vrot.slane %v6692, 2
        %v6694 = vadd.f32 %v6692, %v6693
        %v6695 = vrot.slane %v6694, 1
        %v6696 = vadd.f32 %v6694, %v6695
        %v6697 = vpack.c.bf16 %v6591, %v6591
        %v6698 = vpack.c.bf16 %v6598, %v6598
        %v6699 = vpack.c.bf16 %v6605, %v6605
        %v6700 = vpack.c.bf16 %v6612, %v6612
        %v6701 = vpack.c.bf16 %v6619, %v6619
        %v6702 = vpack.c.bf16 %v6626, %v6626
        %v6703 = vpack.c.bf16 %v6633, %v6633
        %v6704 = vpack.c.bf16 %v6640, %v6640
        %v6705 = vpack.c.bf16 %v6647, %v6647
        %v6706 = vpack.c.bf16 %v6654, %v6654
        %v6707 = vpack.c.bf16 %v6661, %v6661
        %v6708 = vpack.c.bf16 %v6668, %v6668
        %v6709 = vpack.c.bf16 %v6675, %v6675
        %v6710 = vpack.c.bf16 %v6682, %v6682
        %v6711 = vpack.c.bf16 %v6689, %v6689
        %v6712 = vpack.c.bf16 %v6696, %v6696
        %v6713 = vld [vmem:[#allocation3] sm:$0xff]
        %v6714 = vld [vmem:[#allocation3 + $0x8] sm:$0xff]
        %v6715 = vpack.c.bf16 %v6714, %v6713
        %v6732 = vunpack.c.l.b16 %v6697
        %v6733 = vunpack.c.l.b16 %v6698
        %v6734 = vunpack.c.l.b16 %v6699
        %v6735 = vunpack.c.l.b16 %v6700
        %v6736 = vunpack.c.l.b16 %v6701
        %v6737 = vunpack.c.l.b16 %v6702
        %v6738 = vunpack.c.l.b16 %v6703
        %v6739 = vunpack.c.l.b16 %v6704
        %v6740 = vunpack.c.l.b16 %v6705
        %v6741 = vunpack.c.l.b16 %v6706
        %v6742 = vunpack.c.l.b16 %v6707
        %v6743 = vunpack.c.l.b16 %v6708
        %v6744 = vunpack.c.l.b16 %v6709
        %v6745 = vunpack.c.l.b16 %v6710
        %v6746 = vunpack.c.l.b16 %v6711
        %v6747 = vunpack.c.l.b16 %v6712
        %v6748 = vsel %vm3485, %v6733, %v6732
        %v6749 = vsel %vm3487, %v6734, %v6748
        %v6750 = vsel %vm3489, %v6735, %v6749
        %v6751 = vsel %vm3491, %v6736, %v6750
        %v6752 = vsel %vm3493, %v6737, %v6751
        %v6753 = vsel %vm3495, %v6738, %v6752
        %v6754 = vsel %vm3497, %v6739, %v6753
        %v6755 = vsel %vm3485, %v6741, %v6740
        %v6756 = vsel %vm3487, %v6742, %v6755
        %v6757 = vsel %vm3489, %v6743, %v6756
        %v6758 = vsel %vm3491, %v6744, %v6757
        %v6759 = vsel %vm3493, %v6745, %v6758
        %v6760 = vsel %vm3495, %v6746, %v6759
        %v6761 = vsel %vm3497, %v6747, %v6760
        %v6762 = vpack.c.b16 %v6761, %v6754
        %6764 = vrot.lane.b32.xlu0 %v6715, 64
        %v6765 = vpop.permute.xlu0 %6764
        %v6768 = vsel %vm1322, %v6762, 0
        %6770 = vmatprep.subr.bf16.mxu0 0
        %6771 = vmatpush1.bf16.msra.mxu0 %v6765
        %6772 = vmatprep.subr.bf16.mxu0 0
        %6773 = vmatpush1.bf16.msra.mxu0 0
        %6774 = vmatprep.subr.bf16.mxu0 0
        %6775 = vmatpush1.bf16.msra.mxu0 0
        %6776 = vmatprep.subr.bf16.mxu0 0
        %6777 = vmatpush1.bf16.msra.mxu0 0
        %6778 = vmatprep.subr.bf16.mxu0 0
        %6779 = vmatpush1.bf16.msra.mxu0 0
        %6780 = vmatprep.subr.bf16.mxu0 0
        %6781 = vmatpush1.bf16.msra.mxu0 0
        %6782 = vmatprep.subr.bf16.mxu0 0
        %6783 = vmatpush1.bf16.msra.mxu0 0
        %6784 = vmatprep.subr.bf16.mxu0 0
        %6785 = vmatpush1.bf16.msra.mxu0 0
        %6786 = vmatprep.subr.bf16.mxu0 0
        %6787 = vmatpush1.bf16.msra.mxu0 0
        %6788 = vmatprep.subr.bf16.mxu0 0
        %6789 = vmatpush1.bf16.msra.mxu0 0
        %6790 = vmatprep.subr.bf16.mxu0 0
        %6791 = vmatpush1.bf16.msra.mxu0 0
        %6792 = vmatprep.subr.bf16.mxu0 0
        %6793 = vmatpush1.bf16.msra.mxu0 0
        %6794 = vmatprep.subr.bf16.mxu0 0
        %6795 = vmatpush1.bf16.msra.mxu0 0
        %6796 = vmatprep.subr.bf16.mxu0 0
        %6797 = vmatpush1.bf16.msra.mxu0 0
        %6798 = vmatprep.subr.bf16.mxu0 0
        %6799 = vmatpush1.bf16.msra.mxu0 0
        %6800 = vmatprep.subr.bf16.mxu0 0
        %6801 = vmatpush1.bf16.msra.mxu0 0
        %6802 = vmatprep.mubr.bf16.mxu0 0
        %6803 = vmatmul.mubr.bf16.gmra.mrb[0].mxu0 %v6768
        %v6804 = vpop.f32.mrb[0].mxu0
        %v6805 = vadd.f32 0.0, %v6804
        %v6806 = vpop.f32.mrb[0].mxu0
        %v6807 = vpop.f32.mrb[0].mxu0
        %v6808 = vadd.f32 0.0, %v6807
        %v6809 = vpop.f32.mrb[0].mxu0
        %6810 = vdwg.mxu0
        %6813 = vrot.lane.b32.xlu0 %v6805, 64
        %v6814 = vpop.permute.xlu0 %6813
        %6815 = vrot.lane.b32.xlu0 %v6808, 64
        %v6816 = vpop.permute.xlu0 %6815
        %6819 = vst.msk [vmem:[#allocation6] sm:$0xff] %vm2021, %v6814
        %6820 = vst.msk [vmem:[#allocation6 + $0x8] sm:$0xff] %vm2021, %v6816
        %v6821 = vld [vmem:[#allocation5] sm:$0xff]
        %v6822 = vld [vmem:[#allocation5 + $0x8] sm:$0xff]
        %vm6823 = vcmask 720544
        %v6824 = vsel %vm6823, %v6821, -inf
        %6825 = vmax.xlane.f32.xlu0 %v6824
        %v6826 = vpop.xlane.xlu0 %6825
        %v6827 = vsel %vm6823, %v6822, -inf
        %6828 = vmax.xlane.f32.xlu0 %v6827
        %v6829 = vpop.xlane.xlu0 %6828
        %v6830 = vsub.f32 %v6821, %v6826
        %v6831 = vsub.f32 %v6822, %v6829
        %v6832 = vmul.f32 %v6830, 1.442695
        %v6833 = vpow.pop %v6832
        %v6834 = vmul.f32 %v6831, 1.442695
        %v6835 = vpow.pop %v6834
        %6838 = vrot.lane.b32.xlu0 %v6833, 44
        %v6839 = vpop.permute.xlu0 %6838
        %6840 = vrot.lane.b32.xlu0 %v6835, 44
        %v6841 = vpop.permute.xlu0 %6840
        %v6844 = vsel %vm2778, %v6839, 0.0
        %6845 = vadd.xlane.f32.xlu0 %v6844
        %v6846 = vpop.xlane.xlu0 %6845
        %v6847 = vsel %vm2778, %v6841, 0.0
        %6848 = vadd.xlane.f32.xlu0 %v6847
        %v6849 = vpop.xlane.xlu0 %6848
        %v6850 = vrcp.pop %v6846
        %v6851 = vrcp.pop %v6849
        %v6852 = vmul.f32 %v6833, %v6850
        %v6853 = vmul.f32 %v6835, %v6851
        %v6854 = vadd.f32 %v2749, %v6821
        %v6855 = vadd.f32 %v2750, %v6822
        %v6856 = vadd.f32 %v2745, %v6821
        %v6857 = vadd.f32 %v2746, %v6822
        %v6858 = vlaneseq
        %v6859 = vshrl.u32 %v6858, 7
        %v6860 = vsub.s32 0, %v6859
        %v6861 = vrot.slane %v6854, %v6860
        %s6863 = sor.u32 256, 20
        %6864 = vbcast.lane.b32.xlu0 %v6861, %s6863
        %v6865 = vpop.permute.xlu0 %6864
        %v6866 = vlaneseq
        %v6867 = vshrl.u32 %v6866, 7
        %v6868 = vsub.s32 1, %v6867
        %v6869 = vrot.slane %v6854, %v6868
        %s6871 = sor.u32 256, 20
        %6872 = vbcast.lane.b32.xlu0 %v6869, %s6871
        %v6873 = vpop.permute.xlu0 %6872
        %v6874 = vlaneseq
        %v6875 = vshrl.u32 %v6874, 7
        %v6876 = vsub.s32 2, %v6875
        %v6877 = vrot.slane %v6854, %v6876
        %s6879 = sor.u32 256, 20
        %6880 = vbcast.lane.b32.xlu0 %v6877, %s6879
        %v6881 = vpop.permute.xlu0 %6880
        %v6882 = vlaneseq
        %v6883 = vshrl.u32 %v6882, 7
        %v6884 = vsub.s32 3, %v6883
        %v6885 = vrot.slane %v6854, %v6884
        %s6887 = sor.u32 256, 20
        %6888 = vbcast.lane.b32.xlu0 %v6885, %s6887
        %v6889 = vpop.permute.xlu0 %6888
        %v6890 = vlaneseq
        %v6891 = vshrl.u32 %v6890, 7
        %v6892 = vsub.s32 4, %v6891
        %v6893 = vrot.slane %v6854, %v6892
        %s6895 = sor.u32 256, 20
        %6896 = vbcast.lane.b32.xlu0 %v6893, %s6895
        %v6897 = vpop.permute.xlu0 %6896
        %v6898 = vlaneseq
        %v6899 = vshrl.u32 %v6898, 7
        %v6900 = vsub.s32 5, %v6899
        %v6901 = vrot.slane %v6854, %v6900
        %s6903 = sor.u32 256, 20
        %6904 = vbcast.lane.b32.xlu0 %v6901, %s6903
        %v6905 = vpop.permute.xlu0 %6904
        %v6906 = vlaneseq
        %v6907 = vshrl.u32 %v6906, 7
        %v6908 = vsub.s32 6, %v6907
        %v6909 = vrot.slane %v6854, %v6908
        %s6911 = sor.u32 256, 20
        %6912 = vbcast.lane.b32.xlu0 %v6909, %s6911
        %v6913 = vpop.permute.xlu0 %6912
        %v6914 = vlaneseq
        %v6915 = vshrl.u32 %v6914, 7
        %v6916 = vsub.s32 7, %v6915
        %v6917 = vrot.slane %v6854, %v6916
        %s6919 = sor.u32 256, 20
        %6920 = vbcast.lane.b32.xlu0 %v6917, %s6919
        %v6921 = vpop.permute.xlu0 %6920
        %v6922 = vlaneseq
        %v6923 = vshrl.u32 %v6922, 7
        %v6924 = vsub.s32 0, %v6923
        %v6925 = vrot.slane %v6855, %v6924
        %s6927 = sor.u32 256, 20
        %6928 = vbcast.lane.b32.xlu0 %v6925, %s6927
        %v6929 = vpop.permute.xlu0 %6928
        %v6930 = vlaneseq
        %v6931 = vshrl.u32 %v6930, 7
        %v6932 = vsub.s32 1, %v6931
        %v6933 = vrot.slane %v6855, %v6932
        %s6935 = sor.u32 256, 20
        %6936 = vbcast.lane.b32.xlu0 %v6933, %s6935
        %v6937 = vpop.permute.xlu0 %6936
        %v6938 = vlaneseq
        %v6939 = vshrl.u32 %v6938, 7
        %v6940 = vsub.s32 2, %v6939
        %v6941 = vrot.slane %v6855, %v6940
        %s6943 = sor.u32 256, 20
        %6944 = vbcast.lane.b32.xlu0 %v6941, %s6943
        %v6945 = vpop.permute.xlu0 %6944
        %v6946 = vlaneseq
        %v6947 = vshrl.u32 %v6946, 7
        %v6948 = vsub.s32 3, %v6947
        %v6949 = vrot.slane %v6855, %v6948
        %s6951 = sor.u32 256, 20
        %6952 = vbcast.lane.b32.xlu0 %v6949, %s6951
        %v6953 = vpop.permute.xlu0 %6952
        %v6954 = vlaneseq
        %v6955 = vshrl.u32 %v6954, 7
        %v6956 = vsub.s32 4, %v6955
        %v6957 = vrot.slane %v6855, %v6956
        %s6959 = sor.u32 256, 20
        %6960 = vbcast.lane.b32.xlu0 %v6957, %s6959
        %v6961 = vpop.permute.xlu0 %6960
        %v6962 = vlaneseq
        %v6963 = vshrl.u32 %v6962, 7
        %v6964 = vsub.s32 5, %v6963
        %v6965 = vrot.slane %v6855, %v6964
        %s6967 = sor.u32 256, 20
        %6968 = vbcast.lane.b32.xlu0 %v6965, %s6967
        %v6969 = vpop.permute.xlu0 %6968
        %v6970 = vlaneseq
        %v6971 = vshrl.u32 %v6970, 7
        %v6972 = vsub.s32 6, %v6971
        %v6973 = vrot.slane %v6855, %v6972
        %s6975 = sor.u32 256, 20
        %6976 = vbcast.lane.b32.xlu0 %v6973, %s6975
        %v6977 = vpop.permute.xlu0 %6976
        %v6978 = vlaneseq
        %v6979 = vshrl.u32 %v6978, 7
        %v6980 = vsub.s32 7, %v6979
        %v6981 = vrot.slane %v6855, %v6980
        %s6983 = sor.u32 256, 20
        %6984 = vbcast.lane.b32.xlu0 %v6981, %s6983
        %v6985 = vpop.permute.xlu0 %6984
        %v6986 = vsub.f32 %v6865, %v2754
        %v6987 = vsub.f32 %v6873, %v2754
        %v6988 = vsub.f32 %v6881, %v2754
        %v6989 = vsub.f32 %v6889, %v2754
        %v6990 = vsub.f32 %v6897, %v2754
        %v6991 = vsub.f32 %v6905, %v2754
        %v6992 = vsub.f32 %v6913, %v2754
        %v6993 = vsub.f32 %v6921, %v2754
        %v6994 = vsub.f32 %v6929, %v2754
        %v6995 = vsub.f32 %v6937, %v2754
        %v6996 = vsub.f32 %v6945, %v2754
        %v6997 = vsub.f32 %v6953, %v2754
        %v6998 = vsub.f32 %v6961, %v2754
        %v6999 = vsub.f32 %v6969, %v2754
        %v7000 = vsub.f32 %v6977, %v2754
        %v7001 = vsub.f32 %v6985, %v2754
        %v7002 = vand.u32 2147483647, %v6986
        %v7003 = vand.u32 2147483647, %v6987
        %v7004 = vand.u32 2147483647, %v6988
        %v7005 = vand.u32 2147483647, %v6989
        %v7006 = vand.u32 2147483647, %v6990
        %v7007 = vand.u32 2147483647, %v6991
        %v7008 = vand.u32 2147483647, %v6992
        %v7009 = vand.u32 2147483647, %v6993
        %v7010 = vand.u32 2147483647, %v6994
        %v7011 = vand.u32 2147483647, %v6995
        %v7012 = vand.u32 2147483647, %v6996
        %v7013 = vand.u32 2147483647, %v6997
        %v7014 = vand.u32 2147483647, %v6998
        %v7015 = vand.u32 2147483647, %v6999
        %v7016 = vand.u32 2147483647, %v7000
        %v7017 = vand.u32 2147483647, %v7001
        %v7018 = vsub.f32 1.0, %v7002
        %v7019 = vsub.f32 1.0, %v7003
        %v7020 = vsub.f32 1.0, %v7004
        %v7021 = vsub.f32 1.0, %v7005
        %v7022 = vsub.f32 1.0, %v7006
        %v7023 = vsub.f32 1.0, %v7007
        %v7024 = vsub.f32 1.0, %v7008
        %v7025 = vsub.f32 1.0, %v7009
        %v7026 = vsub.f32 1.0, %v7010
        %v7027 = vsub.f32 1.0, %v7011
        %v7028 = vsub.f32 1.0, %v7012
        %v7029 = vsub.f32 1.0, %v7013
        %v7030 = vsub.f32 1.0, %v7014
        %v7031 = vsub.f32 1.0, %v7015
        %v7032 = vsub.f32 1.0, %v7016
        %v7033 = vsub.f32 1.0, %v7017
        %v7034 = vmax.f32 %v7018, 0.0
        %v7035 = vmax.f32 %v7019, 0.0
        %v7036 = vmax.f32 %v7020, 0.0
        %v7037 = vmax.f32 %v7021, 0.0
        %v7038 = vmax.f32 %v7022, 0.0
        %v7039 = vmax.f32 %v7023, 0.0
        %v7040 = vmax.f32 %v7024, 0.0
        %v7041 = vmax.f32 %v7025, 0.0
        %v7042 = vmax.f32 %v7026, 0.0
        %v7043 = vmax.f32 %v7027, 0.0
        %v7044 = vmax.f32 %v7028, 0.0
        %v7045 = vmax.f32 %v7029, 0.0
        %v7046 = vmax.f32 %v7030, 0.0
        %v7047 = vmax.f32 %v7031, 0.0
        %v7048 = vmax.f32 %v7032, 0.0
        %v7049 = vmax.f32 %v7033, 0.0
        %v7050 = vlaneseq
        %v7051 = vshrl.u32 %v7050, 7
        %v7052 = vsub.s32 0, %v7051
        %v7053 = vrot.slane %v6856, %v7052
        %s7055 = sor.u32 256, 52
        %7056 = vbcast.lane.b32.xlu0 %v7053, %s7055
        %v7057 = vpop.permute.xlu0 %7056
        %v7058 = vlaneseq
        %v7059 = vshrl.u32 %v7058, 7
        %v7060 = vsub.s32 1, %v7059
        %v7061 = vrot.slane %v6856, %v7060
        %s7063 = sor.u32 256, 52
        %7064 = vbcast.lane.b32.xlu0 %v7061, %s7063
        %v7065 = vpop.permute.xlu0 %7064
        %v7066 = vlaneseq
        %v7067 = vshrl.u32 %v7066, 7
        %v7068 = vsub.s32 2, %v7067
        %v7069 = vrot.slane %v6856, %v7068
        %s7071 = sor.u32 256, 52
        %7072 = vbcast.lane.b32.xlu0 %v7069, %s7071
        %v7073 = vpop.permute.xlu0 %7072
        %v7074 = vlaneseq
        %v7075 = vshrl.u32 %v7074, 7
        %v7076 = vsub.s32 3, %v7075
        %v7077 = vrot.slane %v6856, %v7076
        %s7079 = sor.u32 256, 52
        %7080 = vbcast.lane.b32.xlu0 %v7077, %s7079
        %v7081 = vpop.permute.xlu0 %7080
        %v7082 = vlaneseq
        %v7083 = vshrl.u32 %v7082, 7
        %v7084 = vsub.s32 4, %v7083
        %v7085 = vrot.slane %v6856, %v7084
        %s7087 = sor.u32 256, 52
        %7088 = vbcast.lane.b32.xlu0 %v7085, %s7087
        %v7089 = vpop.permute.xlu0 %7088
        %v7090 = vlaneseq
        %v7091 = vshrl.u32 %v7090, 7
        %v7092 = vsub.s32 5, %v7091
        %v7093 = vrot.slane %v6856, %v7092
        %s7095 = sor.u32 256, 52
        %7096 = vbcast.lane.b32.xlu0 %v7093, %s7095
        %v7097 = vpop.permute.xlu0 %7096
        %v7098 = vlaneseq
        %v7099 = vshrl.u32 %v7098, 7
        %v7100 = vsub.s32 6, %v7099
        %v7101 = vrot.slane %v6856, %v7100
        %s7103 = sor.u32 256, 52
        %7104 = vbcast.lane.b32.xlu0 %v7101, %s7103
        %v7105 = vpop.permute.xlu0 %7104
        %v7106 = vlaneseq
        %v7107 = vshrl.u32 %v7106, 7
        %v7108 = vsub.s32 7, %v7107
        %v7109 = vrot.slane %v6856, %v7108
        %s7111 = sor.u32 256, 52
        %7112 = vbcast.lane.b32.xlu0 %v7109, %s7111
        %v7113 = vpop.permute.xlu0 %7112
        %v7114 = vlaneseq
        %v7115 = vshrl.u32 %v7114, 7
        %v7116 = vsub.s32 0, %v7115
        %v7117 = vrot.slane %v6857, %v7116
        %s7119 = sor.u32 256, 52
        %7120 = vbcast.lane.b32.xlu0 %v7117, %s7119
        %v7121 = vpop.permute.xlu0 %7120
        %v7122 = vlaneseq
        %v7123 = vshrl.u32 %v7122, 7
        %v7124 = vsub.s32 1, %v7123
        %v7125 = vrot.slane %v6857, %v7124
        %s7127 = sor.u32 256, 52
        %7128 = vbcast.lane.b32.xlu0 %v7125, %s7127
        %v7129 = vpop.permute.xlu0 %7128
        %v7130 = vlaneseq
        %v7131 = vshrl.u32 %v7130, 7
        %v7132 = vsub.s32 2, %v7131
        %v7133 = vrot.slane %v6857, %v7132
        %s7135 = sor.u32 256, 52
        %7136 = vbcast.lane.b32.xlu0 %v7133, %s7135
        %v7137 = vpop.permute.xlu0 %7136
        %v7138 = vlaneseq
        %v7139 = vshrl.u32 %v7138, 7
        %v7140 = vsub.s32 3, %v7139
        %v7141 = vrot.slane %v6857, %v7140
        %s7143 = sor.u32 256, 52
        %7144 = vbcast.lane.b32.xlu0 %v7141, %s7143
        %v7145 = vpop.permute.xlu0 %7144
        %v7146 = vlaneseq
        %v7147 = vshrl.u32 %v7146, 7
        %v7148 = vsub.s32 4, %v7147
        %v7149 = vrot.slane %v6857, %v7148
        %s7151 = sor.u32 256, 52
        %7152 = vbcast.lane.b32.xlu0 %v7149, %s7151
        %v7153 = vpop.permute.xlu0 %7152
        %v7154 = vlaneseq
        %v7155 = vshrl.u32 %v7154, 7
        %v7156 = vsub.s32 5, %v7155
        %v7157 = vrot.slane %v6857, %v7156
        %s7159 = sor.u32 256, 52
        %7160 = vbcast.lane.b32.xlu0 %v7157, %s7159
        %v7161 = vpop.permute.xlu0 %7160
        %v7162 = vlaneseq
        %v7163 = vshrl.u32 %v7162, 7
        %v7164 = vsub.s32 6, %v7163
        %v7165 = vrot.slane %v6857, %v7164
        %s7167 = sor.u32 256, 52
        %7168 = vbcast.lane.b32.xlu0 %v7165, %s7167
        %v7169 = vpop.permute.xlu0 %7168
        %v7170 = vlaneseq
        %v7171 = vshrl.u32 %v7170, 7
        %v7172 = vsub.s32 7, %v7171
        %v7173 = vrot.slane %v6857, %v7172
        %s7175 = sor.u32 256, 52
        %7176 = vbcast.lane.b32.xlu0 %v7173, %s7175
        %v7177 = vpop.permute.xlu0 %7176
        %v7178 = vsub.f32 %v7057, %v2752
        %v7179 = vsub.f32 %v7065, %v2752
        %v7180 = vsub.f32 %v7073, %v2752
        %v7181 = vsub.f32 %v7081, %v2752
        %v7182 = vsub.f32 %v7089, %v2752
        %v7183 = vsub.f32 %v7097, %v2752
        %v7184 = vsub.f32 %v7105, %v2752
        %v7185 = vsub.f32 %v7113, %v2752
        %v7186 = vsub.f32 %v7121, %v2752
        %v7187 = vsub.f32 %v7129, %v2752
        %v7188 = vsub.f32 %v7137, %v2752
        %v7189 = vsub.f32 %v7145, %v2752
        %v7190 = vsub.f32 %v7153, %v2752
        %v7191 = vsub.f32 %v7161, %v2752
        %v7192 = vsub.f32 %v7169, %v2752
        %v7193 = vsub.f32 %v7177, %v2752
        %v7194 = vand.u32 2147483647, %v7178
        %v7195 = vand.u32 2147483647, %v7179
        %v7196 = vand.u32 2147483647, %v7180
        %v7197 = vand.u32 2147483647, %v7181
        %v7198 = vand.u32 2147483647, %v7182
        %v7199 = vand.u32 2147483647, %v7183
        %v7200 = vand.u32 2147483647, %v7184
        %v7201 = vand.u32 2147483647, %v7185
        %v7202 = vand.u32 2147483647, %v7186
        %v7203 = vand.u32 2147483647, %v7187
        %v7204 = vand.u32 2147483647, %v7188
        %v7205 = vand.u32 2147483647, %v7189
        %v7206 = vand.u32 2147483647, %v7190
        %v7207 = vand.u32 2147483647, %v7191
        %v7208 = vand.u32 2147483647, %v7192
        %v7209 = vand.u32 2147483647, %v7193
        %v7210 = vsub.f32 1.0, %v7194
        %v7211 = vsub.f32 1.0, %v7195
        %v7212 = vsub.f32 1.0, %v7196
        %v7213 = vsub.f32 1.0, %v7197
        %v7214 = vsub.f32 1.0, %v7198
        %v7215 = vsub.f32 1.0, %v7199
        %v7216 = vsub.f32 1.0, %v7200
        %v7217 = vsub.f32 1.0, %v7201
        %v7218 = vsub.f32 1.0, %v7202
        %v7219 = vsub.f32 1.0, %v7203
        %v7220 = vsub.f32 1.0, %v7204
        %v7221 = vsub.f32 1.0, %v7205
        %v7222 = vsub.f32 1.0, %v7206
        %v7223 = vsub.f32 1.0, %v7207
        %v7224 = vsub.f32 1.0, %v7208
        %v7225 = vsub.f32 1.0, %v7209
        %v7226 = vmax.f32 %v7210, 0.0
        %v7227 = vmax.f32 %v7211, 0.0
        %v7228 = vmax.f32 %v7212, 0.0
        %v7229 = vmax.f32 %v7213, 0.0
        %v7230 = vmax.f32 %v7214, 0.0
        %v7231 = vmax.f32 %v7215, 0.0
        %v7232 = vmax.f32 %v7216, 0.0
        %v7233 = vmax.f32 %v7217, 0.0
        %v7234 = vmax.f32 %v7218, 0.0
        %v7235 = vmax.f32 %v7219, 0.0
        %v7236 = vmax.f32 %v7220, 0.0
        %v7237 = vmax.f32 %v7221, 0.0
        %v7238 = vmax.f32 %v7222, 0.0
        %v7239 = vmax.f32 %v7223, 0.0
        %v7240 = vmax.f32 %v7224, 0.0
        %v7241 = vmax.f32 %v7225, 0.0
        %v7242 = vlaneseq
        %v7243 = vshrl.u32 %v7242, 7
        %v7244 = vsub.s32 0, %v7243
        %v7245 = vrot.slane %v6852, %v7244
        %s7247 = sor.u32 256, 84
        %7248 = vbcast.lane.b32.xlu0 %v7245, %s7247
        %v7249 = vpop.permute.xlu0 %7248
        %v7250 = vlaneseq
        %v7251 = vshrl.u32 %v7250, 7
        %v7252 = vsub.s32 1, %v7251
        %v7253 = vrot.slane %v6852, %v7252
        %s7255 = sor.u32 256, 84
        %7256 = vbcast.lane.b32.xlu0 %v7253, %s7255
        %v7257 = vpop.permute.xlu0 %7256
        %v7258 = vlaneseq
        %v7259 = vshrl.u32 %v7258, 7
        %v7260 = vsub.s32 2, %v7259
        %v7261 = vrot.slane %v6852, %v7260
        %s7263 = sor.u32 256, 84
        %7264 = vbcast.lane.b32.xlu0 %v7261, %s7263
        %v7265 = vpop.permute.xlu0 %7264
        %v7266 = vlaneseq
        %v7267 = vshrl.u32 %v7266, 7
        %v7268 = vsub.s32 3, %v7267
        %v7269 = vrot.slane %v6852, %v7268
        %s7271 = sor.u32 256, 84
        %7272 = vbcast.lane.b32.xlu0 %v7269, %s7271
        %v7273 = vpop.permute.xlu0 %7272
        %v7274 = vlaneseq
        %v7275 = vshrl.u32 %v7274, 7
        %v7276 = vsub.s32 4, %v7275
        %v7277 = vrot.slane %v6852, %v7276
        %s7279 = sor.u32 256, 84
        %7280 = vbcast.lane.b32.xlu0 %v7277, %s7279
        %v7281 = vpop.permute.xlu0 %7280
        %v7282 = vlaneseq
        %v7283 = vshrl.u32 %v7282, 7
        %v7284 = vsub.s32 5, %v7283
        %v7285 = vrot.slane %v6852, %v7284
        %s7287 = sor.u32 256, 84
        %7288 = vbcast.lane.b32.xlu0 %v7285, %s7287
        %v7289 = vpop.permute.xlu0 %7288
        %v7290 = vlaneseq
        %v7291 = vshrl.u32 %v7290, 7
        %v7292 = vsub.s32 6, %v7291
        %v7293 = vrot.slane %v6852, %v7292
        %s7295 = sor.u32 256, 84
        %7296 = vbcast.lane.b32.xlu0 %v7293, %s7295
        %v7297 = vpop.permute.xlu0 %7296
        %v7298 = vlaneseq
        %v7299 = vshrl.u32 %v7298, 7
        %v7300 = vsub.s32 7, %v7299
        %v7301 = vrot.slane %v6852, %v7300
        %s7303 = sor.u32 256, 84
        %7304 = vbcast.lane.b32.xlu0 %v7301, %s7303
        %v7305 = vpop.permute.xlu0 %7304
        %v7306 = vlaneseq
        %v7307 = vshrl.u32 %v7306, 7
        %v7308 = vsub.s32 0, %v7307
        %v7309 = vrot.slane %v6853, %v7308
        %s7311 = sor.u32 256, 84
        %7312 = vbcast.lane.b32.xlu0 %v7309, %s7311
        %v7313 = vpop.permute.xlu0 %7312
        %v7314 = vlaneseq
        %v7315 = vshrl.u32 %v7314, 7
        %v7316 = vsub.s32 1, %v7315
        %v7317 = vrot.slane %v6853, %v7316
        %s7319 = sor.u32 256, 84
        %7320 = vbcast.lane.b32.xlu0 %v7317, %s7319
        %v7321 = vpop.permute.xlu0 %7320
        %v7322 = vlaneseq
        %v7323 = vshrl.u32 %v7322, 7
        %v7324 = vsub.s32 2, %v7323
        %v7325 = vrot.slane %v6853, %v7324
        %s7327 = sor.u32 256, 84
        %7328 = vbcast.lane.b32.xlu0 %v7325, %s7327
        %v7329 = vpop.permute.xlu0 %7328
        %v7330 = vlaneseq
        %v7331 = vshrl.u32 %v7330, 7
        %v7332 = vsub.s32 3, %v7331
        %v7333 = vrot.slane %v6853, %v7332
        %s7335 = sor.u32 256, 84
        %7336 = vbcast.lane.b32.xlu0 %v7333, %s7335
        %v7337 = vpop.permute.xlu0 %7336
        %v7338 = vlaneseq
        %v7339 = vshrl.u32 %v7338, 7
        %v7340 = vsub.s32 4, %v7339
        %v7341 = vrot.slane %v6853, %v7340
        %s7343 = sor.u32 256, 84
        %7344 = vbcast.lane.b32.xlu0 %v7341, %s7343
        %v7345 = vpop.permute.xlu0 %7344
        %v7346 = vlaneseq
        %v7347 = vshrl.u32 %v7346, 7
        %v7348 = vsub.s32 5, %v7347
        %v7349 = vrot.slane %v6853, %v7348
        %s7351 = sor.u32 256, 84
        %7352 = vbcast.lane.b32.xlu0 %v7349, %s7351
        %v7353 = vpop.permute.xlu0 %7352
        %v7354 = vlaneseq
        %v7355 = vshrl.u32 %v7354, 7
        %v7356 = vsub.s32 6, %v7355
        %v7357 = vrot.slane %v6853, %v7356
        %s7359 = sor.u32 256, 84
        %7360 = vbcast.lane.b32.xlu0 %v7357, %s7359
        %v7361 = vpop.permute.xlu0 %7360
        %v7362 = vlaneseq
        %v7363 = vshrl.u32 %v7362, 7
        %v7364 = vsub.s32 7, %v7363
        %v7365 = vrot.slane %v6853, %v7364
        %s7367 = sor.u32 256, 84
        %7368 = vbcast.lane.b32.xlu0 %v7365, %s7367
        %v7369 = vpop.permute.xlu0 %7368
        %v7370 = vmul.f32 %v7249, %v7034
        %v7371 = vmul.f32 %v7257, %v7035
        %v7372 = vmul.f32 %v7265, %v7036
        %v7373 = vmul.f32 %v7273, %v7037
        %v7374 = vmul.f32 %v7281, %v7038
        %v7375 = vmul.f32 %v7289, %v7039
        %v7376 = vmul.f32 %v7297, %v7040
        %v7377 = vmul.f32 %v7305, %v7041
        %v7378 = vmul.f32 %v7313, %v7042
        %v7379 = vmul.f32 %v7321, %v7043
        %v7380 = vmul.f32 %v7329, %v7044
        %v7381 = vmul.f32 %v7337, %v7045
        %v7382 = vmul.f32 %v7345, %v7046
        %v7383 = vmul.f32 %v7353, %v7047
        %v7384 = vmul.f32 %v7361, %v7048
        %v7385 = vmul.f32 %v7369, %v7049
        %v7386 = vmul.f32 %v7370, %v7226
        %v7387 = vmul.f32 %v7371, %v7227
        %v7388 = vmul.f32 %v7372, %v7228
        %v7389 = vmul.f32 %v7373, %v7229
        %v7390 = vmul.f32 %v7374, %v7230
        %v7391 = vmul.f32 %v7375, %v7231
        %v7392 = vmul.f32 %v7376, %v7232
        %v7393 = vmul.f32 %v7377, %v7233
        %v7394 = vmul.f32 %v7378, %v7234
        %v7395 = vmul.f32 %v7379, %v7235
        %v7396 = vmul.f32 %v7380, %v7236
        %v7397 = vmul.f32 %v7381, %v7237
        %v7398 = vmul.f32 %v7382, %v7238
        %v7399 = vmul.f32 %v7383, %v7239
        %v7400 = vmul.f32 %v7384, %v7240
        %v7401 = vmul.f32 %v7385, %v7241
        %v7402 = vsel %vm3321, %v7386, 0.0
        %v7403 = vrot.slane %v7402, 4
        %v7404 = vadd.f32 %v7402, %v7403
        %v7405 = vrot.slane %v7404, 2
        %v7406 = vadd.f32 %v7404, %v7405
        %v7407 = vrot.slane %v7406, 1
        %v7408 = vadd.f32 %v7406, %v7407
        %v7409 = vsel %vm3321, %v7387, 0.0
        %v7410 = vrot.slane %v7409, 4
        %v7411 = vadd.f32 %v7409, %v7410
        %v7412 = vrot.slane %v7411, 2
        %v7413 = vadd.f32 %v7411, %v7412
        %v7414 = vrot.slane %v7413, 1
        %v7415 = vadd.f32 %v7413, %v7414
        %v7416 = vsel %vm3321, %v7388, 0.0
        %v7417 = vrot.slane %v7416, 4
        %v7418 = vadd.f32 %v7416, %v7417
        %v7419 = vrot.slane %v7418, 2
        %v7420 = vadd.f32 %v7418, %v7419
        %v7421 = vrot.slane %v7420, 1
        %v7422 = vadd.f32 %v7420, %v7421
        %v7423 = vsel %vm3321, %v7389, 0.0
        %v7424 = vrot.slane %v7423, 4
        %v7425 = vadd.f32 %v7423, %v7424
        %v7426 = vrot.slane %v7425, 2
        %v7427 = vadd.f32 %v7425, %v7426
        %v7428 = vrot.slane %v7427, 1
        %v7429 = vadd.f32 %v7427, %v7428
        %v7430 = vsel %vm3321, %v7390, 0.0
        %v7431 = vrot.slane %v7430, 4
        %v7432 = vadd.f32 %v7430, %v7431
        %v7433 = vrot.slane %v7432, 2
        %v7434 = vadd.f32 %v7432, %v7433
        %v7435 = vrot.slane %v7434, 1
        %v7436 = vadd.f32 %v7434, %v7435
        %v7437 = vsel %vm3321, %v7391, 0.0
        %v7438 = vrot.slane %v7437, 4
        %v7439 = vadd.f32 %v7437, %v7438
        %v7440 = vrot.slane %v7439, 2
        %v7441 = vadd.f32 %v7439, %v7440
        %v7442 = vrot.slane %v7441, 1
        %v7443 = vadd.f32 %v7441, %v7442
        %v7444 = vsel %vm3321, %v7392, 0.0
        %v7445 = vrot.slane %v7444, 4
        %v7446 = vadd.f32 %v7444, %v7445
        %v7447 = vrot.slane %v7446, 2
        %v7448 = vadd.f32 %v7446, %v7447
        %v7449 = vrot.slane %v7448, 1
        %v7450 = vadd.f32 %v7448, %v7449
        %v7451 = vsel %vm3321, %v7393, 0.0
        %v7452 = vrot.slane %v7451, 4
        %v7453 = vadd.f32 %v7451, %v7452
        %v7454 = vrot.slane %v7453, 2
        %v7455 = vadd.f32 %v7453, %v7454
        %v7456 = vrot.slane %v7455, 1
        %v7457 = vadd.f32 %v7455, %v7456
        %v7458 = vsel %vm3321, %v7394, 0.0
        %v7459 = vrot.slane %v7458, 4
        %v7460 = vadd.f32 %v7458, %v7459
        %v7461 = vrot.slane %v7460, 2
        %v7462 = vadd.f32 %v7460, %v7461
        %v7463 = vrot.slane %v7462, 1
        %v7464 = vadd.f32 %v7462, %v7463
        %v7465 = vsel %vm3321, %v7395, 0.0
        %v7466 = vrot.slane %v7465, 4
        %v7467 = vadd.f32 %v7465, %v7466
        %v7468 = vrot.slane %v7467, 2
        %v7469 = vadd.f32 %v7467, %v7468
        %v7470 = vrot.slane %v7469, 1
        %v7471 = vadd.f32 %v7469, %v7470
        %v7472 = vsel %vm3321, %v7396, 0.0
        %v7473 = vrot.slane %v7472, 4
        %v7474 = vadd.f32 %v7472, %v7473
        %v7475 = vrot.slane %v7474, 2
        %v7476 = vadd.f32 %v7474, %v7475
        %v7477 = vrot.slane %v7476, 1
        %v7478 = vadd.f32 %v7476, %v7477
        %v7479 = vsel %vm3321, %v7397, 0.0
        %v7480 = vrot.slane %v7479, 4
        %v7481 = vadd.f32 %v7479, %v7480
        %v7482 = vrot.slane %v7481, 2
        %v7483 = vadd.f32 %v7481, %v7482
        %v7484 = vrot.slane %v7483, 1
        %v7485 = vadd.f32 %v7483, %v7484
        %v7486 = vsel %vm3321, %v7398, 0.0
        %v7487 = vrot.slane %v7486, 4
        %v7488 = vadd.f32 %v7486, %v7487
        %v7489 = vrot.slane %v7488, 2
        %v7490 = vadd.f32 %v7488, %v7489
        %v7491 = vrot.slane %v7490, 1
        %v7492 = vadd.f32 %v7490, %v7491
        %v7493 = vsel %vm3321, %v7399, 0.0
        %v7494 = vrot.slane %v7493, 4
        %v7495 = vadd.f32 %v7493, %v7494
        %v7496 = vrot.slane %v7495, 2
        %v7497 = vadd.f32 %v7495, %v7496
        %v7498 = vrot.slane %v7497, 1
        %v7499 = vadd.f32 %v7497, %v7498
        %v7500 = vsel %vm3321, %v7400, 0.0
        %v7501 = vrot.slane %v7500, 4
        %v7502 = vadd.f32 %v7500, %v7501
        %v7503 = vrot.slane %v7502, 2
        %v7504 = vadd.f32 %v7502, %v7503
        %v7505 = vrot.slane %v7504, 1
        %v7506 = vadd.f32 %v7504, %v7505
        %v7507 = vsel %vm3321, %v7401, 0.0
        %v7508 = vrot.slane %v7507, 4
        %v7509 = vadd.f32 %v7507, %v7508
        %v7510 = vrot.slane %v7509, 2
        %v7511 = vadd.f32 %v7509, %v7510
        %v7512 = vrot.slane %v7511, 1
        %v7513 = vadd.f32 %v7511, %v7512
        %v7514 = vpack.c.bf16 %v7408, %v7408
        %v7515 = vpack.c.bf16 %v7415, %v7415
        %v7516 = vpack.c.bf16 %v7422, %v7422
        %v7517 = vpack.c.bf16 %v7429, %v7429
        %v7518 = vpack.c.bf16 %v7436, %v7436
        %v7519 = vpack.c.bf16 %v7443, %v7443
        %v7520 = vpack.c.bf16 %v7450, %v7450
        %v7521 = vpack.c.bf16 %v7457, %v7457
        %v7522 = vpack.c.bf16 %v7464, %v7464
        %v7523 = vpack.c.bf16 %v7471, %v7471
        %v7524 = vpack.c.bf16 %v7478, %v7478
        %v7525 = vpack.c.bf16 %v7485, %v7485
        %v7526 = vpack.c.bf16 %v7492, %v7492
        %v7527 = vpack.c.bf16 %v7499, %v7499
        %v7528 = vpack.c.bf16 %v7506, %v7506
        %v7529 = vpack.c.bf16 %v7513, %v7513
        %v7530 = vld [vmem:[#allocation3] sm:$0xff]
        %v7531 = vld [vmem:[#allocation3 + $0x8] sm:$0xff]
        %v7532 = vpack.c.bf16 %v7531, %v7530
        %v7549 = vunpack.c.l.b16 %v7514
        %v7550 = vunpack.c.l.b16 %v7515
        %v7551 = vunpack.c.l.b16 %v7516
        %v7552 = vunpack.c.l.b16 %v7517
        %v7553 = vunpack.c.l.b16 %v7518
        %v7554 = vunpack.c.l.b16 %v7519
        %v7555 = vunpack.c.l.b16 %v7520
        %v7556 = vunpack.c.l.b16 %v7521
        %v7557 = vunpack.c.l.b16 %v7522
        %v7558 = vunpack.c.l.b16 %v7523
        %v7559 = vunpack.c.l.b16 %v7524
        %v7560 = vunpack.c.l.b16 %v7525
        %v7561 = vunpack.c.l.b16 %v7526
        %v7562 = vunpack.c.l.b16 %v7527
        %v7563 = vunpack.c.l.b16 %v7528
        %v7564 = vunpack.c.l.b16 %v7529
        %v7565 = vsel %vm3485, %v7550, %v7549
        %v7566 = vsel %vm3487, %v7551, %v7565
        %v7567 = vsel %vm3489, %v7552, %v7566
        %v7568 = vsel %vm3491, %v7553, %v7567
        %v7569 = vsel %vm3493, %v7554, %v7568
        %v7570 = vsel %vm3495, %v7555, %v7569
        %v7571 = vsel %vm3497, %v7556, %v7570
        %v7572 = vsel %vm3485, %v7558, %v7557
        %v7573 = vsel %vm3487, %v7559, %v7572
        %v7574 = vsel %vm3489, %v7560, %v7573
        %v7575 = vsel %vm3491, %v7561, %v7574
        %v7576 = vsel %vm3493, %v7562, %v7575
        %v7577 = vsel %vm3495, %v7563, %v7576
        %v7578 = vsel %vm3497, %v7564, %v7577
        %v7579 = vpack.c.b16 %v7578, %v7571
        %7581 = vrot.lane.b32.xlu0 %v7532, 48
        %v7582 = vpop.permute.xlu0 %7581
        %v7585 = vsel %vm1322, %v7579, 0
        %7587 = vmatprep.subr.bf16.mxu0 0
        %7588 = vmatpush1.bf16.msra.mxu0 %v7582
        %7589 = vmatprep.subr.bf16.mxu0 0
        %7590 = vmatpush1.bf16.msra.mxu0 0
        %7591 = vmatprep.subr.bf16.mxu0 0
        %7592 = vmatpush1.bf16.msra.mxu0 0
        %7593 = vmatprep.subr.bf16.mxu0 0
        %7594 = vmatpush1.bf16.msra.mxu0 0
        %7595 = vmatprep.subr.bf16.mxu0 0
        %7596 = vmatpush1.bf16.msra.mxu0 0
        %7597 = vmatprep.subr.bf16.mxu0 0
        %7598 = vmatpush1.bf16.msra.mxu0 0
        %7599 = vmatprep.subr.bf16.mxu0 0
        %7600 = vmatpush1.bf16.msra.mxu0 0
        %7601 = vmatprep.subr.bf16.mxu0 0
        %7602 = vmatpush1.bf16.msra.mxu0 0
        %7603 = vmatprep.subr.bf16.mxu0 0
        %7604 = vmatpush1.bf16.msra.mxu0 0
        %7605 = vmatprep.subr.bf16.mxu0 0
        %7606 = vmatpush1.bf16.msra.mxu0 0
        %7607 = vmatprep.subr.bf16.mxu0 0
        %7608 = vmatpush1.bf16.msra.mxu0 0
        %7609 = vmatprep.subr.bf16.mxu0 0
        %7610 = vmatpush1.bf16.msra.mxu0 0
        %7611 = vmatprep.subr.bf16.mxu0 0
        %7612 = vmatpush1.bf16.msra.mxu0 0
        %7613 = vmatprep.subr.bf16.mxu0 0
        %7614 = vmatpush1.bf16.msra.mxu0 0
        %7615 = vmatprep.subr.bf16.mxu0 0
        %7616 = vmatpush1.bf16.msra.mxu0 0
        %7617 = vmatprep.subr.bf16.mxu0 0
        %7618 = vmatpush1.bf16.msra.mxu0 0
        %7619 = vmatprep.mubr.bf16.mxu0 0
        %7620 = vmatmul.mubr.bf16.gmra.mrb[0].mxu0 %v7585
        %v7621 = vpop.f32.mrb[0].mxu0
        %v7622 = vadd.f32 0.0, %v7621
        %v7623 = vpop.f32.mrb[0].mxu0
        %v7624 = vpop.f32.mrb[0].mxu0
        %v7625 = vadd.f32 0.0, %v7624
        %v7626 = vpop.f32.mrb[0].mxu0
        %7627 = vdwg.mxu0
        %7630 = vrot.lane.b32.xlu0 %v7622, 80
        %v7631 = vpop.permute.xlu0 %7630
        %7632 = vrot.lane.b32.xlu0 %v7625, 80
        %v7633 = vpop.permute.xlu0 %7632
        %7636 = vst.msk [vmem:[#allocation6] sm:$0xff] %vm2167, %v7631
        %7637 = vst.msk [vmem:[#allocation6 + $0x8] sm:$0xff] %vm2167, %v7633
        %v7638 = vld [vmem:[#allocation5] sm:$0xff]
        %v7639 = vld [vmem:[#allocation5 + $0x8] sm:$0xff]
        %vm7640 = vcmask 753344
        %v7641 = vsel %vm7640, %v7638, -inf
        %7642 = vmax.xlane.f32.xlu0 %v7641
        %v7643 = vpop.xlane.xlu0 %7642
        %v7644 = vsel %vm7640, %v7639, -inf
        %7645 = vmax.xlane.f32.xlu0 %v7644
        %v7646 = vpop.xlane.xlu0 %7645
        %v7647 = vsub.f32 %v7638, %v7643
        %v7648 = vsub.f32 %v7639, %v7646
        %v7649 = vmul.f32 %v7647, 1.442695
        %v7650 = vpow.pop %v7649
        %v7651 = vmul.f32 %v7648, 1.442695
        %v7652 = vpow.pop %v7651
        %7655 = vrot.lane.b32.xlu0 %v7650, 40
        %v7656 = vpop.permute.xlu0 %7655
        %7657 = vrot.lane.b32.xlu0 %v7652, 40
        %v7658 = vpop.permute.xlu0 %7657
        %v7661 = vsel %vm2778, %v7656, 0.0
        %7662 = vadd.xlane.f32.xlu0 %v7661
        %v7663 = vpop.xlane.xlu0 %7662
        %v7664 = vsel %vm2778, %v7658, 0.0
        %7665 = vadd.xlane.f32.xlu0 %v7664
        %v7666 = vpop.xlane.xlu0 %7665
        %v7667 = vrcp.pop %v7663
        %v7668 = vrcp.pop %v7666
        %v7669 = vmul.f32 %v7650, %v7667
        %v7670 = vmul.f32 %v7652, %v7668
        %v7671 = vadd.f32 %v2749, %v7638
        %v7672 = vadd.f32 %v2750, %v7639
        %v7673 = vadd.f32 %v2745, %v7638
        %v7674 = vadd.f32 %v2746, %v7639
        %v7675 = vlaneseq
        %v7676 = vshrl.u32 %v7675, 7
        %v7677 = vsub.s32 0, %v7676
        %v7678 = vrot.slane %v7671, %v7677
        %s7680 = sor.u32 256, 24
        %7681 = vbcast.lane.b32.xlu0 %v7678, %s7680
        %v7682 = vpop.permute.xlu0 %7681
        %v7683 = vlaneseq
        %v7684 = vshrl.u32 %v7683, 7
        %v7685 = vsub.s32 1, %v7684
        %v7686 = vrot.slane %v7671, %v7685
        %s7688 = sor.u32 256, 24
        %7689 = vbcast.lane.b32.xlu0 %v7686, %s7688
        %v7690 = vpop.permute.xlu0 %7689
        %v7691 = vlaneseq
        %v7692 = vshrl.u32 %v7691, 7
        %v7693 = vsub.s32 2, %v7692
        %v7694 = vrot.slane %v7671, %v7693
        %s7696 = sor.u32 256, 24
        %7697 = vbcast.lane.b32.xlu0 %v7694, %s7696
        %v7698 = vpop.permute.xlu0 %7697
        %v7699 = vlaneseq
        %v7700 = vshrl.u32 %v7699, 7
        %v7701 = vsub.s32 3, %v7700
        %v7702 = vrot.slane %v7671, %v7701
        %s7704 = sor.u32 256, 24
        %7705 = vbcast.lane.b32.xlu0 %v7702, %s7704
        %v7706 = vpop.permute.xlu0 %7705
        %v7707 = vlaneseq
        %v7708 = vshrl.u32 %v7707, 7
        %v7709 = vsub.s32 4, %v7708
        %v7710 = vrot.slane %v7671, %v7709
        %s7712 = sor.u32 256, 24
        %7713 = vbcast.lane.b32.xlu0 %v7710, %s7712
        %v7714 = vpop.permute.xlu0 %7713
        %v7715 = vlaneseq
        %v7716 = vshrl.u32 %v7715, 7
        %v7717 = vsub.s32 5, %v7716
        %v7718 = vrot.slane %v7671, %v7717
        %s7720 = sor.u32 256, 24
        %7721 = vbcast.lane.b32.xlu0 %v7718, %s7720
        %v7722 = vpop.permute.xlu0 %7721
        %v7723 = vlaneseq
        %v7724 = vshrl.u32 %v7723, 7
        %v7725 = vsub.s32 6, %v7724
        %v7726 = vrot.slane %v7671, %v7725
        %s7728 = sor.u32 256, 24
        %7729 = vbcast.lane.b32.xlu0 %v7726, %s7728
        %v7730 = vpop.permute.xlu0 %7729
        %v7731 = vlaneseq
        %v7732 = vshrl.u32 %v7731, 7
        %v7733 = vsub.s32 7, %v7732
        %v7734 = vrot.slane %v7671, %v7733
        %s7736 = sor.u32 256, 24
        %7737 = vbcast.lane.b32.xlu0 %v7734, %s7736
        %v7738 = vpop.permute.xlu0 %7737
        %v7739 = vlaneseq
        %v7740 = vshrl.u32 %v7739, 7
        %v7741 = vsub.s32 0, %v7740
        %v7742 = vrot.slane %v7672, %v7741
        %s7744 = sor.u32 256, 24
        %7745 = vbcast.lane.b32.xlu0 %v7742, %s7744
        %v7746 = vpop.permute.xlu0 %7745
        %v7747 = vlaneseq
        %v7748 = vshrl.u32 %v7747, 7
        %v7749 = vsub.s32 1, %v7748
        %v7750 = vrot.slane %v7672, %v7749
        %s7752 = sor.u32 256, 24
        %7753 = vbcast.lane.b32.xlu0 %v7750, %s7752
        %v7754 = vpop.permute.xlu0 %7753
        %v7755 = vlaneseq
        %v7756 = vshrl.u32 %v7755, 7
        %v7757 = vsub.s32 2, %v7756
        %v7758 = vrot.slane %v7672, %v7757
        %s7760 = sor.u32 256, 24
        %7761 = vbcast.lane.b32.xlu0 %v7758, %s7760
        %v7762 = vpop.permute.xlu0 %7761
        %v7763 = vlaneseq
        %v7764 = vshrl.u32 %v7763, 7
        %v7765 = vsub.s32 3, %v7764
        %v7766 = vrot.slane %v7672, %v7765
        %s7768 = sor.u32 256, 24
        %7769 = vbcast.lane.b32.xlu0 %v7766, %s7768
        %v7770 = vpop.permute.xlu0 %7769
        %v7771 = vlaneseq
        %v7772 = vshrl.u32 %v7771, 7
        %v7773 = vsub.s32 4, %v7772
        %v7774 = vrot.slane %v7672, %v7773
        %s7776 = sor.u32 256, 24
        %7777 = vbcast.lane.b32.xlu0 %v7774, %s7776
        %v7778 = vpop.permute.xlu0 %7777
        %v7779 = vlaneseq
        %v7780 = vshrl.u32 %v7779, 7
        %v7781 = vsub.s32 5, %v7780
        %v7782 = vrot.slane %v7672, %v7781
        %s7784 = sor.u32 256, 24
        %7785 = vbcast.lane.b32.xlu0 %v7782, %s7784
        %v7786 = vpop.permute.xlu0 %7785
        %v7787 = vlaneseq
        %v7788 = vshrl.u32 %v7787, 7
        %v7789 = vsub.s32 6, %v7788
        %v7790 = vrot.slane %v7672, %v7789
        %s7792 = sor.u32 256, 24
        %7793 = vbcast.lane.b32.xlu0 %v7790, %s7792
        %v7794 = vpop.permute.xlu0 %7793
        %v7795 = vlaneseq
        %v7796 = vshrl.u32 %v7795, 7
        %v7797 = vsub.s32 7, %v7796
        %v7798 = vrot.slane %v7672, %v7797
        %s7800 = sor.u32 256, 24
        %7801 = vbcast.lane.b32.xlu0 %v7798, %s7800
        %v7802 = vpop.permute.xlu0 %7801
        %v7803 = vsub.f32 %v7682, %v2754
        %v7804 = vsub.f32 %v7690, %v2754
        %v7805 = vsub.f32 %v7698, %v2754
        %v7806 = vsub.f32 %v7706, %v2754
        %v7807 = vsub.f32 %v7714, %v2754
        %v7808 = vsub.f32 %v7722, %v2754
        %v7809 = vsub.f32 %v7730, %v2754
        %v7810 = vsub.f32 %v7738, %v2754
        %v7811 = vsub.f32 %v7746, %v2754
        %v7812 = vsub.f32 %v7754, %v2754
        %v7813 = vsub.f32 %v7762, %v2754
        %v7814 = vsub.f32 %v7770, %v2754
        %v7815 = vsub.f32 %v7778, %v2754
        %v7816 = vsub.f32 %v7786, %v2754
        %v7817 = vsub.f32 %v7794, %v2754
        %v7818 = vsub.f32 %v7802, %v2754
        %v7819 = vand.u32 2147483647, %v7803
        %v7820 = vand.u32 2147483647, %v7804
        %v7821 = vand.u32 2147483647, %v7805
        %v7822 = vand.u32 2147483647, %v7806
        %v7823 = vand.u32 2147483647, %v7807
        %v7824 = vand.u32 2147483647, %v7808
        %v7825 = vand.u32 2147483647, %v7809
        %v7826 = vand.u32 2147483647, %v7810
        %v7827 = vand.u32 2147483647, %v7811
        %v7828 = vand.u32 2147483647, %v7812
        %v7829 = vand.u32 2147483647, %v7813
        %v7830 = vand.u32 2147483647, %v7814
        %v7831 = vand.u32 2147483647, %v7815
        %v7832 = vand.u32 2147483647, %v7816
        %v7833 = vand.u32 2147483647, %v7817
        %v7834 = vand.u32 2147483647, %v7818
        %v7835 = vsub.f32 1.0, %v7819
        %v7836 = vsub.f32 1.0, %v7820
        %v7837 = vsub.f32 1.0, %v7821
        %v7838 = vsub.f32 1.0, %v7822
        %v7839 = vsub.f32 1.0, %v7823
        %v7840 = vsub.f32 1.0, %v7824
        %v7841 = vsub.f32 1.0, %v7825
        %v7842 = vsub.f32 1.0, %v7826
        %v7843 = vsub.f32 1.0, %v7827
        %v7844 = vsub.f32 1.0, %v7828
        %v7845 = vsub.f32 1.0, %v7829
        %v7846 = vsub.f32 1.0, %v7830
        %v7847 = vsub.f32 1.0, %v7831
        %v7848 = vsub.f32 1.0, %v7832
        %v7849 = vsub.f32 1.0, %v7833
        %v7850 = vsub.f32 1.0, %v7834
        %v7851 = vmax.f32 %v7835, 0.0
        %v7852 = vmax.f32 %v7836, 0.0
        %v7853 = vmax.f32 %v7837, 0.0
        %v7854 = vmax.f32 %v7838, 0.0
        %v7855 = vmax.f32 %v7839, 0.0
        %v7856 = vmax.f32 %v7840, 0.0
        %v7857 = vmax.f32 %v7841, 0.0
        %v7858 = vmax.f32 %v7842, 0.0
        %v7859 = vmax.f32 %v7843, 0.0
        %v7860 = vmax.f32 %v7844, 0.0
        %v7861 = vmax.f32 %v7845, 0.0
        %v7862 = vmax.f32 %v7846, 0.0
        %v7863 = vmax.f32 %v7847, 0.0
        %v7864 = vmax.f32 %v7848, 0.0
        %v7865 = vmax.f32 %v7849, 0.0
        %v7866 = vmax.f32 %v7850, 0.0
        %v7867 = vlaneseq
        %v7868 = vshrl.u32 %v7867, 7
        %v7869 = vsub.s32 0, %v7868
        %v7870 = vrot.slane %v7673, %v7869
        %s7872 = sor.u32 256, 56
        %7873 = vbcast.lane.b32.xlu0 %v7870, %s7872
        %v7874 = vpop.permute.xlu0 %7873
        %v7875 = vlaneseq
        %v7876 = vshrl.u32 %v7875, 7
        %v7877 = vsub.s32 1, %v7876
        %v7878 = vrot.slane %v7673, %v7877
        %s7880 = sor.u32 256, 56
        %7881 = vbcast.lane.b32.xlu0 %v7878, %s7880
        %v7882 = vpop.permute.xlu0 %7881
        %v7883 = vlaneseq
        %v7884 = vshrl.u32 %v7883, 7
        %v7885 = vsub.s32 2, %v7884
        %v7886 = vrot.slane %v7673, %v7885
        %s7888 = sor.u32 256, 56
        %7889 = vbcast.lane.b32.xlu0 %v7886, %s7888
        %v7890 = vpop.permute.xlu0 %7889
        %v7891 = vlaneseq
        %v7892 = vshrl.u32 %v7891, 7
        %v7893 = vsub.s32 3, %v7892
        %v7894 = vrot.slane %v7673, %v7893
        %s7896 = sor.u32 256, 56
        %7897 = vbcast.lane.b32.xlu0 %v7894, %s7896
        %v7898 = vpop.permute.xlu0 %7897
        %v7899 = vlaneseq
        %v7900 = vshrl.u32 %v7899, 7
        %v7901 = vsub.s32 4, %v7900
        %v7902 = vrot.slane %v7673, %v7901
        %s7904 = sor.u32 256, 56
        %7905 = vbcast.lane.b32.xlu0 %v7902, %s7904
        %v7906 = vpop.permute.xlu0 %7905
        %v7907 = vlaneseq
        %v7908 = vshrl.u32 %v7907, 7
        %v7909 = vsub.s32 5, %v7908
        %v7910 = vrot.slane %v7673, %v7909
        %s7912 = sor.u32 256, 56
        %7913 = vbcast.lane.b32.xlu0 %v7910, %s7912
        %v7914 = vpop.permute.xlu0 %7913
        %v7915 = vlaneseq
        %v7916 = vshrl.u32 %v7915, 7
        %v7917 = vsub.s32 6, %v7916
        %v7918 = vrot.slane %v7673, %v7917
        %s7920 = sor.u32 256, 56
        %7921 = vbcast.lane.b32.xlu0 %v7918, %s7920
        %v7922 = vpop.permute.xlu0 %7921
        %v7923 = vlaneseq
        %v7924 = vshrl.u32 %v7923, 7
        %v7925 = vsub.s32 7, %v7924
        %v7926 = vrot.slane %v7673, %v7925
        %s7928 = sor.u32 256, 56
        %7929 = vbcast.lane.b32.xlu0 %v7926, %s7928
        %v7930 = vpop.permute.xlu0 %7929
        %v7931 = vlaneseq
        %v7932 = vshrl.u32 %v7931, 7
        %v7933 = vsub.s32 0, %v7932
        %v7934 = vrot.slane %v7674, %v7933
        %s7936 = sor.u32 256, 56
        %7937 = vbcast.lane.b32.xlu0 %v7934, %s7936
        %v7938 = vpop.permute.xlu0 %7937
        %v7939 = vlaneseq
        %v7940 = vshrl.u32 %v7939, 7
        %v7941 = vsub.s32 1, %v7940
        %v7942 = vrot.slane %v7674, %v7941
        %s7944 = sor.u32 256, 56
        %7945 = vbcast.lane.b32.xlu0 %v7942, %s7944
        %v7946 = vpop.permute.xlu0 %7945
        %v7947 = vlaneseq
        %v7948 = vshrl.u32 %v7947, 7
        %v7949 = vsub.s32 2, %v7948
        %v7950 = vrot.slane %v7674, %v7949
        %s7952 = sor.u32 256, 56
        %7953 = vbcast.lane.b32.xlu0 %v7950, %s7952
        %v7954 = vpop.permute.xlu0 %7953
        %v7955 = vlaneseq
        %v7956 = vshrl.u32 %v7955, 7
        %v7957 = vsub.s32 3, %v7956
        %v7958 = vrot.slane %v7674, %v7957
        %s7960 = sor.u32 256, 56
        %7961 = vbcast.lane.b32.xlu0 %v7958, %s7960
        %v7962 = vpop.permute.xlu0 %7961
        %v7963 = vlaneseq
        %v7964 = vshrl.u32 %v7963, 7
        %v7965 = vsub.s32 4, %v7964
        %v7966 = vrot.slane %v7674, %v7965
        %s7968 = sor.u32 256, 56
        %7969 = vbcast.lane.b32.xlu0 %v7966, %s7968
        %v7970 = vpop.permute.xlu0 %7969
        %v7971 = vlaneseq
        %v7972 = vshrl.u32 %v7971, 7
        %v7973 = vsub.s32 5, %v7972
        %v7974 = vrot.slane %v7674, %v7973
        %s7976 = sor.u32 256, 56
        %7977 = vbcast.lane.b32.xlu0 %v7974, %s7976
        %v7978 = vpop.permute.xlu0 %7977
        %v7979 = vlaneseq
        %v7980 = vshrl.u32 %v7979, 7
        %v7981 = vsub.s32 6, %v7980
        %v7982 = vrot.slane %v7674, %v7981
        %s7984 = sor.u32 256, 56
        %7985 = vbcast.lane.b32.xlu0 %v7982, %s7984
        %v7986 = vpop.permute.xlu0 %7985
        %v7987 = vlaneseq
        %v7988 = vshrl.u32 %v7987, 7
        %v7989 = vsub.s32 7, %v7988
        %v7990 = vrot.slane %v7674, %v7989
        %s7992 = sor.u32 256, 56
        %7993 = vbcast.lane.b32.xlu0 %v7990, %s7992
        %v7994 = vpop.permute.xlu0 %7993
        %v7995 = vsub.f32 %v7874, %v2752
        %v7996 = vsub.f32 %v7882, %v2752
        %v7997 = vsub.f32 %v7890, %v2752
        %v7998 = vsub.f32 %v7898, %v2752
        %v7999 = vsub.f32 %v7906, %v2752
        %v8000 = vsub.f32 %v7914, %v2752
        %v8001 = vsub.f32 %v7922, %v2752
        %v8002 = vsub.f32 %v7930, %v2752
        %v8003 = vsub.f32 %v7938, %v2752
        %v8004 = vsub.f32 %v7946, %v2752
        %v8005 = vsub.f32 %v7954, %v2752
        %v8006 = vsub.f32 %v7962, %v2752
        %v8007 = vsub.f32 %v7970, %v2752
        %v8008 = vsub.f32 %v7978, %v2752
        %v8009 = vsub.f32 %v7986, %v2752
        %v8010 = vsub.f32 %v7994, %v2752
        %v8011 = vand.u32 2147483647, %v7995
        %v8012 = vand.u32 2147483647, %v7996
        %v8013 = vand.u32 2147483647, %v7997
        %v8014 = vand.u32 2147483647, %v7998
        %v8015 = vand.u32 2147483647, %v7999
        %v8016 = vand.u32 2147483647, %v8000
        %v8017 = vand.u32 2147483647, %v8001
        %v8018 = vand.u32 2147483647, %v8002
        %v8019 = vand.u32 2147483647, %v8003
        %v8020 = vand.u32 2147483647, %v8004
        %v8021 = vand.u32 2147483647, %v8005
        %v8022 = vand.u32 2147483647, %v8006
        %v8023 = vand.u32 2147483647, %v8007
        %v8024 = vand.u32 2147483647, %v8008
        %v8025 = vand.u32 2147483647, %v8009
        %v8026 = vand.u32 2147483647, %v8010
        %v8027 = vsub.f32 1.0, %v8011
        %v8028 = vsub.f32 1.0, %v8012
        %v8029 = vsub.f32 1.0, %v8013
        %v8030 = vsub.f32 1.0, %v8014
        %v8031 = vsub.f32 1.0, %v8015
        %v8032 = vsub.f32 1.0, %v8016
        %v8033 = vsub.f32 1.0, %v8017
        %v8034 = vsub.f32 1.0, %v8018
        %v8035 = vsub.f32 1.0, %v8019
        %v8036 = vsub.f32 1.0, %v8020
        %v8037 = vsub.f32 1.0, %v8021
        %v8038 = vsub.f32 1.0, %v8022
        %v8039 = vsub.f32 1.0, %v8023
        %v8040 = vsub.f32 1.0, %v8024
        %v8041 = vsub.f32 1.0, %v8025
        %v8042 = vsub.f32 1.0, %v8026
        %v8043 = vmax.f32 %v8027, 0.0
        %v8044 = vmax.f32 %v8028, 0.0
        %v8045 = vmax.f32 %v8029, 0.0
        %v8046 = vmax.f32 %v8030, 0.0
        %v8047 = vmax.f32 %v8031, 0.0
        %v8048 = vmax.f32 %v8032, 0.0
        %v8049 = vmax.f32 %v8033, 0.0
        %v8050 = vmax.f32 %v8034, 0.0
        %v8051 = vmax.f32 %v8035, 0.0
        %v8052 = vmax.f32 %v8036, 0.0
        %v8053 = vmax.f32 %v8037, 0.0
        %v8054 = vmax.f32 %v8038, 0.0
        %v8055 = vmax.f32 %v8039, 0.0
        %v8056 = vmax.f32 %v8040, 0.0
        %v8057 = vmax.f32 %v8041, 0.0
        %v8058 = vmax.f32 %v8042, 0.0
        %v8059 = vlaneseq
        %v8060 = vshrl.u32 %v8059, 7
        %v8061 = vsub.s32 0, %v8060
        %v8062 = vrot.slane %v7669, %v8061
        %s8064 = sor.u32 256, 88
        %8065 = vbcast.lane.b32.xlu0 %v8062, %s8064
        %v8066 = vpop.permute.xlu0 %8065
        %v8067 = vlaneseq
        %v8068 = vshrl.u32 %v8067, 7
        %v8069 = vsub.s32 1, %v8068
        %v8070 = vrot.slane %v7669, %v8069
        %s8072 = sor.u32 256, 88
        %8073 = vbcast.lane.b32.xlu0 %v8070, %s8072
        %v8074 = vpop.permute.xlu0 %8073
        %v8075 = vlaneseq
        %v8076 = vshrl.u32 %v8075, 7
        %v8077 = vsub.s32 2, %v8076
        %v8078 = vrot.slane %v7669, %v8077
        %s8080 = sor.u32 256, 88
        %8081 = vbcast.lane.b32.xlu0 %v8078, %s8080
        %v8082 = vpop.permute.xlu0 %8081
        %v8083 = vlaneseq
        %v8084 = vshrl.u32 %v8083, 7
        %v8085 = vsub.s32 3, %v8084
        %v8086 = vrot.slane %v7669, %v8085
        %s8088 = sor.u32 256, 88
        %8089 = vbcast.lane.b32.xlu0 %v8086, %s8088
        %v8090 = vpop.permute.xlu0 %8089
        %v8091 = vlaneseq
        %v8092 = vshrl.u32 %v8091, 7
        %v8093 = vsub.s32 4, %v8092
        %v8094 = vrot.slane %v7669, %v8093
        %s8096 = sor.u32 256, 88
        %8097 = vbcast.lane.b32.xlu0 %v8094, %s8096
        %v8098 = vpop.permute.xlu0 %8097
        %v8099 = vlaneseq
        %v8100 = vshrl.u32 %v8099, 7
        %v8101 = vsub.s32 5, %v8100
        %v8102 = vrot.slane %v7669, %v8101
        %s8104 = sor.u32 256, 88
        %8105 = vbcast.lane.b32.xlu0 %v8102, %s8104
        %v8106 = vpop.permute.xlu0 %8105
        %v8107 = vlaneseq
        %v8108 = vshrl.u32 %v8107, 7
        %v8109 = vsub.s32 6, %v8108
        %v8110 = vrot.slane %v7669, %v8109
        %s8112 = sor.u32 256, 88
        %8113 = vbcast.lane.b32.xlu0 %v8110, %s8112
        %v8114 = vpop.permute.xlu0 %8113
        %v8115 = vlaneseq
        %v8116 = vshrl.u32 %v8115, 7
        %v8117 = vsub.s32 7, %v8116
        %v8118 = vrot.slane %v7669, %v8117
        %s8120 = sor.u32 256, 88
        %8121 = vbcast.lane.b32.xlu0 %v8118, %s8120
        %v8122 = vpop.permute.xlu0 %8121
        %v8123 = vlaneseq
        %v8124 = vshrl.u32 %v8123, 7
        %v8125 = vsub.s32 0, %v8124
        %v8126 = vrot.slane %v7670, %v8125
        %s8128 = sor.u32 256, 88
        %8129 = vbcast.lane.b32.xlu0 %v8126, %s8128
        %v8130 = vpop.permute.xlu0 %8129
        %v8131 = vlaneseq
        %v8132 = vshrl.u32 %v8131, 7
        %v8133 = vsub.s32 1, %v8132
        %v8134 = vrot.slane %v7670, %v8133
        %s8136 = sor.u32 256, 88
        %8137 = vbcast.lane.b32.xlu0 %v8134, %s8136
        %v8138 = vpop.permute.xlu0 %8137
        %v8139 = vlaneseq
        %v8140 = vshrl.u32 %v8139, 7
        %v8141 = vsub.s32 2, %v8140
        %v8142 = vrot.slane %v7670, %v8141
        %s8144 = sor.u32 256, 88
        %8145 = vbcast.lane.b32.xlu0 %v8142, %s8144
        %v8146 = vpop.permute.xlu0 %8145
        %v8147 = vlaneseq
        %v8148 = vshrl.u32 %v8147, 7
        %v8149 = vsub.s32 3, %v8148
        %v8150 = vrot.slane %v7670, %v8149
        %s8152 = sor.u32 256, 88
        %8153 = vbcast.lane.b32.xlu0 %v8150, %s8152
        %v8154 = vpop.permute.xlu0 %8153
        %v8155 = vlaneseq
        %v8156 = vshrl.u32 %v8155, 7
        %v8157 = vsub.s32 4, %v8156
        %v8158 = vrot.slane %v7670, %v8157
        %s8160 = sor.u32 256, 88
        %8161 = vbcast.lane.b32.xlu0 %v8158, %s8160
        %v8162 = vpop.permute.xlu0 %8161
        %v8163 = vlaneseq
        %v8164 = vshrl.u32 %v8163, 7
        %v8165 = vsub.s32 5, %v8164
        %v8166 = vrot.slane %v7670, %v8165
        %s8168 = sor.u32 256, 88
        %8169 = vbcast.lane.b32.xlu0 %v8166, %s8168
        %v8170 = vpop.permute.xlu0 %8169
        %v8171 = vlaneseq
        %v8172 = vshrl.u32 %v8171, 7
        %v8173 = vsub.s32 6, %v8172
        %v8174 = vrot.slane %v7670, %v8173
        %s8176 = sor.u32 256, 88
        %8177 = vbcast.lane.b32.xlu0 %v8174, %s8176
        %v8178 = vpop.permute.xlu0 %8177
        %v8179 = vlaneseq
        %v8180 = vshrl.u32 %v8179, 7
        %v8181 = vsub.s32 7, %v8180
        %v8182 = vrot.slane %v7670, %v8181
        %s8184 = sor.u32 256, 88
        %8185 = vbcast.lane.b32.xlu0 %v8182, %s8184
        %v8186 = vpop.permute.xlu0 %8185
        %v8187 = vmul.f32 %v8066, %v7851
        %v8188 = vmul.f32 %v8074, %v7852
        %v8189 = vmul.f32 %v8082, %v7853
        %v8190 = vmul.f32 %v8090, %v7854
        %v8191 = vmul.f32 %v8098, %v7855
        %v8192 = vmul.f32 %v8106, %v7856
        %v8193 = vmul.f32 %v8114, %v7857
        %v8194 = vmul.f32 %v8122, %v7858
        %v8195 = vmul.f32 %v8130, %v7859
        %v8196 = vmul.f32 %v8138, %v7860
        %v8197 = vmul.f32 %v8146, %v7861
        %v8198 = vmul.f32 %v8154, %v7862
        %v8199 = vmul.f32 %v8162, %v7863
        %v8200 = vmul.f32 %v8170, %v7864
        %v8201 = vmul.f32 %v8178, %v7865
        %v8202 = vmul.f32 %v8186, %v7866
        %v8203 = vmul.f32 %v8187, %v8043
        %v8204 = vmul.f32 %v8188, %v8044
        %v8205 = vmul.f32 %v8189, %v8045
        %v8206 = vmul.f32 %v8190, %v8046
        %v8207 = vmul.f32 %v8191, %v8047
        %v8208 = vmul.f32 %v8192, %v8048
        %v8209 = vmul.f32 %v8193, %v8049
        %v8210 = vmul.f32 %v8194, %v8050
        %v8211 = vmul.f32 %v8195, %v8051
        %v8212 = vmul.f32 %v8196, %v8052
        %v8213 = vmul.f32 %v8197, %v8053
        %v8214 = vmul.f32 %v8198, %v8054
        %v8215 = vmul.f32 %v8199, %v8055
        %v8216 = vmul.f32 %v8200, %v8056
        %v8217 = vmul.f32 %v8201, %v8057
        %v8218 = vmul.f32 %v8202, %v8058
        %v8219 = vsel %vm3321, %v8203, 0.0
        %v8220 = vrot.slane %v8219, 4
        %v8221 = vadd.f32 %v8219, %v8220
        %v8222 = vrot.slane %v8221, 2
        %v8223 = vadd.f32 %v8221, %v8222
        %v8224 = vrot.slane %v8223, 1
        %v8225 = vadd.f32 %v8223, %v8224
        %v8226 = vsel %vm3321, %v8204, 0.0
        %v8227 = vrot.slane %v8226, 4
        %v8228 = vadd.f32 %v8226, %v8227
        %v8229 = vrot.slane %v8228, 2
        %v8230 = vadd.f32 %v8228, %v8229
        %v8231 = vrot.slane %v8230, 1
        %v8232 = vadd.f32 %v8230, %v8231
        %v8233 = vsel %vm3321, %v8205, 0.0
        %v8234 = vrot.slane %v8233, 4
        %v8235 = vadd.f32 %v8233, %v8234
        %v8236 = vrot.slane %v8235, 2
        %v8237 = vadd.f32 %v8235, %v8236
        %v8238 = vrot.slane %v8237, 1
        %v8239 = vadd.f32 %v8237, %v8238
        %v8240 = vsel %vm3321, %v8206, 0.0
        %v8241 = vrot.slane %v8240, 4
        %v8242 = vadd.f32 %v8240, %v8241
        %v8243 = vrot.slane %v8242, 2
        %v8244 = vadd.f32 %v8242, %v8243
        %v8245 = vrot.slane %v8244, 1
        %v8246 = vadd.f32 %v8244, %v8245
        %v8247 = vsel %vm3321, %v8207, 0.0
        %v8248 = vrot.slane %v8247, 4
        %v8249 = vadd.f32 %v8247, %v8248
        %v8250 = vrot.slane %v8249, 2
        %v8251 = vadd.f32 %v8249, %v8250
        %v8252 = vrot.slane %v8251, 1
        %v8253 = vadd.f32 %v8251, %v8252
        %v8254 = vsel %vm3321, %v8208, 0.0
        %v8255 = vrot.slane %v8254, 4
        %v8256 = vadd.f32 %v8254, %v8255
        %v8257 = vrot.slane %v8256, 2
        %v8258 = vadd.f32 %v8256, %v8257
        %v8259 = vrot.slane %v8258, 1
        %v8260 = vadd.f32 %v8258, %v8259
        %v8261 = vsel %vm3321, %v8209, 0.0
        %v8262 = vrot.slane %v8261, 4
        %v8263 = vadd.f32 %v8261, %v8262
        %v8264 = vrot.slane %v8263, 2
        %v8265 = vadd.f32 %v8263, %v8264
        %v8266 = vrot.slane %v8265, 1
        %v8267 = vadd.f32 %v8265, %v8266
        %v8268 = vsel %vm3321, %v8210, 0.0
        %v8269 = vrot.slane %v8268, 4
        %v8270 = vadd.f32 %v8268, %v8269
        %v8271 = vrot.slane %v8270, 2
        %v8272 = vadd.f32 %v8270, %v8271
        %v8273 = vrot.slane %v8272, 1
        %v8274 = vadd.f32 %v8272, %v8273
        %v8275 = vsel %vm3321, %v8211, 0.0
        %v8276 = vrot.slane %v8275, 4
        %v8277 = vadd.f32 %v8275, %v8276
        %v8278 = vrot.slane %v8277, 2
        %v8279 = vadd.f32 %v8277, %v8278
        %v8280 = vrot.slane %v8279, 1
        %v8281 = vadd.f32 %v8279, %v8280
        %v8282 = vsel %vm3321, %v8212, 0.0
        %v8283 = vrot.slane %v8282, 4
        %v8284 = vadd.f32 %v8282, %v8283
        %v8285 = vrot.slane %v8284, 2
        %v8286 = vadd.f32 %v8284, %v8285
        %v8287 = vrot.slane %v8286, 1
        %v8288 = vadd.f32 %v8286, %v8287
        %v8289 = vsel %vm3321, %v8213, 0.0
        %v8290 = vrot.slane %v8289, 4
        %v8291 = vadd.f32 %v8289, %v8290
        %v8292 = vrot.slane %v8291, 2
        %v8293 = vadd.f32 %v8291, %v8292
        %v8294 = vrot.slane %v8293, 1
        %v8295 = vadd.f32 %v8293, %v8294
        %v8296 = vsel %vm3321, %v8214, 0.0
        %v8297 = vrot.slane %v8296, 4
        %v8298 = vadd.f32 %v8296, %v8297
        %v8299 = vrot.slane %v8298, 2
        %v8300 = vadd.f32 %v8298, %v8299
        %v8301 = vrot.slane %v8300, 1
        %v8302 = vadd.f32 %v8300, %v8301
        %v8303 = vsel %vm3321, %v8215, 0.0
        %v8304 = vrot.slane %v8303, 4
        %v8305 = vadd.f32 %v8303, %v8304
        %v8306 = vrot.slane %v8305, 2
        %v8307 = vadd.f32 %v8305, %v8306
        %v8308 = vrot.slane %v8307, 1
        %v8309 = vadd.f32 %v8307, %v8308
        %v8310 = vsel %vm3321, %v8216, 0.0
        %v8311 = vrot.slane %v8310, 4
        %v8312 = vadd.f32 %v8310, %v8311
        %v8313 = vrot.slane %v8312, 2
        %v8314 = vadd.f32 %v8312, %v8313
        %v8315 = vrot.slane %v8314, 1
        %v8316 = vadd.f32 %v8314, %v8315
        %v8317 = vsel %vm3321, %v8217, 0.0
        %v8318 = vrot.slane %v8317, 4
        %v8319 = vadd.f32 %v8317, %v8318
        %v8320 = vrot.slane %v8319, 2
        %v8321 = vadd.f32 %v8319, %v8320
        %v8322 = vrot.slane %v8321, 1
        %v8323 = vadd.f32 %v8321, %v8322
        %v8324 = vsel %vm3321, %v8218, 0.0
        %v8325 = vrot.slane %v8324, 4
        %v8326 = vadd.f32 %v8324, %v8325
        %v8327 = vrot.slane %v8326, 2
        %v8328 = vadd.f32 %v8326, %v8327
        %v8329 = vrot.slane %v8328, 1
        %v8330 = vadd.f32 %v8328, %v8329
        %v8331 = vpack.c.bf16 %v8225, %v8225
        %v8332 = vpack.c.bf16 %v8232, %v8232
        %v8333 = vpack.c.bf16 %v8239, %v8239
        %v8334 = vpack.c.bf16 %v8246, %v8246
        %v8335 = vpack.c.bf16 %v8253, %v8253
        %v8336 = vpack.c.bf16 %v8260, %v8260
        %v8337 = vpack.c.bf16 %v8267, %v8267
        %v8338 = vpack.c.bf16 %v8274, %v8274
        %v8339 = vpack.c.bf16 %v8281, %v8281
        %v8340 = vpack.c.bf16 %v8288, %v8288
        %v8341 = vpack.c.bf16 %v8295, %v8295
        %v8342 = vpack.c.bf16 %v8302, %v8302
        %v8343 = vpack.c.bf16 %v8309, %v8309
        %v8344 = vpack.c.bf16 %v8316, %v8316
        %v8345 = vpack.c.bf16 %v8323, %v8323
        %v8346 = vpack.c.bf16 %v8330, %v8330
        %v8347 = vld [vmem:[#allocation3] sm:$0xff]
        %v8348 = vld [vmem:[#allocation3 + $0x8] sm:$0xff]
        %v8349 = vpack.c.bf16 %v8348, %v8347
        %v8366 = vunpack.c.l.b16 %v8331
        %v8367 = vunpack.c.l.b16 %v8332
        %v8368 = vunpack.c.l.b16 %v8333
        %v8369 = vunpack.c.l.b16 %v8334
        %v8370 = vunpack.c.l.b16 %v8335
        %v8371 = vunpack.c.l.b16 %v8336
        %v8372 = vunpack.c.l.b16 %v8337
        %v8373 = vunpack.c.l.b16 %v8338
        %v8374 = vunpack.c.l.b16 %v8339
        %v8375 = vunpack.c.l.b16 %v8340
        %v8376 = vunpack.c.l.b16 %v8341
        %v8377 = vunpack.c.l.b16 %v8342
        %v8378 = vunpack.c.l.b16 %v8343
        %v8379 = vunpack.c.l.b16 %v8344
        %v8380 = vunpack.c.l.b16 %v8345
        %v8381 = vunpack.c.l.b16 %v8346
        %v8382 = vsel %vm3485, %v8367, %v8366
        %v8383 = vsel %vm3487, %v8368, %v8382
        %v8384 = vsel %vm3489, %v8369, %v8383
        %v8385 = vsel %vm3491, %v8370, %v8384
        %v8386 = vsel %vm3493, %v8371, %v8385
        %v8387 = vsel %vm3495, %v8372, %v8386
        %v8388 = vsel %vm3497, %v8373, %v8387
        %v8389 = vsel %vm3485, %v8375, %v8374
        %v8390 = vsel %vm3487, %v8376, %v8389
        %v8391 = vsel %vm3489, %v8377, %v8390
        %v8392 = vsel %vm3491, %v8378, %v8391
        %v8393 = vsel %vm3493, %v8379, %v8392
        %v8394 = vsel %vm3495, %v8380, %v8393
        %v8395 = vsel %vm3497, %v8381, %v8394
        %v8396 = vpack.c.b16 %v8395, %v8388
        %8398 = vrot.lane.b32.xlu0 %v8349, 32
        %v8399 = vpop.permute.xlu0 %8398
        %v8402 = vsel %vm1322, %v8396, 0
        %8404 = vmatprep.subr.bf16.mxu0 0
        %8405 = vmatpush1.bf16.msra.mxu0 %v8399
        %8406 = vmatprep.subr.bf16.mxu0 0
        %8407 = vmatpush1.bf16.msra.mxu0 0
        %8408 = vmatprep.subr.bf16.mxu0 0
        %8409 = vmatpush1.bf16.msra.mxu0 0
        %8410 = vmatprep.subr.bf16.mxu0 0
        %8411 = vmatpush1.bf16.msra.mxu0 0
        %8412 = vmatprep.subr.bf16.mxu0 0
        %8413 = vmatpush1.bf16.msra.mxu0 0
        %8414 = vmatprep.subr.bf16.mxu0 0
        %8415 = vmatpush1.bf16.msra.mxu0 0
        %8416 = vmatprep.subr.bf16.mxu0 0
        %8417 = vmatpush1.bf16.msra.mxu0 0
        %8418 = vmatprep.subr.bf16.mxu0 0
        %8419 = vmatpush1.bf16.msra.mxu0 0
        %8420 = vmatprep.subr.bf16.mxu0 0
        %8421 = vmatpush1.bf16.msra.mxu0 0
        %8422 = vmatprep.subr.bf16.mxu0 0
        %8423 = vmatpush1.bf16.msra.mxu0 0
        %8424 = vmatprep.subr.bf16.mxu0 0
        %8425 = vmatpush1.bf16.msra.mxu0 0
        %8426 = vmatprep.subr.bf16.mxu0 0
        %8427 = vmatpush1.bf16.msra.mxu0 0
        %8428 = vmatprep.subr.bf16.mxu0 0
        %8429 = vmatpush1.bf16.msra.mxu0 0
        %8430 = vmatprep.subr.bf16.mxu0 0
        %8431 = vmatpush1.bf16.msra.mxu0 0
        %8432 = vmatprep.subr.bf16.mxu0 0
        %8433 = vmatpush1.bf16.msra.mxu0 0
        %8434 = vmatprep.subr.bf16.mxu0 0
        %8435 = vmatpush1.bf16.msra.mxu0 0
        %8436 = vmatprep.mubr.bf16.mxu0 0
        %8437 = vmatmul.mubr.bf16.gmra.mrb[0].mxu0 %v8402
        %v8438 = vpop.f32.mrb[0].mxu0
        %v8439 = vadd.f32 0.0, %v8438
        %v8440 = vpop.f32.mrb[0].mxu0
        %v8441 = vpop.f32.mrb[0].mxu0
        %v8442 = vadd.f32 0.0, %v8441
        %v8443 = vpop.f32.mrb[0].mxu0
        %8444 = vdwg.mxu0
        %8447 = vrot.lane.b32.xlu0 %v8439, 96
        %v8448 = vpop.permute.xlu0 %8447
        %8449 = vrot.lane.b32.xlu0 %v8442, 96
        %v8450 = vpop.permute.xlu0 %8449
        %8453 = vst.msk [vmem:[#allocation6] sm:$0xff] %vm2313, %v8448
        %8454 = vst.msk [vmem:[#allocation6 + $0x8] sm:$0xff] %vm2313, %v8450
        %v8455 = vld [vmem:[#allocation5] sm:$0xff]
        %v8456 = vld [vmem:[#allocation5 + $0x8] sm:$0xff]
        %vm8457 = vcmask 786144
        %v8458 = vsel %vm8457, %v8455, -inf
        %8459 = vmax.xlane.f32.xlu0 %v8458
        %v8460 = vpop.xlane.xlu0 %8459
        %v8461 = vsel %vm8457, %v8456, -inf
        %8462 = vmax.xlane.f32.xlu0 %v8461
        %v8463 = vpop.xlane.xlu0 %8462
        %v8464 = vsub.f32 %v8455, %v8460
        %v8465 = vsub.f32 %v8456, %v8463
        %v8466 = vmul.f32 %v8464, 1.442695
        %v8467 = vpow.pop %v8466
        %v8468 = vmul.f32 %v8465, 1.442695
        %v8469 = vpow.pop %v8468
        %8472 = vrot.lane.b32.xlu0 %v8467, 36
        %v8473 = vpop.permute.xlu0 %8472
        %8474 = vrot.lane.b32.xlu0 %v8469, 36
        %v8475 = vpop.permute.xlu0 %8474
        %v8478 = vsel %vm2778, %v8473, 0.0
        %8479 = vadd.xlane.f32.xlu0 %v8478
        %v8480 = vpop.xlane.xlu0 %8479
        %v8481 = vsel %vm2778, %v8475, 0.0
        %8482 = vadd.xlane.f32.xlu0 %v8481
        %v8483 = vpop.xlane.xlu0 %8482
        %v8484 = vrcp.pop %v8480
        %v8485 = vrcp.pop %v8483
        %v8486 = vmul.f32 %v8467, %v8484
        %v8487 = vmul.f32 %v8469, %v8485
        %v8488 = vadd.f32 %v2749, %v8455
        %v8489 = vadd.f32 %v2750, %v8456
        %v8490 = vadd.f32 %v2745, %v8455
        %v8491 = vadd.f32 %v2746, %v8456
        %v8492 = vlaneseq
        %v8493 = vshrl.u32 %v8492, 7
        %v8494 = vsub.s32 0, %v8493
        %v8495 = vrot.slane %v8488, %v8494
        %s8497 = sor.u32 256, 28
        %8498 = vbcast.lane.b32.xlu0 %v8495, %s8497
        %v8499 = vpop.permute.xlu0 %8498
        %v8500 = vlaneseq
        %v8501 = vshrl.u32 %v8500, 7
        %v8502 = vsub.s32 1, %v8501
        %v8503 = vrot.slane %v8488, %v8502
        %s8505 = sor.u32 256, 28
        %8506 = vbcast.lane.b32.xlu0 %v8503, %s8505
        %v8507 = vpop.permute.xlu0 %8506
        %v8508 = vlaneseq
        %v8509 = vshrl.u32 %v8508, 7
        %v8510 = vsub.s32 2, %v8509
        %v8511 = vrot.slane %v8488, %v8510
        %s8513 = sor.u32 256, 28
        %8514 = vbcast.lane.b32.xlu0 %v8511, %s8513
        %v8515 = vpop.permute.xlu0 %8514
        %v8516 = vlaneseq
        %v8517 = vshrl.u32 %v8516, 7
        %v8518 = vsub.s32 3, %v8517
        %v8519 = vrot.slane %v8488, %v8518
        %s8521 = sor.u32 256, 28
        %8522 = vbcast.lane.b32.xlu0 %v8519, %s8521
        %v8523 = vpop.permute.xlu0 %8522
        %v8524 = vlaneseq
        %v8525 = vshrl.u32 %v8524, 7
        %v8526 = vsub.s32 4, %v8525
        %v8527 = vrot.slane %v8488, %v8526
        %s8529 = sor.u32 256, 28
        %8530 = vbcast.lane.b32.xlu0 %v8527, %s8529
        %v8531 = vpop.permute.xlu0 %8530
        %v8532 = vlaneseq
        %v8533 = vshrl.u32 %v8532, 7
        %v8534 = vsub.s32 5, %v8533
        %v8535 = vrot.slane %v8488, %v8534
        %s8537 = sor.u32 256, 28
        %8538 = vbcast.lane.b32.xlu0 %v8535, %s8537
        %v8539 = vpop.permute.xlu0 %8538
        %v8540 = vlaneseq
        %v8541 = vshrl.u32 %v8540, 7
        %v8542 = vsub.s32 6, %v8541
        %v8543 = vrot.slane %v8488, %v8542
        %s8545 = sor.u32 256, 28
        %8546 = vbcast.lane.b32.xlu0 %v8543, %s8545
        %v8547 = vpop.permute.xlu0 %8546
        %v8548 = vlaneseq
        %v8549 = vshrl.u32 %v8548, 7
        %v8550 = vsub.s32 7, %v8549
        %v8551 = vrot.slane %v8488, %v8550
        %s8553 = sor.u32 256, 28
        %8554 = vbcast.lane.b32.xlu0 %v8551, %s8553
        %v8555 = vpop.permute.xlu0 %8554
        %v8556 = vlaneseq
        %v8557 = vshrl.u32 %v8556, 7
        %v8558 = vsub.s32 0, %v8557
        %v8559 = vrot.slane %v8489, %v8558
        %s8561 = sor.u32 256, 28
        %8562 = vbcast.lane.b32.xlu0 %v8559, %s8561
        %v8563 = vpop.permute.xlu0 %8562
        %v8564 = vlaneseq
        %v8565 = vshrl.u32 %v8564, 7
        %v8566 = vsub.s32 1, %v8565
        %v8567 = vrot.slane %v8489, %v8566
        %s8569 = sor.u32 256, 28
        %8570 = vbcast.lane.b32.xlu0 %v8567, %s8569
        %v8571 = vpop.permute.xlu0 %8570
        %v8572 = vlaneseq
        %v8573 = vshrl.u32 %v8572, 7
        %v8574 = vsub.s32 2, %v8573
        %v8575 = vrot.slane %v8489, %v8574
        %s8577 = sor.u32 256, 28
        %8578 = vbcast.lane.b32.xlu0 %v8575, %s8577
        %v8579 = vpop.permute.xlu0 %8578
        %v8580 = vlaneseq
        %v8581 = vshrl.u32 %v8580, 7
        %v8582 = vsub.s32 3, %v8581
        %v8583 = vrot.slane %v8489, %v8582
        %s8585 = sor.u32 256, 28
        %8586 = vbcast.lane.b32.xlu0 %v8583, %s8585
        %v8587 = vpop.permute.xlu0 %8586
        %v8588 = vlaneseq
        %v8589 = vshrl.u32 %v8588, 7
        %v8590 = vsub.s32 4, %v8589
        %v8591 = vrot.slane %v8489, %v8590
        %s8593 = sor.u32 256, 28
        %8594 = vbcast.lane.b32.xlu0 %v8591, %s8593
        %v8595 = vpop.permute.xlu0 %8594
        %v8596 = vlaneseq
        %v8597 = vshrl.u32 %v8596, 7
        %v8598 = vsub.s32 5, %v8597
        %v8599 = vrot.slane %v8489, %v8598
        %s8601 = sor.u32 256, 28
        %8602 = vbcast.lane.b32.xlu0 %v8599, %s8601
        %v8603 = vpop.permute.xlu0 %8602
        %v8604 = vlaneseq
        %v8605 = vshrl.u32 %v8604, 7
        %v8606 = vsub.s32 6, %v8605
        %v8607 = vrot.slane %v8489, %v8606
        %s8609 = sor.u32 256, 28
        %8610 = vbcast.lane.b32.xlu0 %v8607, %s8609
        %v8611 = vpop.permute.xlu0 %8610
        %v8612 = vlaneseq
        %v8613 = vshrl.u32 %v8612, 7
        %v8614 = vsub.s32 7, %v8613
        %v8615 = vrot.slane %v8489, %v8614
        %s8617 = sor.u32 256, 28
        %8618 = vbcast.lane.b32.xlu0 %v8615, %s8617
        %v8619 = vpop.permute.xlu0 %8618
        %v8620 = vsub.f32 %v8499, %v2754
        %v8621 = vsub.f32 %v8507, %v2754
        %v8622 = vsub.f32 %v8515, %v2754
        %v8623 = vsub.f32 %v8523, %v2754
        %v8624 = vsub.f32 %v8531, %v2754
        %v8625 = vsub.f32 %v8539, %v2754
        %v8626 = vsub.f32 %v8547, %v2754
        %v8627 = vsub.f32 %v8555, %v2754
        %v8628 = vsub.f32 %v8563, %v2754
        %v8629 = vsub.f32 %v8571, %v2754
        %v8630 = vsub.f32 %v8579, %v2754
        %v8631 = vsub.f32 %v8587, %v2754
        %v8632 = vsub.f32 %v8595, %v2754
        %v8633 = vsub.f32 %v8603, %v2754
        %v8634 = vsub.f32 %v8611, %v2754
        %v8635 = vsub.f32 %v8619, %v2754
        %v8636 = vand.u32 2147483647, %v8620
        %v8637 = vand.u32 2147483647, %v8621
        %v8638 = vand.u32 2147483647, %v8622
        %v8639 = vand.u32 2147483647, %v8623
        %v8640 = vand.u32 2147483647, %v8624
        %v8641 = vand.u32 2147483647, %v8625
        %v8642 = vand.u32 2147483647, %v8626
        %v8643 = vand.u32 2147483647, %v8627
        %v8644 = vand.u32 2147483647, %v8628
        %v8645 = vand.u32 2147483647, %v8629
        %v8646 = vand.u32 2147483647, %v8630
        %v8647 = vand.u32 2147483647, %v8631
        %v8648 = vand.u32 2147483647, %v8632
        %v8649 = vand.u32 2147483647, %v8633
        %v8650 = vand.u32 2147483647, %v8634
        %v8651 = vand.u32 2147483647, %v8635
        %v8652 = vsub.f32 1.0, %v8636
        %v8653 = vsub.f32 1.0, %v8637
        %v8654 = vsub.f32 1.0, %v8638
        %v8655 = vsub.f32 1.0, %v8639
        %v8656 = vsub.f32 1.0, %v8640
        %v8657 = vsub.f32 1.0, %v8641
        %v8658 = vsub.f32 1.0, %v8642
        %v8659 = vsub.f32 1.0, %v8643
        %v8660 = vsub.f32 1.0, %v8644
        %v8661 = vsub.f32 1.0, %v8645
        %v8662 = vsub.f32 1.0, %v8646
        %v8663 = vsub.f32 1.0, %v8647
        %v8664 = vsub.f32 1.0, %v8648
        %v8665 = vsub.f32 1.0, %v8649
        %v8666 = vsub.f32 1.0, %v8650
        %v8667 = vsub.f32 1.0, %v8651
        %v8668 = vmax.f32 %v8652, 0.0
        %v8669 = vmax.f32 %v8653, 0.0
        %v8670 = vmax.f32 %v8654, 0.0
        %v8671 = vmax.f32 %v8655, 0.0
        %v8672 = vmax.f32 %v8656, 0.0
        %v8673 = vmax.f32 %v8657, 0.0
        %v8674 = vmax.f32 %v8658, 0.0
        %v8675 = vmax.f32 %v8659, 0.0
        %v8676 = vmax.f32 %v8660, 0.0
        %v8677 = vmax.f32 %v8661, 0.0
        %v8678 = vmax.f32 %v8662, 0.0
        %v8679 = vmax.f32 %v8663, 0.0
        %v8680 = vmax.f32 %v8664, 0.0
        %v8681 = vmax.f32 %v8665, 0.0
        %v8682 = vmax.f32 %v8666, 0.0
        %v8683 = vmax.f32 %v8667, 0.0
        %v8684 = vlaneseq
        %v8685 = vshrl.u32 %v8684, 7
        %v8686 = vsub.s32 0, %v8685
        %v8687 = vrot.slane %v8490, %v8686
        %s8689 = sor.u32 256, 60
        %8690 = vbcast.lane.b32.xlu0 %v8687, %s8689
        %v8691 = vpop.permute.xlu0 %8690
        %v8692 = vlaneseq
        %v8693 = vshrl.u32 %v8692, 7
        %v8694 = vsub.s32 1, %v8693
        %v8695 = vrot.slane %v8490, %v8694
        %s8697 = sor.u32 256, 60
        %8698 = vbcast.lane.b32.xlu0 %v8695, %s8697
        %v8699 = vpop.permute.xlu0 %8698
        %v8700 = vlaneseq
        %v8701 = vshrl.u32 %v8700, 7
        %v8702 = vsub.s32 2, %v8701
        %v8703 = vrot.slane %v8490, %v8702
        %s8705 = sor.u32 256, 60
        %8706 = vbcast.lane.b32.xlu0 %v8703, %s8705
        %v8707 = vpop.permute.xlu0 %8706
        %v8708 = vlaneseq
        %v8709 = vshrl.u32 %v8708, 7
        %v8710 = vsub.s32 3, %v8709
        %v8711 = vrot.slane %v8490, %v8710
        %s8713 = sor.u32 256, 60
        %8714 = vbcast.lane.b32.xlu0 %v8711, %s8713
        %v8715 = vpop.permute.xlu0 %8714
        %v8716 = vlaneseq
        %v8717 = vshrl.u32 %v8716, 7
        %v8718 = vsub.s32 4, %v8717
        %v8719 = vrot.slane %v8490, %v8718
        %s8721 = sor.u32 256, 60
        %8722 = vbcast.lane.b32.xlu0 %v8719, %s8721
        %v8723 = vpop.permute.xlu0 %8722
        %v8724 = vlaneseq
        %v8725 = vshrl.u32 %v8724, 7
        %v8726 = vsub.s32 5, %v8725
        %v8727 = vrot.slane %v8490, %v8726
        %s8729 = sor.u32 256, 60
        %8730 = vbcast.lane.b32.xlu0 %v8727, %s8729
        %v8731 = vpop.permute.xlu0 %8730
        %v8732 = vlaneseq
        %v8733 = vshrl.u32 %v8732, 7
        %v8734 = vsub.s32 6, %v8733
        %v8735 = vrot.slane %v8490, %v8734
        %s8737 = sor.u32 256, 60
        %8738 = vbcast.lane.b32.xlu0 %v8735, %s8737
        %v8739 = vpop.permute.xlu0 %8738
        %v8740 = vlaneseq
        %v8741 = vshrl.u32 %v8740, 7
        %v8742 = vsub.s32 7, %v8741
        %v8743 = vrot.slane %v8490, %v8742
        %s8745 = sor.u32 256, 60
        %8746 = vbcast.lane.b32.xlu0 %v8743, %s8745
        %v8747 = vpop.permute.xlu0 %8746
        %v8748 = vlaneseq
        %v8749 = vshrl.u32 %v8748, 7
        %v8750 = vsub.s32 0, %v8749
        %v8751 = vrot.slane %v8491, %v8750
        %s8753 = sor.u32 256, 60
        %8754 = vbcast.lane.b32.xlu0 %v8751, %s8753
        %v8755 = vpop.permute.xlu0 %8754
        %v8756 = vlaneseq
        %v8757 = vshrl.u32 %v8756, 7
        %v8758 = vsub.s32 1, %v8757
        %v8759 = vrot.slane %v8491, %v8758
        %s8761 = sor.u32 256, 60
        %8762 = vbcast.lane.b32.xlu0 %v8759, %s8761
        %v8763 = vpop.permute.xlu0 %8762
        %v8764 = vlaneseq
        %v8765 = vshrl.u32 %v8764, 7
        %v8766 = vsub.s32 2, %v8765
        %v8767 = vrot.slane %v8491, %v8766
        %s8769 = sor.u32 256, 60
        %8770 = vbcast.lane.b32.xlu0 %v8767, %s8769
        %v8771 = vpop.permute.xlu0 %8770
        %v8772 = vlaneseq
        %v8773 = vshrl.u32 %v8772, 7
        %v8774 = vsub.s32 3, %v8773
        %v8775 = vrot.slane %v8491, %v8774
        %s8777 = sor.u32 256, 60
        %8778 = vbcast.lane.b32.xlu0 %v8775, %s8777
        %v8779 = vpop.permute.xlu0 %8778
        %v8780 = vlaneseq
        %v8781 = vshrl.u32 %v8780, 7
        %v8782 = vsub.s32 4, %v8781
        %v8783 = vrot.slane %v8491, %v8782
        %s8785 = sor.u32 256, 60
        %8786 = vbcast.lane.b32.xlu0 %v8783, %s8785
        %v8787 = vpop.permute.xlu0 %8786
        %v8788 = vlaneseq
        %v8789 = vshrl.u32 %v8788, 7
        %v8790 = vsub.s32 5, %v8789
        %v8791 = vrot.slane %v8491, %v8790
        %s8793 = sor.u32 256, 60
        %8794 = vbcast.lane.b32.xlu0 %v8791, %s8793
        %v8795 = vpop.permute.xlu0 %8794
        %v8796 = vlaneseq
        %v8797 = vshrl.u32 %v8796, 7
        %v8798 = vsub.s32 6, %v8797
        %v8799 = vrot.slane %v8491, %v8798
        %s8801 = sor.u32 256, 60
        %8802 = vbcast.lane.b32.xlu0 %v8799, %s8801
        %v8803 = vpop.permute.xlu0 %8802
        %v8804 = vlaneseq
        %v8805 = vshrl.u32 %v8804, 7
        %v8806 = vsub.s32 7, %v8805
        %v8807 = vrot.slane %v8491, %v8806
        %s8809 = sor.u32 256, 60
        %8810 = vbcast.lane.b32.xlu0 %v8807, %s8809
        %v8811 = vpop.permute.xlu0 %8810
        %v8812 = vsub.f32 %v8691, %v2752
        %v8813 = vsub.f32 %v8699, %v2752
        %v8814 = vsub.f32 %v8707, %v2752
        %v8815 = vsub.f32 %v8715, %v2752
        %v8816 = vsub.f32 %v8723, %v2752
        %v8817 = vsub.f32 %v8731, %v2752
        %v8818 = vsub.f32 %v8739, %v2752
        %v8819 = vsub.f32 %v8747, %v2752
        %v8820 = vsub.f32 %v8755, %v2752
        %v8821 = vsub.f32 %v8763, %v2752
        %v8822 = vsub.f32 %v8771, %v2752
        %v8823 = vsub.f32 %v8779, %v2752
        %v8824 = vsub.f32 %v8787, %v2752
        %v8825 = vsub.f32 %v8795, %v2752
        %v8826 = vsub.f32 %v8803, %v2752
        %v8827 = vsub.f32 %v8811, %v2752
        %v8828 = vand.u32 2147483647, %v8812
        %v8829 = vand.u32 2147483647, %v8813
        %v8830 = vand.u32 2147483647, %v8814
        %v8831 = vand.u32 2147483647, %v8815
        %v8832 = vand.u32 2147483647, %v8816
        %v8833 = vand.u32 2147483647, %v8817
        %v8834 = vand.u32 2147483647, %v8818
        %v8835 = vand.u32 2147483647, %v8819
        %v8836 = vand.u32 2147483647, %v8820
        %v8837 = vand.u32 2147483647, %v8821
        %v8838 = vand.u32 2147483647, %v8822
        %v8839 = vand.u32 2147483647, %v8823
        %v8840 = vand.u32 2147483647, %v8824
        %v8841 = vand.u32 2147483647, %v8825
        %v8842 = vand.u32 2147483647, %v8826
        %v8843 = vand.u32 2147483647, %v8827
        %v8844 = vsub.f32 1.0, %v8828
        %v8845 = vsub.f32 1.0, %v8829
        %v8846 = vsub.f32 1.0, %v8830
        %v8847 = vsub.f32 1.0, %v8831
        %v8848 = vsub.f32 1.0, %v8832
        %v8849 = vsub.f32 1.0, %v8833
        %v8850 = vsub.f32 1.0, %v8834
        %v8851 = vsub.f32 1.0, %v8835
        %v8852 = vsub.f32 1.0, %v8836
        %v8853 = vsub.f32 1.0, %v8837
        %v8854 = vsub.f32 1.0, %v8838
        %v8855 = vsub.f32 1.0, %v8839
        %v8856 = vsub.f32 1.0, %v8840
        %v8857 = vsub.f32 1.0, %v8841
        %v8858 = vsub.f32 1.0, %v8842
        %v8859 = vsub.f32 1.0, %v8843
        %v8860 = vmax.f32 %v8844, 0.0
        %v8861 = vmax.f32 %v8845, 0.0
        %v8862 = vmax.f32 %v8846, 0.0
        %v8863 = vmax.f32 %v8847, 0.0
        %v8864 = vmax.f32 %v8848, 0.0
        %v8865 = vmax.f32 %v8849, 0.0
        %v8866 = vmax.f32 %v8850, 0.0
        %v8867 = vmax.f32 %v8851, 0.0
        %v8868 = vmax.f32 %v8852, 0.0
        %v8869 = vmax.f32 %v8853, 0.0
        %v8870 = vmax.f32 %v8854, 0.0
        %v8871 = vmax.f32 %v8855, 0.0
        %v8872 = vmax.f32 %v8856, 0.0
        %v8873 = vmax.f32 %v8857, 0.0
        %v8874 = vmax.f32 %v8858, 0.0
        %v8875 = vmax.f32 %v8859, 0.0
        %v8876 = vlaneseq
        %v8877 = vshrl.u32 %v8876, 7
        %v8878 = vsub.s32 0, %v8877
        %v8879 = vrot.slane %v8486, %v8878
        %s8881 = sor.u32 256, 92
        %8882 = vbcast.lane.b32.xlu0 %v8879, %s8881
        %v8883 = vpop.permute.xlu0 %8882
        %v8884 = vlaneseq
        %v8885 = vshrl.u32 %v8884, 7
        %v8886 = vsub.s32 1, %v8885
        %v8887 = vrot.slane %v8486, %v8886
        %s8889 = sor.u32 256, 92
        %8890 = vbcast.lane.b32.xlu0 %v8887, %s8889
        %v8891 = vpop.permute.xlu0 %8890
        %v8892 = vlaneseq
        %v8893 = vshrl.u32 %v8892, 7
        %v8894 = vsub.s32 2, %v8893
        %v8895 = vrot.slane %v8486, %v8894
        %s8897 = sor.u32 256, 92
        %8898 = vbcast.lane.b32.xlu0 %v8895, %s8897
        %v8899 = vpop.permute.xlu0 %8898
        %v8900 = vlaneseq
        %v8901 = vshrl.u32 %v8900, 7
        %v8902 = vsub.s32 3, %v8901
        %v8903 = vrot.slane %v8486, %v8902
        %s8905 = sor.u32 256, 92
        %8906 = vbcast.lane.b32.xlu0 %v8903, %s8905
        %v8907 = vpop.permute.xlu0 %8906
        %v8908 = vlaneseq
        %v8909 = vshrl.u32 %v8908, 7
        %v8910 = vsub.s32 4, %v8909
        %v8911 = vrot.slane %v8486, %v8910
        %s8913 = sor.u32 256, 92
        %8914 = vbcast.lane.b32.xlu0 %v8911, %s8913
        %v8915 = vpop.permute.xlu0 %8914
        %v8916 = vlaneseq
        %v8917 = vshrl.u32 %v8916, 7
        %v8918 = vsub.s32 5, %v8917
        %v8919 = vrot.slane %v8486, %v8918
        %s8921 = sor.u32 256, 92
        %8922 = vbcast.lane.b32.xlu0 %v8919, %s8921
        %v8923 = vpop.permute.xlu0 %8922
        %v8924 = vlaneseq
        %v8925 = vshrl.u32 %v8924, 7
        %v8926 = vsub.s32 6, %v8925
        %v8927 = vrot.slane %v8486, %v8926
        %s8929 = sor.u32 256, 92
        %8930 = vbcast.lane.b32.xlu0 %v8927, %s8929
        %v8931 = vpop.permute.xlu0 %8930
        %v8932 = vlaneseq
        %v8933 = vshrl.u32 %v8932, 7
        %v8934 = vsub.s32 7, %v8933
        %v8935 = vrot.slane %v8486, %v8934
        %s8937 = sor.u32 256, 92
        %8938 = vbcast.lane.b32.xlu0 %v8935, %s8937
        %v8939 = vpop.permute.xlu0 %8938
        %v8940 = vlaneseq
        %v8941 = vshrl.u32 %v8940, 7
        %v8942 = vsub.s32 0, %v8941
        %v8943 = vrot.slane %v8487, %v8942
        %s8945 = sor.u32 256, 92
        %8946 = vbcast.lane.b32.xlu0 %v8943, %s8945
        %v8947 = vpop.permute.xlu0 %8946
        %v8948 = vlaneseq
        %v8949 = vshrl.u32 %v8948, 7
        %v8950 = vsub.s32 1, %v8949
        %v8951 = vrot.slane %v8487, %v8950
        %s8953 = sor.u32 256, 92
        %8954 = vbcast.lane.b32.xlu0 %v8951, %s8953
        %v8955 = vpop.permute.xlu0 %8954
        %v8956 = vlaneseq
        %v8957 = vshrl.u32 %v8956, 7
        %v8958 = vsub.s32 2, %v8957
        %v8959 = vrot.slane %v8487, %v8958
        %s8961 = sor.u32 256, 92
        %8962 = vbcast.lane.b32.xlu0 %v8959, %s8961
        %v8963 = vpop.permute.xlu0 %8962
        %v8964 = vlaneseq
        %v8965 = vshrl.u32 %v8964, 7
        %v8966 = vsub.s32 3, %v8965
        %v8967 = vrot.slane %v8487, %v8966
        %s8969 = sor.u32 256, 92
        %8970 = vbcast.lane.b32.xlu0 %v8967, %s8969
        %v8971 = vpop.permute.xlu0 %8970
        %v8972 = vlaneseq
        %v8973 = vshrl.u32 %v8972, 7
        %v8974 = vsub.s32 4, %v8973
        %v8975 = vrot.slane %v8487, %v8974
        %s8977 = sor.u32 256, 92
        %8978 = vbcast.lane.b32.xlu0 %v8975, %s8977
        %v8979 = vpop.permute.xlu0 %8978
        %v8980 = vlaneseq
        %v8981 = vshrl.u32 %v8980, 7
        %v8982 = vsub.s32 5, %v8981
        %v8983 = vrot.slane %v8487, %v8982
        %s8985 = sor.u32 256, 92
        %8986 = vbcast.lane.b32.xlu0 %v8983, %s8985
        %v8987 = vpop.permute.xlu0 %8986
        %v8988 = vlaneseq
        %v8989 = vshrl.u32 %v8988, 7
        %v8990 = vsub.s32 6, %v8989
        %v8991 = vrot.slane %v8487, %v8990
        %s8993 = sor.u32 256, 92
        %8994 = vbcast.lane.b32.xlu0 %v8991, %s8993
        %v8995 = vpop.permute.xlu0 %8994
        %v8996 = vlaneseq
        %v8997 = vshrl.u32 %v8996, 7
        %v8998 = vsub.s32 7, %v8997
        %v8999 = vrot.slane %v8487, %v8998
        %s9001 = sor.u32 256, 92
        %9002 = vbcast.lane.b32.xlu0 %v8999, %s9001
        %v9003 = vpop.permute.xlu0 %9002
        %v9004 = vmul.f32 %v8883, %v8668
        %v9005 = vmul.f32 %v8891, %v8669
        %v9006 = vmul.f32 %v8899, %v8670
        %v9007 = vmul.f32 %v8907, %v8671
        %v9008 = vmul.f32 %v8915, %v8672
        %v9009 = vmul.f32 %v8923, %v8673
        %v9010 = vmul.f32 %v8931, %v8674
        %v9011 = vmul.f32 %v8939, %v8675
        %v9012 = vmul.f32 %v8947, %v8676
        %v9013 = vmul.f32 %v8955, %v8677
        %v9014 = vmul.f32 %v8963, %v8678
        %v9015 = vmul.f32 %v8971, %v8679
        %v9016 = vmul.f32 %v8979, %v8680
        %v9017 = vmul.f32 %v8987, %v8681
        %v9018 = vmul.f32 %v8995, %v8682
        %v9019 = vmul.f32 %v9003, %v8683
        %v9020 = vmul.f32 %v9004, %v8860
        %v9021 = vmul.f32 %v9005, %v8861
        %v9022 = vmul.f32 %v9006, %v8862
        %v9023 = vmul.f32 %v9007, %v8863
        %v9024 = vmul.f32 %v9008, %v8864
        %v9025 = vmul.f32 %v9009, %v8865
        %v9026 = vmul.f32 %v9010, %v8866
        %v9027 = vmul.f32 %v9011, %v8867
        %v9028 = vmul.f32 %v9012, %v8868
        %v9029 = vmul.f32 %v9013, %v8869
        %v9030 = vmul.f32 %v9014, %v8870
        %v9031 = vmul.f32 %v9015, %v8871
        %v9032 = vmul.f32 %v9016, %v8872
        %v9033 = vmul.f32 %v9017, %v8873
        %v9034 = vmul.f32 %v9018, %v8874
        %v9035 = vmul.f32 %v9019, %v8875
        %v9036 = vsel %vm3321, %v9020, 0.0
        %v9037 = vrot.slane %v9036, 4
        %v9038 = vadd.f32 %v9036, %v9037
        %v9039 = vrot.slane %v9038, 2
        %v9040 = vadd.f32 %v9038, %v9039
        %v9041 = vrot.slane %v9040, 1
        %v9042 = vadd.f32 %v9040, %v9041
        %v9043 = vsel %vm3321, %v9021, 0.0
        %v9044 = vrot.slane %v9043, 4
        %v9045 = vadd.f32 %v9043, %v9044
        %v9046 = vrot.slane %v9045, 2
        %v9047 = vadd.f32 %v9045, %v9046
        %v9048 = vrot.slane %v9047, 1
        %v9049 = vadd.f32 %v9047, %v9048
        %v9050 = vsel %vm3321, %v9022, 0.0
        %v9051 = vrot.slane %v9050, 4
        %v9052 = vadd.f32 %v9050, %v9051
        %v9053 = vrot.slane %v9052, 2
        %v9054 = vadd.f32 %v9052, %v9053
        %v9055 = vrot.slane %v9054, 1
        %v9056 = vadd.f32 %v9054, %v9055
        %v9057 = vsel %vm3321, %v9023, 0.0
        %v9058 = vrot.slane %v9057, 4
        %v9059 = vadd.f32 %v9057, %v9058
        %v9060 = vrot.slane %v9059, 2
        %v9061 = vadd.f32 %v9059, %v9060
        %v9062 = vrot.slane %v9061, 1
        %v9063 = vadd.f32 %v9061, %v9062
        %v9064 = vsel %vm3321, %v9024, 0.0
        %v9065 = vrot.slane %v9064, 4
        %v9066 = vadd.f32 %v9064, %v9065
        %v9067 = vrot.slane %v9066, 2
        %v9068 = vadd.f32 %v9066, %v9067
        %v9069 = vrot.slane %v9068, 1
        %v9070 = vadd.f32 %v9068, %v9069
        %v9071 = vsel %vm3321, %v9025, 0.0
        %v9072 = vrot.slane %v9071, 4
        %v9073 = vadd.f32 %v9071, %v9072
        %v9074 = vrot.slane %v9073, 2
        %v9075 = vadd.f32 %v9073, %v9074
        %v9076 = vrot.slane %v9075, 1
        %v9077 = vadd.f32 %v9075, %v9076
        %v9078 = vsel %vm3321, %v9026, 0.0
        %v9079 = vrot.slane %v9078, 4
        %v9080 = vadd.f32 %v9078, %v9079
        %v9081 = vrot.slane %v9080, 2
        %v9082 = vadd.f32 %v9080, %v9081
        %v9083 = vrot.slane %v9082, 1
        %v9084 = vadd.f32 %v9082, %v9083
        %v9085 = vsel %vm3321, %v9027, 0.0
        %v9086 = vrot.slane %v9085, 4
        %v9087 = vadd.f32 %v9085, %v9086
        %v9088 = vrot.slane %v9087, 2
        %v9089 = vadd.f32 %v9087, %v9088
        %v9090 = vrot.slane %v9089, 1
        %v9091 = vadd.f32 %v9089, %v9090
        %v9092 = vsel %vm3321, %v9028, 0.0
        %v9093 = vrot.slane %v9092, 4
        %v9094 = vadd.f32 %v9092, %v9093
        %v9095 = vrot.slane %v9094, 2
        %v9096 = vadd.f32 %v9094, %v9095
        %v9097 = vrot.slane %v9096, 1
        %v9098 = vadd.f32 %v9096, %v9097
        %v9099 = vsel %vm3321, %v9029, 0.0
        %v9100 = vrot.slane %v9099, 4
        %v9101 = vadd.f32 %v9099, %v9100
        %v9102 = vrot.slane %v9101, 2
        %v9103 = vadd.f32 %v9101, %v9102
        %v9104 = vrot.slane %v9103, 1
        %v9105 = vadd.f32 %v9103, %v9104
        %v9106 = vsel %vm3321, %v9030, 0.0
        %v9107 = vrot.slane %v9106, 4
        %v9108 = vadd.f32 %v9106, %v9107
        %v9109 = vrot.slane %v9108, 2
        %v9110 = vadd.f32 %v9108, %v9109
        %v9111 = vrot.slane %v9110, 1
        %v9112 = vadd.f32 %v9110, %v9111
        %v9113 = vsel %vm3321, %v9031, 0.0
        %v9114 = vrot.slane %v9113, 4
        %v9115 = vadd.f32 %v9113, %v9114
        %v9116 = vrot.slane %v9115, 2
        %v9117 = vadd.f32 %v9115, %v9116
        %v9118 = vrot.slane %v9117, 1
        %v9119 = vadd.f32 %v9117, %v9118
        %v9120 = vsel %vm3321, %v9032, 0.0
        %v9121 = vrot.slane %v9120, 4
        %v9122 = vadd.f32 %v9120, %v9121
        %v9123 = vrot.slane %v9122, 2
        %v9124 = vadd.f32 %v9122, %v9123
        %v9125 = vrot.slane %v9124, 1
        %v9126 = vadd.f32 %v9124, %v9125
        %v9127 = vsel %vm3321, %v9033, 0.0
        %v9128 = vrot.slane %v9127, 4
        %v9129 = vadd.f32 %v9127, %v9128
        %v9130 = vrot.slane %v9129, 2
        %v9131 = vadd.f32 %v9129, %v9130
        %v9132 = vrot.slane %v9131, 1
        %v9133 = vadd.f32 %v9131, %v9132
        %v9134 = vsel %vm3321, %v9034, 0.0
        %v9135 = vrot.slane %v9134, 4
        %v9136 = vadd.f32 %v9134, %v9135
        %v9137 = vrot.slane %v9136, 2
        %v9138 = vadd.f32 %v9136, %v9137
        %v9139 = vrot.slane %v9138, 1
        %v9140 = vadd.f32 %v9138, %v9139
        %v9141 = vsel %vm3321, %v9035, 0.0
        %v9142 = vrot.slane %v9141, 4
        %v9143 = vadd.f32 %v9141, %v9142
        %v9144 = vrot.slane %v9143, 2
        %v9145 = vadd.f32 %v9143, %v9144
        %v9146 = vrot.slane %v9145, 1
        %v9147 = vadd.f32 %v9145, %v9146
        %v9148 = vpack.c.bf16 %v9042, %v9042
        %v9149 = vpack.c.bf16 %v9049, %v9049
        %v9150 = vpack.c.bf16 %v9056, %v9056
        %v9151 = vpack.c.bf16 %v9063, %v9063
        %v9152 = vpack.c.bf16 %v9070, %v9070
        %v9153 = vpack.c.bf16 %v9077, %v9077
        %v9154 = vpack.c.bf16 %v9084, %v9084
        %v9155 = vpack.c.bf16 %v9091, %v9091
        %v9156 = vpack.c.bf16 %v9098, %v9098
        %v9157 = vpack.c.bf16 %v9105, %v9105
        %v9158 = vpack.c.bf16 %v9112, %v9112
        %v9159 = vpack.c.bf16 %v9119, %v9119
        %v9160 = vpack.c.bf16 %v9126, %v9126
        %v9161 = vpack.c.bf16 %v9133, %v9133
        %v9162 = vpack.c.bf16 %v9140, %v9140
        %v9163 = vpack.c.bf16 %v9147, %v9147
        %v9164 = vld [vmem:[#allocation3] sm:$0xff]
        %v9165 = vld [vmem:[#allocation3 + $0x8] sm:$0xff]
        %v9166 = vpack.c.bf16 %v9165, %v9164
        %v9183 = vunpack.c.l.b16 %v9148
        %v9184 = vunpack.c.l.b16 %v9149
        %v9185 = vunpack.c.l.b16 %v9150
        %v9186 = vunpack.c.l.b16 %v9151
        %v9187 = vunpack.c.l.b16 %v9152
        %v9188 = vunpack.c.l.b16 %v9153
        %v9189 = vunpack.c.l.b16 %v9154
        %v9190 = vunpack.c.l.b16 %v9155
        %v9191 = vunpack.c.l.b16 %v9156
        %v9192 = vunpack.c.l.b16 %v9157
        %v9193 = vunpack.c.l.b16 %v9158
        %v9194 = vunpack.c.l.b16 %v9159
        %v9195 = vunpack.c.l.b16 %v9160
        %v9196 = vunpack.c.l.b16 %v9161
        %v9197 = vunpack.c.l.b16 %v9162
        %v9198 = vunpack.c.l.b16 %v9163
        %v9199 = vsel %vm3485, %v9184, %v9183
        %v9200 = vsel %vm3487, %v9185, %v9199
        %v9201 = vsel %vm3489, %v9186, %v9200
        %v9202 = vsel %vm3491, %v9187, %v9201
        %v9203 = vsel %vm3493, %v9188, %v9202
        %v9204 = vsel %vm3495, %v9189, %v9203
        %v9205 = vsel %vm3497, %v9190, %v9204
        %v9206 = vsel %vm3485, %v9192, %v9191
        %v9207 = vsel %vm3487, %v9193, %v9206
        %v9208 = vsel %vm3489, %v9194, %v9207
        %v9209 = vsel %vm3491, %v9195, %v9208
        %v9210 = vsel %vm3493, %v9196, %v9209
        %v9211 = vsel %vm3495, %v9197, %v9210
        %v9212 = vsel %vm3497, %v9198, %v9211
        %v9213 = vpack.c.b16 %v9212, %v9205
        %9215 = vrot.lane.b32.xlu0 %v9166, 16
        %v9216 = vpop.permute.xlu0 %9215
        %v9219 = vsel %vm1322, %v9213, 0
        %9221 = vmatprep.subr.bf16.mxu0 0
        %9222 = vmatpush1.bf16.msra.mxu0 %v9216
        %9223 = vmatprep.subr.bf16.mxu0 0
        %9224 = vmatpush1.bf16.msra.mxu0 0
        %9225 = vmatprep.subr.bf16.mxu0 0
        %9226 = vmatpush1.bf16.msra.mxu0 0
        %9227 = vmatprep.subr.bf16.mxu0 0
        %9228 = vmatpush1.bf16.msra.mxu0 0
        %9229 = vmatprep.subr.bf16.mxu0 0
        %9230 = vmatpush1.bf16.msra.mxu0 0
        %9231 = vmatprep.subr.bf16.mxu0 0
        %9232 = vmatpush1.bf16.msra.mxu0 0
        %9233 = vmatprep.subr.bf16.mxu0 0
        %9234 = vmatpush1.bf16.msra.mxu0 0
        %9235 = vmatprep.subr.bf16.mxu0 0
        %9236 = vmatpush1.bf16.msra.mxu0 0
        %9237 = vmatprep.subr.bf16.mxu0 0
        %9238 = vmatpush1.bf16.msra.mxu0 0
        %9239 = vmatprep.subr.bf16.mxu0 0
        %9240 = vmatpush1.bf16.msra.mxu0 0
        %9241 = vmatprep.subr.bf16.mxu0 0
        %9242 = vmatpush1.bf16.msra.mxu0 0
        %9243 = vmatprep.subr.bf16.mxu0 0
        %9244 = vmatpush1.bf16.msra.mxu0 0
        %9245 = vmatprep.subr.bf16.mxu0 0
        %9246 = vmatpush1.bf16.msra.mxu0 0
        %9247 = vmatprep.subr.bf16.mxu0 0
        %9248 = vmatpush1.bf16.msra.mxu0 0
        %9249 = vmatprep.subr.bf16.mxu0 0
        %9250 = vmatpush1.bf16.msra.mxu0 0
        %9251 = vmatprep.subr.bf16.mxu0 0
        %9252 = vmatpush1.bf16.msra.mxu0 0
        %9253 = vmatprep.mubr.bf16.mxu0 0
        %9254 = vmatmul.mubr.bf16.gmra.mrb[0].mxu0 %v9219
        %v9255 = vpop.f32.mrb[0].mxu0
        %v9256 = vadd.f32 0.0, %v9255
        %v9257 = vpop.f32.mrb[0].mxu0
        %v9258 = vpop.f32.mrb[0].mxu0
        %v9259 = vadd.f32 0.0, %v9258
        %v9260 = vpop.f32.mrb[0].mxu0
        %9261 = vdwg.mxu0
        %9264 = vrot.lane.b32.xlu0 %v9256, 112
        %v9265 = vpop.permute.xlu0 %9264
        %9266 = vrot.lane.b32.xlu0 %v9259, 112
        %v9267 = vpop.permute.xlu0 %9266
        %9270 = vst.msk [vmem:[#allocation6] sm:$0xff] %vm2459, %v9265
        %9271 = vst.msk [vmem:[#allocation6 + $0x8] sm:$0xff] %vm2459, %v9267
        %v9272 = vld [vmem:[#allocation6] sm:$0xff]
        %v9273 = vld [vmem:[#allocation6 + $0x8] sm:$0xff]
        %v9274 = vpack.c.bf16 %v9273, %v9272
        %v9275 = vld [vmem:[#allocation25] sm:$0xf]
        %v9276 = vld [vmem:[#allocation25 + $0x4] sm:$0xf]
        %v9277 = vld [vmem:[#allocation25 + $0x8] sm:$0xf]
        %v9278 = vld [vmem:[#allocation25 + $0xc] sm:$0xf]
        %v9279 = vld [vmem:[#allocation25 + $0x10] sm:$0xf]
        %v9280 = vld [vmem:[#allocation25 + $0x14] sm:$0xf]
        %v9281 = vld [vmem:[#allocation25 + $0x18] sm:$0xf]
        %v9282 = vld [vmem:[#allocation25 + $0x1c] sm:$0xf]
        %v9283 = vld [vmem:[#allocation25 + $0x20] sm:$0xf]
        %v9284 = vld [vmem:[#allocation25 + $0x24] sm:$0xf]
        %v9285 = vld [vmem:[#allocation25 + $0x28] sm:$0xf]
        %v9286 = vld [vmem:[#allocation25 + $0x2c] sm:$0xf]
        %v9287 = vld [vmem:[#allocation25 + $0x30] sm:$0xf]
        %v9288 = vld [vmem:[#allocation25 + $0x34] sm:$0xf]
        %v9289 = vld [vmem:[#allocation25 + $0x38] sm:$0xf]
        %v9290 = vld [vmem:[#allocation25 + $0x3c] sm:$0xf]
        %v9291 = vld [vmem:[#allocation27] sm:$0x1]
        %v9293 = vlaneseq
        %v9294 = vshrl.u32 %v9293, 7
        %v9295 = vsub.s32 0, %v9294
        %v9296 = vrot.slane %v9291, %v9295
        %v9314 = vunpack.c.l.b16 %v9275
        %v9315 = vunpack.c.l.b16 %v9276
        %v9316 = vunpack.c.l.b16 %v9277
        %v9317 = vunpack.c.l.b16 %v9278
        %v9318 = vunpack.c.l.b16 %v9279
        %v9319 = vunpack.c.l.b16 %v9280
        %v9320 = vunpack.c.l.b16 %v9281
        %v9321 = vunpack.c.l.b16 %v9282
        %v9322 = vunpack.c.l.b16 %v9283
        %v9323 = vunpack.c.l.b16 %v9284
        %v9324 = vunpack.c.l.b16 %v9285
        %v9325 = vunpack.c.l.b16 %v9286
        %v9326 = vunpack.c.l.b16 %v9287
        %v9327 = vunpack.c.l.b16 %v9288
        %v9328 = vunpack.c.l.b16 %v9289
        %v9329 = vunpack.c.l.b16 %v9290
        %v9330 = vpack.c.b16 %v9315, %v9314
        %v9331 = vpack.c.b16 %v9317, %v9316
        %v9332 = vpack.c.b16 %v9319, %v9318
        %v9333 = vpack.c.b16 %v9321, %v9320
        %v9334 = vpack.c.b16 %v9323, %v9322
        %v9335 = vpack.c.b16 %v9325, %v9324
        %v9336 = vpack.c.b16 %v9327, %v9326
        %v9337 = vpack.c.b16 %v9329, %v9328
        %9346 = vmatprep.subr.bf16.mxu0 0
        %9347 = vmatpush1.bf16.msra.mxu0 %v9330
        %9348 = vmatprep.subr.bf16.mxu0 0
        %9349 = vmatpush1.bf16.msra.mxu0 %v9331
        %9350 = vmatprep.subr.bf16.mxu0 0
        %9351 = vmatpush1.bf16.msra.mxu0 %v9332
        %9352 = vmatprep.subr.bf16.mxu0 0
        %9353 = vmatpush1.bf16.msra.mxu0 %v9333
        %9354 = vmatprep.subr.bf16.mxu0 0
        %9355 = vmatpush1.bf16.msra.mxu0 %v9334
        %9356 = vmatprep.subr.bf16.mxu0 0
        %9357 = vmatpush1.bf16.msra.mxu0 %v9335
        %9358 = vmatprep.subr.bf16.mxu0 0
        %9359 = vmatpush1.bf16.msra.mxu0 %v9336
        %9360 = vmatprep.subr.bf16.mxu0 0
        %9361 = vmatpush1.bf16.msra.mxu0 %v9337
        %9362 = vmatprep.subr.bf16.mxu0 0
        %9363 = vmatpush1.bf16.msra.mxu0 0
        %9364 = vmatprep.subr.bf16.mxu0 0
        %9365 = vmatpush1.bf16.msra.mxu0 0
        %9366 = vmatprep.subr.bf16.mxu0 0
        %9367 = vmatpush1.bf16.msra.mxu0 0
        %9368 = vmatprep.subr.bf16.mxu0 0
        %9369 = vmatpush1.bf16.msra.mxu0 0
        %9370 = vmatprep.subr.bf16.mxu0 0
        %9371 = vmatpush1.bf16.msra.mxu0 0
        %9372 = vmatprep.subr.bf16.mxu0 0
        %9373 = vmatpush1.bf16.msra.mxu0 0
        %9374 = vmatprep.subr.bf16.mxu0 0
        %9375 = vmatpush1.bf16.msra.mxu0 0
        %9376 = vmatprep.subr.bf16.mxu0 0
        %9377 = vmatpush1.bf16.msra.mxu0 0
        %9378 = vmatprep.mubr.bf16.mxu0 0
        %9379 = vmatmul.mubr.bf16.gmra.mrb[0].mxu0 %v9274
        %v9380 = vpop.f32.mrb[0].mxu0
        %v9381 = vadd.f32 %v9296, %v9380
        %v9382 = vpop.f32.mrb[0].mxu0
        %v9383 = vpop.f32.mrb[0].mxu0
        %v9384 = vadd.f32 %v9296, %v9383
        %v9385 = vpop.f32.mrb[0].mxu0
        %9386 = vdwg.mxu0
        %v9387 = vadd.f32 %v2614, %v9381
        %v9388 = vadd.f32 %v2615, %v9384
        %9389 = vadd.xlane.f32.xlu0 %v9387
        %v9390 = vpop.xlane.xlu0 %9389
        %9391 = vadd.xlane.f32.xlu0 %v9388
        %v9392 = vpop.xlane.xlu0 %9391
        %v9393 = vmul.f32 %v9390, %v2583
        %v9394 = vmul.f32 %v9392, %v2583
        %v9395 = vsub.f32 %v9387, %v9393
        %v9396 = vsub.f32 %v9388, %v9394
        %v9397 = vmul.f32 %v9395, %v9395
        %v9398 = vmul.f32 %v9396, %v9396
        %9399 = vadd.xlane.f32.xlu0 %v9397
        %v9400 = vpop.xlane.xlu0 %9399
        %9401 = vadd.xlane.f32.xlu0 %v9398
        %v9402 = vpop.xlane.xlu0 %9401
        %v9403 = vmul.f32 %v9400, %v2583
        %v9404 = vmul.f32 %v9402, %v2583
        %v9405 = vadd.f32 %v9403, 1e-05
        %v9406 = vadd.f32 %v9404, 1e-05
        %v9407 = vrsqrt.pop %v9405
        %v9408 = vrsqrt.pop %v9406
        %v9409 = vmul.f32 %v9395, %v9407
        %v9410 = vmul.f32 %v9396, %v9408
        %v9411 = vld [vmem:[%s19 + $0x1] sm:$0x1]
        %v9412 = vlaneseq
        %v9413 = vshrl.u32 %v9412, 7
        %v9414 = vsub.s32 0, %v9413
        %v9415 = vrot.slane %v9411, %v9414
        %v9416 = vmul.f32 %v9409, %v9415
        %v9417 = vmul.f32 %v9410, %v9415
        %v9418 = vld [vmem:[%s20 + $0x1] sm:$0x1]
        %v9419 = vlaneseq
        %v9420 = vshrl.u32 %v9419, 7
        %v9421 = vsub.s32 0, %v9420
        %v9422 = vrot.slane %v9418, %v9421
        %v9423 = vadd.f32 %v9416, %v9422
        %v9424 = vadd.f32 %v9417, %v9422
        %v9425 = vpack.c.bf16 %v9424, %v9423
        %v9426 = vld [vmem:[%s15] sm:$0xff]
        %v9427 = vld [vmem:[%s15 + $0x8] sm:$0xff]
        %v9428 = vld [vmem:[%s15 + $0x10] sm:$0xff]
        %v9429 = vld [vmem:[%s15 + $0x18] sm:$0xff]
        %v9430 = vld [vmem:[%s15 + $0x20] sm:$0xff]
        %v9431 = vld [vmem:[%s15 + $0x28] sm:$0xff]
        %v9432 = vld [vmem:[%s15 + $0x30] sm:$0xff]
        %v9433 = vld [vmem:[%s15 + $0x38] sm:$0xff]
        %v9434 = vld [vmem:[%s15 + $0x40] sm:$0xff]
        %v9435 = vld [vmem:[%s15 + $0x48] sm:$0xff]
        %v9436 = vld [vmem:[%s15 + $0x50] sm:$0xff]
        %v9437 = vld [vmem:[%s15 + $0x58] sm:$0xff]
        %v9438 = vld [vmem:[%s15 + $0x60] sm:$0xff]
        %v9439 = vld [vmem:[%s15 + $0x68] sm:$0xff]
        %v9440 = vld [vmem:[%s15 + $0x70] sm:$0xff]
        %v9441 = vld [vmem:[%s15 + $0x78] sm:$0xff]
        %v9442 = vld [vmem:[%s16] sm:$0x3]
        %v9444 = vlaneseq
        %v9445 = vshrl.u32 %v9444, 7
        %v9446 = vsub.s32 0, %v9445
        %v9447 = vrot.slane %v9442, %v9446
        %v9448 = vlaneseq
        %v9449 = vshrl.u32 %v9448, 7
        %v9450 = vsub.s32 1, %v9449
        %v9451 = vrot.slane %v9442, %v9450
        %v9470 = vunpack.c.l.b16 %v9426
        %v9471 = vunpack.c.h.b16 %v9426
        %v9472 = vunpack.c.l.b16 %v9427
        %v9473 = vunpack.c.h.b16 %v9427
        %v9474 = vunpack.c.l.b16 %v9428
        %v9475 = vunpack.c.h.b16 %v9428
        %v9476 = vunpack.c.l.b16 %v9429
        %v9477 = vunpack.c.h.b16 %v9429
        %v9478 = vunpack.c.l.b16 %v9430
        %v9479 = vunpack.c.h.b16 %v9430
        %v9480 = vunpack.c.l.b16 %v9431
        %v9481 = vunpack.c.h.b16 %v9431
        %v9482 = vunpack.c.l.b16 %v9432
        %v9483 = vunpack.c.h.b16 %v9432
        %v9484 = vunpack.c.l.b16 %v9433
        %v9485 = vunpack.c.h.b16 %v9433
        %v9486 = vunpack.c.l.b16 %v9434
        %v9487 = vunpack.c.h.b16 %v9434
        %v9488 = vunpack.c.l.b16 %v9435
        %v9489 = vunpack.c.h.b16 %v9435
        %v9490 = vunpack.c.l.b16 %v9436
        %v9491 = vunpack.c.h.b16 %v9436
        %v9492 = vunpack.c.l.b16 %v9437
        %v9493 = vunpack.c.h.b16 %v9437
        %v9494 = vunpack.c.l.b16 %v9438
        %v9495 = vunpack.c.h.b16 %v9438
        %v9496 = vunpack.c.l.b16 %v9439
        %v9497 = vunpack.c.h.b16 %v9439
        %v9498 = vunpack.c.l.b16 %v9440
        %v9499 = vunpack.c.h.b16 %v9440
        %v9500 = vunpack.c.l.b16 %v9441
        %v9501 = vunpack.c.h.b16 %v9441
        %v9502 = vpack.c.b16 %v9472, %v9470
        %v9503 = vpack.c.b16 %v9473, %v9471
        %v9504 = vpack.c.b16 %v9476, %v9474
        %v9505 = vpack.c.b16 %v9477, %v9475
        %v9506 = vpack.c.b16 %v9480, %v9478
        %v9507 = vpack.c.b16 %v9481, %v9479
        %v9508 = vpack.c.b16 %v9484, %v9482
        %v9509 = vpack.c.b16 %v9485, %v9483
        %v9510 = vpack.c.b16 %v9488, %v9486
        %v9511 = vpack.c.b16 %v9489, %v9487
        %v9512 = vpack.c.b16 %v9492, %v9490
        %v9513 = vpack.c.b16 %v9493, %v9491
        %v9514 = vpack.c.b16 %v9496, %v9494
        %v9515 = vpack.c.b16 %v9497, %v9495
        %v9516 = vpack.c.b16 %v9500, %v9498
        %v9517 = vpack.c.b16 %v9501, %v9499
        %9534 = vmatprep.subr.bf16.mxu0 %v9503
        %9535 = vmatpush1.bf16.msra.mxu0 %v9502
        %9536 = vmatprep.subr.bf16.mxu0 %v9505
        %9537 = vmatpush1.bf16.msra.mxu0 %v9504
        %9538 = vmatprep.subr.bf16.mxu0 %v9507
        %9539 = vmatpush1.bf16.msra.mxu0 %v9506
        %9540 = vmatprep.subr.bf16.mxu0 %v9509
        %9541 = vmatpush1.bf16.msra.mxu0 %v9508
        %9542 = vmatprep.subr.bf16.mxu0 %v9511
        %9543 = vmatpush1.bf16.msra.mxu0 %v9510
        %9544 = vmatprep.subr.bf16.mxu0 %v9513
        %9545 = vmatpush1.bf16.msra.mxu0 %v9512
        %9546 = vmatprep.subr.bf16.mxu0 %v9515
        %9547 = vmatpush1.bf16.msra.mxu0 %v9514
        %9548 = vmatprep.subr.bf16.mxu0 %v9517
        %9549 = vmatpush1.bf16.msra.mxu0 %v9516
        %9550 = vmatprep.subr.bf16.mxu0 0
        %9551 = vmatpush1.bf16.msra.mxu0 0
        %9552 = vmatprep.subr.bf16.mxu0 0
        %9553 = vmatpush1.bf16.msra.mxu0 0
        %9554 = vmatprep.subr.bf16.mxu0 0
        %9555 = vmatpush1.bf16.msra.mxu0 0
        %9556 = vmatprep.subr.bf16.mxu0 0
        %9557 = vmatpush1.bf16.msra.mxu0 0
        %9558 = vmatprep.subr.bf16.mxu0 0
        %9559 = vmatpush1.bf16.msra.mxu0 0
        %9560 = vmatprep.subr.bf16.mxu0 0
        %9561 = vmatpush1.bf16.msra.mxu0 0
        %9562 = vmatprep.subr.bf16.mxu0 0
        %9563 = vmatpush1.bf16.msra.mxu0 0
        %9564 = vmatprep.subr.bf16.mxu0 0
        %9565 = vmatpush1.bf16.msra.mxu0 0
        %9566 = vmatprep.mubr.bf16.mxu0 0
        %9567 = vmatmul.mubr.bf16.gmra.mrb[0].mxu0 %v9425
        %v9568 = vpop.f32.mrb[0].mxu0
        %v9569 = vadd.f32 %v9447, %v9568
        %v9570 = vpop.f32.mrb[0].mxu0
        %v9571 = vadd.f32 %v9451, %v9570
        %v9572 = vpop.f32.mrb[0].mxu0
        %v9573 = vadd.f32 %v9447, %v9572
        %v9574 = vpop.f32.mrb[0].mxu0
        %v9575 = vadd.f32 %v9451, %v9574
        %9576 = vdwg.mxu0
        %v9577 = vmax.f32 %v9569, 0.0
        %v9578 = vmax.f32 %v9571, 0.0
        %v9579 = vmax.f32 %v9573, 0.0
        %v9580 = vmax.f32 %v9575, 0.0
        %v9581 = vpack.c.bf16 %v9579, %v9577
        %v9582 = vpack.c.bf16 %v9580, %v9578
        %v9583 = vld [vmem:[#allocation28] sm:$0xf]
        %v9584 = vld [vmem:[#allocation28 + $0x4] sm:$0xf]
        %v9585 = vld [vmem:[#allocation28 + $0x8] sm:$0xf]
        %v9586 = vld [vmem:[#allocation28 + $0xc] sm:$0xf]
        %v9587 = vld [vmem:[#allocation28 + $0x10] sm:$0xf]
        %v9588 = vld [vmem:[#allocation28 + $0x14] sm:$0xf]
        %v9589 = vld [vmem:[#allocation28 + $0x18] sm:$0xf]
        %v9590 = vld [vmem:[#allocation28 + $0x1c] sm:$0xf]
        %v9591 = vld [vmem:[#allocation28 + $0x20] sm:$0xf]
        %v9592 = vld [vmem:[#allocation28 + $0x24] sm:$0xf]
        %v9593 = vld [vmem:[#allocation28 + $0x28] sm:$0xf]
        %v9594 = vld [vmem:[#allocation28 + $0x2c] sm:$0xf]
        %v9595 = vld [vmem:[#allocation28 + $0x30] sm:$0xf]
        %v9596 = vld [vmem:[#allocation28 + $0x34] sm:$0xf]
        %v9597 = vld [vmem:[#allocation28 + $0x38] sm:$0xf]
        %v9598 = vld [vmem:[#allocation28 + $0x3c] sm:$0xf]
        %v9599 = vld [vmem:[#allocation28 + $0x40] sm:$0xf]
        %v9600 = vld [vmem:[#allocation28 + $0x44] sm:$0xf]
        %v9601 = vld [vmem:[#allocation28 + $0x48] sm:$0xf]
        %v9602 = vld [vmem:[#allocation28 + $0x4c] sm:$0xf]
        %v9603 = vld [vmem:[#allocation28 + $0x50] sm:$0xf]
        %v9604 = vld [vmem:[#allocation28 + $0x54] sm:$0xf]
        %v9605 = vld [vmem:[#allocation28 + $0x58] sm:$0xf]
        %v9606 = vld [vmem:[#allocation28 + $0x5c] sm:$0xf]
        %v9607 = vld [vmem:[#allocation28 + $0x60] sm:$0xf]
        %v9608 = vld [vmem:[#allocation28 + $0x64] sm:$0xf]
        %v9609 = vld [vmem:[#allocation28 + $0x68] sm:$0xf]
        %v9610 = vld [vmem:[#allocation28 + $0x6c] sm:$0xf]
        %v9611 = vld [vmem:[#allocation28 + $0x70] sm:$0xf]
        %v9612 = vld [vmem:[#allocation28 + $0x74] sm:$0xf]
        %v9613 = vld [vmem:[#allocation28 + $0x78] sm:$0xf]
        %v9614 = vld [vmem:[#allocation28 + $0x7c] sm:$0xf]
        %v9615 = vld [vmem:[%s18] sm:$0x1]
        %v9617 = vlaneseq
        %v9618 = vshrl.u32 %v9617, 7
        %v9619 = vsub.s32 0, %v9618
        %v9620 = vrot.slane %v9615, %v9619
        %v9654 = vunpack.c.l.b16 %v9583
        %v9655 = vunpack.c.l.b16 %v9584
        %v9656 = vunpack.c.l.b16 %v9585
        %v9657 = vunpack.c.l.b16 %v9586
        %v9658 = vunpack.c.l.b16 %v9587
        %v9659 = vunpack.c.l.b16 %v9588
        %v9660 = vunpack.c.l.b16 %v9589
        %v9661 = vunpack.c.l.b16 %v9590
        %v9662 = vunpack.c.l.b16 %v9591
        %v9663 = vunpack.c.l.b16 %v9592
        %v9664 = vunpack.c.l.b16 %v9593
        %v9665 = vunpack.c.l.b16 %v9594
        %v9666 = vunpack.c.l.b16 %v9595
        %v9667 = vunpack.c.l.b16 %v9596
        %v9668 = vunpack.c.l.b16 %v9597
        %v9669 = vunpack.c.l.b16 %v9598
        %v9670 = vunpack.c.l.b16 %v9599
        %v9671 = vunpack.c.l.b16 %v9600
        %v9672 = vunpack.c.l.b16 %v9601
        %v9673 = vunpack.c.l.b16 %v9602
        %v9674 = vunpack.c.l.b16 %v9603
        %v9675 = vunpack.c.l.b16 %v9604
        %v9676 = vunpack.c.l.b16 %v9605
        %v9677 = vunpack.c.l.b16 %v9606
        %v9678 = vunpack.c.l.b16 %v9607
        %v9679 = vunpack.c.l.b16 %v9608
        %v9680 = vunpack.c.l.b16 %v9609
        %v9681 = vunpack.c.l.b16 %v9610
        %v9682 = vunpack.c.l.b16 %v9611
        %v9683 = vunpack.c.l.b16 %v9612
        %v9684 = vunpack.c.l.b16 %v9613
        %v9685 = vunpack.c.l.b16 %v9614
        %v9686 = vpack.c.b16 %v9655, %v9654
        %v9687 = vpack.c.b16 %v9657, %v9656
        %v9688 = vpack.c.b16 %v9659, %v9658
        %v9689 = vpack.c.b16 %v9661, %v9660
        %v9690 = vpack.c.b16 %v9663, %v9662
        %v9691 = vpack.c.b16 %v9665, %v9664
        %v9692 = vpack.c.b16 %v9667, %v9666
        %v9693 = vpack.c.b16 %v9669, %v9668
        %v9694 = vpack.c.b16 %v9671, %v9670
        %v9695 = vpack.c.b16 %v9673, %v9672
        %v9696 = vpack.c.b16 %v9675, %v9674
        %v9697 = vpack.c.b16 %v9677, %v9676
        %v9698 = vpack.c.b16 %v9679, %v9678
        %v9699 = vpack.c.b16 %v9681, %v9680
        %v9700 = vpack.c.b16 %v9683, %v9682
        %v9701 = vpack.c.b16 %v9685, %v9684
        %9718 = vmatprep.subr.bf16.mxu0 0
        %9719 = vmatpush1.bf16.msra.mxu0 %v9686
        %9720 = vmatprep.subr.bf16.mxu0 0
        %9721 = vmatpush1.bf16.msra.mxu0 %v9687
        %9722 = vmatprep.subr.bf16.mxu0 0
        %9723 = vmatpush1.bf16.msra.mxu0 %v9688
        %9724 = vmatprep.subr.bf16.mxu0 0
        %9725 = vmatpush1.bf16.msra.mxu0 %v9689
        %9726 = vmatprep.subr.bf16.mxu0 0
        %9727 = vmatpush1.bf16.msra.mxu0 %v9690
        %9728 = vmatprep.subr.bf16.mxu0 0
        %9729 = vmatpush1.bf16.msra.mxu0 %v9691
        %9730 = vmatprep.subr.bf16.mxu0 0
        %9731 = vmatpush1.bf16.msra.mxu0 %v9692
        %9732 = vmatprep.subr.bf16.mxu0 0
        %9733 = vmatpush1.bf16.msra.mxu0 %v9693
        %9734 = vmatprep.subr.bf16.mxu0 0
        %9735 = vmatpush1.bf16.msra.mxu0 %v9694
        %9736 = vmatprep.subr.bf16.mxu0 0
        %9737 = vmatpush1.bf16.msra.mxu0 %v9695
        %9738 = vmatprep.subr.bf16.mxu0 0
        %9739 = vmatpush1.bf16.msra.mxu0 %v9696
        %9740 = vmatprep.subr.bf16.mxu0 0
        %9741 = vmatpush1.bf16.msra.mxu0 %v9697
        %9742 = vmatprep.subr.bf16.mxu0 0
        %9743 = vmatpush1.bf16.msra.mxu0 %v9698
        %9744 = vmatprep.subr.bf16.mxu0 0
        %9745 = vmatpush1.bf16.msra.mxu0 %v9699
        %9746 = vmatprep.subr.bf16.mxu0 0
        %9747 = vmatpush1.bf16.msra.mxu0 %v9700
        %9748 = vmatprep.subr.bf16.mxu0 0
        %9749 = vmatpush1.bf16.msra.mxu0 %v9701
        %9750 = vmatprep.mubr.bf16.mxu0 %v9582
        %9751 = vmatmul.mubr.bf16.gmra.mrb[0].mxu0 %v9581
        %v9752 = vpop.f32.mrb[0].mxu0
        %v9753 = vadd.f32 %v9620, %v9752
        %v9754 = vpop.f32.mrb[0].mxu0
        %v9755 = vpop.f32.mrb[0].mxu0
        %v9756 = vadd.f32 %v9620, %v9755
        %v9757 = vpop.f32.mrb[0].mxu0
        %9758 = vdwg.mxu0
        %v9759 = vadd.f32 %v9423, %v9753
        %v9760 = vadd.f32 %v9424, %v9756
        %9761 = vadd.xlane.f32.xlu0 %v9759
        %v9762 = vpop.xlane.xlu0 %9761
        %9763 = vadd.xlane.f32.xlu0 %v9760
        %v9764 = vpop.xlane.xlu0 %9763
        %v9765 = vmul.f32 %v9762, %v2583
        %v9766 = vmul.f32 %v9764, %v2583
        %v9767 = vsub.f32 %v9759, %v9765
        %v9768 = vsub.f32 %v9760, %v9766
        %v9769 = vmul.f32 %v9767, %v9767
        %v9770 = vmul.f32 %v9768, %v9768
        %9771 = vadd.xlane.f32.xlu0 %v9769
        %v9772 = vpop.xlane.xlu0 %9771
        %9773 = vadd.xlane.f32.xlu0 %v9770
        %v9774 = vpop.xlane.xlu0 %9773
        %v9775 = vmul.f32 %v9772, %v2583
        %v9776 = vmul.f32 %v9774, %v2583
        %v9777 = vadd.f32 %v9775, 1e-05
        %v9778 = vadd.f32 %v9776, 1e-05
        %v9779 = vrsqrt.pop %v9777
        %v9780 = vrsqrt.pop %v9778
        %v9781 = vmul.f32 %v9767, %v9779
        %v9782 = vmul.f32 %v9768, %v9780
        %v9783 = vld [vmem:[%s19 + $0x2] sm:$0x1]
        %v9784 = vlaneseq
        %v9785 = vshrl.u32 %v9784, 7
        %v9786 = vsub.s32 0, %v9785
        %v9787 = vrot.slane %v9783, %v9786
        %v9788 = vmul.f32 %v9781, %v9787
        %v9789 = vmul.f32 %v9782, %v9787
        %v9790 = vld [vmem:[%s20 + $0x2] sm:$0x1]
        %v9791 = vlaneseq
        %v9792 = vshrl.u32 %v9791, 7
        %v9793 = vsub.s32 0, %v9792
        %v9794 = vrot.slane %v9790, %v9793
        %v9795 = vadd.f32 %v9788, %v9794
        %v9796 = vadd.f32 %v9789, %v9794
        %9797 = vst [vmem:[#allocation2] sm:$0xff] %v9795
        %9798 = vst [vmem:[#allocation2 + $0x8] sm:$0xff] %v9796
        // Predicated region
        $region165: #{tpu_custom_call.1} parent=103 // pred_check
          %p9799 = pneg %p910
        $region166: #{tpu_custom_call.1} parent=103 // pred_check_branch
          %9801 = sbr.rel (%p9799) target = $region168
        $region167: #{tpu_custom_call.1} parent=103 // pred_region
          %9802 = vst [vmem:[%s903] sm:$0xff] %v9795
          %9803 = vst [vmem:[%s903 + $0x8] sm:$0xff] %v9796
        $region168: #{tpu_custom_call.1} parent=103 // pred_fallthru
          _
        %s9804 = sand.u32 %s523, 1
        %s9805 = scalar_lea.sflag [#allocation9], %s9804
        %s9806 = sand.u32 %s523, 1
        %s9807 = smul.addr %s9806, 16
        %s9808 = scalar_lea.vmem [#allocation30], %s9807
        // Predicated region
        $region169: #{tpu_custom_call.1} parent=103 // pred_check
          %p9809 = pneg %p533
        $region170: #{tpu_custom_call.1} parent=103 // pred_check_branch
          %9811 = sbr.rel (%p9809) target = $region172
        $region171: #{tpu_custom_call.1} parent=103 // pred_region
          %s9813 = ssub.s32 256, 256
          %9814 = vsyncadd %s9805, %s9813
          %s9815 = smul.addr %s51, 2
          %s9816 = smul.addr %s9815, 128
          %s9817 = scalar_lea.hbm %s21, %s9816
          %s9818 = sshll.u32 %s9808, 4
          %s9819 = int_to_ptr.vmem [resolvable:$true] %s9818
          %9824 = dma.vmem_to_hbm [thread:$0]  %s9819, 256, %s9817, %s9805, 128, 128, 8
        $region172: #{tpu_custom_call.1} parent=103 // pred_fallthru
          _
      $region104: #{tpu_custom_call.1} parent=5 // pred_fallthru
        _
      %p9825 = scmp.le.s32.totalorder 2, %s42
      // Predicated region
      $region173: #{tpu_custom_call.1} parent=5 // pred_check
        %p9826 = pneg %p9825
      $region174: #{tpu_custom_call.1} parent=5 // pred_check_branch
        %9828 = sbr.rel (%p9826) target = $region176
      $region175: #{tpu_custom_call.1} parent=5 // pred_region
        %s9829 = ssub.s32 %s42, 2
        // Predicated region
        $region177: #{tpu_custom_call.1} parent=175 // pred_check
          %p9830 = pneg %p539
        $region178: #{tpu_custom_call.1} parent=175 // pred_check_branch
          %9832 = sbr.rel (%p9830) target = $region180
        $region179: #{tpu_custom_call.1} parent=175 // pred_region
          %s9833 = sand.u32 %s524, 1
          %s9834 = scalar_lea.sflag [#allocation9], %s9833
          %s9835 = sand.u32 %s524, 1
          %s9836 = smul.addr %s9835, 16
          %s9837 = scalar_lea.vmem [#allocation30], %s9836
          %9838 = dma.done %s9834, 256
        $region180: #{tpu_custom_call.1} parent=175 // pred_fallthru
          _
      $region176: #{tpu_custom_call.1} parent=5 // pred_fallthru
        _
    $region6: #{tpu_custom_call.1} parent=1 // loop_footer
      %s46 = sadd.s32 1, %s42
    $region7: #{tpu_custom_call.1} parent=1 // loop_footer_branch
      %41 = sbr.rel target = $region3
    $region8: #{tpu_custom_call.1} parent=1 // loop_exit
      _
    %9839 = vsyncpa [#allocation8], 1
    %s9840 = scalar_lea.sflag [#allocation8], 1
    %9841 = vsyncpa %s9840, 1
    %9842 = vsyncpa [#allocation11], 1
    %s9843 = scalar_lea.sflag [#allocation11], 1
    %9844 = vsyncpa %s9843, 1
    %9845 = vsyncpa [#allocation14], 1
    %9846 = vsyncpa [#allocation17], 1
    %9847 = vsyncpa [#allocation20], 1
    %9848 = vsyncpa [#allocation23], 1
    %9849 = vsyncpa [#allocation26], 1
    %9850 = vsyncpa [#allocation29], 1
    %9851 = vsyncpa [#allocation9], 1
    %s9852 = scalar_lea.sflag [#allocation9], 1
    %9853 = vsyncpa %s9852, 1

</llo_original>
